<compile_context>
chip_gen: v7x
topology: tpu7x:2x2x1
jax: 0.10.0
libtpu: 0.0.40
codegen_flags: <defaults>
</compile_context>

<pallas_src>
import jax
import jax.numpy as jnp
from jax.experimental import pallas as pl
from jax.experimental.pallas import tpu as pltpu


# ----------------------------------------------------------------------------
# Fused MaCow step kernel (one batch element per grid step)
# ----------------------------------------------------------------------------

def _macow_step_kernel(x_ref, condp_ref, an_bias_ref, an_scale_ref, w1x1_ref,
                       w_in_x_ref, w_in_c_ref, b_in_ref, w_sc_ref, b_sc_ref,
                       half_mask_ref, o_ref, ld_ref, padx_ref, padf_ref):
    """ActNorm -> 1x1 conv -> conditional affine coupling, fully in VMEM.

    x_ref:        (1, H, W, C)         activation block
    condp_ref:    (1, H+2, W+2, hc)    pre-padded conditioning block
    an_bias_ref:  (1, C)               actnorm bias
    an_scale_ref: (1, C)               exp(actnorm log-scale)
    w1x1_ref:     (C, C)               invertible 1x1 conv weight
    w_in_x_ref:   (9, C2, hidden)      3x3 taps, x1 slice of w_in
    w_in_c_ref:   (9, hc, hidden)      3x3 taps, cond slice of w_in
    b_in_ref:     (1, hidden)
    w_sc_ref:     (9, hidden, 2*C)     3x3 taps, channel-remapped w_out:
                                       [:, :, C2:C]   -> scale logits
                                       [:, :, C+C2:]  -> shift
                                       (first C2 of each half zero-padded)
    b_sc_ref:     (1, 2*C)             matching remapped bias
    half_mask_ref:(1, C)               0 on pass-through half, 1 on coupled half
    o_ref:        (1, H, W, C)
    ld_ref:       (1, 1, 1)            per-sample coupling logdet
    padx_ref:     (H+2, W+2, C2)  VMEM halo scratch for x1
    padf_ref:     (H+2, W+2, hidden) VMEM halo scratch for hidden features
    """
    _, H, W, C = x_ref.shape
    C2 = C // 2
    hc = condp_ref.shape[-1]
    hidden = b_in_ref.shape[-1]
    HW = H * W

    # ---- ActNorm + invertible 1x1 conv (channel mixing) --------------------
    x = x_ref[0].reshape(HW, C).astype(jnp.float32)
    x = (x + an_bias_ref[...]) * an_scale_ref[...]
    x = jnp.dot(x, w1x1_ref[...], preferred_element_type=jnp.float32)

    # ---- coupling net, conv #1: 3x3 over [x1, cond], ELU -------------------
    x1 = x[:, :C2]

    padx_ref[...] = jnp.zeros_like(padx_ref)                 # zero halo
    padx_ref[1:H + 1, 1:W + 1, :] = x1.reshape(H, W, C2)     # interior
    xp = padx_ref[...]
    cp = condp_ref[0].astype(jnp.float32)

    acc1 = jnp.zeros((HW, hidden), jnp.float32)
    for k in range(9):
        dy, dx = divmod(k, 3)
        px = xp[dy:dy + H, dx:dx + W, :].reshape(HW, C2)
        pc = cp[dy:dy + H, dx:dx + W, :].reshape(HW, hc)
        acc1 = acc1 + jnp.dot(px, w_in_x_ref[k],
                              preferred_element_type=jnp.float32)
        acc1 = acc1 + jnp.dot(pc, w_in_c_ref[k],
                              preferred_element_type=jnp.float32)
    acc1 = acc1 + b_in_ref[...]
    feat = jnp.where(acc1 > 0, acc1,
                     jnp.exp(jnp.minimum(acc1, 0.0)) - 1.0)   # ELU

    # ---- coupling net, conv #2 + fused affine-coupling apply ---------------
    padf_ref[...] = jnp.zeros_like(padf_ref)
    padf_ref[1:H + 1, 1:W + 1, :] = feat.reshape(H, W, hidden)
    fp = padf_ref[...]

    acc2 = jnp.zeros((HW, 2 * C), jnp.float32)
    for k in range(9):
        dy, dx = divmod(k, 3)
        pf = fp[dy:dy + H, dx:dx + W, :].reshape(HW, hidden)
        acc2 = acc2 + jnp.dot(pf, w_sc_ref[k],
                              preferred_element_type=jnp.float32)
    acc2 = acc2 + b_sc_ref[...]

    s_raw = acc2[:, :C]          # scale logits live on channels [C2, C)
    shift = acc2[:, C:]          # shift lives on channels [C2, C), zero elsewhere
    # log(sigmoid(s + 2)), zeroed on the pass-through half of the channels
    log_scale = half_mask_ref[...] * (-jax.nn.softplus(-(s_raw + 2.0)))

    y = x * jnp.exp(log_scale) + shift     # first half == x1, second half == y2

    o_ref[...] = y.reshape(1, H, W, C).astype(o_ref.dtype)
    ld_ref[...] = jnp.sum(log_scale).reshape(1, 1, 1)


def macow_step(x, cond_padded, p, logdet):
    """One fused MaCow flow step. x: (N,H,W,C) NHWC, cond_padded: (N,H+2,W+2,hc)."""
    N, H, W, C = x.shape
    C2 = C // 2
    hc = cond_padded.shape[-1]
    hidden = p['w_in'].shape[-1]

    # ---- parameter-only preprocessing (trace-time / XLA, tiny) -------------
    an_scale = jnp.exp(p['an_logs'])                                 # (1, C)
    w_in = p['w_in']                                                 # (3,3,C2+hc,hidden)
    w_in_x = w_in[:, :, :C2, :].reshape(9, C2, hidden)
    w_in_c = w_in[:, :, C2:, :].reshape(9, hc, hidden)
    b_in = p['b_in'].reshape(1, hidden)

    # remap w_out/b_out output channels so that the conv directly produces
    # [ 0 | scale-logits ] on channels [0,C) and [ 0 | shift ] on [C,2C);
    # the coupling then becomes a full-width multiply-add (no in-kernel
    # channel concat / offset stores needed).
    w_out = p['w_out']                                               # (3,3,hidden,C)
    w_sc = jnp.zeros((3, 3, hidden, 2 * C), jnp.float32)
    w_sc = w_sc.at[..., C2:C].set(w_out[..., :C2])
    w_sc = w_sc.at[..., C + C2:].set(w_out[..., C2:])
    w_sc = w_sc.reshape(9, hidden, 2 * C)
    b_sc = jnp.zeros((1, 2 * C), jnp.float32)
    b_sc = b_sc.at[0, C2:C].set(p['b_out'][:C2])
    b_sc = b_sc.at[0, C + C2:].set(p['b_out'][C2:])
    half_mask = jnp.concatenate(
        [jnp.zeros((1, C2), jnp.float32), jnp.ones((1, C2), jnp.float32)],
        axis=1)

    y, ld = pl.pallas_call(
        _macow_step_kernel,
        out_shape=(jax.ShapeDtypeStruct((N, H, W, C), x.dtype),
                   jax.ShapeDtypeStruct((N, 1, 1), jnp.float32)),
        grid=(N,),
        in_specs=[
            pl.BlockSpec((1, H, W, C), lambda n: (n, 0, 0, 0)),
            pl.BlockSpec((1, H + 2, W + 2, hc), lambda n: (n, 0, 0, 0)),
            pl.BlockSpec((1, C), lambda n: (0, 0)),
            pl.BlockSpec((1, C), lambda n: (0, 0)),
            pl.BlockSpec((C, C), lambda n: (0, 0)),
            pl.BlockSpec((9, C2, hidden), lambda n: (0, 0, 0)),
            pl.BlockSpec((9, hc, hidden), lambda n: (0, 0, 0)),
            pl.BlockSpec((1, hidden), lambda n: (0, 0)),
            pl.BlockSpec((9, hidden, 2 * C), lambda n: (0, 0, 0)),
            pl.BlockSpec((1, 2 * C), lambda n: (0, 0)),
            pl.BlockSpec((1, C), lambda n: (0, 0)),
        ],
        out_specs=(
            pl.BlockSpec((1, H, W, C), lambda n: (n, 0, 0, 0)),
            pl.BlockSpec((1, 1, 1), lambda n: (n, 0, 0)),
        ),
        scratch_shapes=[
            pltpu.VMEM((H + 2, W + 2, C2), jnp.float32),
            pltpu.VMEM((H + 2, W + 2, hidden), jnp.float32),
        ],
        compiler_params=pltpu.CompilerParams(
            dimension_semantics=("parallel",)),
    )(x, cond_padded, p['an_bias'], an_scale, p['w1x1'],
      w_in_x, w_in_c, b_in, w_sc, b_sc, half_mask)

    # parameter-only logdet terms (actnorm + 1x1 conv) in plain JAX
    _, w_logabsdet = jnp.linalg.slogdet(p['w1x1'])
    logdet = (logdet + H * W * jnp.sum(p['an_logs'])
              + H * W * w_logabsdet + ld.reshape(N))
    return y, logdet


# ----------------------------------------------------------------------------
# Flow glue (reshapes / param bookkeeping in plain JAX)
# ----------------------------------------------------------------------------

def squeeze2(x):  # NHWC: (N,H,W,C) -> (N,H/2,W/2,4C)
    N, H, W, C = x.shape
    x = x.reshape(N, H // 2, 2, W // 2, 2, C)
    x = x.transpose(0, 1, 3, 5, 2, 4)
    return x.reshape(N, H // 2, W // 2, 4 * C)


def unsqueeze2(x):  # inverse of squeeze2
    N, H, W, C = x.shape
    x = x.reshape(N, H, W, C // 4, 2, 2)
    x = x.transpose(0, 1, 4, 2, 5, 3)
    return x.reshape(N, 2 * H, 2 * W, C // 4)


def avgpool2(x):  # downsample cond feature map to the level resolution
    N, H, W, C = x.shape
    return x.reshape(N, H // 2, 2, W // 2, 2, C).mean(axis=(2, 4))


def init_params(key, levels, num_steps, in_channels, hidden, h_channels):
    params = []
    C = in_channels
    for lvl in range(levels):
        C = C * 4  # squeeze
        level_params = []
        for _ in range(num_steps):
            C2 = C // 2
            key, k0, k1, k2, k3, k4 = jax.random.split(key, 6)
            level_params.append({
                'an_logs': 0.01 * jax.random.normal(k0, (1, C), jnp.float32),
                'an_bias': 0.01 * jax.random.normal(k1, (1, C), jnp.float32),
                'w1x1': jnp.eye(C, dtype=jnp.float32)
                        + 0.01 * jax.random.normal(k2, (C, C), jnp.float32),
                'w_in': 0.05 * jax.random.normal(
                    k3, (3, 3, C2 + h_channels, hidden), jnp.float32),
                'b_in': jnp.zeros((hidden,), jnp.float32),
                'w_out': 0.05 * jax.random.normal(
                    k4, (3, 3, hidden, 2 * C2), jnp.float32),
                'b_out': jnp.zeros((2 * C2,), jnp.float32),
            })
        params.append(level_params)
        if lvl < levels - 1:
            C = C // 2  # channel split
    return params


def flow_forward(x_nchw, cond_nchw, params, levels, num_steps):
    # layout: convert PyTorch NCHW -> NHWC for the kernel
    x = jnp.transpose(x_nchw, (0, 2, 3, 1)).astype(jnp.float32)
    cond = jnp.transpose(cond_nchw, (0, 2, 3, 1)).astype(jnp.float32)
    N = x.shape[0]
    logdet = jnp.zeros((N,), jnp.float32)

    zs = []
    h, c = x, cond
    for lvl in range(levels):
        h = squeeze2(h)
        c = avgpool2(c)
        # pad the conditioning map once per level (reused by every step)
        c_pad = jnp.pad(c, ((0, 0), (1, 1), (1, 1), (0, 0)))
        for s in range(num_steps):
            h, logdet = macow_step(h, c_pad, params[lvl][s], logdet)
        if lvl < levels - 1:
            Cc = h.shape[-1]
            z, h = h[..., :Cc // 2], h[..., Cc // 2:]
            zs.append(z)
    zs.append(h)

    # re-assemble output at the input resolution (same numel as input)
    outs = []
    for i, z in enumerate(zs):
        n_unsq = (i + 1) if i < len(zs) - 1 else levels
        for _ in range(n_unsq):
            z = unsqueeze2(z)
        outs.append(z)
    out = jnp.concatenate(outs, axis=-1)
    out_nchw = jnp.transpose(out, (0, 3, 1, 2))
    return out_nchw, logdet


class SupervisedMacowTransformer:
    """JAX/Pallas re-implementation of the forward pass."""

    def __init__(self, config, key):
        self.config = config
        self.levels = config['factor']
        self.num_steps = config['num_steps']
        self.params = init_params(
            key, self.levels, self.num_steps,
            config['flow_in_channels'], config['flow_mid_channels'],
            config['h_channels'])
        levels, num_steps = self.levels, self.num_steps
        self._fwd = jax.jit(
            lambda x, cond, params: flow_forward(x, cond, params,
                                                 levels, num_steps))

    def forward(self, x, cond, reverse=False):
        if reverse:
            # TODO(synk): reverse / sample paths not implemented.
            raise NotImplementedError
        out, logdet = self._fwd(x, cond, self.params)
        return out, logdet


if __name__ == "__main__":
    config = {
        'num_steps': 2,
        'flow_in_channels': 4,
        'flow_mid_channels': 32,
        'h_channels': 4,
        'factor': 2,
        'transform': 'affine',
        'prior_transform': 'affine',
        'kernel_size': 3,
        'coupling_type': 'conv',
        'activation': 'elu',
        'flow_attn_heads': 1,
        'p_dropout': 0.0,
    }

    key = jax.random.PRNGKey(0)
    kx, kc, kp = jax.random.split(key, 3)
    x = jax.random.normal(kx, (2, 4, 16, 16), jnp.float32)          # NCHW
    cond = jax.random.normal(kc, (2, config['h_channels'], 16, 16),
                             jnp.float32)                            # NCHW

    model = SupervisedMacowTransformer(config, kp)
    out, logdet = model.forward(x, cond)
    jax.block_until_ready((out, logdet))

    assert out.shape == x.shape
    assert logdet.shape == (x.shape[0],)
    assert bool(jnp.all(jnp.isfinite(out))) and bool(jnp.all(jnp.isfinite(logdet)))
    print("KERNEL_OK")
</pallas_src>

<mosaic_0001>
module attributes {stable_mosaic.version = 11 : i64} {
  func.func @_macow_step_kernel(%arg0: i32, %arg1: memref<1x8x8x16xf32, #tpu.memory_space<vmem>>, %arg2: memref<1x10x10x4xf32, #tpu.memory_space<vmem>>, %arg3: memref<1x16xf32, #tpu.memory_space<vmem>>, %arg4: memref<1x16xf32, #tpu.memory_space<vmem>>, %arg5: memref<16x16xf32, #tpu.memory_space<vmem>>, %arg6: memref<9x8x32xf32, #tpu.memory_space<vmem>>, %arg7: memref<9x4x32xf32, #tpu.memory_space<vmem>>, %arg8: memref<1x32xf32, #tpu.memory_space<vmem>>, %arg9: memref<9x32x32xf32, #tpu.memory_space<vmem>>, %arg10: memref<1x32xf32, #tpu.memory_space<vmem>>, %arg11: memref<1x16xf32, #tpu.memory_space<vmem>>, %arg12: memref<1x8x8x16xf32, #tpu.memory_space<vmem>>, %arg13: memref<1x1x1xf32, #tpu.memory_space<vmem>>, %arg14: memref<10x10x8xf32, #tpu.memory_space<vmem>>, %arg15: memref<10x10x32xf32, #tpu.memory_space<vmem>>) attributes {dimension_semantics = [#tpu.dimension_semantics<parallel>], iteration_bounds = array<i64: 2>, scalar_prefetch = 0 : i64, scratch_operands = 2 : i64, tpu.core_type = #tpu.core_type<tc>, window_params = [{transform_indices = @transform_0, window_bounds = array<i64: 1, 8, 8, 16>}, {transform_indices = @transform_1, window_bounds = array<i64: 1, 10, 10, 4>}, {pipeline_mode = #tpu.pipeline_mode<synchronous>, transform_indices = @transform_2, window_bounds = array<i64: 1, 16>}, {pipeline_mode = #tpu.pipeline_mode<synchronous>, transform_indices = @transform_3, window_bounds = array<i64: 1, 16>}, {pipeline_mode = #tpu.pipeline_mode<synchronous>, transform_indices = @transform_4, window_bounds = array<i64: 16, 16>}, {pipeline_mode = #tpu.pipeline_mode<synchronous>, transform_indices = @transform_5, window_bounds = array<i64: 9, 8, 32>}, {pipeline_mode = #tpu.pipeline_mode<synchronous>, transform_indices = @transform_6, window_bounds = array<i64: 9, 4, 32>}, {pipeline_mode = #tpu.pipeline_mode<synchronous>, transform_indices = @transform_7, window_bounds = array<i64: 1, 32>}, {pipeline_mode = #tpu.pipeline_mode<synchronous>, transform_indices = @transform_8, window_bounds = array<i64: 9, 32, 32>}, {pipeline_mode = #tpu.pipeline_mode<synchronous>, transform_indices = @transform_9, window_bounds = array<i64: 1, 32>}, {pipeline_mode = #tpu.pipeline_mode<synchronous>, transform_indices = @transform_10, window_bounds = array<i64: 1, 16>}, {transform_indices = @transform_11, window_bounds = array<i64: 1, 8, 8, 16>}, {transform_indices = @transform_12, window_bounds = array<i64: 1, 1, 1>}]} {
    %c0 = arith.constant 0 : index
    %c0_0 = arith.constant 0 : index
    %c0_1 = arith.constant 0 : index
    %c0_2 = arith.constant 0 : index
    %0 = vector.load %arg1[%c0, %c0_0, %c0_1, %c0_2] : memref<1x8x8x16xf32, #tpu.memory_space<vmem>>, vector<1x8x8x16xf32>
    %1 = vector.shape_cast %0 : vector<1x8x8x16xf32> to vector<8x8x16xf32>
    %2 = vector.shape_cast %1 : vector<8x8x16xf32> to vector<64x16xf32>
    %c0_3 = arith.constant 0 : index
    %c0_4 = arith.constant 0 : index
    %3 = vector.load %arg3[%c0_3, %c0_4] : memref<1x16xf32, #tpu.memory_space<vmem>>, vector<1x16xf32>
    %4 = vector.broadcast %3 : vector<1x16xf32> to vector<64x16xf32>
    %5 = arith.addf %2, %4 : vector<64x16xf32>
    %c0_5 = arith.constant 0 : index
    %c0_6 = arith.constant 0 : index
    %6 = vector.load %arg4[%c0_5, %c0_6] : memref<1x16xf32, #tpu.memory_space<vmem>>, vector<1x16xf32>
    %7 = vector.broadcast %6 : vector<1x16xf32> to vector<64x16xf32>
    %8 = arith.mulf %5, %7 : vector<64x16xf32>
    %c0_7 = arith.constant 0 : index
    %c0_8 = arith.constant 0 : index
    %9 = vector.load %arg5[%c0_7, %c0_8] : memref<16x16xf32, #tpu.memory_space<vmem>>, vector<16x16xf32>
    %cst = arith.constant dense<0.000000e+00> : vector<64x16xf32>
    %10 = tpu.matmul %8, %9, %cst {dimension_numbers = #tpu.dot_dimension_numbers<[1], [0], [0], [1], [0, 0, 1, 1], [], []>} : vector<64x16xf32>, vector<16x16xf32>, vector<64x16xf32> -> vector<64x16xf32>
    %11 = vector.extract_strided_slice %10 {offsets = [0, 0], sizes = [64, 8], strides = [1, 1]} : vector<64x16xf32> to vector<64x8xf32>
    %cst_9 = arith.constant 0.000000e+00 : f32
    %12 = vector.broadcast %cst_9 : f32 to vector<10x10x8xf32>
    %c0_10 = arith.constant 0 : index
    %c0_11 = arith.constant 0 : index
    %c0_12 = arith.constant 0 : index
    %13 = vector.load %arg14[%c0_10, %c0_11, %c0_12] : memref<10x10x8xf32, #tpu.memory_space<vmem>>, vector<10x10x8xf32>
    tpu.vector_store %arg14[%c0_10, %c0_11, %c0_12], %12 {strides = array<i32>} : memref<10x10x8xf32, #tpu.memory_space<vmem>>, vector<10x10x8xf32>,
    %14 = vector.shape_cast %11 : vector<64x8xf32> to vector<8x8x8xf32>
    %c1 = arith.constant 1 : index
    %c1_13 = arith.constant 1 : index
    %c0_14 = arith.constant 0 : index
    %15 = vector.load %arg14[%c1, %c1_13, %c0_14] : memref<10x10x8xf32, #tpu.memory_space<vmem>>, vector<8x8x8xf32>
    tpu.vector_store %arg14[%c1, %c1_13, %c0_14], %14 {strides = array<i32>} : memref<10x10x8xf32, #tpu.memory_space<vmem>>, vector<8x8x8xf32>,
    %c0_15 = arith.constant 0 : index
    %c0_16 = arith.constant 0 : index
    %c0_17 = arith.constant 0 : index
    %16 = vector.load %arg14[%c0_15, %c0_16, %c0_17] : memref<10x10x8xf32, #tpu.memory_space<vmem>>, vector<10x10x8xf32>
    %c0_18 = arith.constant 0 : index
    %c0_19 = arith.constant 0 : index
    %c0_20 = arith.constant 0 : index
    %c0_21 = arith.constant 0 : index
    %17 = vector.load %arg2[%c0_18, %c0_19, %c0_20, %c0_21] : memref<1x10x10x4xf32, #tpu.memory_space<vmem>>, vector<1x10x10x4xf32>
    %18 = vector.shape_cast %17 : vector<1x10x10x4xf32> to vector<10x10x4xf32>
    %cst_22 = arith.constant 0.000000e+00 : f32
    %19 = vector.broadcast %cst_22 : f32 to vector<64x32xf32>
    %20 = vector.extract_strided_slice %16 {offsets = [0, 0, 0], sizes = [8, 8, 8], strides = [1, 1, 1]} : vector<10x10x8xf32> to vector<8x8x8xf32>
    %21 = vector.shape_cast %20 : vector<8x8x8xf32> to vector<64x8xf32>
    %22 = vector.extract_strided_slice %18 {offsets = [0, 0, 0], sizes = [8, 8, 4], strides = [1, 1, 1]} : vector<10x10x4xf32> to vector<8x8x4xf32>
    %23 = vector.shape_cast %22 : vector<8x8x4xf32> to vector<64x4xf32>
    %c0_23 = arith.constant 0 : index
    %c0_24 = arith.constant 0 : index
    %c0_25 = arith.constant 0 : index
    %24 = vector.load %arg6[%c0_23, %c0_24, %c0_25] : memref<9x8x32xf32, #tpu.memory_space<vmem>>, vector<1x8x32xf32>
    %25 = vector.shape_cast %24 : vector<1x8x32xf32> to vector<8x32xf32>
    %cst_26 = arith.constant dense<0.000000e+00> : vector<64x32xf32>
    %26 = tpu.matmul %21, %25, %cst_26 {dimension_numbers = #tpu.dot_dimension_numbers<[1], [0], [0], [1], [0, 0, 1, 1], [], []>} : vector<64x8xf32>, vector<8x32xf32>, vector<64x32xf32> -> vector<64x32xf32>
    %27 = arith.addf %19, %26 : vector<64x32xf32>
    %c0_27 = arith.constant 0 : index
    %c0_28 = arith.constant 0 : index
    %c0_29 = arith.constant 0 : index
    %28 = vector.load %arg7[%c0_27, %c0_28, %c0_29] : memref<9x4x32xf32, #tpu.memory_space<vmem>>, vector<1x4x32xf32>
    %29 = vector.shape_cast %28 : vector<1x4x32xf32> to vector<4x32xf32>
    %cst_30 = arith.constant dense<0.000000e+00> : vector<64x32xf32>
    %30 = tpu.matmul %23, %29, %cst_30 {dimension_numbers = #tpu.dot_dimension_numbers<[1], [0], [0], [1], [0, 0, 1, 1], [], []>} : vector<64x4xf32>, vector<4x32xf32>, vector<64x32xf32> -> vector<64x32xf32>
    %31 = arith.addf %27, %30 : vector<64x32xf32>
    %32 = vector.extract_strided_slice %16 {offsets = [0, 1, 0], sizes = [8, 8, 8], strides = [1, 1, 1]} : vector<10x10x8xf32> to vector<8x8x8xf32>
    %33 = vector.shape_cast %32 : vector<8x8x8xf32> to vector<64x8xf32>
    %34 = vector.extract_strided_slice %18 {offsets = [0, 1, 0], sizes = [8, 8, 4], strides = [1, 1, 1]} : vector<10x10x4xf32> to vector<8x8x4xf32>
    %35 = vector.shape_cast %34 : vector<8x8x4xf32> to vector<64x4xf32>
    %c1_31 = arith.constant 1 : index
    %c0_32 = arith.constant 0 : index
    %c0_33 = arith.constant 0 : index
    %36 = vector.load %arg6[%c1_31, %c0_32, %c0_33] : memref<9x8x32xf32, #tpu.memory_space<vmem>>, vector<1x8x32xf32>
    %37 = vector.shape_cast %36 : vector<1x8x32xf32> to vector<8x32xf32>
    %cst_34 = arith.constant dense<0.000000e+00> : vector<64x32xf32>
    %38 = tpu.matmul %33, %37, %cst_34 {dimension_numbers = #tpu.dot_dimension_numbers<[1], [0], [0], [1], [0, 0, 1, 1], [], []>} : vector<64x8xf32>, vector<8x32xf32>, vector<64x32xf32> -> vector<64x32xf32>
    %39 = arith.addf %31, %38 : vector<64x32xf32>
    %c1_35 = arith.constant 1 : index
    %c0_36 = arith.constant 0 : index
    %c0_37 = arith.constant 0 : index
    %40 = vector.load %arg7[%c1_35, %c0_36, %c0_37] : memref<9x4x32xf32, #tpu.memory_space<vmem>>, vector<1x4x32xf32>
    %41 = vector.shape_cast %40 : vector<1x4x32xf32> to vector<4x32xf32>
    %cst_38 = arith.constant dense<0.000000e+00> : vector<64x32xf32>
    %42 = tpu.matmul %35, %41, %cst_38 {dimension_numbers = #tpu.dot_dimension_numbers<[1], [0], [0], [1], [0, 0, 1, 1], [], []>} : vector<64x4xf32>, vector<4x32xf32>, vector<64x32xf32> -> vector<64x32xf32>
    %43 = arith.addf %39, %42 : vector<64x32xf32>
    %44 = vector.extract_strided_slice %16 {offsets = [0, 2, 0], sizes = [8, 8, 8], strides = [1, 1, 1]} : vector<10x10x8xf32> to vector<8x8x8xf32>
    %45 = vector.shape_cast %44 : vector<8x8x8xf32> to vector<64x8xf32>
    %46 = vector.extract_strided_slice %18 {offsets = [0, 2, 0], sizes = [8, 8, 4], strides = [1, 1, 1]} : vector<10x10x4xf32> to vector<8x8x4xf32>
    %47 = vector.shape_cast %46 : vector<8x8x4xf32> to vector<64x4xf32>
    %c2 = arith.constant 2 : index
    %c0_39 = arith.constant 0 : index
    %c0_40 = arith.constant 0 : index
    %48 = vector.load %arg6[%c2, %c0_39, %c0_40] : memref<9x8x32xf32, #tpu.memory_space<vmem>>, vector<1x8x32xf32>
    %49 = vector.shape_cast %48 : vector<1x8x32xf32> to vector<8x32xf32>
    %cst_41 = arith.constant dense<0.000000e+00> : vector<64x32xf32>
    %50 = tpu.matmul %45, %49, %cst_41 {dimension_numbers = #tpu.dot_dimension_numbers<[1], [0], [0], [1], [0, 0, 1, 1], [], []>} : vector<64x8xf32>, vector<8x32xf32>, vector<64x32xf32> -> vector<64x32xf32>
    %51 = arith.addf %43, %50 : vector<64x32xf32>
    %c2_42 = arith.constant 2 : index
    %c0_43 = arith.constant 0 : index
    %c0_44 = arith.constant 0 : index
    %52 = vector.load %arg7[%c2_42, %c0_43, %c0_44] : memref<9x4x32xf32, #tpu.memory_space<vmem>>, vector<1x4x32xf32>
    %53 = vector.shape_cast %52 : vector<1x4x32xf32> to vector<4x32xf32>
    %cst_45 = arith.constant dense<0.000000e+00> : vector<64x32xf32>
    %54 = tpu.matmul %47, %53, %cst_45 {dimension_numbers = #tpu.dot_dimension_numbers<[1], [0], [0], [1], [0, 0, 1, 1], [], []>} : vector<64x4xf32>, vector<4x32xf32>, vector<64x32xf32> -> vector<64x32xf32>
    %55 = arith.addf %51, %54 : vector<64x32xf32>
    %56 = vector.extract_strided_slice %16 {offsets = [1, 0, 0], sizes = [8, 8, 8], strides = [1, 1, 1]} : vector<10x10x8xf32> to vector<8x8x8xf32>
    %57 = vector.shape_cast %56 : vector<8x8x8xf32> to vector<64x8xf32>
    %58 = vector.extract_strided_slice %18 {offsets = [1, 0, 0], sizes = [8, 8, 4], strides = [1, 1, 1]} : vector<10x10x4xf32> to vector<8x8x4xf32>
    %59 = vector.shape_cast %58 : vector<8x8x4xf32> to vector<64x4xf32>
    %c3 = arith.constant 3 : index
    %c0_46 = arith.constant 0 : index
    %c0_47 = arith.constant 0 : index
    %60 = vector.load %arg6[%c3, %c0_46, %c0_47] : memref<9x8x32xf32, #tpu.memory_space<vmem>>, vector<1x8x32xf32>
    %61 = vector.shape_cast %60 : vector<1x8x32xf32> to vector<8x32xf32>
    %cst_48 = arith.constant dense<0.000000e+00> : vector<64x32xf32>
    %62 = tpu.matmul %57, %61, %cst_48 {dimension_numbers = #tpu.dot_dimension_numbers<[1], [0], [0], [1], [0, 0, 1, 1], [], []>} : vector<64x8xf32>, vector<8x32xf32>, vector<64x32xf32> -> vector<64x32xf32>
    %63 = arith.addf %55, %62 : vector<64x32xf32>
    %c3_49 = arith.constant 3 : index
    %c0_50 = arith.constant 0 : index
    %c0_51 = arith.constant 0 : index
    %64 = vector.load %arg7[%c3_49, %c0_50, %c0_51] : memref<9x4x32xf32, #tpu.memory_space<vmem>>, vector<1x4x32xf32>
    %65 = vector.shape_cast %64 : vector<1x4x32xf32> to vector<4x32xf32>
    %cst_52 = arith.constant dense<0.000000e+00> : vector<64x32xf32>
    %66 = tpu.matmul %59, %65, %cst_52 {dimension_numbers = #tpu.dot_dimension_numbers<[1], [0], [0], [1], [0, 0, 1, 1], [], []>} : vector<64x4xf32>, vector<4x32xf32>, vector<64x32xf32> -> vector<64x32xf32>
    %67 = arith.addf %63, %66 : vector<64x32xf32>
    %68 = vector.extract_strided_slice %16 {offsets = [1, 1, 0], sizes = [8, 8, 8], strides = [1, 1, 1]} : vector<10x10x8xf32> to vector<8x8x8xf32>
    %69 = vector.shape_cast %68 : vector<8x8x8xf32> to vector<64x8xf32>
    %70 = vector.extract_strided_slice %18 {offsets = [1, 1, 0], sizes = [8, 8, 4], strides = [1, 1, 1]} : vector<10x10x4xf32> to vector<8x8x4xf32>
    %71 = vector.shape_cast %70 : vector<8x8x4xf32> to vector<64x4xf32>
    %c4 = arith.constant 4 : index
    %c0_53 = arith.constant 0 : index
    %c0_54 = arith.constant 0 : index
    %72 = vector.load %arg6[%c4, %c0_53, %c0_54] : memref<9x8x32xf32, #tpu.memory_space<vmem>>, vector<1x8x32xf32>
    %73 = vector.shape_cast %72 : vector<1x8x32xf32> to vector<8x32xf32>
    %cst_55 = arith.constant dense<0.000000e+00> : vector<64x32xf32>
    %74 = tpu.matmul %69, %73, %cst_55 {dimension_numbers = #tpu.dot_dimension_numbers<[1], [0], [0], [1], [0, 0, 1, 1], [], []>} : vector<64x8xf32>, vector<8x32xf32>, vector<64x32xf32> -> vector<64x32xf32>
    %75 = arith.addf %67, %74 : vector<64x32xf32>
    %c4_56 = arith.constant 4 : index
    %c0_57 = arith.constant 0 : index
    %c0_58 = arith.constant 0 : index
    %76 = vector.load %arg7[%c4_56, %c0_57, %c0_58] : memref<9x4x32xf32, #tpu.memory_space<vmem>>, vector<1x4x32xf32>
    %77 = vector.shape_cast %76 : vector<1x4x32xf32> to vector<4x32xf32>
    %cst_59 = arith.constant dense<0.000000e+00> : vector<64x32xf32>
    %78 = tpu.matmul %71, %77, %cst_59 {dimension_numbers = #tpu.dot_dimension_numbers<[1], [0], [0], [1], [0, 0, 1, 1], [], []>} : vector<64x4xf32>, vector<4x32xf32>, vector<64x32xf32> -> vector<64x32xf32>
    %79 = arith.addf %75, %78 : vector<64x32xf32>
    %80 = vector.extract_strided_slice %16 {offsets = [1, 2, 0], sizes = [8, 8, 8], strides = [1, 1, 1]} : vector<10x10x8xf32> to vector<8x8x8xf32>
    %81 = vector.shape_cast %80 : vector<8x8x8xf32> to vector<64x8xf32>
    %82 = vector.extract_strided_slice %18 {offsets = [1, 2, 0], sizes = [8, 8, 4], strides = [1, 1, 1]} : vector<10x10x4xf32> to vector<8x8x4xf32>
    %83 = vector.shape_cast %82 : vector<8x8x4xf32> to vector<64x4xf32>
    %c5 = arith.constant 5 : index
    %c0_60 = arith.constant 0 : index
    %c0_61 = arith.constant 0 : index
    %84 = vector.load %arg6[%c5, %c0_60, %c0_61] : memref<9x8x32xf32, #tpu.memory_space<vmem>>, vector<1x8x32xf32>
    %85 = vector.shape_cast %84 : vector<1x8x32xf32> to vector<8x32xf32>
    %cst_62 = arith.constant dense<0.000000e+00> : vector<64x32xf32>
    %86 = tpu.matmul %81, %85, %cst_62 {dimension_numbers = #tpu.dot_dimension_numbers<[1], [0], [0], [1], [0, 0, 1, 1], [], []>} : vector<64x8xf32>, vector<8x32xf32>, vector<64x32xf32> -> vector<64x32xf32>
    %87 = arith.addf %79, %86 : vector<64x32xf32>
    %c5_63 = arith.constant 5 : index
    %c0_64 = arith.constant 0 : index
    %c0_65 = arith.constant 0 : index
    %88 = vector.load %arg7[%c5_63, %c0_64, %c0_65] : memref<9x4x32xf32, #tpu.memory_space<vmem>>, vector<1x4x32xf32>
    %89 = vector.shape_cast %88 : vector<1x4x32xf32> to vector<4x32xf32>
    %cst_66 = arith.constant dense<0.000000e+00> : vector<64x32xf32>
    %90 = tpu.matmul %83, %89, %cst_66 {dimension_numbers = #tpu.dot_dimension_numbers<[1], [0], [0], [1], [0, 0, 1, 1], [], []>} : vector<64x4xf32>, vector<4x32xf32>, vector<64x32xf32> -> vector<64x32xf32>
    %91 = arith.addf %87, %90 : vector<64x32xf32>
    %92 = vector.extract_strided_slice %16 {offsets = [2, 0, 0], sizes = [8, 8, 8], strides = [1, 1, 1]} : vector<10x10x8xf32> to vector<8x8x8xf32>
    %93 = vector.shape_cast %92 : vector<8x8x8xf32> to vector<64x8xf32>
    %94 = vector.extract_strided_slice %18 {offsets = [2, 0, 0], sizes = [8, 8, 4], strides = [1, 1, 1]} : vector<10x10x4xf32> to vector<8x8x4xf32>
    %95 = vector.shape_cast %94 : vector<8x8x4xf32> to vector<64x4xf32>
    %c6 = arith.constant 6 : index
    %c0_67 = arith.constant 0 : index
    %c0_68 = arith.constant 0 : index
    %96 = vector.load %arg6[%c6, %c0_67, %c0_68] : memref<9x8x32xf32, #tpu.memory_space<vmem>>, vector<1x8x32xf32>
    %97 = vector.shape_cast %96 : vector<1x8x32xf32> to vector<8x32xf32>
    %cst_69 = arith.constant dense<0.000000e+00> : vector<64x32xf32>
    %98 = tpu.matmul %93, %97, %cst_69 {dimension_numbers = #tpu.dot_dimension_numbers<[1], [0], [0], [1], [0, 0, 1, 1], [], []>} : vector<64x8xf32>, vector<8x32xf32>, vector<64x32xf32> -> vector<64x32xf32>
    %99 = arith.addf %91, %98 : vector<64x32xf32>
    %c6_70 = arith.constant 6 : index
    %c0_71 = arith.constant 0 : index
    %c0_72 = arith.constant 0 : index
    %100 = vector.load %arg7[%c6_70, %c0_71, %c0_72] : memref<9x4x32xf32, #tpu.memory_space<vmem>>, vector<1x4x32xf32>
    %101 = vector.shape_cast %100 : vector<1x4x32xf32> to vector<4x32xf32>
    %cst_73 = arith.constant dense<0.000000e+00> : vector<64x32xf32>
    %102 = tpu.matmul %95, %101, %cst_73 {dimension_numbers = #tpu.dot_dimension_numbers<[1], [0], [0], [1], [0, 0, 1, 1], [], []>} : vector<64x4xf32>, vector<4x32xf32>, vector<64x32xf32> -> vector<64x32xf32>
    %103 = arith.addf %99, %102 : vector<64x32xf32>
    %104 = vector.extract_strided_slice %16 {offsets = [2, 1, 0], sizes = [8, 8, 8], strides = [1, 1, 1]} : vector<10x10x8xf32> to vector<8x8x8xf32>
    %105 = vector.shape_cast %104 : vector<8x8x8xf32> to vector<64x8xf32>
    %106 = vector.extract_strided_slice %18 {offsets = [2, 1, 0], sizes = [8, 8, 4], strides = [1, 1, 1]} : vector<10x10x4xf32> to vector<8x8x4xf32>
    %107 = vector.shape_cast %106 : vector<8x8x4xf32> to vector<64x4xf32>
    %c7 = arith.constant 7 : index
    %c0_74 = arith.constant 0 : index
    %c0_75 = arith.constant 0 : index
    %108 = vector.load %arg6[%c7, %c0_74, %c0_75] : memref<9x8x32xf32, #tpu.memory_space<vmem>>, vector<1x8x32xf32>
    %109 = vector.shape_cast %108 : vector<1x8x32xf32> to vector<8x32xf32>
    %cst_76 = arith.constant dense<0.000000e+00> : vector<64x32xf32>
    %110 = tpu.matmul %105, %109, %cst_76 {dimension_numbers = #tpu.dot_dimension_numbers<[1], [0], [0], [1], [0, 0, 1, 1], [], []>} : vector<64x8xf32>, vector<8x32xf32>, vector<64x32xf32> -> vector<64x32xf32>
    %111 = arith.addf %103, %110 : vector<64x32xf32>
    %c7_77 = arith.constant 7 : index
    %c0_78 = arith.constant 0 : index
    %c0_79 = arith.constant 0 : index
    %112 = vector.load %arg7[%c7_77, %c0_78, %c0_79] : memref<9x4x32xf32, #tpu.memory_space<vmem>>, vector<1x4x32xf32>
    %113 = vector.shape_cast %112 : vector<1x4x32xf32> to vector<4x32xf32>
    %cst_80 = arith.constant dense<0.000000e+00> : vector<64x32xf32>
    %114 = tpu.matmul %107, %113, %cst_80 {dimension_numbers = #tpu.dot_dimension_numbers<[1], [0], [0], [1], [0, 0, 1, 1], [], []>} : vector<64x4xf32>, vector<4x32xf32>, vector<64x32xf32> -> vector<64x32xf32>
    %115 = arith.addf %111, %114 : vector<64x32xf32>
    %116 = vector.extract_strided_slice %16 {offsets = [2, 2, 0], sizes = [8, 8, 8], strides = [1, 1, 1]} : vector<10x10x8xf32> to vector<8x8x8xf32>
    %117 = vector.shape_cast %116 : vector<8x8x8xf32> to vector<64x8xf32>
    %118 = vector.extract_strided_slice %18 {offsets = [2, 2, 0], sizes = [8, 8, 4], strides = [1, 1, 1]} : vector<10x10x4xf32> to vector<8x8x4xf32>
    %119 = vector.shape_cast %118 : vector<8x8x4xf32> to vector<64x4xf32>
    %c8 = arith.constant 8 : index
    %c0_81 = arith.constant 0 : index
    %c0_82 = arith.constant 0 : index
    %120 = vector.load %arg6[%c8, %c0_81, %c0_82] : memref<9x8x32xf32, #tpu.memory_space<vmem>>, vector<1x8x32xf32>
    %121 = vector.shape_cast %120 : vector<1x8x32xf32> to vector<8x32xf32>
    %cst_83 = arith.constant dense<0.000000e+00> : vector<64x32xf32>
    %122 = tpu.matmul %117, %121, %cst_83 {dimension_numbers = #tpu.dot_dimension_numbers<[1], [0], [0], [1], [0, 0, 1, 1], [], []>} : vector<64x8xf32>, vector<8x32xf32>, vector<64x32xf32> -> vector<64x32xf32>
    %123 = arith.addf %115, %122 : vector<64x32xf32>
    %c8_84 = arith.constant 8 : index
    %c0_85 = arith.constant 0 : index
    %c0_86 = arith.constant 0 : index
    %124 = vector.load %arg7[%c8_84, %c0_85, %c0_86] : memref<9x4x32xf32, #tpu.memory_space<vmem>>, vector<1x4x32xf32>
    %125 = vector.shape_cast %124 : vector<1x4x32xf32> to vector<4x32xf32>
    %cst_87 = arith.constant dense<0.000000e+00> : vector<64x32xf32>
    %126 = tpu.matmul %119, %125, %cst_87 {dimension_numbers = #tpu.dot_dimension_numbers<[1], [0], [0], [1], [0, 0, 1, 1], [], []>} : vector<64x4xf32>, vector<4x32xf32>, vector<64x32xf32> -> vector<64x32xf32>
    %127 = arith.addf %123, %126 : vector<64x32xf32>
    %c0_88 = arith.constant 0 : index
    %c0_89 = arith.constant 0 : index
    %128 = vector.load %arg8[%c0_88, %c0_89] : memref<1x32xf32, #tpu.memory_space<vmem>>, vector<1x32xf32>
    %129 = vector.broadcast %128 : vector<1x32xf32> to vector<64x32xf32>
    %130 = arith.addf %127, %129 : vector<64x32xf32>
    %cst_90 = arith.constant 0.000000e+00 : f32
    %131 = vector.broadcast %cst_90 : f32 to vector<64x32xf32>
    %132 = arith.cmpf ogt, %130, %131 : vector<64x32xf32>
    %cst_91 = arith.constant 0.000000e+00 : f32
    %133 = vector.broadcast %cst_91 : f32 to vector<64x32xf32>
    %134 = arith.minimumf %130, %133 : vector<64x32xf32>
    %135 = math.exp %134 : vector<64x32xf32>
    %cst_92 = arith.constant 1.000000e+00 : f32
    %136 = vector.broadcast %cst_92 : f32 to vector<64x32xf32>
    %137 = arith.subf %135, %136 : vector<64x32xf32>
    %138 = arith.select %132, %130, %137 : vector<64x32xi1>, vector<64x32xf32>
    %cst_93 = arith.constant 0.000000e+00 : f32
    %139 = vector.broadcast %cst_93 : f32 to vector<10x10x32xf32>
    %c0_94 = arith.constant 0 : index
    %c0_95 = arith.constant 0 : index
    %c0_96 = arith.constant 0 : index
    %140 = vector.load %arg15[%c0_94, %c0_95, %c0_96] : memref<10x10x32xf32, #tpu.memory_space<vmem>>, vector<10x10x32xf32>
    tpu.vector_store %arg15[%c0_94, %c0_95, %c0_96], %139 {strides = array<i32>} : memref<10x10x32xf32, #tpu.memory_space<vmem>>, vector<10x10x32xf32>,
    %141 = vector.shape_cast %138 : vector<64x32xf32> to vector<8x8x32xf32>
    %c1_97 = arith.constant 1 : index
    %c1_98 = arith.constant 1 : index
    %c0_99 = arith.constant 0 : index
    %142 = vector.load %arg15[%c1_97, %c1_98, %c0_99] : memref<10x10x32xf32, #tpu.memory_space<vmem>>, vector<8x8x32xf32>
    tpu.vector_store %arg15[%c1_97, %c1_98, %c0_99], %141 {strides = array<i32>} : memref<10x10x32xf32, #tpu.memory_space<vmem>>, vector<8x8x32xf32>,
    %c0_100 = arith.constant 0 : index
    %c0_101 = arith.constant 0 : index
    %c0_102 = arith.constant 0 : index
    %143 = vector.load %arg15[%c0_100, %c0_101, %c0_102] : memref<10x10x32xf32, #tpu.memory_space<vmem>>, vector<10x10x32xf32>
    %cst_103 = arith.constant 0.000000e+00 : f32
    %144 = vector.broadcast %cst_103 : f32 to vector<64x32xf32>
    %145 = vector.extract_strided_slice %143 {offsets = [0, 0, 0], sizes = [8, 8, 32], strides = [1, 1, 1]} : vector<10x10x32xf32> to vector<8x8x32xf32>
    %146 = vector.shape_cast %145 : vector<8x8x32xf32> to vector<64x32xf32>
    %c0_104 = arith.constant 0 : index
    %c0_105 = arith.constant 0 : index
    %c0_106 = arith.constant 0 : index
    %147 = vector.load %arg9[%c0_104, %c0_105, %c0_106] : memref<9x32x32xf32, #tpu.memory_space<vmem>>, vector<1x32x32xf32>
    %148 = vector.shape_cast %147 : vector<1x32x32xf32> to vector<32x32xf32>
    %cst_107 = arith.constant dense<0.000000e+00> : vector<64x32xf32>
    %149 = tpu.matmul %146, %148, %cst_107 {dimension_numbers = #tpu.dot_dimension_numbers<[1], [0], [0], [1], [0, 0, 1, 1], [], []>} : vector<64x32xf32>, vector<32x32xf32>, vector<64x32xf32> -> vector<64x32xf32>
    %150 = arith.addf %144, %149 : vector<64x32xf32>
    %151 = vector.extract_strided_slice %143 {offsets = [0, 1, 0], sizes = [8, 8, 32], strides = [1, 1, 1]} : vector<10x10x32xf32> to vector<8x8x32xf32>
    %152 = vector.shape_cast %151 : vector<8x8x32xf32> to vector<64x32xf32>
    %c1_108 = arith.constant 1 : index
    %c0_109 = arith.constant 0 : index
    %c0_110 = arith.constant 0 : index
    %153 = vector.load %arg9[%c1_108, %c0_109, %c0_110] : memref<9x32x32xf32, #tpu.memory_space<vmem>>, vector<1x32x32xf32>
    %154 = vector.shape_cast %153 : vector<1x32x32xf32> to vector<32x32xf32>
    %cst_111 = arith.constant dense<0.000000e+00> : vector<64x32xf32>
    %155 = tpu.matmul %152, %154, %cst_111 {dimension_numbers = #tpu.dot_dimension_numbers<[1], [0], [0], [1], [0, 0, 1, 1], [], []>} : vector<64x32xf32>, vector<32x32xf32>, vector<64x32xf32> -> vector<64x32xf32>
    %156 = arith.addf %150, %155 : vector<64x32xf32>
    %157 = vector.extract_strided_slice %143 {offsets = [0, 2, 0], sizes = [8, 8, 32], strides = [1, 1, 1]} : vector<10x10x32xf32> to vector<8x8x32xf32>
    %158 = vector.shape_cast %157 : vector<8x8x32xf32> to vector<64x32xf32>
    %c2_112 = arith.constant 2 : index
    %c0_113 = arith.constant 0 : index
    %c0_114 = arith.constant 0 : index
    %159 = vector.load %arg9[%c2_112, %c0_113, %c0_114] : memref<9x32x32xf32, #tpu.memory_space<vmem>>, vector<1x32x32xf32>
    %160 = vector.shape_cast %159 : vector<1x32x32xf32> to vector<32x32xf32>
    %cst_115 = arith.constant dense<0.000000e+00> : vector<64x32xf32>
    %161 = tpu.matmul %158, %160, %cst_115 {dimension_numbers = #tpu.dot_dimension_numbers<[1], [0], [0], [1], [0, 0, 1, 1], [], []>} : vector<64x32xf32>, vector<32x32xf32>, vector<64x32xf32> -> vector<64x32xf32>
    %162 = arith.addf %156, %161 : vector<64x32xf32>
    %163 = vector.extract_strided_slice %143 {offsets = [1, 0, 0], sizes = [8, 8, 32], strides = [1, 1, 1]} : vector<10x10x32xf32> to vector<8x8x32xf32>
    %164 = vector.shape_cast %163 : vector<8x8x32xf32> to vector<64x32xf32>
    %c3_116 = arith.constant 3 : index
    %c0_117 = arith.constant 0 : index
    %c0_118 = arith.constant 0 : index
    %165 = vector.load %arg9[%c3_116, %c0_117, %c0_118] : memref<9x32x32xf32, #tpu.memory_space<vmem>>, vector<1x32x32xf32>
    %166 = vector.shape_cast %165 : vector<1x32x32xf32> to vector<32x32xf32>
    %cst_119 = arith.constant dense<0.000000e+00> : vector<64x32xf32>
    %167 = tpu.matmul %164, %166, %cst_119 {dimension_numbers = #tpu.dot_dimension_numbers<[1], [0], [0], [1], [0, 0, 1, 1], [], []>} : vector<64x32xf32>, vector<32x32xf32>, vector<64x32xf32> -> vector<64x32xf32>
    %168 = arith.addf %162, %167 : vector<64x32xf32>
    %169 = vector.extract_strided_slice %143 {offsets = [1, 1, 0], sizes = [8, 8, 32], strides = [1, 1, 1]} : vector<10x10x32xf32> to vector<8x8x32xf32>
    %170 = vector.shape_cast %169 : vector<8x8x32xf32> to vector<64x32xf32>
    %c4_120 = arith.constant 4 : index
    %c0_121 = arith.constant 0 : index
    %c0_122 = arith.constant 0 : index
    %171 = vector.load %arg9[%c4_120, %c0_121, %c0_122] : memref<9x32x32xf32, #tpu.memory_space<vmem>>, vector<1x32x32xf32>
    %172 = vector.shape_cast %171 : vector<1x32x32xf32> to vector<32x32xf32>
    %cst_123 = arith.constant dense<0.000000e+00> : vector<64x32xf32>
    %173 = tpu.matmul %170, %172, %cst_123 {dimension_numbers = #tpu.dot_dimension_numbers<[1], [0], [0], [1], [0, 0, 1, 1], [], []>} : vector<64x32xf32>, vector<32x32xf32>, vector<64x32xf32> -> vector<64x32xf32>
    %174 = arith.addf %168, %173 : vector<64x32xf32>
    %175 = vector.extract_strided_slice %143 {offsets = [1, 2, 0], sizes = [8, 8, 32], strides = [1, 1, 1]} : vector<10x10x32xf32> to vector<8x8x32xf32>
    %176 = vector.shape_cast %175 : vector<8x8x32xf32> to vector<64x32xf32>
    %c5_124 = arith.constant 5 : index
    %c0_125 = arith.constant 0 : index
    %c0_126 = arith.constant 0 : index
    %177 = vector.load %arg9[%c5_124, %c0_125, %c0_126] : memref<9x32x32xf32, #tpu.memory_space<vmem>>, vector<1x32x32xf32>
    %178 = vector.shape_cast %177 : vector<1x32x32xf32> to vector<32x32xf32>
    %cst_127 = arith.constant dense<0.000000e+00> : vector<64x32xf32>
    %179 = tpu.matmul %176, %178, %cst_127 {dimension_numbers = #tpu.dot_dimension_numbers<[1], [0], [0], [1], [0, 0, 1, 1], [], []>} : vector<64x32xf32>, vector<32x32xf32>, vector<64x32xf32> -> vector<64x32xf32>
    %180 = arith.addf %174, %179 : vector<64x32xf32>
    %181 = vector.extract_strided_slice %143 {offsets = [2, 0, 0], sizes = [8, 8, 32], strides = [1, 1, 1]} : vector<10x10x32xf32> to vector<8x8x32xf32>
    %182 = vector.shape_cast %181 : vector<8x8x32xf32> to vector<64x32xf32>
    %c6_128 = arith.constant 6 : index
    %c0_129 = arith.constant 0 : index
    %c0_130 = arith.constant 0 : index
    %183 = vector.load %arg9[%c6_128, %c0_129, %c0_130] : memref<9x32x32xf32, #tpu.memory_space<vmem>>, vector<1x32x32xf32>
    %184 = vector.shape_cast %183 : vector<1x32x32xf32> to vector<32x32xf32>
    %cst_131 = arith.constant dense<0.000000e+00> : vector<64x32xf32>
    %185 = tpu.matmul %182, %184, %cst_131 {dimension_numbers = #tpu.dot_dimension_numbers<[1], [0], [0], [1], [0, 0, 1, 1], [], []>} : vector<64x32xf32>, vector<32x32xf32>, vector<64x32xf32> -> vector<64x32xf32>
    %186 = arith.addf %180, %185 : vector<64x32xf32>
    %187 = vector.extract_strided_slice %143 {offsets = [2, 1, 0], sizes = [8, 8, 32], strides = [1, 1, 1]} : vector<10x10x32xf32> to vector<8x8x32xf32>
    %188 = vector.shape_cast %187 : vector<8x8x32xf32> to vector<64x32xf32>
    %c7_132 = arith.constant 7 : index
    %c0_133 = arith.constant 0 : index
    %c0_134 = arith.constant 0 : index
    %189 = vector.load %arg9[%c7_132, %c0_133, %c0_134] : memref<9x32x32xf32, #tpu.memory_space<vmem>>, vector<1x32x32xf32>
    %190 = vector.shape_cast %189 : vector<1x32x32xf32> to vector<32x32xf32>
    %cst_135 = arith.constant dense<0.000000e+00> : vector<64x32xf32>
    %191 = tpu.matmul %188, %190, %cst_135 {dimension_numbers = #tpu.dot_dimension_numbers<[1], [0], [0], [1], [0, 0, 1, 1], [], []>} : vector<64x32xf32>, vector<32x32xf32>, vector<64x32xf32> -> vector<64x32xf32>
    %192 = arith.addf %186, %191 : vector<64x32xf32>
    %193 = vector.extract_strided_slice %143 {offsets = [2, 2, 0], sizes = [8, 8, 32], strides = [1, 1, 1]} : vector<10x10x32xf32> to vector<8x8x32xf32>
    %194 = vector.shape_cast %193 : vector<8x8x32xf32> to vector<64x32xf32>
    %c8_136 = arith.constant 8 : index
    %c0_137 = arith.constant 0 : index
    %c0_138 = arith.constant 0 : index
    %195 = vector.load %arg9[%c8_136, %c0_137, %c0_138] : memref<9x32x32xf32, #tpu.memory_space<vmem>>, vector<1x32x32xf32>
    %196 = vector.shape_cast %195 : vector<1x32x32xf32> to vector<32x32xf32>
    %cst_139 = arith.constant dense<0.000000e+00> : vector<64x32xf32>
    %197 = tpu.matmul %194, %196, %cst_139 {dimension_numbers = #tpu.dot_dimension_numbers<[1], [0], [0], [1], [0, 0, 1, 1], [], []>} : vector<64x32xf32>, vector<32x32xf32>, vector<64x32xf32> -> vector<64x32xf32>
    %198 = arith.addf %192, %197 : vector<64x32xf32>
    %c0_140 = arith.constant 0 : index
    %c0_141 = arith.constant 0 : index
    %199 = vector.load %arg10[%c0_140, %c0_141] : memref<1x32xf32, #tpu.memory_space<vmem>>, vector<1x32xf32>
    %200 = vector.broadcast %199 : vector<1x32xf32> to vector<64x32xf32>
    %201 = arith.addf %198, %200 : vector<64x32xf32>
    %202 = vector.extract_strided_slice %201 {offsets = [0, 0], sizes = [64, 16], strides = [1, 1]} : vector<64x32xf32> to vector<64x16xf32>
    %203 = vector.extract_strided_slice %201 {offsets = [0, 16], sizes = [64, 16], strides = [1, 1]} : vector<64x32xf32> to vector<64x16xf32>
    %c0_142 = arith.constant 0 : index
    %c0_143 = arith.constant 0 : index
    %204 = vector.load %arg11[%c0_142, %c0_143] : memref<1x16xf32, #tpu.memory_space<vmem>>, vector<1x16xf32>
    %cst_144 = arith.constant 2.000000e+00 : f32
    %205 = vector.broadcast %cst_144 : f32 to vector<64x16xf32>
    %206 = arith.addf %202, %205 : vector<64x16xf32>
    %cst_145 = arith.constant 0.000000e+00 : f32
    %207 = vector.broadcast %cst_145 : f32 to vector<64x16xf32>
    %208 = arith.subf %207, %206 : vector<64x16xf32>
    %cst_146 = arith.constant 0.000000e+00 : f32
    %209 = vector.broadcast %cst_146 : f32 to vector<64x16xf32>
    %210 = arith.maximumf %208, %209 : vector<64x16xf32>
    %211 = vector.broadcast %cst_146 : f32 to vector<64x16xf32>
    %212 = arith.subf %208, %211 : vector<64x16xf32>
    %213 = arith.cmpf one, %212, %212 : vector<64x16xf32>
    %214 = vector.broadcast %cst_146 : f32 to vector<64x16xf32>
    %215 = arith.addf %208, %214 : vector<64x16xf32>
    %216 = math.absf %212 : vector<64x16xf32>
    %cst_147 = arith.constant 0.000000e+00 : f32
    %217 = vector.broadcast %cst_147 : f32 to vector<64x16xf32>
    %218 = arith.subf %217, %216 : vector<64x16xf32>
    %219 = math.exp %218 : vector<64x16xf32>
    %220 = math.log1p %219 : vector<64x16xf32>
    %221 = arith.addf %210, %220 : vector<64x16xf32>
    %222 = arith.select %213, %215, %221 : vector<64x16xi1>, vector<64x16xf32>
    %cst_148 = arith.constant 0.000000e+00 : f32
    %223 = vector.broadcast %cst_148 : f32 to vector<64x16xf32>
    %224 = arith.subf %223, %222 : vector<64x16xf32>
    %225 = vector.broadcast %204 : vector<1x16xf32> to vector<64x16xf32>
    %226 = arith.mulf %225, %224 : vector<64x16xf32>
    %227 = math.exp %226 : vector<64x16xf32>
    %228 = arith.mulf %10, %227 : vector<64x16xf32>
    %229 = arith.addf %228, %203 : vector<64x16xf32>
    %230 = vector.shape_cast %229 : vector<64x16xf32> to vector<1x8x8x16xf32>
    %c0_149 = arith.constant 0 : index
    %c0_150 = arith.constant 0 : index
    %c0_151 = arith.constant 0 : index
    %c0_152 = arith.constant 0 : index
    %231 = vector.load %arg12[%c0_149, %c0_150, %c0_151, %c0_152] : memref<1x8x8x16xf32, #tpu.memory_space<vmem>>, vector<1x8x8x16xf32>
    tpu.vector_store %arg12[%c0_149, %c0_150, %c0_151, %c0_152], %230 {strides = array<i32>} : memref<1x8x8x16xf32, #tpu.memory_space<vmem>>, vector<1x8x8x16xf32>,
    %232 = vector.shape_cast %226 : vector<64x16xf32> to vector<1x64x16xf32>
    %cst_153 = arith.constant dense<0.000000e+00> : vector<1xf32>
    %233 = vector.multi_reduction <add>, %232, %cst_153 [1, 2] : vector<1x64x16xf32> to vector<1xf32>
    %234 = vector.shape_cast %233 : vector<1xf32> to vector<1x1x1xf32>
    %235 = vector.extract %234[0, 0, 0] : f32 from vector<1x1x1xf32>
    %236 = vector.broadcast %235 : f32 to vector<1x1x1xf32>
    %c0_154 = arith.constant 0 : index
    %c0_155 = arith.constant 0 : index
    %c0_156 = arith.constant 0 : index
    %237 = vector.load %arg13[%c0_154, %c0_155, %c0_156] : memref<1x1x1xf32, #tpu.memory_space<vmem>>, vector<1x1x1xf32>
    tpu.vector_store %arg13[%c0_154, %c0_155, %c0_156], %236 {strides = array<i32>} : memref<1x1x1xf32, #tpu.memory_space<vmem>>, vector<1x1x1xf32>,
    return
  }
  func.func @transform_0(%arg0: i32) -> (i32, i32, i32, i32) {
    %c0_i32 = arith.constant 0 : i32
    %c0_i32_0 = arith.constant 0 : i32
    %c0_i32_1 = arith.constant 0 : i32
    %c0_i32_2 = arith.constant 0 : i32
    return %arg0, %c0_i32, %c0_i32_0, %c0_i32_1 : i32, i32, i32, i32
  }
  func.func @transform_1(%arg0: i32) -> (i32, i32, i32, i32) {
    %c0_i32 = arith.constant 0 : i32
    %c0_i32_0 = arith.constant 0 : i32
    %c0_i32_1 = arith.constant 0 : i32
    %c0_i32_2 = arith.constant 0 : i32
    return %arg0, %c0_i32, %c0_i32_0, %c0_i32_1 : i32, i32, i32, i32
  }
  func.func @transform_2(%arg0: i32) -> (i32, i32) {
    %c0_i32 = arith.constant 0 : i32
    %c0_i32_0 = arith.constant 0 : i32
    %c0_i32_1 = arith.constant 0 : i32
    return %c0_i32, %c0_i32_0 : i32, i32
  }
  func.func @transform_3(%arg0: i32) -> (i32, i32) {
    %c0_i32 = arith.constant 0 : i32
    %c0_i32_0 = arith.constant 0 : i32
    %c0_i32_1 = arith.constant 0 : i32
    return %c0_i32, %c0_i32_0 : i32, i32
  }
  func.func @transform_4(%arg0: i32) -> (i32, i32) {
    %c0_i32 = arith.constant 0 : i32
    %c0_i32_0 = arith.constant 0 : i32
    %c0_i32_1 = arith.constant 0 : i32
    return %c0_i32, %c0_i32_0 : i32, i32
  }
  func.func @transform_5(%arg0: i32) -> (i32, i32, i32) {
    %c0_i32 = arith.constant 0 : i32
    %c0_i32_0 = arith.constant 0 : i32
    %c0_i32_1 = arith.constant 0 : i32
    %c0_i32_2 = arith.constant 0 : i32
    return %c0_i32, %c0_i32_0, %c0_i32_1 : i32, i32, i32
  }
  func.func @transform_6(%arg0: i32) -> (i32, i32, i32) {
    %c0_i32 = arith.constant 0 : i32
    %c0_i32_0 = arith.constant 0 : i32
    %c0_i32_1 = arith.constant 0 : i32
    %c0_i32_2 = arith.constant 0 : i32
    return %c0_i32, %c0_i32_0, %c0_i32_1 : i32, i32, i32
  }
  func.func @transform_7(%arg0: i32) -> (i32, i32) {
    %c0_i32 = arith.constant 0 : i32
    %c0_i32_0 = arith.constant 0 : i32
    %c0_i32_1 = arith.constant 0 : i32
    return %c0_i32, %c0_i32_0 : i32, i32
  }
  func.func @transform_8(%arg0: i32) -> (i32, i32, i32) {
    %c0_i32 = arith.constant 0 : i32
    %c0_i32_0 = arith.constant 0 : i32
    %c0_i32_1 = arith.constant 0 : i32
    %c0_i32_2 = arith.constant 0 : i32
    return %c0_i32, %c0_i32_0, %c0_i32_1 : i32, i32, i32
  }
  func.func @transform_9(%arg0: i32) -> (i32, i32) {
    %c0_i32 = arith.constant 0 : i32
    %c0_i32_0 = arith.constant 0 : i32
    %c0_i32_1 = arith.constant 0 : i32
    return %c0_i32, %c0_i32_0 : i32, i32
  }
  func.func @transform_10(%arg0: i32) -> (i32, i32) {
    %c0_i32 = arith.constant 0 : i32
    %c0_i32_0 = arith.constant 0 : i32
    %c0_i32_1 = arith.constant 0 : i32
    return %c0_i32, %c0_i32_0 : i32, i32
  }
  func.func @transform_11(%arg0: i32) -> (i32, i32, i32, i32) {
    %c0_i32 = arith.constant 0 : i32
    %c0_i32_0 = arith.constant 0 : i32
    %c0_i32_1 = arith.constant 0 : i32
    %c0_i32_2 = arith.constant 0 : i32
    return %arg0, %c0_i32, %c0_i32_0, %c0_i32_1 : i32, i32, i32, i32
  }
  func.func @transform_12(%arg0: i32) -> (i32, i32, i32) {
    %c0_i32 = arith.constant 0 : i32
    %c0_i32_0 = arith.constant 0 : i32
    %c0_i32_1 = arith.constant 0 : i32
    return %arg0, %c0_i32, %c0_i32_0 : i32, i32, i32
  }
}

module attributes {stable_mosaic.version = 11 : i64} {
  func.func @_macow_step_kernel(%arg0: i32, %arg1: memref<1x4x4x32xf32, #tpu.memory_space<vmem>>, %arg2: memref<1x6x6x4xf32, #tpu.memory_space<vmem>>, %arg3: memref<1x32xf32, #tpu.memory_space<vmem>>, %arg4: memref<1x32xf32, #tpu.memory_space<vmem>>, %arg5: memref<32x32xf32, #tpu.memory_space<vmem>>, %arg6: memref<9x16x32xf32, #tpu.memory_space<vmem>>, %arg7: memref<9x4x32xf32, #tpu.memory_space<vmem>>, %arg8: memref<1x32xf32, #tpu.memory_space<vmem>>, %arg9: memref<9x32x64xf32, #tpu.memory_space<vmem>>, %arg10: memref<1x64xf32, #tpu.memory_space<vmem>>, %arg11: memref<1x32xf32, #tpu.memory_space<vmem>>, %arg12: memref<1x4x4x32xf32, #tpu.memory_space<vmem>>, %arg13: memref<1x1x1xf32, #tpu.memory_space<vmem>>, %arg14: memref<6x6x16xf32, #tpu.memory_space<vmem>>, %arg15: memref<6x6x32xf32, #tpu.memory_space<vmem>>) attributes {dimension_semantics = [#tpu.dimension_semantics<parallel>], iteration_bounds = array<i64: 2>, scalar_prefetch = 0 : i64, scratch_operands = 2 : i64, tpu.core_type = #tpu.core_type<tc>, window_params = [{transform_indices = @transform_0, window_bounds = array<i64: 1, 4, 4, 32>}, {transform_indices = @transform_1, window_bounds = array<i64: 1, 6, 6, 4>}, {pipeline_mode = #tpu.pipeline_mode<synchronous>, transform_indices = @transform_2, window_bounds = array<i64: 1, 32>}, {pipeline_mode = #tpu.pipeline_mode<synchronous>, transform_indices = @transform_3, window_bounds = array<i64: 1, 32>}, {pipeline_mode = #tpu.pipeline_mode<synchronous>, transform_indices = @transform_4, window_bounds = array<i64: 32, 32>}, {pipeline_mode = #tpu.pipeline_mode<synchronous>, transform_indices = @transform_5, window_bounds = array<i64: 9, 16, 32>}, {pipeline_mode = #tpu.pipeline_mode<synchronous>, transform_indices = @transform_6, window_bounds = array<i64: 9, 4, 32>}, {pipeline_mode = #tpu.pipeline_mode<synchronous>, transform_indices = @transform_7, window_bounds = array<i64: 1, 32>}, {pipeline_mode = #tpu.pipeline_mode<synchronous>, transform_indices = @transform_8, window_bounds = array<i64: 9, 32, 64>}, {pipeline_mode = #tpu.pipeline_mode<synchronous>, transform_indices = @transform_9, window_bounds = array<i64: 1, 64>}, {pipeline_mode = #tpu.pipeline_mode<synchronous>, transform_indices = @transform_10, window_bounds = array<i64: 1, 32>}, {transform_indices = @transform_11, window_bounds = array<i64: 1, 4, 4, 32>}, {transform_indices = @transform_12, window_bounds = array<i64: 1, 1, 1>}]} {
    %c0 = arith.constant 0 : index
    %c0_0 = arith.constant 0 : index
    %c0_1 = arith.constant 0 : index
    %c0_2 = arith.constant 0 : index
    %0 = vector.load %arg1[%c0, %c0_0, %c0_1, %c0_2] : memref<1x4x4x32xf32, #tpu.memory_space<vmem>>, vector<1x4x4x32xf32>
    %1 = vector.shape_cast %0 : vector<1x4x4x32xf32> to vector<4x4x32xf32>
    %2 = vector.shape_cast %1 : vector<4x4x32xf32> to vector<16x32xf32>
    %c0_3 = arith.constant 0 : index
    %c0_4 = arith.constant 0 : index
    %3 = vector.load %arg3[%c0_3, %c0_4] : memref<1x32xf32, #tpu.memory_space<vmem>>, vector<1x32xf32>
    %4 = vector.broadcast %3 : vector<1x32xf32> to vector<16x32xf32>
    %5 = arith.addf %2, %4 : vector<16x32xf32>
    %c0_5 = arith.constant 0 : index
    %c0_6 = arith.constant 0 : index
    %6 = vector.load %arg4[%c0_5, %c0_6] : memref<1x32xf32, #tpu.memory_space<vmem>>, vector<1x32xf32>
    %7 = vector.broadcast %6 : vector<1x32xf32> to vector<16x32xf32>
    %8 = arith.mulf %5, %7 : vector<16x32xf32>
    %c0_7 = arith.constant 0 : index
    %c0_8 = arith.constant 0 : index
    %9 = vector.load %arg5[%c0_7, %c0_8] : memref<32x32xf32, #tpu.memory_space<vmem>>, vector<32x32xf32>
    %cst = arith.constant dense<0.000000e+00> : vector<16x32xf32>
    %10 = tpu.matmul %8, %9, %cst {dimension_numbers = #tpu.dot_dimension_numbers<[1], [0], [0], [1], [0, 0, 1, 1], [], []>} : vector<16x32xf32>, vector<32x32xf32>, vector<16x32xf32> -> vector<16x32xf32>
    %11 = vector.extract_strided_slice %10 {offsets = [0, 0], sizes = [16, 16], strides = [1, 1]} : vector<16x32xf32> to vector<16x16xf32>
    %cst_9 = arith.constant 0.000000e+00 : f32
    %12 = vector.broadcast %cst_9 : f32 to vector<6x6x16xf32>
    %c0_10 = arith.constant 0 : index
    %c0_11 = arith.constant 0 : index
    %c0_12 = arith.constant 0 : index
    %13 = vector.load %arg14[%c0_10, %c0_11, %c0_12] : memref<6x6x16xf32, #tpu.memory_space<vmem>>, vector<6x6x16xf32>
    tpu.vector_store %arg14[%c0_10, %c0_11, %c0_12], %12 {strides = array<i32>} : memref<6x6x16xf32, #tpu.memory_space<vmem>>, vector<6x6x16xf32>,
    %14 = vector.shape_cast %11 : vector<16x16xf32> to vector<4x4x16xf32>
    %c1 = arith.constant 1 : index
    %c1_13 = arith.constant 1 : index
    %c0_14 = arith.constant 0 : index
    %15 = vector.load %arg14[%c1, %c1_13, %c0_14] : memref<6x6x16xf32, #tpu.memory_space<vmem>>, vector<4x4x16xf32>
    tpu.vector_store %arg14[%c1, %c1_13, %c0_14], %14 {strides = array<i32>} : memref<6x6x16xf32, #tpu.memory_space<vmem>>, vector<4x4x16xf32>,
    %c0_15 = arith.constant 0 : index
    %c0_16 = arith.constant 0 : index
    %c0_17 = arith.constant 0 : index
    %16 = vector.load %arg14[%c0_15, %c0_16, %c0_17] : memref<6x6x16xf32, #tpu.memory_space<vmem>>, vector<6x6x16xf32>
    %c0_18 = arith.constant 0 : index
    %c0_19 = arith.constant 0 : index
    %c0_20 = arith.constant 0 : index
    %c0_21 = arith.constant 0 : index
    %17 = vector.load %arg2[%c0_18, %c0_19, %c0_20, %c0_21] : memref<1x6x6x4xf32, #tpu.memory_space<vmem>>, vector<1x6x6x4xf32>
    %18 = vector.shape_cast %17 : vector<1x6x6x4xf32> to vector<6x6x4xf32>
    %cst_22 = arith.constant 0.000000e+00 : f32
    %19 = vector.broadcast %cst_22 : f32 to vector<16x32xf32>
    %20 = vector.extract_strided_slice %16 {offsets = [0, 0, 0], sizes = [4, 4, 16], strides = [1, 1, 1]} : vector<6x6x16xf32> to vector<4x4x16xf32>
    %21 = vector.shape_cast %20 : vector<4x4x16xf32> to vector<16x16xf32>
    %22 = vector.extract_strided_slice %18 {offsets = [0, 0, 0], sizes = [4, 4, 4], strides = [1, 1, 1]} : vector<6x6x4xf32> to vector<4x4x4xf32>
    %23 = vector.shape_cast %22 : vector<4x4x4xf32> to vector<16x4xf32>
    %c0_23 = arith.constant 0 : index
    %c0_24 = arith.constant 0 : index
    %c0_25 = arith.constant 0 : index
    %24 = vector.load %arg6[%c0_23, %c0_24, %c0_25] : memref<9x16x32xf32, #tpu.memory_space<vmem>>, vector<1x16x32xf32>
    %25 = vector.shape_cast %24 : vector<1x16x32xf32> to vector<16x32xf32>
    %cst_26 = arith.constant dense<0.000000e+00> : vector<16x32xf32>
    %26 = tpu.matmul %21, %25, %cst_26 {dimension_numbers = #tpu.dot_dimension_numbers<[1], [0], [0], [1], [0, 0, 1, 1], [], []>} : vector<16x16xf32>, vector<16x32xf32>, vector<16x32xf32> -> vector<16x32xf32>
    %27 = arith.addf %19, %26 : vector<16x32xf32>
    %c0_27 = arith.constant 0 : index
    %c0_28 = arith.constant 0 : index
    %c0_29 = arith.constant 0 : index
    %28 = vector.load %arg7[%c0_27, %c0_28, %c0_29] : memref<9x4x32xf32, #tpu.memory_space<vmem>>, vector<1x4x32xf32>
    %29 = vector.shape_cast %28 : vector<1x4x32xf32> to vector<4x32xf32>
    %cst_30 = arith.constant dense<0.000000e+00> : vector<16x32xf32>
    %30 = tpu.matmul %23, %29, %cst_30 {dimension_numbers = #tpu.dot_dimension_numbers<[1], [0], [0], [1], [0, 0, 1, 1], [], []>} : vector<16x4xf32>, vector<4x32xf32>, vector<16x32xf32> -> vector<16x32xf32>
    %31 = arith.addf %27, %30 : vector<16x32xf32>
    %32 = vector.extract_strided_slice %16 {offsets = [0, 1, 0], sizes = [4, 4, 16], strides = [1, 1, 1]} : vector<6x6x16xf32> to vector<4x4x16xf32>
    %33 = vector.shape_cast %32 : vector<4x4x16xf32> to vector<16x16xf32>
    %34 = vector.extract_strided_slice %18 {offsets = [0, 1, 0], sizes = [4, 4, 4], strides = [1, 1, 1]} : vector<6x6x4xf32> to vector<4x4x4xf32>
    %35 = vector.shape_cast %34 : vector<4x4x4xf32> to vector<16x4xf32>
    %c1_31 = arith.constant 1 : index
    %c0_32 = arith.constant 0 : index
    %c0_33 = arith.constant 0 : index
    %36 = vector.load %arg6[%c1_31, %c0_32, %c0_33] : memref<9x16x32xf32, #tpu.memory_space<vmem>>, vector<1x16x32xf32>
    %37 = vector.shape_cast %36 : vector<1x16x32xf32> to vector<16x32xf32>
    %cst_34 = arith.constant dense<0.000000e+00> : vector<16x32xf32>
    %38 = tpu.matmul %33, %37, %cst_34 {dimension_numbers = #tpu.dot_dimension_numbers<[1], [0], [0], [1], [0, 0, 1, 1], [], []>} : vector<16x16xf32>, vector<16x32xf32>, vector<16x32xf32> -> vector<16x32xf32>
    %39 = arith.addf %31, %38 : vector<16x32xf32>
    %c1_35 = arith.constant 1 : index
    %c0_36 = arith.constant 0 : index
    %c0_37 = arith.constant 0 : index
    %40 = vector.load %arg7[%c1_35, %c0_36, %c0_37] : memref<9x4x32xf32, #tpu.memory_space<vmem>>, vector<1x4x32xf32>
    %41 = vector.shape_cast %40 : vector<1x4x32xf32> to vector<4x32xf32>
    %cst_38 = arith.constant dense<0.000000e+00> : vector<16x32xf32>
    %42 = tpu.matmul %35, %41, %cst_38 {dimension_numbers = #tpu.dot_dimension_numbers<[1], [0], [0], [1], [0, 0, 1, 1], [], []>} : vector<16x4xf32>, vector<4x32xf32>, vector<16x32xf32> -> vector<16x32xf32>
    %43 = arith.addf %39, %42 : vector<16x32xf32>
    %44 = vector.extract_strided_slice %16 {offsets = [0, 2, 0], sizes = [4, 4, 16], strides = [1, 1, 1]} : vector<6x6x16xf32> to vector<4x4x16xf32>
    %45 = vector.shape_cast %44 : vector<4x4x16xf32> to vector<16x16xf32>
    %46 = vector.extract_strided_slice %18 {offsets = [0, 2, 0], sizes = [4, 4, 4], strides = [1, 1, 1]} : vector<6x6x4xf32> to vector<4x4x4xf32>
    %47 = vector.shape_cast %46 : vector<4x4x4xf32> to vector<16x4xf32>
    %c2 = arith.constant 2 : index
    %c0_39 = arith.constant 0 : index
    %c0_40 = arith.constant 0 : index
    %48 = vector.load %arg6[%c2, %c0_39, %c0_40] : memref<9x16x32xf32, #tpu.memory_space<vmem>>, vector<1x16x32xf32>
    %49 = vector.shape_cast %48 : vector<1x16x32xf32> to vector<16x32xf32>
    %cst_41 = arith.constant dense<0.000000e+00> : vector<16x32xf32>
    %50 = tpu.matmul %45, %49, %cst_41 {dimension_numbers = #tpu.dot_dimension_numbers<[1], [0], [0], [1], [0, 0, 1, 1], [], []>} : vector<16x16xf32>, vector<16x32xf32>, vector<16x32xf32> -> vector<16x32xf32>
    %51 = arith.addf %43, %50 : vector<16x32xf32>
    %c2_42 = arith.constant 2 : index
    %c0_43 = arith.constant 0 : index
    %c0_44 = arith.constant 0 : index
    %52 = vector.load %arg7[%c2_42, %c0_43, %c0_44] : memref<9x4x32xf32, #tpu.memory_space<vmem>>, vector<1x4x32xf32>
    %53 = vector.shape_cast %52 : vector<1x4x32xf32> to vector<4x32xf32>
    %cst_45 = arith.constant dense<0.000000e+00> : vector<16x32xf32>
    %54 = tpu.matmul %47, %53, %cst_45 {dimension_numbers = #tpu.dot_dimension_numbers<[1], [0], [0], [1], [0, 0, 1, 1], [], []>} : vector<16x4xf32>, vector<4x32xf32>, vector<16x32xf32> -> vector<16x32xf32>
    %55 = arith.addf %51, %54 : vector<16x32xf32>
    %56 = vector.extract_strided_slice %16 {offsets = [1, 0, 0], sizes = [4, 4, 16], strides = [1, 1, 1]} : vector<6x6x16xf32> to vector<4x4x16xf32>
    %57 = vector.shape_cast %56 : vector<4x4x16xf32> to vector<16x16xf32>
    %58 = vector.extract_strided_slice %18 {offsets = [1, 0, 0], sizes = [4, 4, 4], strides = [1, 1, 1]} : vector<6x6x4xf32> to vector<4x4x4xf32>
    %59 = vector.shape_cast %58 : vector<4x4x4xf32> to vector<16x4xf32>
    %c3 = arith.constant 3 : index
    %c0_46 = arith.constant 0 : index
    %c0_47 = arith.constant 0 : index
    %60 = vector.load %arg6[%c3, %c0_46, %c0_47] : memref<9x16x32xf32, #tpu.memory_space<vmem>>, vector<1x16x32xf32>
    %61 = vector.shape_cast %60 : vector<1x16x32xf32> to vector<16x32xf32>
    %cst_48 = arith.constant dense<0.000000e+00> : vector<16x32xf32>
    %62 = tpu.matmul %57, %61, %cst_48 {dimension_numbers = #tpu.dot_dimension_numbers<[1], [0], [0], [1], [0, 0, 1, 1], [], []>} : vector<16x16xf32>, vector<16x32xf32>, vector<16x32xf32> -> vector<16x32xf32>
    %63 = arith.addf %55, %62 : vector<16x32xf32>
    %c3_49 = arith.constant 3 : index
    %c0_50 = arith.constant 0 : index
    %c0_51 = arith.constant 0 : index
    %64 = vector.load %arg7[%c3_49, %c0_50, %c0_51] : memref<9x4x32xf32, #tpu.memory_space<vmem>>, vector<1x4x32xf32>
    %65 = vector.shape_cast %64 : vector<1x4x32xf32> to vector<4x32xf32>
    %cst_52 = arith.constant dense<0.000000e+00> : vector<16x32xf32>
    %66 = tpu.matmul %59, %65, %cst_52 {dimension_numbers = #tpu.dot_dimension_numbers<[1], [0], [0], [1], [0, 0, 1, 1], [], []>} : vector<16x4xf32>, vector<4x32xf32>, vector<16x32xf32> -> vector<16x32xf32>
    %67 = arith.addf %63, %66 : vector<16x32xf32>
    %68 = vector.extract_strided_slice %16 {offsets = [1, 1, 0], sizes = [4, 4, 16], strides = [1, 1, 1]} : vector<6x6x16xf32> to vector<4x4x16xf32>
    %69 = vector.shape_cast %68 : vector<4x4x16xf32> to vector<16x16xf32>
    %70 = vector.extract_strided_slice %18 {offsets = [1, 1, 0], sizes = [4, 4, 4], strides = [1, 1, 1]} : vector<6x6x4xf32> to vector<4x4x4xf32>
    %71 = vector.shape_cast %70 : vector<4x4x4xf32> to vector<16x4xf32>
    %c4 = arith.constant 4 : index
    %c0_53 = arith.constant 0 : index
    %c0_54 = arith.constant 0 : index
    %72 = vector.load %arg6[%c4, %c0_53, %c0_54] : memref<9x16x32xf32, #tpu.memory_space<vmem>>, vector<1x16x32xf32>
    %73 = vector.shape_cast %72 : vector<1x16x32xf32> to vector<16x32xf32>
    %cst_55 = arith.constant dense<0.000000e+00> : vector<16x32xf32>
    %74 = tpu.matmul %69, %73, %cst_55 {dimension_numbers = #tpu.dot_dimension_numbers<[1], [0], [0], [1], [0, 0, 1, 1], [], []>} : vector<16x16xf32>, vector<16x32xf32>, vector<16x32xf32> -> vector<16x32xf32>
    %75 = arith.addf %67, %74 : vector<16x32xf32>
    %c4_56 = arith.constant 4 : index
    %c0_57 = arith.constant 0 : index
    %c0_58 = arith.constant 0 : index
    %76 = vector.load %arg7[%c4_56, %c0_57, %c0_58] : memref<9x4x32xf32, #tpu.memory_space<vmem>>, vector<1x4x32xf32>
    %77 = vector.shape_cast %76 : vector<1x4x32xf32> to vector<4x32xf32>
    %cst_59 = arith.constant dense<0.000000e+00> : vector<16x32xf32>
    %78 = tpu.matmul %71, %77, %cst_59 {dimension_numbers = #tpu.dot_dimension_numbers<[1], [0], [0], [1], [0, 0, 1, 1], [], []>} : vector<16x4xf32>, vector<4x32xf32>, vector<16x32xf32> -> vector<16x32xf32>
    %79 = arith.addf %75, %78 : vector<16x32xf32>
    %80 = vector.extract_strided_slice %16 {offsets = [1, 2, 0], sizes = [4, 4, 16], strides = [1, 1, 1]} : vector<6x6x16xf32> to vector<4x4x16xf32>
    %81 = vector.shape_cast %80 : vector<4x4x16xf32> to vector<16x16xf32>
    %82 = vector.extract_strided_slice %18 {offsets = [1, 2, 0], sizes = [4, 4, 4], strides = [1, 1, 1]} : vector<6x6x4xf32> to vector<4x4x4xf32>
    %83 = vector.shape_cast %82 : vector<4x4x4xf32> to vector<16x4xf32>
    %c5 = arith.constant 5 : index
    %c0_60 = arith.constant 0 : index
    %c0_61 = arith.constant 0 : index
    %84 = vector.load %arg6[%c5, %c0_60, %c0_61] : memref<9x16x32xf32, #tpu.memory_space<vmem>>, vector<1x16x32xf32>
    %85 = vector.shape_cast %84 : vector<1x16x32xf32> to vector<16x32xf32>
    %cst_62 = arith.constant dense<0.000000e+00> : vector<16x32xf32>
    %86 = tpu.matmul %81, %85, %cst_62 {dimension_numbers = #tpu.dot_dimension_numbers<[1], [0], [0], [1], [0, 0, 1, 1], [], []>} : vector<16x16xf32>, vector<16x32xf32>, vector<16x32xf32> -> vector<16x32xf32>
    %87 = arith.addf %79, %86 : vector<16x32xf32>
    %c5_63 = arith.constant 5 : index
    %c0_64 = arith.constant 0 : index
    %c0_65 = arith.constant 0 : index
    %88 = vector.load %arg7[%c5_63, %c0_64, %c0_65] : memref<9x4x32xf32, #tpu.memory_space<vmem>>, vector<1x4x32xf32>
    %89 = vector.shape_cast %88 : vector<1x4x32xf32> to vector<4x32xf32>
    %cst_66 = arith.constant dense<0.000000e+00> : vector<16x32xf32>
    %90 = tpu.matmul %83, %89, %cst_66 {dimension_numbers = #tpu.dot_dimension_numbers<[1], [0], [0], [1], [0, 0, 1, 1], [], []>} : vector<16x4xf32>, vector<4x32xf32>, vector<16x32xf32> -> vector<16x32xf32>
    %91 = arith.addf %87, %90 : vector<16x32xf32>
    %92 = vector.extract_strided_slice %16 {offsets = [2, 0, 0], sizes = [4, 4, 16], strides = [1, 1, 1]} : vector<6x6x16xf32> to vector<4x4x16xf32>
    %93 = vector.shape_cast %92 : vector<4x4x16xf32> to vector<16x16xf32>
    %94 = vector.extract_strided_slice %18 {offsets = [2, 0, 0], sizes = [4, 4, 4], strides = [1, 1, 1]} : vector<6x6x4xf32> to vector<4x4x4xf32>
    %95 = vector.shape_cast %94 : vector<4x4x4xf32> to vector<16x4xf32>
    %c6 = arith.constant 6 : index
    %c0_67 = arith.constant 0 : index
    %c0_68 = arith.constant 0 : index
    %96 = vector.load %arg6[%c6, %c0_67, %c0_68] : memref<9x16x32xf32, #tpu.memory_space<vmem>>, vector<1x16x32xf32>
    %97 = vector.shape_cast %96 : vector<1x16x32xf32> to vector<16x32xf32>
    %cst_69 = arith.constant dense<0.000000e+00> : vector<16x32xf32>
    %98 = tpu.matmul %93, %97, %cst_69 {dimension_numbers = #tpu.dot_dimension_numbers<[1], [0], [0], [1], [0, 0, 1, 1], [], []>} : vector<16x16xf32>, vector<16x32xf32>, vector<16x32xf32> -> vector<16x32xf32>
    %99 = arith.addf %91, %98 : vector<16x32xf32>
    %c6_70 = arith.constant 6 : index
    %c0_71 = arith.constant 0 : index
    %c0_72 = arith.constant 0 : index
    %100 = vector.load %arg7[%c6_70, %c0_71, %c0_72] : memref<9x4x32xf32, #tpu.memory_space<vmem>>, vector<1x4x32xf32>
    %101 = vector.shape_cast %100 : vector<1x4x32xf32> to vector<4x32xf32>
    %cst_73 = arith.constant dense<0.000000e+00> : vector<16x32xf32>
    %102 = tpu.matmul %95, %101, %cst_73 {dimension_numbers = #tpu.dot_dimension_numbers<[1], [0], [0], [1], [0, 0, 1, 1], [], []>} : vector<16x4xf32>, vector<4x32xf32>, vector<16x32xf32> -> vector<16x32xf32>
    %103 = arith.addf %99, %102 : vector<16x32xf32>
    %104 = vector.extract_strided_slice %16 {offsets = [2, 1, 0], sizes = [4, 4, 16], strides = [1, 1, 1]} : vector<6x6x16xf32> to vector<4x4x16xf32>
    %105 = vector.shape_cast %104 : vector<4x4x16xf32> to vector<16x16xf32>
    %106 = vector.extract_strided_slice %18 {offsets = [2, 1, 0], sizes = [4, 4, 4], strides = [1, 1, 1]} : vector<6x6x4xf32> to vector<4x4x4xf32>
    %107 = vector.shape_cast %106 : vector<4x4x4xf32> to vector<16x4xf32>
    %c7 = arith.constant 7 : index
    %c0_74 = arith.constant 0 : index
    %c0_75 = arith.constant 0 : index
    %108 = vector.load %arg6[%c7, %c0_74, %c0_75] : memref<9x16x32xf32, #tpu.memory_space<vmem>>, vector<1x16x32xf32>
    %109 = vector.shape_cast %108 : vector<1x16x32xf32> to vector<16x32xf32>
    %cst_76 = arith.constant dense<0.000000e+00> : vector<16x32xf32>
    %110 = tpu.matmul %105, %109, %cst_76 {dimension_numbers = #tpu.dot_dimension_numbers<[1], [0], [0], [1], [0, 0, 1, 1], [], []>} : vector<16x16xf32>, vector<16x32xf32>, vector<16x32xf32> -> vector<16x32xf32>
    %111 = arith.addf %103, %110 : vector<16x32xf32>
    %c7_77 = arith.constant 7 : index
    %c0_78 = arith.constant 0 : index
    %c0_79 = arith.constant 0 : index
    %112 = vector.load %arg7[%c7_77, %c0_78, %c0_79] : memref<9x4x32xf32, #tpu.memory_space<vmem>>, vector<1x4x32xf32>
    %113 = vector.shape_cast %112 : vector<1x4x32xf32> to vector<4x32xf32>
    %cst_80 = arith.constant dense<0.000000e+00> : vector<16x32xf32>
    %114 = tpu.matmul %107, %113, %cst_80 {dimension_numbers = #tpu.dot_dimension_numbers<[1], [0], [0], [1], [0, 0, 1, 1], [], []>} : vector<16x4xf32>, vector<4x32xf32>, vector<16x32xf32> -> vector<16x32xf32>
    %115 = arith.addf %111, %114 : vector<16x32xf32>
    %116 = vector.extract_strided_slice %16 {offsets = [2, 2, 0], sizes = [4, 4, 16], strides = [1, 1, 1]} : vector<6x6x16xf32> to vector<4x4x16xf32>
    %117 = vector.shape_cast %116 : vector<4x4x16xf32> to vector<16x16xf32>
    %118 = vector.extract_strided_slice %18 {offsets = [2, 2, 0], sizes = [4, 4, 4], strides = [1, 1, 1]} : vector<6x6x4xf32> to vector<4x4x4xf32>
    %119 = vector.shape_cast %118 : vector<4x4x4xf32> to vector<16x4xf32>
    %c8 = arith.constant 8 : index
    %c0_81 = arith.constant 0 : index
    %c0_82 = arith.constant 0 : index
    %120 = vector.load %arg6[%c8, %c0_81, %c0_82] : memref<9x16x32xf32, #tpu.memory_space<vmem>>, vector<1x16x32xf32>
    %121 = vector.shape_cast %120 : vector<1x16x32xf32> to vector<16x32xf32>
    %cst_83 = arith.constant dense<0.000000e+00> : vector<16x32xf32>
    %122 = tpu.matmul %117, %121, %cst_83 {dimension_numbers = #tpu.dot_dimension_numbers<[1], [0], [0], [1], [0, 0, 1, 1], [], []>} : vector<16x16xf32>, vector<16x32xf32>, vector<16x32xf32> -> vector<16x32xf32>
    %123 = arith.addf %115, %122 : vector<16x32xf32>
    %c8_84 = arith.constant 8 : index
    %c0_85 = arith.constant 0 : index
    %c0_86 = arith.constant 0 : index
    %124 = vector.load %arg7[%c8_84, %c0_85, %c0_86] : memref<9x4x32xf32, #tpu.memory_space<vmem>>, vector<1x4x32xf32>
    %125 = vector.shape_cast %124 : vector<1x4x32xf32> to vector<4x32xf32>
    %cst_87 = arith.constant dense<0.000000e+00> : vector<16x32xf32>
    %126 = tpu.matmul %119, %125, %cst_87 {dimension_numbers = #tpu.dot_dimension_numbers<[1], [0], [0], [1], [0, 0, 1, 1], [], []>} : vector<16x4xf32>, vector<4x32xf32>, vector<16x32xf32> -> vector<16x32xf32>
    %127 = arith.addf %123, %126 : vector<16x32xf32>
    %c0_88 = arith.constant 0 : index
    %c0_89 = arith.constant 0 : index
    %128 = vector.load %arg8[%c0_88, %c0_89] : memref<1x32xf32, #tpu.memory_space<vmem>>, vector<1x32xf32>
    %129 = vector.broadcast %128 : vector<1x32xf32> to vector<16x32xf32>
    %130 = arith.addf %127, %129 : vector<16x32xf32>
    %cst_90 = arith.constant 0.000000e+00 : f32
    %131 = vector.broadcast %cst_90 : f32 to vector<16x32xf32>
    %132 = arith.cmpf ogt, %130, %131 : vector<16x32xf32>
    %cst_91 = arith.constant 0.000000e+00 : f32
    %133 = vector.broadcast %cst_91 : f32 to vector<16x32xf32>
    %134 = arith.minimumf %130, %133 : vector<16x32xf32>
    %135 = math.exp %134 : vector<16x32xf32>
    %cst_92 = arith.constant 1.000000e+00 : f32
    %136 = vector.broadcast %cst_92 : f32 to vector<16x32xf32>
    %137 = arith.subf %135, %136 : vector<16x32xf32>
    %138 = arith.select %132, %130, %137 : vector<16x32xi1>, vector<16x32xf32>
    %cst_93 = arith.constant 0.000000e+00 : f32
    %139 = vector.broadcast %cst_93 : f32 to vector<6x6x32xf32>
    %c0_94 = arith.constant 0 : index
    %c0_95 = arith.constant 0 : index
    %c0_96 = arith.constant 0 : index
    %140 = vector.load %arg15[%c0_94, %c0_95, %c0_96] : memref<6x6x32xf32, #tpu.memory_space<vmem>>, vector<6x6x32xf32>
    tpu.vector_store %arg15[%c0_94, %c0_95, %c0_96], %139 {strides = array<i32>} : memref<6x6x32xf32, #tpu.memory_space<vmem>>, vector<6x6x32xf32>,
    %141 = vector.shape_cast %138 : vector<16x32xf32> to vector<4x4x32xf32>
    %c1_97 = arith.constant 1 : index
    %c1_98 = arith.constant 1 : index
    %c0_99 = arith.constant 0 : index
    %142 = vector.load %arg15[%c1_97, %c1_98, %c0_99] : memref<6x6x32xf32, #tpu.memory_space<vmem>>, vector<4x4x32xf32>
    tpu.vector_store %arg15[%c1_97, %c1_98, %c0_99], %141 {strides = array<i32>} : memref<6x6x32xf32, #tpu.memory_space<vmem>>, vector<4x4x32xf32>,
    %c0_100 = arith.constant 0 : index
    %c0_101 = arith.constant 0 : index
    %c0_102 = arith.constant 0 : index
    %143 = vector.load %arg15[%c0_100, %c0_101, %c0_102] : memref<6x6x32xf32, #tpu.memory_space<vmem>>, vector<6x6x32xf32>
    %cst_103 = arith.constant 0.000000e+00 : f32
    %144 = vector.broadcast %cst_103 : f32 to vector<16x64xf32>
    %145 = vector.extract_strided_slice %143 {offsets = [0, 0, 0], sizes = [4, 4, 32], strides = [1, 1, 1]} : vector<6x6x32xf32> to vector<4x4x32xf32>
    %146 = vector.shape_cast %145 : vector<4x4x32xf32> to vector<16x32xf32>
    %c0_104 = arith.constant 0 : index
    %c0_105 = arith.constant 0 : index
    %c0_106 = arith.constant 0 : index
    %147 = vector.load %arg9[%c0_104, %c0_105, %c0_106] : memref<9x32x64xf32, #tpu.memory_space<vmem>>, vector<1x32x64xf32>
    %148 = vector.shape_cast %147 : vector<1x32x64xf32> to vector<32x64xf32>
    %cst_107 = arith.constant dense<0.000000e+00> : vector<16x64xf32>
    %149 = tpu.matmul %146, %148, %cst_107 {dimension_numbers = #tpu.dot_dimension_numbers<[1], [0], [0], [1], [0, 0, 1, 1], [], []>} : vector<16x32xf32>, vector<32x64xf32>, vector<16x64xf32> -> vector<16x64xf32>
    %150 = arith.addf %144, %149 : vector<16x64xf32>
    %151 = vector.extract_strided_slice %143 {offsets = [0, 1, 0], sizes = [4, 4, 32], strides = [1, 1, 1]} : vector<6x6x32xf32> to vector<4x4x32xf32>
    %152 = vector.shape_cast %151 : vector<4x4x32xf32> to vector<16x32xf32>
    %c1_108 = arith.constant 1 : index
    %c0_109 = arith.constant 0 : index
    %c0_110 = arith.constant 0 : index
    %153 = vector.load %arg9[%c1_108, %c0_109, %c0_110] : memref<9x32x64xf32, #tpu.memory_space<vmem>>, vector<1x32x64xf32>
    %154 = vector.shape_cast %153 : vector<1x32x64xf32> to vector<32x64xf32>
    %cst_111 = arith.constant dense<0.000000e+00> : vector<16x64xf32>
    %155 = tpu.matmul %152, %154, %cst_111 {dimension_numbers = #tpu.dot_dimension_numbers<[1], [0], [0], [1], [0, 0, 1, 1], [], []>} : vector<16x32xf32>, vector<32x64xf32>, vector<16x64xf32> -> vector<16x64xf32>
    %156 = arith.addf %150, %155 : vector<16x64xf32>
    %157 = vector.extract_strided_slice %143 {offsets = [0, 2, 0], sizes = [4, 4, 32], strides = [1, 1, 1]} : vector<6x6x32xf32> to vector<4x4x32xf32>
    %158 = vector.shape_cast %157 : vector<4x4x32xf32> to vector<16x32xf32>
    %c2_112 = arith.constant 2 : index
    %c0_113 = arith.constant 0 : index
    %c0_114 = arith.constant 0 : index
    %159 = vector.load %arg9[%c2_112, %c0_113, %c0_114] : memref<9x32x64xf32, #tpu.memory_space<vmem>>, vector<1x32x64xf32>
    %160 = vector.shape_cast %159 : vector<1x32x64xf32> to vector<32x64xf32>
    %cst_115 = arith.constant dense<0.000000e+00> : vector<16x64xf32>
    %161 = tpu.matmul %158, %160, %cst_115 {dimension_numbers = #tpu.dot_dimension_numbers<[1], [0], [0], [1], [0, 0, 1, 1], [], []>} : vector<16x32xf32>, vector<32x64xf32>, vector<16x64xf32> -> vector<16x64xf32>
    %162 = arith.addf %156, %161 : vector<16x64xf32>
    %163 = vector.extract_strided_slice %143 {offsets = [1, 0, 0], sizes = [4, 4, 32], strides = [1, 1, 1]} : vector<6x6x32xf32> to vector<4x4x32xf32>
    %164 = vector.shape_cast %163 : vector<4x4x32xf32> to vector<16x32xf32>
    %c3_116 = arith.constant 3 : index
    %c0_117 = arith.constant 0 : index
    %c0_118 = arith.constant 0 : index
    %165 = vector.load %arg9[%c3_116, %c0_117, %c0_118] : memref<9x32x64xf32, #tpu.memory_space<vmem>>, vector<1x32x64xf32>
    %166 = vector.shape_cast %165 : vector<1x32x64xf32> to vector<32x64xf32>
    %cst_119 = arith.constant dense<0.000000e+00> : vector<16x64xf32>
    %167 = tpu.matmul %164, %166, %cst_119 {dimension_numbers = #tpu.dot_dimension_numbers<[1], [0], [0], [1], [0, 0, 1, 1], [], []>} : vector<16x32xf32>, vector<32x64xf32>, vector<16x64xf32> -> vector<16x64xf32>
    %168 = arith.addf %162, %167 : vector<16x64xf32>
    %169 = vector.extract_strided_slice %143 {offsets = [1, 1, 0], sizes = [4, 4, 32], strides = [1, 1, 1]} : vector<6x6x32xf32> to vector<4x4x32xf32>
    %170 = vector.shape_cast %169 : vector<4x4x32xf32> to vector<16x32xf32>
    %c4_120 = arith.constant 4 : index
    %c0_121 = arith.constant 0 : index
    %c0_122 = arith.constant 0 : index
    %171 = vector.load %arg9[%c4_120, %c0_121, %c0_122] : memref<9x32x64xf32, #tpu.memory_space<vmem>>, vector<1x32x64xf32>
    %172 = vector.shape_cast %171 : vector<1x32x64xf32> to vector<32x64xf32>
    %cst_123 = arith.constant dense<0.000000e+00> : vector<16x64xf32>
    %173 = tpu.matmul %170, %172, %cst_123 {dimension_numbers = #tpu.dot_dimension_numbers<[1], [0], [0], [1], [0, 0, 1, 1], [], []>} : vector<16x32xf32>, vector<32x64xf32>, vector<16x64xf32> -> vector<16x64xf32>
    %174 = arith.addf %168, %173 : vector<16x64xf32>
    %175 = vector.extract_strided_slice %143 {offsets = [1, 2, 0], sizes = [4, 4, 32], strides = [1, 1, 1]} : vector<6x6x32xf32> to vector<4x4x32xf32>
    %176 = vector.shape_cast %175 : vector<4x4x32xf32> to vector<16x32xf32>
    %c5_124 = arith.constant 5 : index
    %c0_125 = arith.constant 0 : index
    %c0_126 = arith.constant 0 : index
    %177 = vector.load %arg9[%c5_124, %c0_125, %c0_126] : memref<9x32x64xf32, #tpu.memory_space<vmem>>, vector<1x32x64xf32>
    %178 = vector.shape_cast %177 : vector<1x32x64xf32> to vector<32x64xf32>
    %cst_127 = arith.constant dense<0.000000e+00> : vector<16x64xf32>
    %179 = tpu.matmul %176, %178, %cst_127 {dimension_numbers = #tpu.dot_dimension_numbers<[1], [0], [0], [1], [0, 0, 1, 1], [], []>} : vector<16x32xf32>, vector<32x64xf32>, vector<16x64xf32> -> vector<16x64xf32>
    %180 = arith.addf %174, %179 : vector<16x64xf32>
    %181 = vector.extract_strided_slice %143 {offsets = [2, 0, 0], sizes = [4, 4, 32], strides = [1, 1, 1]} : vector<6x6x32xf32> to vector<4x4x32xf32>
    %182 = vector.shape_cast %181 : vector<4x4x32xf32> to vector<16x32xf32>
    %c6_128 = arith.constant 6 : index
    %c0_129 = arith.constant 0 : index
    %c0_130 = arith.constant 0 : index
    %183 = vector.load %arg9[%c6_128, %c0_129, %c0_130] : memref<9x32x64xf32, #tpu.memory_space<vmem>>, vector<1x32x64xf32>
    %184 = vector.shape_cast %183 : vector<1x32x64xf32> to vector<32x64xf32>
    %cst_131 = arith.constant dense<0.000000e+00> : vector<16x64xf32>
    %185 = tpu.matmul %182, %184, %cst_131 {dimension_numbers = #tpu.dot_dimension_numbers<[1], [0], [0], [1], [0, 0, 1, 1], [], []>} : vector<16x32xf32>, vector<32x64xf32>, vector<16x64xf32> -> vector<16x64xf32>
    %186 = arith.addf %180, %185 : vector<16x64xf32>
    %187 = vector.extract_strided_slice %143 {offsets = [2, 1, 0], sizes = [4, 4, 32], strides = [1, 1, 1]} : vector<6x6x32xf32> to vector<4x4x32xf32>
    %188 = vector.shape_cast %187 : vector<4x4x32xf32> to vector<16x32xf32>
    %c7_132 = arith.constant 7 : index
    %c0_133 = arith.constant 0 : index
    %c0_134 = arith.constant 0 : index
    %189 = vector.load %arg9[%c7_132, %c0_133, %c0_134] : memref<9x32x64xf32, #tpu.memory_space<vmem>>, vector<1x32x64xf32>
    %190 = vector.shape_cast %189 : vector<1x32x64xf32> to vector<32x64xf32>
    %cst_135 = arith.constant dense<0.000000e+00> : vector<16x64xf32>
    %191 = tpu.matmul %188, %190, %cst_135 {dimension_numbers = #tpu.dot_dimension_numbers<[1], [0], [0], [1], [0, 0, 1, 1], [], []>} : vector<16x32xf32>, vector<32x64xf32>, vector<16x64xf32> -> vector<16x64xf32>
    %192 = arith.addf %186, %191 : vector<16x64xf32>
    %193 = vector.extract_strided_slice %143 {offsets = [2, 2, 0], sizes = [4, 4, 32], strides = [1, 1, 1]} : vector<6x6x32xf32> to vector<4x4x32xf32>
    %194 = vector.shape_cast %193 : vector<4x4x32xf32> to vector<16x32xf32>
    %c8_136 = arith.constant 8 : index
    %c0_137 = arith.constant 0 : index
    %c0_138 = arith.constant 0 : index
    %195 = vector.load %arg9[%c8_136, %c0_137, %c0_138] : memref<9x32x64xf32, #tpu.memory_space<vmem>>, vector<1x32x64xf32>
    %196 = vector.shape_cast %195 : vector<1x32x64xf32> to vector<32x64xf32>
    %cst_139 = arith.constant dense<0.000000e+00> : vector<16x64xf32>
    %197 = tpu.matmul %194, %196, %cst_139 {dimension_numbers = #tpu.dot_dimension_numbers<[1], [0], [0], [1], [0, 0, 1, 1], [], []>} : vector<16x32xf32>, vector<32x64xf32>, vector<16x64xf32> -> vector<16x64xf32>
    %198 = arith.addf %192, %197 : vector<16x64xf32>
    %c0_140 = arith.constant 0 : index
    %c0_141 = arith.constant 0 : index
    %199 = vector.load %arg10[%c0_140, %c0_141] : memref<1x64xf32, #tpu.memory_space<vmem>>, vector<1x64xf32>
    %200 = vector.broadcast %199 : vector<1x64xf32> to vector<16x64xf32>
    %201 = arith.addf %198, %200 : vector<16x64xf32>
    %202 = vector.extract_strided_slice %201 {offsets = [0, 0], sizes = [16, 32], strides = [1, 1]} : vector<16x64xf32> to vector<16x32xf32>
    %203 = vector.extract_strided_slice %201 {offsets = [0, 32], sizes = [16, 32], strides = [1, 1]} : vector<16x64xf32> to vector<16x32xf32>
    %c0_142 = arith.constant 0 : index
    %c0_143 = arith.constant 0 : index
    %204 = vector.load %arg11[%c0_142, %c0_143] : memref<1x32xf32, #tpu.memory_space<vmem>>, vector<1x32xf32>
    %cst_144 = arith.constant 2.000000e+00 : f32
    %205 = vector.broadcast %cst_144 : f32 to vector<16x32xf32>
    %206 = arith.addf %202, %205 : vector<16x32xf32>
    %cst_145 = arith.constant 0.000000e+00 : f32
    %207 = vector.broadcast %cst_145 : f32 to vector<16x32xf32>
    %208 = arith.subf %207, %206 : vector<16x32xf32>
    %cst_146 = arith.constant 0.000000e+00 : f32
    %209 = vector.broadcast %cst_146 : f32 to vector<16x32xf32>
    %210 = arith.maximumf %208, %209 : vector<16x32xf32>
    %211 = vector.broadcast %cst_146 : f32 to vector<16x32xf32>
    %212 = arith.subf %208, %211 : vector<16x32xf32>
    %213 = arith.cmpf one, %212, %212 : vector<16x32xf32>
    %214 = vector.broadcast %cst_146 : f32 to vector<16x32xf32>
    %215 = arith.addf %208, %214 : vector<16x32xf32>
    %216 = math.absf %212 : vector<16x32xf32>
    %cst_147 = arith.constant 0.000000e+00 : f32
    %217 = vector.broadcast %cst_147 : f32 to vector<16x32xf32>
    %218 = arith.subf %217, %216 : vector<16x32xf32>
    %219 = math.exp %218 : vector<16x32xf32>
    %220 = math.log1p %219 : vector<16x32xf32>
    %221 = arith.addf %210, %220 : vector<16x32xf32>
    %222 = arith.select %213, %215, %221 : vector<16x32xi1>, vector<16x32xf32>
    %cst_148 = arith.constant 0.000000e+00 : f32
    %223 = vector.broadcast %cst_148 : f32 to vector<16x32xf32>
    %224 = arith.subf %223, %222 : vector<16x32xf32>
    %225 = vector.broadcast %204 : vector<1x32xf32> to vector<16x32xf32>
    %226 = arith.mulf %225, %224 : vector<16x32xf32>
    %227 = math.exp %226 : vector<16x32xf32>
    %228 = arith.mulf %10, %227 : vector<16x32xf32>
    %229 = arith.addf %228, %203 : vector<16x32xf32>
    %230 = vector.shape_cast %229 : vector<16x32xf32> to vector<1x4x4x32xf32>
    %c0_149 = arith.constant 0 : index
    %c0_150 = arith.constant 0 : index
    %c0_151 = arith.constant 0 : index
    %c0_152 = arith.constant 0 : index
    %231 = vector.load %arg12[%c0_149, %c0_150, %c0_151, %c0_152] : memref<1x4x4x32xf32, #tpu.memory_space<vmem>>, vector<1x4x4x32xf32>
    tpu.vector_store %arg12[%c0_149, %c0_150, %c0_151, %c0_152], %230 {strides = array<i32>} : memref<1x4x4x32xf32, #tpu.memory_space<vmem>>, vector<1x4x4x32xf32>,
    %232 = vector.shape_cast %226 : vector<16x32xf32> to vector<1x16x32xf32>
    %cst_153 = arith.constant dense<0.000000e+00> : vector<1xf32>
    %233 = vector.multi_reduction <add>, %232, %cst_153 [1, 2] : vector<1x16x32xf32> to vector<1xf32>
    %234 = vector.shape_cast %233 : vector<1xf32> to vector<1x1x1xf32>
    %235 = vector.extract %234[0, 0, 0] : f32 from vector<1x1x1xf32>
    %236 = vector.broadcast %235 : f32 to vector<1x1x1xf32>
    %c0_154 = arith.constant 0 : index
    %c0_155 = arith.constant 0 : index
    %c0_156 = arith.constant 0 : index
    %237 = vector.load %arg13[%c0_154, %c0_155, %c0_156] : memref<1x1x1xf32, #tpu.memory_space<vmem>>, vector<1x1x1xf32>
    tpu.vector_store %arg13[%c0_154, %c0_155, %c0_156], %236 {strides = array<i32>} : memref<1x1x1xf32, #tpu.memory_space<vmem>>, vector<1x1x1xf32>,
    return
  }
  func.func @transform_0(%arg0: i32) -> (i32, i32, i32, i32) {
    %c0_i32 = arith.constant 0 : i32
    %c0_i32_0 = arith.constant 0 : i32
    %c0_i32_1 = arith.constant 0 : i32
    %c0_i32_2 = arith.constant 0 : i32
    return %arg0, %c0_i32, %c0_i32_0, %c0_i32_1 : i32, i32, i32, i32
  }
  func.func @transform_1(%arg0: i32) -> (i32, i32, i32, i32) {
    %c0_i32 = arith.constant 0 : i32
    %c0_i32_0 = arith.constant 0 : i32
    %c0_i32_1 = arith.constant 0 : i32
    %c0_i32_2 = arith.constant 0 : i32
    return %arg0, %c0_i32, %c0_i32_0, %c0_i32_1 : i32, i32, i32, i32
  }
  func.func @transform_2(%arg0: i32) -> (i32, i32) {
    %c0_i32 = arith.constant 0 : i32
    %c0_i32_0 = arith.constant 0 : i32
    %c0_i32_1 = arith.constant 0 : i32
    return %c0_i32, %c0_i32_0 : i32, i32
  }
  func.func @transform_3(%arg0: i32) -> (i32, i32) {
    %c0_i32 = arith.constant 0 : i32
    %c0_i32_0 = arith.constant 0 : i32
    %c0_i32_1 = arith.constant 0 : i32
    return %c0_i32, %c0_i32_0 : i32, i32
  }
  func.func @transform_4(%arg0: i32) -> (i32, i32) {
    %c0_i32 = arith.constant 0 : i32
    %c0_i32_0 = arith.constant 0 : i32
    %c0_i32_1 = arith.constant 0 : i32
    return %c0_i32, %c0_i32_0 : i32, i32
  }
  func.func @transform_5(%arg0: i32) -> (i32, i32, i32) {
    %c0_i32 = arith.constant 0 : i32
    %c0_i32_0 = arith.constant 0 : i32
    %c0_i32_1 = arith.constant 0 : i32
    %c0_i32_2 = arith.constant 0 : i32
    return %c0_i32, %c0_i32_0, %c0_i32_1 : i32, i32, i32
  }
  func.func @transform_6(%arg0: i32) -> (i32, i32, i32) {
    %c0_i32 = arith.constant 0 : i32
    %c0_i32_0 = arith.constant 0 : i32
    %c0_i32_1 = arith.constant 0 : i32
    %c0_i32_2 = arith.constant 0 : i32
    return %c0_i32, %c0_i32_0, %c0_i32_1 : i32, i32, i32
  }
  func.func @transform_7(%arg0: i32) -> (i32, i32) {
    %c0_i32 = arith.constant 0 : i32
    %c0_i32_0 = arith.constant 0 : i32
    %c0_i32_1 = arith.constant 0 : i32
    return %c0_i32, %c0_i32_0 : i32, i32
  }
  func.func @transform_8(%arg0: i32) -> (i32, i32, i32) {
    %c0_i32 = arith.constant 0 : i32
    %c0_i32_0 = arith.constant 0 : i32
    %c0_i32_1 = arith.constant 0 : i32
    %c0_i32_2 = arith.constant 0 : i32
    return %c0_i32, %c0_i32_0, %c0_i32_1 : i32, i32, i32
  }
  func.func @transform_9(%arg0: i32) -> (i32, i32) {
    %c0_i32 = arith.constant 0 : i32
    %c0_i32_0 = arith.constant 0 : i32
    %c0_i32_1 = arith.constant 0 : i32
    return %c0_i32, %c0_i32_0 : i32, i32
  }
  func.func @transform_10(%arg0: i32) -> (i32, i32) {
    %c0_i32 = arith.constant 0 : i32
    %c0_i32_0 = arith.constant 0 : i32
    %c0_i32_1 = arith.constant 0 : i32
    return %c0_i32, %c0_i32_0 : i32, i32
  }
  func.func @transform_11(%arg0: i32) -> (i32, i32, i32, i32) {
    %c0_i32 = arith.constant 0 : i32
    %c0_i32_0 = arith.constant 0 : i32
    %c0_i32_1 = arith.constant 0 : i32
    %c0_i32_2 = arith.constant 0 : i32
    return %arg0, %c0_i32, %c0_i32_0, %c0_i32_1 : i32, i32, i32, i32
  }
  func.func @transform_12(%arg0: i32) -> (i32, i32, i32) {
    %c0_i32 = arith.constant 0 : i32
    %c0_i32_0 = arith.constant 0 : i32
    %c0_i32_1 = arith.constant 0 : i32
    return %arg0, %c0_i32, %c0_i32_0 : i32, i32, i32
  }
}

</mosaic_0001>

<llo_original>
// kernel: _lambda_.4
$region0: #{_lambda_.4}
  #allocation0 [shape = 'u32[]', space=smem, size = 0x4, offset = 0x4, fixed_abs, tag = 'smem constant byte address 0x4 - core index']
  #allocation1 [shape = 'u32[144,128]{1,0:T(1,128)}', space=vmem, size = 0x12000, scoped, tag = 'internal scratch']
  #allocation2 [shape = 'f32[10,10,8]{2,1,0:T(8,128)}', space=vmem, size = 0x14000, scoped, tag = 'scratch operand']
  #allocation3 [shape = 'f32[10,10,32]{2,1,0:T(8,128)}', space=vmem, size = 0x14000, scoped, tag = 'scratch operand']
  %s0 = inlined_call_operand.vmem [shape: f32[2,8,8,16], index: 0, kind: input, shape index: {}]
  %s1 = inlined_call_operand.vmem [shape: f32[2,10,10,4], index: 1, kind: input, shape index: {}]
  %s2 = inlined_call_operand.vmem [shape: f32[1,16], index: 2, kind: input, shape index: {}]
  %s3 = inlined_call_operand.vmem [shape: f32[1,16], index: 3, kind: input, shape index: {}]
  %s4 = inlined_call_operand.vmem [shape: f32[16,16], index: 4, kind: input, shape index: {}]
  %s5 = inlined_call_operand.vmem [shape: f32[9,8,32], index: 5, kind: input, shape index: {}]
  %s6 = inlined_call_operand.vmem [shape: f32[9,4,32], index: 6, kind: input, shape index: {}]
  %s7 = inlined_call_operand.vmem [shape: f32[1,32], index: 7, kind: input, shape index: {}]
  %s8 = inlined_call_operand.vmem [shape: f32[9,32,32], index: 8, kind: input, shape index: {}]
  %s9 = inlined_call_operand.vmem [shape: f32[1,32], index: 9, kind: input, shape index: {}]
  %s10 = inlined_call_operand.vmem [shape: f32[1,16], index: 10, kind: input, shape index: {}]
  %s11 = inlined_call_operand.vmem [shape: f32[2,8,8,16], index: 11, kind: output, shape index: {0}]
  %s12 = inlined_call_operand.vmem [shape: f32[2,1,1], index: 12, kind: output, shape index: {1}]
  %13 = xla_tuple %s11, %s12
  %s14 = sld [smem:[#allocation0]]
  $region85: #{_lambda_.4} parent=0
    _
  %s16 = ssub.s32 1, %s14
  %s17 = scalar_select 0, %s16, %s14
  loop: start=0, step=1, limit=4
  $region2: #{_lambda_.4} parent=0 // loop_pre_header
    _
  $region3: #{_lambda_.4} parent=0 // loop_header
    %s19 = sphi 0, %s23
    %p20 = scmp.ge.s32.totalorder %s19, 4
    %s29 = sphi 0, %s31
    %s32 = sphi 0, %s29
    %s33 = sphi 0, %s32
    %s49 = sphi 0, %s33
    %s55 = sphi 0, %s57
    %s58 = sphi 0, %s55
    %s59 = sphi 0, %s58
    %s75 = sphi 0, %s59
    %s79 = sphi 0, %s79
    %s81 = sphi 0, %s79
    %s82 = sphi 0, %s81
    %s96 = sphi 0, %s82
    %s100 = sphi 0, %s100
    %s102 = sphi 0, %s100
    %s103 = sphi 0, %s102
    %s117 = sphi 0, %s103
    %s121 = sphi 0, %s121
    %s123 = sphi 0, %s121
    %s124 = sphi 0, %s123
    %s138 = sphi 0, %s124
    %s142 = sphi 0, %s142
    %s144 = sphi 0, %s142
    %s145 = sphi 0, %s144
    %s159 = sphi 0, %s145
    %s163 = sphi 0, %s163
    %s165 = sphi 0, %s163
    %s166 = sphi 0, %s165
    %s180 = sphi 0, %s166
    %s184 = sphi 0, %s184
    %s186 = sphi 0, %s184
    %s187 = sphi 0, %s186
    %s201 = sphi 0, %s187
    %s205 = sphi 0, %s205
    %s207 = sphi 0, %s205
    %s208 = sphi 0, %s207
    %s222 = sphi 0, %s208
    %s226 = sphi 0, %s226
    %s228 = sphi 0, %s226
    %s229 = sphi 0, %s228
    %s243 = sphi 0, %s229
    %s247 = sphi 0, %s247
    %s249 = sphi 0, %s247
    %s250 = sphi 0, %s249
    %s264 = sphi 0, %s250
    %s270 = sphi 0, %s272
    %s273 = sphi 0, %s270
    %s274 = sphi 0, %s273
    %s290 = sphi 0, %s274
    %s296 = sphi 0, %s298
    %s299 = sphi 0, %s296
    %s300 = sphi 0, %s299
    %s316 = sphi 0, %s300
  $region4: #{_lambda_.4} parent=0 // loop_header_branch
    %22 = sbr.rel (%p20) target = $region8
  $region5: #{_lambda_.4} parent=0 // loop_body
    %s24 = ssub.s32 %s19, 1
    %s25 = ssub.s32 %s19, 2
    %s26 = sadd.s32 %s19, 1
    %s27 = ssub.s32 %s19, %s26
    %p28 = scmp.eq.s32.totalorder %s27, 0
    %s30 = sadd.s32 %s29, 1
    %s31 = scalar_select %p28, %s29, %s30
    %p34 = pneg %p28
    %p35 = scmp.eq.s32.totalorder %s19, 1
    %p36 = por %p34, %p35
    %p37 = scmp.ne.s32.totalorder %s29, %s32
    %p38 = scmp.eq.s32.totalorder %s19, 0
    %p39 = por %p37, %p38
    %p40 = scmp.ne.s32.totalorder %s29, %s32
    %p41 = scmp.eq.s32.totalorder %s24, 1
    %p42 = por %p40, %p41
    %p43 = scmp.ne.s32.totalorder %s32, %s33
    %p44 = scmp.eq.s32.totalorder %s24, 0
    %p45 = por %p43, %p44
    %p46 = scmp.ne.s32.totalorder %s32, %s33
    %p47 = scmp.eq.s32.totalorder %s25, 1
    %p48 = por %p46, %p47
    %p50 = scmp.ne.s32.totalorder %s33, %s49
    %p51 = scmp.eq.s32.totalorder %s25, 0
    %p52 = por %p50, %p51
    %s53 = ssub.s32 %s19, %s26
    %p54 = scmp.eq.s32.totalorder %s53, 0
    %s56 = sadd.s32 %s55, 1
    %s57 = scalar_select %p54, %s55, %s56
    %p60 = pneg %p54
    %p61 = scmp.eq.s32.totalorder %s19, 1
    %p62 = por %p60, %p61
    %p63 = scmp.ne.s32.totalorder %s55, %s58
    %p64 = scmp.eq.s32.totalorder %s19, 0
    %p65 = por %p63, %p64
    %p66 = scmp.ne.s32.totalorder %s55, %s58
    %p67 = scmp.eq.s32.totalorder %s24, 1
    %p68 = por %p66, %p67
    %p69 = scmp.ne.s32.totalorder %s58, %s59
    %p70 = scmp.eq.s32.totalorder %s24, 0
    %p71 = por %p69, %p70
    %p72 = scmp.ne.s32.totalorder %s58, %s59
    %p73 = scmp.eq.s32.totalorder %s25, 1
    %p74 = por %p72, %p73
    %p76 = scmp.ne.s32.totalorder %s59, %s75
    %p77 = scmp.eq.s32.totalorder %s25, 0
    %p78 = por %p76, %p77
    %s80 = sadd.s32 %s79, 1
    %p83 = scmp.eq.s32.totalorder %s19, 1
    %p84 = scmp.ne.s32.totalorder %s79, %s81
    %p85 = scmp.eq.s32.totalorder %s19, 0
    %p86 = por %p84, %p85
    %p87 = scmp.ne.s32.totalorder %s79, %s81
    %p88 = scmp.eq.s32.totalorder %s24, 1
    %p89 = por %p87, %p88
    %p90 = scmp.ne.s32.totalorder %s81, %s82
    %p91 = scmp.eq.s32.totalorder %s24, 0
    %p92 = por %p90, %p91
    %p93 = scmp.ne.s32.totalorder %s81, %s82
    %p94 = scmp.eq.s32.totalorder %s25, 1
    %p95 = por %p93, %p94
    %p97 = scmp.ne.s32.totalorder %s82, %s96
    %p98 = scmp.eq.s32.totalorder %s25, 0
    %p99 = por %p97, %p98
    %s101 = sadd.s32 %s100, 1
    %p104 = scmp.eq.s32.totalorder %s19, 1
    %p105 = scmp.ne.s32.totalorder %s100, %s102
    %p106 = scmp.eq.s32.totalorder %s19, 0
    %p107 = por %p105, %p106
    %p108 = scmp.ne.s32.totalorder %s100, %s102
    %p109 = scmp.eq.s32.totalorder %s24, 1
    %p110 = por %p108, %p109
    %p111 = scmp.ne.s32.totalorder %s102, %s103
    %p112 = scmp.eq.s32.totalorder %s24, 0
    %p113 = por %p111, %p112
    %p114 = scmp.ne.s32.totalorder %s102, %s103
    %p115 = scmp.eq.s32.totalorder %s25, 1
    %p116 = por %p114, %p115
    %p118 = scmp.ne.s32.totalorder %s103, %s117
    %p119 = scmp.eq.s32.totalorder %s25, 0
    %p120 = por %p118, %p119
    %s122 = sadd.s32 %s121, 1
    %p125 = scmp.eq.s32.totalorder %s19, 1
    %p126 = scmp.ne.s32.totalorder %s121, %s123
    %p127 = scmp.eq.s32.totalorder %s19, 0
    %p128 = por %p126, %p127
    %p129 = scmp.ne.s32.totalorder %s121, %s123
    %p130 = scmp.eq.s32.totalorder %s24, 1
    %p131 = por %p129, %p130
    %p132 = scmp.ne.s32.totalorder %s123, %s124
    %p133 = scmp.eq.s32.totalorder %s24, 0
    %p134 = por %p132, %p133
    %p135 = scmp.ne.s32.totalorder %s123, %s124
    %p136 = scmp.eq.s32.totalorder %s25, 1
    %p137 = por %p135, %p136
    %p139 = scmp.ne.s32.totalorder %s124, %s138
    %p140 = scmp.eq.s32.totalorder %s25, 0
    %p141 = por %p139, %p140
    %s143 = sadd.s32 %s142, 1
    %p146 = scmp.eq.s32.totalorder %s19, 1
    %p147 = scmp.ne.s32.totalorder %s142, %s144
    %p148 = scmp.eq.s32.totalorder %s19, 0
    %p149 = por %p147, %p148
    %p150 = scmp.ne.s32.totalorder %s142, %s144
    %p151 = scmp.eq.s32.totalorder %s24, 1
    %p152 = por %p150, %p151
    %p153 = scmp.ne.s32.totalorder %s144, %s145
    %p154 = scmp.eq.s32.totalorder %s24, 0
    %p155 = por %p153, %p154
    %p156 = scmp.ne.s32.totalorder %s144, %s145
    %p157 = scmp.eq.s32.totalorder %s25, 1
    %p158 = por %p156, %p157
    %p160 = scmp.ne.s32.totalorder %s145, %s159
    %p161 = scmp.eq.s32.totalorder %s25, 0
    %p162 = por %p160, %p161
    %s164 = sadd.s32 %s163, 1
    %p167 = scmp.eq.s32.totalorder %s19, 1
    %p168 = scmp.ne.s32.totalorder %s163, %s165
    %p169 = scmp.eq.s32.totalorder %s19, 0
    %p170 = por %p168, %p169
    %p171 = scmp.ne.s32.totalorder %s163, %s165
    %p172 = scmp.eq.s32.totalorder %s24, 1
    %p173 = por %p171, %p172
    %p174 = scmp.ne.s32.totalorder %s165, %s166
    %p175 = scmp.eq.s32.totalorder %s24, 0
    %p176 = por %p174, %p175
    %p177 = scmp.ne.s32.totalorder %s165, %s166
    %p178 = scmp.eq.s32.totalorder %s25, 1
    %p179 = por %p177, %p178
    %p181 = scmp.ne.s32.totalorder %s166, %s180
    %p182 = scmp.eq.s32.totalorder %s25, 0
    %p183 = por %p181, %p182
    %s185 = sadd.s32 %s184, 1
    %p188 = scmp.eq.s32.totalorder %s19, 1
    %p189 = scmp.ne.s32.totalorder %s184, %s186
    %p190 = scmp.eq.s32.totalorder %s19, 0
    %p191 = por %p189, %p190
    %p192 = scmp.ne.s32.totalorder %s184, %s186
    %p193 = scmp.eq.s32.totalorder %s24, 1
    %p194 = por %p192, %p193
    %p195 = scmp.ne.s32.totalorder %s186, %s187
    %p196 = scmp.eq.s32.totalorder %s24, 0
    %p197 = por %p195, %p196
    %p198 = scmp.ne.s32.totalorder %s186, %s187
    %p199 = scmp.eq.s32.totalorder %s25, 1
    %p200 = por %p198, %p199
    %p202 = scmp.ne.s32.totalorder %s187, %s201
    %p203 = scmp.eq.s32.totalorder %s25, 0
    %p204 = por %p202, %p203
    %s206 = sadd.s32 %s205, 1
    %p209 = scmp.eq.s32.totalorder %s19, 1
    %p210 = scmp.ne.s32.totalorder %s205, %s207
    %p211 = scmp.eq.s32.totalorder %s19, 0
    %p212 = por %p210, %p211
    %p213 = scmp.ne.s32.totalorder %s205, %s207
    %p214 = scmp.eq.s32.totalorder %s24, 1
    %p215 = por %p213, %p214
    %p216 = scmp.ne.s32.totalorder %s207, %s208
    %p217 = scmp.eq.s32.totalorder %s24, 0
    %p218 = por %p216, %p217
    %p219 = scmp.ne.s32.totalorder %s207, %s208
    %p220 = scmp.eq.s32.totalorder %s25, 1
    %p221 = por %p219, %p220
    %p223 = scmp.ne.s32.totalorder %s208, %s222
    %p224 = scmp.eq.s32.totalorder %s25, 0
    %p225 = por %p223, %p224
    %s227 = sadd.s32 %s226, 1
    %p230 = scmp.eq.s32.totalorder %s19, 1
    %p231 = scmp.ne.s32.totalorder %s226, %s228
    %p232 = scmp.eq.s32.totalorder %s19, 0
    %p233 = por %p231, %p232
    %p234 = scmp.ne.s32.totalorder %s226, %s228
    %p235 = scmp.eq.s32.totalorder %s24, 1
    %p236 = por %p234, %p235
    %p237 = scmp.ne.s32.totalorder %s228, %s229
    %p238 = scmp.eq.s32.totalorder %s24, 0
    %p239 = por %p237, %p238
    %p240 = scmp.ne.s32.totalorder %s228, %s229
    %p241 = scmp.eq.s32.totalorder %s25, 1
    %p242 = por %p240, %p241
    %p244 = scmp.ne.s32.totalorder %s229, %s243
    %p245 = scmp.eq.s32.totalorder %s25, 0
    %p246 = por %p244, %p245
    %s248 = sadd.s32 %s247, 1
    %p251 = scmp.eq.s32.totalorder %s19, 1
    %p252 = scmp.ne.s32.totalorder %s247, %s249
    %p253 = scmp.eq.s32.totalorder %s19, 0
    %p254 = por %p252, %p253
    %p255 = scmp.ne.s32.totalorder %s247, %s249
    %p256 = scmp.eq.s32.totalorder %s24, 1
    %p257 = por %p255, %p256
    %p258 = scmp.ne.s32.totalorder %s249, %s250
    %p259 = scmp.eq.s32.totalorder %s24, 0
    %p260 = por %p258, %p259
    %p261 = scmp.ne.s32.totalorder %s249, %s250
    %p262 = scmp.eq.s32.totalorder %s25, 1
    %p263 = por %p261, %p262
    %p265 = scmp.ne.s32.totalorder %s250, %s264
    %p266 = scmp.eq.s32.totalorder %s25, 0
    %p267 = por %p265, %p266
    %s268 = ssub.s32 %s19, %s26
    %p269 = scmp.eq.s32.totalorder %s268, 0
    %s271 = sadd.s32 %s270, 1
    %s272 = scalar_select %p269, %s270, %s271
    %p275 = pneg %p269
    %p276 = scmp.eq.s32.totalorder %s19, 1
    %p277 = por %p275, %p276
    %p278 = scmp.ne.s32.totalorder %s270, %s273
    %p279 = scmp.eq.s32.totalorder %s19, 0
    %p280 = por %p278, %p279
    %p281 = scmp.ne.s32.totalorder %s270, %s273
    %p282 = scmp.eq.s32.totalorder %s24, 1
    %p283 = por %p281, %p282
    %p284 = scmp.ne.s32.totalorder %s273, %s274
    %p285 = scmp.eq.s32.totalorder %s24, 0
    %p286 = por %p284, %p285
    %p287 = scmp.ne.s32.totalorder %s273, %s274
    %p288 = scmp.eq.s32.totalorder %s25, 1
    %p289 = por %p287, %p288
    %p291 = scmp.ne.s32.totalorder %s274, %s290
    %p292 = scmp.eq.s32.totalorder %s25, 0
    %p293 = por %p291, %p292
    %s294 = ssub.s32 %s19, %s26
    %p295 = scmp.eq.s32.totalorder %s294, 0
    %s297 = sadd.s32 %s296, 1
    %s298 = scalar_select %p295, %s296, %s297
    %p301 = pneg %p295
    %p302 = scmp.eq.s32.totalorder %s19, 1
    %p303 = por %p301, %p302
    %p304 = scmp.ne.s32.totalorder %s296, %s299
    %p305 = scmp.eq.s32.totalorder %s19, 0
    %p306 = por %p304, %p305
    %p307 = scmp.ne.s32.totalorder %s296, %s299
    %p308 = scmp.eq.s32.totalorder %s24, 1
    %p309 = por %p307, %p308
    %p310 = scmp.ne.s32.totalorder %s299, %s300
    %p311 = scmp.eq.s32.totalorder %s24, 0
    %p312 = por %p310, %p311
    %p313 = scmp.ne.s32.totalorder %s299, %s300
    %p314 = scmp.eq.s32.totalorder %s25, 1
    %p315 = por %p313, %p314
    %p317 = scmp.ne.s32.totalorder %s300, %s316
    %p318 = scmp.eq.s32.totalorder %s25, 0
    %p319 = por %p317, %p318
    %p320 = scmp.le.s32.totalorder 1, %s19
    %p321 = scmp.lt.s32.totalorder %s19, 3
    %p322 = pnand %p320, %p321
    %p323 = pneg %p322
    // Predicated region
    $region9: #{_lambda_.4} parent=5 // pred_check
      _
    $region10: #{_lambda_.4} parent=5 // pred_check_branch
      %325 = sbr.rel (%p322) target = $region12
    $region11: #{_lambda_.4} parent=5 // pred_region
      %s326 = ssub.s32 %s19, 1
      // Predicated region
      $region13: #{_lambda_.4} parent=11 // pred_check
        %p327 = pneg %p92
      $region14: #{_lambda_.4} parent=11 // pred_check_branch
        %329 = sbr.rel (%p327) target = $region16
      $region15: #{_lambda_.4} parent=11 // pred_region
        _
      $region16: #{_lambda_.4} parent=11 // pred_fallthru
        _
      // Predicated region
      $region17: #{_lambda_.4} parent=11 // pred_check
        %p330 = pneg %p113
      $region18: #{_lambda_.4} parent=11 // pred_check_branch
        %332 = sbr.rel (%p330) target = $region20
      $region19: #{_lambda_.4} parent=11 // pred_region
        _
      $region20: #{_lambda_.4} parent=11 // pred_fallthru
        _
      // Predicated region
      $region21: #{_lambda_.4} parent=11 // pred_check
        %p333 = pneg %p134
      $region22: #{_lambda_.4} parent=11 // pred_check_branch
        %335 = sbr.rel (%p333) target = $region24
      $region23: #{_lambda_.4} parent=11 // pred_region
        _
      $region24: #{_lambda_.4} parent=11 // pred_fallthru
        _
      // Predicated region
      $region25: #{_lambda_.4} parent=11 // pred_check
        %p336 = pneg %p155
      $region26: #{_lambda_.4} parent=11 // pred_check_branch
        %338 = sbr.rel (%p336) target = $region28
      $region27: #{_lambda_.4} parent=11 // pred_region
        _
      $region28: #{_lambda_.4} parent=11 // pred_fallthru
        _
      // Predicated region
      $region29: #{_lambda_.4} parent=11 // pred_check
        %p339 = pneg %p176
      $region30: #{_lambda_.4} parent=11 // pred_check_branch
        %341 = sbr.rel (%p339) target = $region32
      $region31: #{_lambda_.4} parent=11 // pred_region
        _
      $region32: #{_lambda_.4} parent=11 // pred_fallthru
        _
      // Predicated region
      $region33: #{_lambda_.4} parent=11 // pred_check
        %p342 = pneg %p197
      $region34: #{_lambda_.4} parent=11 // pred_check_branch
        %344 = sbr.rel (%p342) target = $region36
      $region35: #{_lambda_.4} parent=11 // pred_region
        _
      $region36: #{_lambda_.4} parent=11 // pred_fallthru
        _
      // Predicated region
      $region37: #{_lambda_.4} parent=11 // pred_check
        %p345 = pneg %p218
      $region38: #{_lambda_.4} parent=11 // pred_check_branch
        %347 = sbr.rel (%p345) target = $region40
      $region39: #{_lambda_.4} parent=11 // pred_region
        _
      $region40: #{_lambda_.4} parent=11 // pred_fallthru
        _
      // Predicated region
      $region41: #{_lambda_.4} parent=11 // pred_check
        %p348 = pneg %p239
      $region42: #{_lambda_.4} parent=11 // pred_check_branch
        %350 = sbr.rel (%p348) target = $region44
      $region43: #{_lambda_.4} parent=11 // pred_region
        _
      $region44: #{_lambda_.4} parent=11 // pred_fallthru
        _
      // Predicated region
      $region45: #{_lambda_.4} parent=11 // pred_check
        %p351 = pneg %p260
      $region46: #{_lambda_.4} parent=11 // pred_check_branch
        %353 = sbr.rel (%p351) target = $region48
      $region47: #{_lambda_.4} parent=11 // pred_region
        _
      $region48: #{_lambda_.4} parent=11 // pred_fallthru
        _
    $region12: #{_lambda_.4} parent=5 // pred_fallthru
      _
    %p354 = scmp.lt.s32.totalorder %s19, 2
    // Predicated region
    $region49: #{_lambda_.4} parent=5 // pred_check
      %p355 = pneg %p354
    $region50: #{_lambda_.4} parent=5 // pred_check_branch
      %357 = sbr.rel (%p355) target = $region52
    $region51: #{_lambda_.4} parent=5 // pred_region
      // Predicated region
      $region53: #{_lambda_.4} parent=51 // pred_check
        %p358 = pneg %p39
      $region54: #{_lambda_.4} parent=51 // pred_check_branch
        %360 = sbr.rel (%p358) target = $region56
      $region55: #{_lambda_.4} parent=51 // pred_region
        %p361 = scmp.lt.s32.totalorder %s19, 1
        %s362 = scalar_select %p361, %s19, 1
        %s363 = smul.addr %s362, 8
        %s364 = smul.addr %s363, 8
        %s365 = scalar_lea.vmem %s0, %s364
      $region56: #{_lambda_.4} parent=51 // pred_fallthru
        _
      // Predicated region
      $region57: #{_lambda_.4} parent=51 // pred_check
        %p366 = pneg %p65
      $region58: #{_lambda_.4} parent=51 // pred_check_branch
        %368 = sbr.rel (%p366) target = $region60
      $region59: #{_lambda_.4} parent=51 // pred_region
        %p369 = scmp.lt.s32.totalorder %s19, 1
        %s370 = scalar_select %p369, %s19, 1
        %s371 = smul.addr %s370, 20
        %s372 = smul.addr %s371, 8
        %s373 = scalar_lea.vmem %s1, %s372
      $region60: #{_lambda_.4} parent=51 // pred_fallthru
        _
    $region52: #{_lambda_.4} parent=5 // pred_fallthru
      _
    %p374 = scmp.le.s32.totalorder 1, %s19
    %p375 = scmp.lt.s32.totalorder %s19, 3
    %p376 = pnand %p374, %p375
    %p377 = pneg %p376
    // Predicated region
    $region61: #{_lambda_.4} parent=5 // pred_check
      _
    $region62: #{_lambda_.4} parent=5 // pred_check_branch
      %379 = sbr.rel (%p376) target = $region64
    $region63: #{_lambda_.4} parent=5 // pred_region
      %s380 = ssub.s32 %s19, 1
      %p381 = scmp.lt.s32.totalorder %s24, 1
      %s382 = scalar_select %p381, %s24, 1
      %s383 = smul.addr %s382, 8
      %s384 = smul.addr %s383, 8
      %s385 = scalar_lea.vmem %s0, %s384
      %p386 = pneg %p45
      %p387 = pneg %p42
      %p388 = scmp.lt.s32.totalorder %s24, 1
      %s389 = scalar_select %p388, %s24, 1
      %s390 = smul.addr %s389, 20
      %s391 = smul.addr %s390, 8
      %s392 = scalar_lea.vmem %s1, %s391
      %p393 = pneg %p71
      %p394 = pneg %p68
      %p395 = pneg %p92
      %p396 = pneg %p89
      %p397 = pneg %p113
      %p398 = pneg %p110
      %p399 = pneg %p134
      %p400 = pneg %p131
      %p401 = pneg %p155
      %p402 = pneg %p152
      %p403 = pneg %p176
      %p404 = pneg %p173
      %p405 = pneg %p197
      %p406 = pneg %p194
      %p407 = pneg %p218
      %p408 = pneg %p215
      %p409 = pneg %p239
      %p410 = pneg %p236
      %p411 = pneg %p260
      %p412 = pneg %p257
      %p413 = pneg %p286
      %p414 = pneg %p283
      %p415 = scmp.lt.s32.totalorder %s24, 1
      %s416 = scalar_select %p415, %s24, 1
      %s417 = smul.addr %s416, 8
      %s418 = smul.addr %s417, 8
      %s419 = scalar_lea.vmem %s11, %s418
      %p420 = pneg %p312
      %p421 = pneg %p309
      %p422 = scmp.lt.s32.totalorder %s24, 1
      %s423 = scalar_select %p422, %s24, 1
      %s424 = scalar_lea.vmem %s12, %s423
      %p425 = scmp.lt.s32.totalorder %s24, 1
      %s426 = scalar_select %p425, %s24, 1
      %s427 = smul.addr %s426, 8
      %s428 = smul.addr %s427, 8
      %s429 = scalar_lea.vmem %s0, %s428
      %p430 = scmp.lt.s32.totalorder %s24, 1
      %s431 = scalar_select %p430, %s24, 1
      %s432 = smul.addr %s431, 20
      %s433 = smul.addr %s432, 8
      %s434 = scalar_lea.vmem %s1, %s433
      %p435 = scmp.lt.s32.totalorder %s24, 1
      %s436 = scalar_select %p435, %s24, 1
      %s437 = smul.addr %s436, 8
      %s438 = smul.addr %s437, 8
      %s439 = scalar_lea.vmem %s11, %s438
      %p440 = scmp.lt.s32.totalorder %s24, 1
      %s441 = scalar_select %p440, %s24, 1
      %s442 = scalar_lea.vmem %s12, %s441
      %v443 = vld [vmem:[%s429] sm:$0xff]
      %v444 = vld [vmem:[%s429 + $0x8] sm:$0xff]
      %v445 = vld [vmem:[%s429 + $0x10] sm:$0xff]
      %v446 = vld [vmem:[%s429 + $0x18] sm:$0xff]
      %v447 = vld [vmem:[%s429 + $0x20] sm:$0xff]
      %v448 = vld [vmem:[%s429 + $0x28] sm:$0xff]
      %v449 = vld [vmem:[%s429 + $0x30] sm:$0xff]
      %v450 = vld [vmem:[%s429 + $0x38] sm:$0xff]
      %v451 = vld [vmem:[%s2] sm:$0x1]
      %v453 = vlaneseq
      %v454 = vshrl.u32 %v453, 7
      %v455 = vsub.s32 0, %v454
      %v456 = vrot.slane %v451, %v455
      %v458 = vadd.f32 %v443, %v456
      %v459 = vadd.f32 %v444, %v456
      %v460 = vadd.f32 %v445, %v456
      %v461 = vadd.f32 %v446, %v456
      %v462 = vadd.f32 %v447, %v456
      %v463 = vadd.f32 %v448, %v456
      %v464 = vadd.f32 %v449, %v456
      %v465 = vadd.f32 %v450, %v456
      %v466 = vld [vmem:[%s3] sm:$0x1]
      %v468 = vlaneseq
      %v469 = vshrl.u32 %v468, 7
      %v470 = vsub.s32 0, %v469
      %v471 = vrot.slane %v466, %v470
      %v473 = vmul.f32 %v458, %v471
      %v474 = vmul.f32 %v459, %v471
      %v475 = vmul.f32 %v460, %v471
      %v476 = vmul.f32 %v461, %v471
      %v477 = vmul.f32 %v462, %v471
      %v478 = vmul.f32 %v463, %v471
      %v479 = vmul.f32 %v464, %v471
      %v480 = vmul.f32 %v465, %v471
      %v481 = vld [vmem:[%s4] sm:$0xff]
      %v482 = vld [vmem:[%s4 + $0x8] sm:$0xff]
      %vm483 = vcmask 130048
      %v485 = vsel %vm483, %v473, 0
      %v488 = vsel %vm483, %v474, 0
      %v491 = vsel %vm483, %v475, 0
      %v494 = vsel %vm483, %v476, 0
      %v497 = vsel %vm483, %v477, 0
      %v500 = vsel %vm483, %v478, 0
      %v503 = vsel %vm483, %v479, 0
      %v506 = vsel %vm483, %v480, 0
      %508 = vmatprep.subr.mxu0 0.0
      %509 = vmatpush1.msra.mxu0 %v481
      %510 = vmatprep.subr.mxu0 0.0
      %511 = vmatpush1.msra.mxu0 %v482
      %512 = vmatprep.subr.mxu0 0.0
      %513 = vmatpush1.msra.mxu0 0.0
      %514 = vmatprep.subr.mxu0 0.0
      %515 = vmatpush1.msra.mxu0 0.0
      %516 = vmatprep.subr.mxu0 0.0
      %517 = vmatpush1.msra.mxu0 0.0
      %518 = vmatprep.subr.mxu0 0.0
      %519 = vmatpush1.msra.mxu0 0.0
      %520 = vmatprep.subr.mxu0 0.0
      %521 = vmatpush1.msra.mxu0 0.0
      %522 = vmatprep.subr.mxu0 0.0
      %523 = vmatpush1.msra.mxu0 0.0
      %524 = vmatprep.subr.mxu0 0.0
      %525 = vmatpush1.msra.mxu0 0.0
      %526 = vmatprep.subr.mxu0 0.0
      %527 = vmatpush1.msra.mxu0 0.0
      %528 = vmatprep.subr.mxu0 0.0
      %529 = vmatpush1.msra.mxu0 0.0
      %530 = vmatprep.subr.mxu0 0.0
      %531 = vmatpush1.msra.mxu0 0.0
      %532 = vmatprep.subr.mxu0 0.0
      %533 = vmatpush1.msra.mxu0 0.0
      %534 = vmatprep.subr.mxu0 0.0
      %535 = vmatpush1.msra.mxu0 0.0
      %536 = vmatprep.subr.mxu0 0.0
      %537 = vmatpush1.msra.mxu0 0.0
      %538 = vmatprep.subr.mxu0 0.0
      %539 = vmatpush1.msra.mxu0 0.0
      %540 = vmatprep.subr.mxu0 0.0
      %541 = vmatpush1.msra.mxu0 0.0
      %542 = vmatprep.subr.mxu0 0.0
      %543 = vmatpush1.msra.mxu0 0.0
      %544 = vmatprep.subr.mxu0 0.0
      %545 = vmatpush1.msra.mxu0 0.0
      %546 = vmatprep.subr.mxu0 0.0
      %547 = vmatpush1.msra.mxu0 0.0
      %548 = vmatprep.subr.mxu0 0.0
      %549 = vmatpush1.msra.mxu0 0.0
      %550 = vmatprep.subr.mxu0 0.0
      %551 = vmatpush1.msra.mxu0 0.0
      %552 = vmatprep.subr.mxu0 0.0
      %553 = vmatpush1.msra.mxu0 0.0
      %554 = vmatprep.subr.mxu0 0.0
      %555 = vmatpush1.msra.mxu0 0.0
      %556 = vmatprep.subr.mxu0 0.0
      %557 = vmatpush1.msra.mxu0 0.0
      %558 = vmatprep.subr.mxu0 0.0
      %559 = vmatpush1.msra.mxu0 0.0
      %560 = vmatprep.subr.mxu0 0.0
      %561 = vmatpush1.msra.mxu0 0.0
      %562 = vmatprep.subr.mxu0 0.0
      %563 = vmatpush1.msra.mxu0 0.0
      %564 = vmatprep.subr.mxu0 0.0
      %565 = vmatpush1.msra.mxu0 0.0
      %566 = vmatprep.subr.mxu0 0.0
      %567 = vmatpush1.msra.mxu0 0.0
      %568 = vmatprep.subr.mxu0 0.0
      %569 = vmatpush1.msra.mxu0 0.0
      %570 = vmatprep.subr.mxu0 0.0
      %571 = vmatpush1.msra.mxu0 0.0
      %572 = vmatprep.mubr.f32.mxu0 0.0
      %573 = vmatmul.mubr.f32.gmra.mrb[0].mxu0 %v485
      %v574 = vpop.f32.mrb[0].mxu0
      %v575 = vadd.f32 0.0, %v574
      %v576 = vpop.f32.mrb[0].mxu0
      %577 = vmatprep.mubr.f32.mxu0 0.0
      %578 = vmatmul.mubr.f32.gmra.mrb[0].mxu0 %v488
      %v579 = vpop.f32.mrb[0].mxu0
      %v580 = vadd.f32 0.0, %v579
      %v581 = vpop.f32.mrb[0].mxu0
      %582 = vmatprep.mubr.f32.mxu0 0.0
      %583 = vmatmul.mubr.f32.gmra.mrb[0].mxu0 %v491
      %v584 = vpop.f32.mrb[0].mxu0
      %v585 = vadd.f32 0.0, %v584
      %v586 = vpop.f32.mrb[0].mxu0
      %587 = vmatprep.mubr.f32.mxu0 0.0
      %588 = vmatmul.mubr.f32.gmra.mrb[0].mxu0 %v494
      %v589 = vpop.f32.mrb[0].mxu0
      %v590 = vadd.f32 0.0, %v589
      %v591 = vpop.f32.mrb[0].mxu0
      %592 = vmatprep.mubr.f32.mxu0 0.0
      %593 = vmatmul.mubr.f32.gmra.mrb[0].mxu0 %v497
      %v594 = vpop.f32.mrb[0].mxu0
      %v595 = vadd.f32 0.0, %v594
      %v596 = vpop.f32.mrb[0].mxu0
      %597 = vmatprep.mubr.f32.mxu0 0.0
      %598 = vmatmul.mubr.f32.gmra.mrb[0].mxu0 %v500
      %v599 = vpop.f32.mrb[0].mxu0
      %v600 = vadd.f32 0.0, %v599
      %v601 = vpop.f32.mrb[0].mxu0
      %602 = vmatprep.mubr.f32.mxu0 0.0
      %603 = vmatmul.mubr.f32.gmra.mrb[0].mxu0 %v503
      %v604 = vpop.f32.mrb[0].mxu0
      %v605 = vadd.f32 0.0, %v604
      %v606 = vpop.f32.mrb[0].mxu0
      %607 = vmatprep.mubr.f32.mxu0 0.0
      %608 = vmatmul.mubr.f32.gmra.mrb[0].mxu0 %v506
      %v609 = vpop.f32.mrb[0].mxu0
      %v610 = vadd.f32 0.0, %v609
      %v611 = vpop.f32.mrb[0].mxu0
      %612 = vdwg.mxu0
      %vm613 = vcmask 64512
      %614 = vst.msk [vmem:[#allocation2] sm:$0xff] %vm613, 0.0
      %vm615 = vcmask 58368
      %616 = vst.msk [vmem:[#allocation2 + $0x8] sm:$0x3] %vm615, 0.0
      %617 = vst.msk [vmem:[#allocation2 + $0x10] sm:$0xff] %vm613, 0.0
      %618 = vst.msk [vmem:[#allocation2 + $0x18] sm:$0x3] %vm615, 0.0
      %619 = vst.msk [vmem:[#allocation2 + $0x20] sm:$0xff] %vm613, 0.0
      %620 = vst.msk [vmem:[#allocation2 + $0x28] sm:$0x3] %vm615, 0.0
      %621 = vst.msk [vmem:[#allocation2 + $0x30] sm:$0xff] %vm613, 0.0
      %622 = vst.msk [vmem:[#allocation2 + $0x38] sm:$0x3] %vm615, 0.0
      %623 = vst.msk [vmem:[#allocation2 + $0x40] sm:$0xff] %vm613, 0.0
      %624 = vst.msk [vmem:[#allocation2 + $0x48] sm:$0x3] %vm615, 0.0
      %625 = vst.msk [vmem:[#allocation2 + $0x50] sm:$0xff] %vm613, 0.0
      %626 = vst.msk [vmem:[#allocation2 + $0x58] sm:$0x3] %vm615, 0.0
      %627 = vst.msk [vmem:[#allocation2 + $0x60] sm:$0xff] %vm613, 0.0
      %628 = vst.msk [vmem:[#allocation2 + $0x68] sm:$0x3] %vm615, 0.0
      %629 = vst.msk [vmem:[#allocation2 + $0x70] sm:$0xff] %vm613, 0.0
      %630 = vst.msk [vmem:[#allocation2 + $0x78] sm:$0x3] %vm615, 0.0
      %631 = vst.msk [vmem:[#allocation2 + $0x80] sm:$0xff] %vm613, 0.0
      %632 = vst.msk [vmem:[#allocation2 + $0x88] sm:$0x3] %vm615, 0.0
      %633 = vst.msk [vmem:[#allocation2 + $0x90] sm:$0xff] %vm613, 0.0
      %634 = vst.msk [vmem:[#allocation2 + $0x98] sm:$0x3] %vm615, 0.0
      %s635 = scalar_lea.vmem [#allocation2], 16
      %636 = vst.msk [vmem:[%s635 + $0x1] sm:$0xff] %vm613, %v575
      %637 = vst.msk [vmem:[%s635 + $0x11] sm:$0xff] %vm613, %v580
      %638 = vst.msk [vmem:[%s635 + $0x21] sm:$0xff] %vm613, %v585
      %639 = vst.msk [vmem:[%s635 + $0x31] sm:$0xff] %vm613, %v590
      %640 = vst.msk [vmem:[%s635 + $0x41] sm:$0xff] %vm613, %v595
      %641 = vst.msk [vmem:[%s635 + $0x51] sm:$0xff] %vm613, %v600
      %642 = vst.msk [vmem:[%s635 + $0x61] sm:$0xff] %vm613, %v605
      %643 = vst.msk [vmem:[%s635 + $0x71] sm:$0xff] %vm613, %v610
      %v644 = vld [vmem:[#allocation2] sm:$0xff]
      %v645 = vld [vmem:[#allocation2 + $0x8] sm:$0x3]
      %v646 = vld [vmem:[#allocation2 + $0x10] sm:$0xff]
      %v647 = vld [vmem:[#allocation2 + $0x18] sm:$0x3]
      %v648 = vld [vmem:[#allocation2 + $0x20] sm:$0xff]
      %v649 = vld [vmem:[#allocation2 + $0x28] sm:$0x3]
      %v650 = vld [vmem:[#allocation2 + $0x30] sm:$0xff]
      %v651 = vld [vmem:[#allocation2 + $0x38] sm:$0x3]
      %v652 = vld [vmem:[#allocation2 + $0x40] sm:$0xff]
      %v653 = vld [vmem:[#allocation2 + $0x48] sm:$0x3]
      %v654 = vld [vmem:[#allocation2 + $0x50] sm:$0xff]
      %v655 = vld [vmem:[#allocation2 + $0x58] sm:$0x3]
      %v656 = vld [vmem:[#allocation2 + $0x60] sm:$0xff]
      %v657 = vld [vmem:[#allocation2 + $0x68] sm:$0x3]
      %v658 = vld [vmem:[#allocation2 + $0x70] sm:$0xff]
      %v659 = vld [vmem:[#allocation2 + $0x78] sm:$0x3]
      %v660 = vld [vmem:[#allocation2 + $0x80] sm:$0xff]
      %v661 = vld [vmem:[#allocation2 + $0x88] sm:$0x3]
      %v662 = vld [vmem:[#allocation2 + $0x90] sm:$0xff]
      %v663 = vld [vmem:[#allocation2 + $0x98] sm:$0x3]
      %v664 = vld [vmem:[%s434] sm:$0xff]
      %v665 = vld [vmem:[%s434 + $0x8] sm:$0x3]
      %v666 = vld [vmem:[%s434 + $0x10] sm:$0xff]
      %v667 = vld [vmem:[%s434 + $0x18] sm:$0x3]
      %v668 = vld [vmem:[%s434 + $0x20] sm:$0xff]
      %v669 = vld [vmem:[%s434 + $0x28] sm:$0x3]
      %v670 = vld [vmem:[%s434 + $0x30] sm:$0xff]
      %v671 = vld [vmem:[%s434 + $0x38] sm:$0x3]
      %v672 = vld [vmem:[%s434 + $0x40] sm:$0xff]
      %v673 = vld [vmem:[%s434 + $0x48] sm:$0x3]
      %v674 = vld [vmem:[%s434 + $0x50] sm:$0xff]
      %v675 = vld [vmem:[%s434 + $0x58] sm:$0x3]
      %v676 = vld [vmem:[%s434 + $0x60] sm:$0xff]
      %v677 = vld [vmem:[%s434 + $0x68] sm:$0x3]
      %v678 = vld [vmem:[%s434 + $0x70] sm:$0xff]
      %v679 = vld [vmem:[%s434 + $0x78] sm:$0x3]
      %v680 = vld [vmem:[%s434 + $0x80] sm:$0xff]
      %v681 = vld [vmem:[%s434 + $0x88] sm:$0x3]
      %v682 = vld [vmem:[%s434 + $0x90] sm:$0xff]
      %v683 = vld [vmem:[%s434 + $0x98] sm:$0x3]
      %v684 = vld [vmem:[%s5] sm:$0xff]
      %v685 = vld [vmem:[%s6] sm:$0xf]
      %vm686 = vcmask 31744
      %v688 = vsel %vm686, %v664, 0
      %v691 = vsel %vm686, %v666, 0
      %v694 = vsel %vm686, %v668, 0
      %v697 = vsel %vm686, %v670, 0
      %v700 = vsel %vm686, %v672, 0
      %v703 = vsel %vm686, %v674, 0
      %v706 = vsel %vm686, %v676, 0
      %v709 = vsel %vm686, %v678, 0
      %vm711 = vcmask 1043456
      %v713 = vsel %vm711, %v685, 0
      %715 = vmatprep.subr.mxu0 0.0
      %716 = vmatpush1.msra.mxu0 %v713
      %717 = vmatprep.subr.mxu0 0.0
      %718 = vmatpush1.msra.mxu0 0.0
      %719 = vmatprep.subr.mxu0 0.0
      %720 = vmatpush1.msra.mxu0 0.0
      %721 = vmatprep.subr.mxu0 0.0
      %722 = vmatpush1.msra.mxu0 0.0
      %723 = vmatprep.subr.mxu0 0.0
      %724 = vmatpush1.msra.mxu0 0.0
      %725 = vmatprep.subr.mxu0 0.0
      %726 = vmatpush1.msra.mxu0 0.0
      %727 = vmatprep.subr.mxu0 0.0
      %728 = vmatpush1.msra.mxu0 0.0
      %729 = vmatprep.subr.mxu0 0.0
      %730 = vmatpush1.msra.mxu0 0.0
      %731 = vmatprep.subr.mxu0 0.0
      %732 = vmatpush1.msra.mxu0 0.0
      %733 = vmatprep.subr.mxu0 0.0
      %734 = vmatpush1.msra.mxu0 0.0
      %735 = vmatprep.subr.mxu0 0.0
      %736 = vmatpush1.msra.mxu0 0.0
      %737 = vmatprep.subr.mxu0 0.0
      %738 = vmatpush1.msra.mxu0 0.0
      %739 = vmatprep.subr.mxu0 0.0
      %740 = vmatpush1.msra.mxu0 0.0
      %741 = vmatprep.subr.mxu0 0.0
      %742 = vmatpush1.msra.mxu0 0.0
      %743 = vmatprep.subr.mxu0 0.0
      %744 = vmatpush1.msra.mxu0 0.0
      %745 = vmatprep.subr.mxu0 0.0
      %746 = vmatpush1.msra.mxu0 0.0
      %747 = vmatprep.subr.mxu0 0.0
      %748 = vmatpush1.msra.mxu0 0.0
      %749 = vmatprep.subr.mxu0 0.0
      %750 = vmatpush1.msra.mxu0 0.0
      %751 = vmatprep.subr.mxu0 0.0
      %752 = vmatpush1.msra.mxu0 0.0
      %753 = vmatprep.subr.mxu0 0.0
      %754 = vmatpush1.msra.mxu0 0.0
      %755 = vmatprep.subr.mxu0 0.0
      %756 = vmatpush1.msra.mxu0 0.0
      %757 = vmatprep.subr.mxu0 0.0
      %758 = vmatpush1.msra.mxu0 0.0
      %759 = vmatprep.subr.mxu0 0.0
      %760 = vmatpush1.msra.mxu0 0.0
      %761 = vmatprep.subr.mxu0 0.0
      %762 = vmatpush1.msra.mxu0 0.0
      %763 = vmatprep.subr.mxu0 0.0
      %764 = vmatpush1.msra.mxu0 0.0
      %765 = vmatprep.subr.mxu0 0.0
      %766 = vmatpush1.msra.mxu0 0.0
      %767 = vmatprep.subr.mxu0 0.0
      %768 = vmatpush1.msra.mxu0 0.0
      %769 = vmatprep.subr.mxu0 0.0
      %770 = vmatpush1.msra.mxu0 0.0
      %771 = vmatprep.subr.mxu0 0.0
      %772 = vmatpush1.msra.mxu0 0.0
      %773 = vmatprep.subr.mxu0 0.0
      %774 = vmatpush1.msra.mxu0 0.0
      %775 = vmatprep.subr.mxu0 0.0
      %776 = vmatpush1.msra.mxu0 0.0
      %777 = vmatprep.subr.mxu0 0.0
      %778 = vmatpush1.msra.mxu0 0.0
      %779 = vmatprep.mubr.f32.mxu0 0.0
      %780 = vmatmul.mubr.f32.gmra.mrb[0].mxu0 %v688
      %v781 = vpop.f32.mrb[0].mxu0
      %v782 = vadd.f32 0.0, %v781
      %v783 = vpop.f32.mrb[0].mxu0
      %784 = vmatprep.mubr.f32.mxu0 0.0
      %785 = vmatmul.mubr.f32.gmra.mrb[0].mxu0 %v691
      %v786 = vpop.f32.mrb[0].mxu0
      %v787 = vadd.f32 0.0, %v786
      %v788 = vpop.f32.mrb[0].mxu0
      %789 = vmatprep.mubr.f32.mxu0 0.0
      %790 = vmatmul.mubr.f32.gmra.mrb[0].mxu0 %v694
      %v791 = vpop.f32.mrb[0].mxu0
      %v792 = vadd.f32 0.0, %v791
      %v793 = vpop.f32.mrb[0].mxu0
      %794 = vmatprep.mubr.f32.mxu0 0.0
      %795 = vmatmul.mubr.f32.gmra.mrb[0].mxu0 %v697
      %v796 = vpop.f32.mrb[0].mxu0
      %v797 = vadd.f32 0.0, %v796
      %v798 = vpop.f32.mrb[0].mxu0
      %799 = vmatprep.mubr.f32.mxu0 0.0
      %800 = vmatmul.mubr.f32.gmra.mrb[0].mxu0 %v700
      %v801 = vpop.f32.mrb[0].mxu0
      %v802 = vadd.f32 0.0, %v801
      %v803 = vpop.f32.mrb[0].mxu0
      %804 = vmatprep.mubr.f32.mxu0 0.0
      %805 = vmatmul.mubr.f32.gmra.mrb[0].mxu0 %v703
      %v806 = vpop.f32.mrb[0].mxu0
      %v807 = vadd.f32 0.0, %v806
      %v808 = vpop.f32.mrb[0].mxu0
      %809 = vmatprep.mubr.f32.mxu0 0.0
      %810 = vmatmul.mubr.f32.gmra.mrb[0].mxu0 %v706
      %v811 = vpop.f32.mrb[0].mxu0
      %v812 = vadd.f32 0.0, %v811
      %v813 = vpop.f32.mrb[0].mxu0
      %814 = vmatprep.mubr.f32.mxu0 0.0
      %815 = vmatmul.mubr.f32.gmra.mrb[0].mxu0 %v709
      %v816 = vpop.f32.mrb[0].mxu0
      %v817 = vadd.f32 0.0, %v816
      %v818 = vpop.f32.mrb[0].mxu0
      %819 = vdwg.mxu0
      %v821 = vsel %vm613, %v644, 0
      %v824 = vsel %vm613, %v646, 0
      %v827 = vsel %vm613, %v648, 0
      %v830 = vsel %vm613, %v650, 0
      %v833 = vsel %vm613, %v652, 0
      %v836 = vsel %vm613, %v654, 0
      %v839 = vsel %vm613, %v656, 0
      %v842 = vsel %vm613, %v658, 0
      %844 = vmatprep.subr.mxu0 0.0
      %845 = vmatpush1.msra.mxu0 %v684
      %846 = vmatprep.subr.mxu0 0.0
      %847 = vmatpush1.msra.mxu0 0.0
      %848 = vmatprep.subr.mxu0 0.0
      %849 = vmatpush1.msra.mxu0 0.0
      %850 = vmatprep.subr.mxu0 0.0
      %851 = vmatpush1.msra.mxu0 0.0
      %852 = vmatprep.subr.mxu0 0.0
      %853 = vmatpush1.msra.mxu0 0.0
      %854 = vmatprep.subr.mxu0 0.0
      %855 = vmatpush1.msra.mxu0 0.0
      %856 = vmatprep.subr.mxu0 0.0
      %857 = vmatpush1.msra.mxu0 0.0
      %858 = vmatprep.subr.mxu0 0.0
      %859 = vmatpush1.msra.mxu0 0.0
      %860 = vmatprep.subr.mxu0 0.0
      %861 = vmatpush1.msra.mxu0 0.0
      %862 = vmatprep.subr.mxu0 0.0
      %863 = vmatpush1.msra.mxu0 0.0
      %864 = vmatprep.subr.mxu0 0.0
      %865 = vmatpush1.msra.mxu0 0.0
      %866 = vmatprep.subr.mxu0 0.0
      %867 = vmatpush1.msra.mxu0 0.0
      %868 = vmatprep.subr.mxu0 0.0
      %869 = vmatpush1.msra.mxu0 0.0
      %870 = vmatprep.subr.mxu0 0.0
      %871 = vmatpush1.msra.mxu0 0.0
      %872 = vmatprep.subr.mxu0 0.0
      %873 = vmatpush1.msra.mxu0 0.0
      %874 = vmatprep.subr.mxu0 0.0
      %875 = vmatpush1.msra.mxu0 0.0
      %876 = vmatprep.subr.mxu0 0.0
      %877 = vmatpush1.msra.mxu0 0.0
      %878 = vmatprep.subr.mxu0 0.0
      %879 = vmatpush1.msra.mxu0 0.0
      %880 = vmatprep.subr.mxu0 0.0
      %881 = vmatpush1.msra.mxu0 0.0
      %882 = vmatprep.subr.mxu0 0.0
      %883 = vmatpush1.msra.mxu0 0.0
      %884 = vmatprep.subr.mxu0 0.0
      %885 = vmatpush1.msra.mxu0 0.0
      %886 = vmatprep.subr.mxu0 0.0
      %887 = vmatpush1.msra.mxu0 0.0
      %888 = vmatprep.subr.mxu0 0.0
      %889 = vmatpush1.msra.mxu0 0.0
      %890 = vmatprep.subr.mxu0 0.0
      %891 = vmatpush1.msra.mxu0 0.0
      %892 = vmatprep.subr.mxu0 0.0
      %893 = vmatpush1.msra.mxu0 0.0
      %894 = vmatprep.subr.mxu0 0.0
      %895 = vmatpush1.msra.mxu0 0.0
      %896 = vmatprep.subr.mxu0 0.0
      %897 = vmatpush1.msra.mxu0 0.0
      %898 = vmatprep.subr.mxu0 0.0
      %899 = vmatpush1.msra.mxu0 0.0
      %900 = vmatprep.subr.mxu0 0.0
      %901 = vmatpush1.msra.mxu0 0.0
      %902 = vmatprep.subr.mxu0 0.0
      %903 = vmatpush1.msra.mxu0 0.0
      %904 = vmatprep.subr.mxu0 0.0
      %905 = vmatpush1.msra.mxu0 0.0
      %906 = vmatprep.subr.mxu0 0.0
      %907 = vmatpush1.msra.mxu0 0.0
      %908 = vmatprep.mubr.f32.mxu0 0.0
      %909 = vmatmul.mubr.f32.gmra.mrb[0].mxu0 %v821
      %v910 = vpop.f32.mrb[0].mxu0
      %v911 = vadd.f32 %v782, %v910
      %v912 = vpop.f32.mrb[0].mxu0
      %913 = vmatprep.mubr.f32.mxu0 0.0
      %914 = vmatmul.mubr.f32.gmra.mrb[0].mxu0 %v824
      %v915 = vpop.f32.mrb[0].mxu0
      %v916 = vadd.f32 %v787, %v915
      %v917 = vpop.f32.mrb[0].mxu0
      %918 = vmatprep.mubr.f32.mxu0 0.0
      %919 = vmatmul.mubr.f32.gmra.mrb[0].mxu0 %v827
      %v920 = vpop.f32.mrb[0].mxu0
      %v921 = vadd.f32 %v792, %v920
      %v922 = vpop.f32.mrb[0].mxu0
      %923 = vmatprep.mubr.f32.mxu0 0.0
      %924 = vmatmul.mubr.f32.gmra.mrb[0].mxu0 %v830
      %v925 = vpop.f32.mrb[0].mxu0
      %v926 = vadd.f32 %v797, %v925
      %v927 = vpop.f32.mrb[0].mxu0
      %928 = vmatprep.mubr.f32.mxu0 0.0
      %929 = vmatmul.mubr.f32.gmra.mrb[0].mxu0 %v833
      %v930 = vpop.f32.mrb[0].mxu0
      %v931 = vadd.f32 %v802, %v930
      %v932 = vpop.f32.mrb[0].mxu0
      %933 = vmatprep.mubr.f32.mxu0 0.0
      %934 = vmatmul.mubr.f32.gmra.mrb[0].mxu0 %v836
      %v935 = vpop.f32.mrb[0].mxu0
      %v936 = vadd.f32 %v807, %v935
      %v937 = vpop.f32.mrb[0].mxu0
      %938 = vmatprep.mubr.f32.mxu0 0.0
      %939 = vmatmul.mubr.f32.gmra.mrb[0].mxu0 %v839
      %v940 = vpop.f32.mrb[0].mxu0
      %v941 = vadd.f32 %v812, %v940
      %v942 = vpop.f32.mrb[0].mxu0
      %943 = vmatprep.mubr.f32.mxu0 0.0
      %944 = vmatmul.mubr.f32.gmra.mrb[0].mxu0 %v842
      %v945 = vpop.f32.mrb[0].mxu0
      %v946 = vadd.f32 %v817, %v945
      %v947 = vpop.f32.mrb[0].mxu0
      %948 = vdwg.mxu0
      %vm957 = vcmask 1046528
      %v958 = vrot.slane %v644, 1
      %v959 = vrot.slane %v645, 1
      %v960 = vsel %vm957, %v958, %v959
      %v961 = vrot.slane %v646, 1
      %v962 = vrot.slane %v647, 1
      %v963 = vsel %vm957, %v961, %v962
      %v964 = vrot.slane %v648, 1
      %v965 = vrot.slane %v649, 1
      %v966 = vsel %vm957, %v964, %v965
      %v967 = vrot.slane %v650, 1
      %v968 = vrot.slane %v651, 1
      %v969 = vsel %vm957, %v967, %v968
      %v970 = vrot.slane %v652, 1
      %v971 = vrot.slane %v653, 1
      %v972 = vsel %vm957, %v970, %v971
      %v973 = vrot.slane %v654, 1
      %v974 = vrot.slane %v655, 1
      %v975 = vsel %vm957, %v973, %v974
      %v976 = vrot.slane %v656, 1
      %v977 = vrot.slane %v657, 1
      %v978 = vsel %vm957, %v976, %v977
      %v979 = vrot.slane %v658, 1
      %v980 = vrot.slane %v659, 1
      %v981 = vsel %vm957, %v979, %v980
      %v990 = vrot.slane %v664, 1
      %v991 = vrot.slane %v665, 1
      %v992 = vsel %vm957, %v990, %v991
      %v993 = vrot.slane %v666, 1
      %v994 = vrot.slane %v667, 1
      %v995 = vsel %vm957, %v993, %v994
      %v996 = vrot.slane %v668, 1
      %v997 = vrot.slane %v669, 1
      %v998 = vsel %vm957, %v996, %v997
      %v999 = vrot.slane %v670, 1
      %v1000 = vrot.slane %v671, 1
      %v1001 = vsel %vm957, %v999, %v1000
      %v1002 = vrot.slane %v672, 1
      %v1003 = vrot.slane %v673, 1
      %v1004 = vsel %vm957, %v1002, %v1003
      %v1005 = vrot.slane %v674, 1
      %v1006 = vrot.slane %v675, 1
      %v1007 = vsel %vm957, %v1005, %v1006
      %v1008 = vrot.slane %v676, 1
      %v1009 = vrot.slane %v677, 1
      %v1010 = vsel %vm957, %v1008, %v1009
      %v1011 = vrot.slane %v678, 1
      %v1012 = vrot.slane %v679, 1
      %v1013 = vsel %vm957, %v1011, %v1012
      %s1014 = scalar_lea.vmem %s5, 8
      %v1015 = vld [vmem:[%s1014] sm:$0xff]
      %v1016 = vsel %vm613, %v960, 0
      %v1018 = vsel %vm613, %v963, 0
      %v1020 = vsel %vm613, %v966, 0
      %v1022 = vsel %vm613, %v969, 0
      %v1024 = vsel %vm613, %v972, 0
      %v1026 = vsel %vm613, %v975, 0
      %v1028 = vsel %vm613, %v978, 0
      %v1030 = vsel %vm613, %v981, 0
      %1032 = vmatprep.subr.mxu0 0.0
      %1033 = vmatpush1.msra.mxu0 %v1015
      %1034 = vmatprep.subr.mxu0 0.0
      %1035 = vmatpush1.msra.mxu0 0.0
      %1036 = vmatprep.subr.mxu0 0.0
      %1037 = vmatpush1.msra.mxu0 0.0
      %1038 = vmatprep.subr.mxu0 0.0
      %1039 = vmatpush1.msra.mxu0 0.0
      %1040 = vmatprep.subr.mxu0 0.0
      %1041 = vmatpush1.msra.mxu0 0.0
      %1042 = vmatprep.subr.mxu0 0.0
      %1043 = vmatpush1.msra.mxu0 0.0
      %1044 = vmatprep.subr.mxu0 0.0
      %1045 = vmatpush1.msra.mxu0 0.0
      %1046 = vmatprep.subr.mxu0 0.0
      %1047 = vmatpush1.msra.mxu0 0.0
      %1048 = vmatprep.subr.mxu0 0.0
      %1049 = vmatpush1.msra.mxu0 0.0
      %1050 = vmatprep.subr.mxu0 0.0
      %1051 = vmatpush1.msra.mxu0 0.0
      %1052 = vmatprep.subr.mxu0 0.0
      %1053 = vmatpush1.msra.mxu0 0.0
      %1054 = vmatprep.subr.mxu0 0.0
      %1055 = vmatpush1.msra.mxu0 0.0
      %1056 = vmatprep.subr.mxu0 0.0
      %1057 = vmatpush1.msra.mxu0 0.0
      %1058 = vmatprep.subr.mxu0 0.0
      %1059 = vmatpush1.msra.mxu0 0.0
      %1060 = vmatprep.subr.mxu0 0.0
      %1061 = vmatpush1.msra.mxu0 0.0
      %1062 = vmatprep.subr.mxu0 0.0
      %1063 = vmatpush1.msra.mxu0 0.0
      %1064 = vmatprep.subr.mxu0 0.0
      %1065 = vmatpush1.msra.mxu0 0.0
      %1066 = vmatprep.subr.mxu0 0.0
      %1067 = vmatpush1.msra.mxu0 0.0
      %1068 = vmatprep.subr.mxu0 0.0
      %1069 = vmatpush1.msra.mxu0 0.0
      %1070 = vmatprep.subr.mxu0 0.0
      %1071 = vmatpush1.msra.mxu0 0.0
      %1072 = vmatprep.subr.mxu0 0.0
      %1073 = vmatpush1.msra.mxu0 0.0
      %1074 = vmatprep.subr.mxu0 0.0
      %1075 = vmatpush1.msra.mxu0 0.0
      %1076 = vmatprep.subr.mxu0 0.0
      %1077 = vmatpush1.msra.mxu0 0.0
      %1078 = vmatprep.subr.mxu0 0.0
      %1079 = vmatpush1.msra.mxu0 0.0
      %1080 = vmatprep.subr.mxu0 0.0
      %1081 = vmatpush1.msra.mxu0 0.0
      %1082 = vmatprep.subr.mxu0 0.0
      %1083 = vmatpush1.msra.mxu0 0.0
      %1084 = vmatprep.subr.mxu0 0.0
      %1085 = vmatpush1.msra.mxu0 0.0
      %1086 = vmatprep.subr.mxu0 0.0
      %1087 = vmatpush1.msra.mxu0 0.0
      %1088 = vmatprep.subr.mxu0 0.0
      %1089 = vmatpush1.msra.mxu0 0.0
      %1090 = vmatprep.subr.mxu0 0.0
      %1091 = vmatpush1.msra.mxu0 0.0
      %1092 = vmatprep.subr.mxu0 0.0
      %1093 = vmatpush1.msra.mxu0 0.0
      %1094 = vmatprep.subr.mxu0 0.0
      %1095 = vmatpush1.msra.mxu0 0.0
      %1096 = vmatprep.mubr.f32.mxu0 0.0
      %1097 = vmatmul.mubr.f32.gmra.mrb[0].mxu0 %v1016
      %v1098 = vpop.f32.mrb[0].mxu0
      %v1099 = vadd.f32 0.0, %v1098
      %v1100 = vpop.f32.mrb[0].mxu0
      %1101 = vmatprep.mubr.f32.mxu0 0.0
      %1102 = vmatmul.mubr.f32.gmra.mrb[0].mxu0 %v1018
      %v1103 = vpop.f32.mrb[0].mxu0
      %v1104 = vadd.f32 0.0, %v1103
      %v1105 = vpop.f32.mrb[0].mxu0
      %1106 = vmatprep.mubr.f32.mxu0 0.0
      %1107 = vmatmul.mubr.f32.gmra.mrb[0].mxu0 %v1020
      %v1108 = vpop.f32.mrb[0].mxu0
      %v1109 = vadd.f32 0.0, %v1108
      %v1110 = vpop.f32.mrb[0].mxu0
      %1111 = vmatprep.mubr.f32.mxu0 0.0
      %1112 = vmatmul.mubr.f32.gmra.mrb[0].mxu0 %v1022
      %v1113 = vpop.f32.mrb[0].mxu0
      %v1114 = vadd.f32 0.0, %v1113
      %v1115 = vpop.f32.mrb[0].mxu0
      %1116 = vmatprep.mubr.f32.mxu0 0.0
      %1117 = vmatmul.mubr.f32.gmra.mrb[0].mxu0 %v1024
      %v1118 = vpop.f32.mrb[0].mxu0
      %v1119 = vadd.f32 0.0, %v1118
      %v1120 = vpop.f32.mrb[0].mxu0
      %1121 = vmatprep.mubr.f32.mxu0 0.0
      %1122 = vmatmul.mubr.f32.gmra.mrb[0].mxu0 %v1026
      %v1123 = vpop.f32.mrb[0].mxu0
      %v1124 = vadd.f32 0.0, %v1123
      %v1125 = vpop.f32.mrb[0].mxu0
      %1126 = vmatprep.mubr.f32.mxu0 0.0
      %1127 = vmatmul.mubr.f32.gmra.mrb[0].mxu0 %v1028
      %v1128 = vpop.f32.mrb[0].mxu0
      %v1129 = vadd.f32 0.0, %v1128
      %v1130 = vpop.f32.mrb[0].mxu0
      %1131 = vmatprep.mubr.f32.mxu0 0.0
      %1132 = vmatmul.mubr.f32.gmra.mrb[0].mxu0 %v1030
      %v1133 = vpop.f32.mrb[0].mxu0
      %v1134 = vadd.f32 0.0, %v1133
      %v1135 = vpop.f32.mrb[0].mxu0
      %1136 = vdwg.mxu0
      %v1137 = vadd.f32 %v911, %v1099
      %v1138 = vadd.f32 %v916, %v1104
      %v1139 = vadd.f32 %v921, %v1109
      %v1140 = vadd.f32 %v926, %v1114
      %v1141 = vadd.f32 %v931, %v1119
      %v1142 = vadd.f32 %v936, %v1124
      %v1143 = vadd.f32 %v941, %v1129
      %v1144 = vadd.f32 %v946, %v1134
      %s1145 = scalar_lea.vmem %s6, 4
      %v1146 = vld [vmem:[%s1145] sm:$0xf]
      %v1147 = vsel %vm686, %v992, 0
      %v1149 = vsel %vm686, %v995, 0
      %v1151 = vsel %vm686, %v998, 0
      %v1153 = vsel %vm686, %v1001, 0
      %v1155 = vsel %vm686, %v1004, 0
      %v1157 = vsel %vm686, %v1007, 0
      %v1159 = vsel %vm686, %v1010, 0
      %v1161 = vsel %vm686, %v1013, 0
      %v1164 = vsel %vm711, %v1146, 0
      %1166 = vmatprep.subr.mxu0 0.0
      %1167 = vmatpush1.msra.mxu0 %v1164
      %1168 = vmatprep.subr.mxu0 0.0
      %1169 = vmatpush1.msra.mxu0 0.0
      %1170 = vmatprep.subr.mxu0 0.0
      %1171 = vmatpush1.msra.mxu0 0.0
      %1172 = vmatprep.subr.mxu0 0.0
      %1173 = vmatpush1.msra.mxu0 0.0
      %1174 = vmatprep.subr.mxu0 0.0
      %1175 = vmatpush1.msra.mxu0 0.0
      %1176 = vmatprep.subr.mxu0 0.0
      %1177 = vmatpush1.msra.mxu0 0.0
      %1178 = vmatprep.subr.mxu0 0.0
      %1179 = vmatpush1.msra.mxu0 0.0
      %1180 = vmatprep.subr.mxu0 0.0
      %1181 = vmatpush1.msra.mxu0 0.0
      %1182 = vmatprep.subr.mxu0 0.0
      %1183 = vmatpush1.msra.mxu0 0.0
      %1184 = vmatprep.subr.mxu0 0.0
      %1185 = vmatpush1.msra.mxu0 0.0
      %1186 = vmatprep.subr.mxu0 0.0
      %1187 = vmatpush1.msra.mxu0 0.0
      %1188 = vmatprep.subr.mxu0 0.0
      %1189 = vmatpush1.msra.mxu0 0.0
      %1190 = vmatprep.subr.mxu0 0.0
      %1191 = vmatpush1.msra.mxu0 0.0
      %1192 = vmatprep.subr.mxu0 0.0
      %1193 = vmatpush1.msra.mxu0 0.0
      %1194 = vmatprep.subr.mxu0 0.0
      %1195 = vmatpush1.msra.mxu0 0.0
      %1196 = vmatprep.subr.mxu0 0.0
      %1197 = vmatpush1.msra.mxu0 0.0
      %1198 = vmatprep.subr.mxu0 0.0
      %1199 = vmatpush1.msra.mxu0 0.0
      %1200 = vmatprep.subr.mxu0 0.0
      %1201 = vmatpush1.msra.mxu0 0.0
      %1202 = vmatprep.subr.mxu0 0.0
      %1203 = vmatpush1.msra.mxu0 0.0
      %1204 = vmatprep.subr.mxu0 0.0
      %1205 = vmatpush1.msra.mxu0 0.0
      %1206 = vmatprep.subr.mxu0 0.0
      %1207 = vmatpush1.msra.mxu0 0.0
      %1208 = vmatprep.subr.mxu0 0.0
      %1209 = vmatpush1.msra.mxu0 0.0
      %1210 = vmatprep.subr.mxu0 0.0
      %1211 = vmatpush1.msra.mxu0 0.0
      %1212 = vmatprep.subr.mxu0 0.0
      %1213 = vmatpush1.msra.mxu0 0.0
      %1214 = vmatprep.subr.mxu0 0.0
      %1215 = vmatpush1.msra.mxu0 0.0
      %1216 = vmatprep.subr.mxu0 0.0
      %1217 = vmatpush1.msra.mxu0 0.0
      %1218 = vmatprep.subr.mxu0 0.0
      %1219 = vmatpush1.msra.mxu0 0.0
      %1220 = vmatprep.subr.mxu0 0.0
      %1221 = vmatpush1.msra.mxu0 0.0
      %1222 = vmatprep.subr.mxu0 0.0
      %1223 = vmatpush1.msra.mxu0 0.0
      %1224 = vmatprep.subr.mxu0 0.0
      %1225 = vmatpush1.msra.mxu0 0.0
      %1226 = vmatprep.subr.mxu0 0.0
      %1227 = vmatpush1.msra.mxu0 0.0
      %1228 = vmatprep.subr.mxu0 0.0
      %1229 = vmatpush1.msra.mxu0 0.0
      %1230 = vmatprep.mubr.f32.mxu0 0.0
      %1231 = vmatmul.mubr.f32.gmra.mrb[0].mxu0 %v1147
      %v1232 = vpop.f32.mrb[0].mxu0
      %v1233 = vadd.f32 0.0, %v1232
      %v1234 = vpop.f32.mrb[0].mxu0
      %1235 = vmatprep.mubr.f32.mxu0 0.0
      %1236 = vmatmul.mubr.f32.gmra.mrb[0].mxu0 %v1149
      %v1237 = vpop.f32.mrb[0].mxu0
      %v1238 = vadd.f32 0.0, %v1237
      %v1239 = vpop.f32.mrb[0].mxu0
      %1240 = vmatprep.mubr.f32.mxu0 0.0
      %1241 = vmatmul.mubr.f32.gmra.mrb[0].mxu0 %v1151
      %v1242 = vpop.f32.mrb[0].mxu0
      %v1243 = vadd.f32 0.0, %v1242
      %v1244 = vpop.f32.mrb[0].mxu0
      %1245 = vmatprep.mubr.f32.mxu0 0.0
      %1246 = vmatmul.mubr.f32.gmra.mrb[0].mxu0 %v1153
      %v1247 = vpop.f32.mrb[0].mxu0
      %v1248 = vadd.f32 0.0, %v1247
      %v1249 = vpop.f32.mrb[0].mxu0
      %1250 = vmatprep.mubr.f32.mxu0 0.0
      %1251 = vmatmul.mubr.f32.gmra.mrb[0].mxu0 %v1155
      %v1252 = vpop.f32.mrb[0].mxu0
      %v1253 = vadd.f32 0.0, %v1252
      %v1254 = vpop.f32.mrb[0].mxu0
      %1255 = vmatprep.mubr.f32.mxu0 0.0
      %1256 = vmatmul.mubr.f32.gmra.mrb[0].mxu0 %v1157
      %v1257 = vpop.f32.mrb[0].mxu0
      %v1258 = vadd.f32 0.0, %v1257
      %v1259 = vpop.f32.mrb[0].mxu0
      %1260 = vmatprep.mubr.f32.mxu0 0.0
      %1261 = vmatmul.mubr.f32.gmra.mrb[0].mxu0 %v1159
      %v1262 = vpop.f32.mrb[0].mxu0
      %v1263 = vadd.f32 0.0, %v1262
      %v1264 = vpop.f32.mrb[0].mxu0
      %1265 = vmatprep.mubr.f32.mxu0 0.0
      %1266 = vmatmul.mubr.f32.gmra.mrb[0].mxu0 %v1161
      %v1267 = vpop.f32.mrb[0].mxu0
      %v1268 = vadd.f32 0.0, %v1267
      %v1269 = vpop.f32.mrb[0].mxu0
      %1270 = vdwg.mxu0
      %v1271 = vadd.f32 %v1137, %v1233
      %v1272 = vadd.f32 %v1138, %v1238
      %v1273 = vadd.f32 %v1139, %v1243
      %v1274 = vadd.f32 %v1140, %v1248
      %v1275 = vadd.f32 %v1141, %v1253
      %v1276 = vadd.f32 %v1142, %v1258
      %v1277 = vadd.f32 %v1143, %v1263
      %v1278 = vadd.f32 %v1144, %v1268
      %vm1279 = vcmask 1045504
      %v1280 = vrot.slane %v644, 2
      %v1281 = vrot.slane %v645, 2
      %v1282 = vsel %vm1279, %v1280, %v1281
      %v1283 = vrot.slane %v646, 2
      %v1284 = vrot.slane %v647, 2
      %v1285 = vsel %vm1279, %v1283, %v1284
      %v1286 = vrot.slane %v648, 2
      %v1287 = vrot.slane %v649, 2
      %v1288 = vsel %vm1279, %v1286, %v1287
      %v1289 = vrot.slane %v650, 2
      %v1290 = vrot.slane %v651, 2
      %v1291 = vsel %vm1279, %v1289, %v1290
      %v1292 = vrot.slane %v652, 2
      %v1293 = vrot.slane %v653, 2
      %v1294 = vsel %vm1279, %v1292, %v1293
      %v1295 = vrot.slane %v654, 2
      %v1296 = vrot.slane %v655, 2
      %v1297 = vsel %vm1279, %v1295, %v1296
      %v1298 = vrot.slane %v656, 2
      %v1299 = vrot.slane %v657, 2
      %v1300 = vsel %vm1279, %v1298, %v1299
      %v1301 = vrot.slane %v658, 2
      %v1302 = vrot.slane %v659, 2
      %v1303 = vsel %vm1279, %v1301, %v1302
      %v1304 = vrot.slane %v664, 2
      %v1305 = vrot.slane %v665, 2
      %v1306 = vsel %vm1279, %v1304, %v1305
      %v1307 = vrot.slane %v666, 2
      %v1308 = vrot.slane %v667, 2
      %v1309 = vsel %vm1279, %v1307, %v1308
      %v1310 = vrot.slane %v668, 2
      %v1311 = vrot.slane %v669, 2
      %v1312 = vsel %vm1279, %v1310, %v1311
      %v1313 = vrot.slane %v670, 2
      %v1314 = vrot.slane %v671, 2
      %v1315 = vsel %vm1279, %v1313, %v1314
      %v1316 = vrot.slane %v672, 2
      %v1317 = vrot.slane %v673, 2
      %v1318 = vsel %vm1279, %v1316, %v1317
      %v1319 = vrot.slane %v674, 2
      %v1320 = vrot.slane %v675, 2
      %v1321 = vsel %vm1279, %v1319, %v1320
      %v1322 = vrot.slane %v676, 2
      %v1323 = vrot.slane %v677, 2
      %v1324 = vsel %vm1279, %v1322, %v1323
      %v1325 = vrot.slane %v678, 2
      %v1326 = vrot.slane %v679, 2
      %v1327 = vsel %vm1279, %v1325, %v1326
      %s1328 = scalar_lea.vmem %s5, 16
      %v1329 = vld [vmem:[%s1328] sm:$0xff]
      %v1330 = vsel %vm613, %v1282, 0
      %v1332 = vsel %vm613, %v1285, 0
      %v1334 = vsel %vm613, %v1288, 0
      %v1336 = vsel %vm613, %v1291, 0
      %v1338 = vsel %vm613, %v1294, 0
      %v1340 = vsel %vm613, %v1297, 0
      %v1342 = vsel %vm613, %v1300, 0
      %v1344 = vsel %vm613, %v1303, 0
      %1346 = vmatprep.subr.mxu0 0.0
      %1347 = vmatpush1.msra.mxu0 %v1329
      %1348 = vmatprep.subr.mxu0 0.0
      %1349 = vmatpush1.msra.mxu0 0.0
      %1350 = vmatprep.subr.mxu0 0.0
      %1351 = vmatpush1.msra.mxu0 0.0
      %1352 = vmatprep.subr.mxu0 0.0
      %1353 = vmatpush1.msra.mxu0 0.0
      %1354 = vmatprep.subr.mxu0 0.0
      %1355 = vmatpush1.msra.mxu0 0.0
      %1356 = vmatprep.subr.mxu0 0.0
      %1357 = vmatpush1.msra.mxu0 0.0
      %1358 = vmatprep.subr.mxu0 0.0
      %1359 = vmatpush1.msra.mxu0 0.0
      %1360 = vmatprep.subr.mxu0 0.0
      %1361 = vmatpush1.msra.mxu0 0.0
      %1362 = vmatprep.subr.mxu0 0.0
      %1363 = vmatpush1.msra.mxu0 0.0
      %1364 = vmatprep.subr.mxu0 0.0
      %1365 = vmatpush1.msra.mxu0 0.0
      %1366 = vmatprep.subr.mxu0 0.0
      %1367 = vmatpush1.msra.mxu0 0.0
      %1368 = vmatprep.subr.mxu0 0.0
      %1369 = vmatpush1.msra.mxu0 0.0
      %1370 = vmatprep.subr.mxu0 0.0
      %1371 = vmatpush1.msra.mxu0 0.0
      %1372 = vmatprep.subr.mxu0 0.0
      %1373 = vmatpush1.msra.mxu0 0.0
      %1374 = vmatprep.subr.mxu0 0.0
      %1375 = vmatpush1.msra.mxu0 0.0
      %1376 = vmatprep.subr.mxu0 0.0
      %1377 = vmatpush1.msra.mxu0 0.0
      %1378 = vmatprep.subr.mxu0 0.0
      %1379 = vmatpush1.msra.mxu0 0.0
      %1380 = vmatprep.subr.mxu0 0.0
      %1381 = vmatpush1.msra.mxu0 0.0
      %1382 = vmatprep.subr.mxu0 0.0
      %1383 = vmatpush1.msra.mxu0 0.0
      %1384 = vmatprep.subr.mxu0 0.0
      %1385 = vmatpush1.msra.mxu0 0.0
      %1386 = vmatprep.subr.mxu0 0.0
      %1387 = vmatpush1.msra.mxu0 0.0
      %1388 = vmatprep.subr.mxu0 0.0
      %1389 = vmatpush1.msra.mxu0 0.0
      %1390 = vmatprep.subr.mxu0 0.0
      %1391 = vmatpush1.msra.mxu0 0.0
      %1392 = vmatprep.subr.mxu0 0.0
      %1393 = vmatpush1.msra.mxu0 0.0
      %1394 = vmatprep.subr.mxu0 0.0
      %1395 = vmatpush1.msra.mxu0 0.0
      %1396 = vmatprep.subr.mxu0 0.0
      %1397 = vmatpush1.msra.mxu0 0.0
      %1398 = vmatprep.subr.mxu0 0.0
      %1399 = vmatpush1.msra.mxu0 0.0
      %1400 = vmatprep.subr.mxu0 0.0
      %1401 = vmatpush1.msra.mxu0 0.0
      %1402 = vmatprep.subr.mxu0 0.0
      %1403 = vmatpush1.msra.mxu0 0.0
      %1404 = vmatprep.subr.mxu0 0.0
      %1405 = vmatpush1.msra.mxu0 0.0
      %1406 = vmatprep.subr.mxu0 0.0
      %1407 = vmatpush1.msra.mxu0 0.0
      %1408 = vmatprep.subr.mxu0 0.0
      %1409 = vmatpush1.msra.mxu0 0.0
      %1410 = vmatprep.mubr.f32.mxu0 0.0
      %1411 = vmatmul.mubr.f32.gmra.mrb[0].mxu0 %v1330
      %v1412 = vpop.f32.mrb[0].mxu0
      %v1413 = vadd.f32 0.0, %v1412
      %v1414 = vpop.f32.mrb[0].mxu0
      %1415 = vmatprep.mubr.f32.mxu0 0.0
      %1416 = vmatmul.mubr.f32.gmra.mrb[0].mxu0 %v1332
      %v1417 = vpop.f32.mrb[0].mxu0
      %v1418 = vadd.f32 0.0, %v1417
      %v1419 = vpop.f32.mrb[0].mxu0
      %1420 = vmatprep.mubr.f32.mxu0 0.0
      %1421 = vmatmul.mubr.f32.gmra.mrb[0].mxu0 %v1334
      %v1422 = vpop.f32.mrb[0].mxu0
      %v1423 = vadd.f32 0.0, %v1422
      %v1424 = vpop.f32.mrb[0].mxu0
      %1425 = vmatprep.mubr.f32.mxu0 0.0
      %1426 = vmatmul.mubr.f32.gmra.mrb[0].mxu0 %v1336
      %v1427 = vpop.f32.mrb[0].mxu0
      %v1428 = vadd.f32 0.0, %v1427
      %v1429 = vpop.f32.mrb[0].mxu0
      %1430 = vmatprep.mubr.f32.mxu0 0.0
      %1431 = vmatmul.mubr.f32.gmra.mrb[0].mxu0 %v1338
      %v1432 = vpop.f32.mrb[0].mxu0
      %v1433 = vadd.f32 0.0, %v1432
      %v1434 = vpop.f32.mrb[0].mxu0
      %1435 = vmatprep.mubr.f32.mxu0 0.0
      %1436 = vmatmul.mubr.f32.gmra.mrb[0].mxu0 %v1340
      %v1437 = vpop.f32.mrb[0].mxu0
      %v1438 = vadd.f32 0.0, %v1437
      %v1439 = vpop.f32.mrb[0].mxu0
      %1440 = vmatprep.mubr.f32.mxu0 0.0
      %1441 = vmatmul.mubr.f32.gmra.mrb[0].mxu0 %v1342
      %v1442 = vpop.f32.mrb[0].mxu0
      %v1443 = vadd.f32 0.0, %v1442
      %v1444 = vpop.f32.mrb[0].mxu0
      %1445 = vmatprep.mubr.f32.mxu0 0.0
      %1446 = vmatmul.mubr.f32.gmra.mrb[0].mxu0 %v1344
      %v1447 = vpop.f32.mrb[0].mxu0
      %v1448 = vadd.f32 0.0, %v1447
      %v1449 = vpop.f32.mrb[0].mxu0
      %1450 = vdwg.mxu0
      %v1451 = vadd.f32 %v1271, %v1413
      %v1452 = vadd.f32 %v1272, %v1418
      %v1453 = vadd.f32 %v1273, %v1423
      %v1454 = vadd.f32 %v1274, %v1428
      %v1455 = vadd.f32 %v1275, %v1433
      %v1456 = vadd.f32 %v1276, %v1438
      %v1457 = vadd.f32 %v1277, %v1443
      %v1458 = vadd.f32 %v1278, %v1448
      %s1459 = scalar_lea.vmem %s6, 8
      %v1460 = vld [vmem:[%s1459] sm:$0xf]
      %v1461 = vsel %vm686, %v1306, 0
      %v1463 = vsel %vm686, %v1309, 0
      %v1465 = vsel %vm686, %v1312, 0
      %v1467 = vsel %vm686, %v1315, 0
      %v1469 = vsel %vm686, %v1318, 0
      %v1471 = vsel %vm686, %v1321, 0
      %v1473 = vsel %vm686, %v1324, 0
      %v1475 = vsel %vm686, %v1327, 0
      %v1478 = vsel %vm711, %v1460, 0
      %1480 = vmatprep.subr.mxu0 0.0
      %1481 = vmatpush1.msra.mxu0 %v1478
      %1482 = vmatprep.subr.mxu0 0.0
      %1483 = vmatpush1.msra.mxu0 0.0
      %1484 = vmatprep.subr.mxu0 0.0
      %1485 = vmatpush1.msra.mxu0 0.0
      %1486 = vmatprep.subr.mxu0 0.0
      %1487 = vmatpush1.msra.mxu0 0.0
      %1488 = vmatprep.subr.mxu0 0.0
      %1489 = vmatpush1.msra.mxu0 0.0
      %1490 = vmatprep.subr.mxu0 0.0
      %1491 = vmatpush1.msra.mxu0 0.0
      %1492 = vmatprep.subr.mxu0 0.0
      %1493 = vmatpush1.msra.mxu0 0.0
      %1494 = vmatprep.subr.mxu0 0.0
      %1495 = vmatpush1.msra.mxu0 0.0
      %1496 = vmatprep.subr.mxu0 0.0
      %1497 = vmatpush1.msra.mxu0 0.0
      %1498 = vmatprep.subr.mxu0 0.0
      %1499 = vmatpush1.msra.mxu0 0.0
      %1500 = vmatprep.subr.mxu0 0.0
      %1501 = vmatpush1.msra.mxu0 0.0
      %1502 = vmatprep.subr.mxu0 0.0
      %1503 = vmatpush1.msra.mxu0 0.0
      %1504 = vmatprep.subr.mxu0 0.0
      %1505 = vmatpush1.msra.mxu0 0.0
      %1506 = vmatprep.subr.mxu0 0.0
      %1507 = vmatpush1.msra.mxu0 0.0
      %1508 = vmatprep.subr.mxu0 0.0
      %1509 = vmatpush1.msra.mxu0 0.0
      %1510 = vmatprep.subr.mxu0 0.0
      %1511 = vmatpush1.msra.mxu0 0.0
      %1512 = vmatprep.subr.mxu0 0.0
      %1513 = vmatpush1.msra.mxu0 0.0
      %1514 = vmatprep.subr.mxu0 0.0
      %1515 = vmatpush1.msra.mxu0 0.0
      %1516 = vmatprep.subr.mxu0 0.0
      %1517 = vmatpush1.msra.mxu0 0.0
      %1518 = vmatprep.subr.mxu0 0.0
      %1519 = vmatpush1.msra.mxu0 0.0
      %1520 = vmatprep.subr.mxu0 0.0
      %1521 = vmatpush1.msra.mxu0 0.0
      %1522 = vmatprep.subr.mxu0 0.0
      %1523 = vmatpush1.msra.mxu0 0.0
      %1524 = vmatprep.subr.mxu0 0.0
      %1525 = vmatpush1.msra.mxu0 0.0
      %1526 = vmatprep.subr.mxu0 0.0
      %1527 = vmatpush1.msra.mxu0 0.0
      %1528 = vmatprep.subr.mxu0 0.0
      %1529 = vmatpush1.msra.mxu0 0.0
      %1530 = vmatprep.subr.mxu0 0.0
      %1531 = vmatpush1.msra.mxu0 0.0
      %1532 = vmatprep.subr.mxu0 0.0
      %1533 = vmatpush1.msra.mxu0 0.0
      %1534 = vmatprep.subr.mxu0 0.0
      %1535 = vmatpush1.msra.mxu0 0.0
      %1536 = vmatprep.subr.mxu0 0.0
      %1537 = vmatpush1.msra.mxu0 0.0
      %1538 = vmatprep.subr.mxu0 0.0
      %1539 = vmatpush1.msra.mxu0 0.0
      %1540 = vmatprep.subr.mxu0 0.0
      %1541 = vmatpush1.msra.mxu0 0.0
      %1542 = vmatprep.subr.mxu0 0.0
      %1543 = vmatpush1.msra.mxu0 0.0
      %1544 = vmatprep.mubr.f32.mxu0 0.0
      %1545 = vmatmul.mubr.f32.gmra.mrb[0].mxu0 %v1461
      %v1546 = vpop.f32.mrb[0].mxu0
      %v1547 = vadd.f32 0.0, %v1546
      %v1548 = vpop.f32.mrb[0].mxu0
      %1549 = vmatprep.mubr.f32.mxu0 0.0
      %1550 = vmatmul.mubr.f32.gmra.mrb[0].mxu0 %v1463
      %v1551 = vpop.f32.mrb[0].mxu0
      %v1552 = vadd.f32 0.0, %v1551
      %v1553 = vpop.f32.mrb[0].mxu0
      %1554 = vmatprep.mubr.f32.mxu0 0.0
      %1555 = vmatmul.mubr.f32.gmra.mrb[0].mxu0 %v1465
      %v1556 = vpop.f32.mrb[0].mxu0
      %v1557 = vadd.f32 0.0, %v1556
      %v1558 = vpop.f32.mrb[0].mxu0
      %1559 = vmatprep.mubr.f32.mxu0 0.0
      %1560 = vmatmul.mubr.f32.gmra.mrb[0].mxu0 %v1467
      %v1561 = vpop.f32.mrb[0].mxu0
      %v1562 = vadd.f32 0.0, %v1561
      %v1563 = vpop.f32.mrb[0].mxu0
      %1564 = vmatprep.mubr.f32.mxu0 0.0
      %1565 = vmatmul.mubr.f32.gmra.mrb[0].mxu0 %v1469
      %v1566 = vpop.f32.mrb[0].mxu0
      %v1567 = vadd.f32 0.0, %v1566
      %v1568 = vpop.f32.mrb[0].mxu0
      %1569 = vmatprep.mubr.f32.mxu0 0.0
      %1570 = vmatmul.mubr.f32.gmra.mrb[0].mxu0 %v1471
      %v1571 = vpop.f32.mrb[0].mxu0
      %v1572 = vadd.f32 0.0, %v1571
      %v1573 = vpop.f32.mrb[0].mxu0
      %1574 = vmatprep.mubr.f32.mxu0 0.0
      %1575 = vmatmul.mubr.f32.gmra.mrb[0].mxu0 %v1473
      %v1576 = vpop.f32.mrb[0].mxu0
      %v1577 = vadd.f32 0.0, %v1576
      %v1578 = vpop.f32.mrb[0].mxu0
      %1579 = vmatprep.mubr.f32.mxu0 0.0
      %1580 = vmatmul.mubr.f32.gmra.mrb[0].mxu0 %v1475
      %v1581 = vpop.f32.mrb[0].mxu0
      %v1582 = vadd.f32 0.0, %v1581
      %v1583 = vpop.f32.mrb[0].mxu0
      %1584 = vdwg.mxu0
      %v1585 = vadd.f32 %v1451, %v1547
      %v1586 = vadd.f32 %v1452, %v1552
      %v1587 = vadd.f32 %v1453, %v1557
      %v1588 = vadd.f32 %v1454, %v1562
      %v1589 = vadd.f32 %v1455, %v1567
      %v1590 = vadd.f32 %v1456, %v1572
      %v1591 = vadd.f32 %v1457, %v1577
      %v1592 = vadd.f32 %v1458, %v1582
      %s1593 = scalar_lea.vmem %s5, 24
      %v1594 = vld [vmem:[%s1593] sm:$0xff]
      %v1596 = vsel %vm613, %v660, 0
      %1598 = vmatprep.subr.mxu0 0.0
      %1599 = vmatpush1.msra.mxu0 %v1594
      %1600 = vmatprep.subr.mxu0 0.0
      %1601 = vmatpush1.msra.mxu0 0.0
      %1602 = vmatprep.subr.mxu0 0.0
      %1603 = vmatpush1.msra.mxu0 0.0
      %1604 = vmatprep.subr.mxu0 0.0
      %1605 = vmatpush1.msra.mxu0 0.0
      %1606 = vmatprep.subr.mxu0 0.0
      %1607 = vmatpush1.msra.mxu0 0.0
      %1608 = vmatprep.subr.mxu0 0.0
      %1609 = vmatpush1.msra.mxu0 0.0
      %1610 = vmatprep.subr.mxu0 0.0
      %1611 = vmatpush1.msra.mxu0 0.0
      %1612 = vmatprep.subr.mxu0 0.0
      %1613 = vmatpush1.msra.mxu0 0.0
      %1614 = vmatprep.subr.mxu0 0.0
      %1615 = vmatpush1.msra.mxu0 0.0
      %1616 = vmatprep.subr.mxu0 0.0
      %1617 = vmatpush1.msra.mxu0 0.0
      %1618 = vmatprep.subr.mxu0 0.0
      %1619 = vmatpush1.msra.mxu0 0.0
      %1620 = vmatprep.subr.mxu0 0.0
      %1621 = vmatpush1.msra.mxu0 0.0
      %1622 = vmatprep.subr.mxu0 0.0
      %1623 = vmatpush1.msra.mxu0 0.0
      %1624 = vmatprep.subr.mxu0 0.0
      %1625 = vmatpush1.msra.mxu0 0.0
      %1626 = vmatprep.subr.mxu0 0.0
      %1627 = vmatpush1.msra.mxu0 0.0
      %1628 = vmatprep.subr.mxu0 0.0
      %1629 = vmatpush1.msra.mxu0 0.0
      %1630 = vmatprep.subr.mxu0 0.0
      %1631 = vmatpush1.msra.mxu0 0.0
      %1632 = vmatprep.subr.mxu0 0.0
      %1633 = vmatpush1.msra.mxu0 0.0
      %1634 = vmatprep.subr.mxu0 0.0
      %1635 = vmatpush1.msra.mxu0 0.0
      %1636 = vmatprep.subr.mxu0 0.0
      %1637 = vmatpush1.msra.mxu0 0.0
      %1638 = vmatprep.subr.mxu0 0.0
      %1639 = vmatpush1.msra.mxu0 0.0
      %1640 = vmatprep.subr.mxu0 0.0
      %1641 = vmatpush1.msra.mxu0 0.0
      %1642 = vmatprep.subr.mxu0 0.0
      %1643 = vmatpush1.msra.mxu0 0.0
      %1644 = vmatprep.subr.mxu0 0.0
      %1645 = vmatpush1.msra.mxu0 0.0
      %1646 = vmatprep.subr.mxu0 0.0
      %1647 = vmatpush1.msra.mxu0 0.0
      %1648 = vmatprep.subr.mxu0 0.0
      %1649 = vmatpush1.msra.mxu0 0.0
      %1650 = vmatprep.subr.mxu0 0.0
      %1651 = vmatpush1.msra.mxu0 0.0
      %1652 = vmatprep.subr.mxu0 0.0
      %1653 = vmatpush1.msra.mxu0 0.0
      %1654 = vmatprep.subr.mxu0 0.0
      %1655 = vmatpush1.msra.mxu0 0.0
      %1656 = vmatprep.subr.mxu0 0.0
      %1657 = vmatpush1.msra.mxu0 0.0
      %1658 = vmatprep.subr.mxu0 0.0
      %1659 = vmatpush1.msra.mxu0 0.0
      %1660 = vmatprep.subr.mxu0 0.0
      %1661 = vmatpush1.msra.mxu0 0.0
      %1662 = vmatprep.mubr.f32.mxu0 0.0
      %1663 = vmatmul.mubr.f32.gmra.mrb[0].mxu0 %v824
      %v1664 = vpop.f32.mrb[0].mxu0
      %v1665 = vadd.f32 0.0, %v1664
      %v1666 = vpop.f32.mrb[0].mxu0
      %1667 = vmatprep.mubr.f32.mxu0 0.0
      %1668 = vmatmul.mubr.f32.gmra.mrb[0].mxu0 %v827
      %v1669 = vpop.f32.mrb[0].mxu0
      %v1670 = vadd.f32 0.0, %v1669
      %v1671 = vpop.f32.mrb[0].mxu0
      %1672 = vmatprep.mubr.f32.mxu0 0.0
      %1673 = vmatmul.mubr.f32.gmra.mrb[0].mxu0 %v830
      %v1674 = vpop.f32.mrb[0].mxu0
      %v1675 = vadd.f32 0.0, %v1674
      %v1676 = vpop.f32.mrb[0].mxu0
      %1677 = vmatprep.mubr.f32.mxu0 0.0
      %1678 = vmatmul.mubr.f32.gmra.mrb[0].mxu0 %v833
      %v1679 = vpop.f32.mrb[0].mxu0
      %v1680 = vadd.f32 0.0, %v1679
      %v1681 = vpop.f32.mrb[0].mxu0
      %1682 = vmatprep.mubr.f32.mxu0 0.0
      %1683 = vmatmul.mubr.f32.gmra.mrb[0].mxu0 %v836
      %v1684 = vpop.f32.mrb[0].mxu0
      %v1685 = vadd.f32 0.0, %v1684
      %v1686 = vpop.f32.mrb[0].mxu0
      %1687 = vmatprep.mubr.f32.mxu0 0.0
      %1688 = vmatmul.mubr.f32.gmra.mrb[0].mxu0 %v839
      %v1689 = vpop.f32.mrb[0].mxu0
      %v1690 = vadd.f32 0.0, %v1689
      %v1691 = vpop.f32.mrb[0].mxu0
      %1692 = vmatprep.mubr.f32.mxu0 0.0
      %1693 = vmatmul.mubr.f32.gmra.mrb[0].mxu0 %v842
      %v1694 = vpop.f32.mrb[0].mxu0
      %v1695 = vadd.f32 0.0, %v1694
      %v1696 = vpop.f32.mrb[0].mxu0
      %1697 = vmatprep.mubr.f32.mxu0 0.0
      %1698 = vmatmul.mubr.f32.gmra.mrb[0].mxu0 %v1596
      %v1699 = vpop.f32.mrb[0].mxu0
      %v1700 = vadd.f32 0.0, %v1699
      %v1701 = vpop.f32.mrb[0].mxu0
      %1702 = vdwg.mxu0
      %v1703 = vadd.f32 %v1585, %v1665
      %v1704 = vadd.f32 %v1586, %v1670
      %v1705 = vadd.f32 %v1587, %v1675
      %v1706 = vadd.f32 %v1588, %v1680
      %v1707 = vadd.f32 %v1589, %v1685
      %v1708 = vadd.f32 %v1590, %v1690
      %v1709 = vadd.f32 %v1591, %v1695
      %v1710 = vadd.f32 %v1592, %v1700
      %s1711 = scalar_lea.vmem %s6, 12
      %v1712 = vld [vmem:[%s1711] sm:$0xf]
      %v1714 = vsel %vm686, %v680, 0
      %v1717 = vsel %vm711, %v1712, 0
      %1719 = vmatprep.subr.mxu0 0.0
      %1720 = vmatpush1.msra.mxu0 %v1717
      %1721 = vmatprep.subr.mxu0 0.0
      %1722 = vmatpush1.msra.mxu0 0.0
      %1723 = vmatprep.subr.mxu0 0.0
      %1724 = vmatpush1.msra.mxu0 0.0
      %1725 = vmatprep.subr.mxu0 0.0
      %1726 = vmatpush1.msra.mxu0 0.0
      %1727 = vmatprep.subr.mxu0 0.0
      %1728 = vmatpush1.msra.mxu0 0.0
      %1729 = vmatprep.subr.mxu0 0.0
      %1730 = vmatpush1.msra.mxu0 0.0
      %1731 = vmatprep.subr.mxu0 0.0
      %1732 = vmatpush1.msra.mxu0 0.0
      %1733 = vmatprep.subr.mxu0 0.0
      %1734 = vmatpush1.msra.mxu0 0.0
      %1735 = vmatprep.subr.mxu0 0.0
      %1736 = vmatpush1.msra.mxu0 0.0
      %1737 = vmatprep.subr.mxu0 0.0
      %1738 = vmatpush1.msra.mxu0 0.0
      %1739 = vmatprep.subr.mxu0 0.0
      %1740 = vmatpush1.msra.mxu0 0.0
      %1741 = vmatprep.subr.mxu0 0.0
      %1742 = vmatpush1.msra.mxu0 0.0
      %1743 = vmatprep.subr.mxu0 0.0
      %1744 = vmatpush1.msra.mxu0 0.0
      %1745 = vmatprep.subr.mxu0 0.0
      %1746 = vmatpush1.msra.mxu0 0.0
      %1747 = vmatprep.subr.mxu0 0.0
      %1748 = vmatpush1.msra.mxu0 0.0
      %1749 = vmatprep.subr.mxu0 0.0
      %1750 = vmatpush1.msra.mxu0 0.0
      %1751 = vmatprep.subr.mxu0 0.0
      %1752 = vmatpush1.msra.mxu0 0.0
      %1753 = vmatprep.subr.mxu0 0.0
      %1754 = vmatpush1.msra.mxu0 0.0
      %1755 = vmatprep.subr.mxu0 0.0
      %1756 = vmatpush1.msra.mxu0 0.0
      %1757 = vmatprep.subr.mxu0 0.0
      %1758 = vmatpush1.msra.mxu0 0.0
      %1759 = vmatprep.subr.mxu0 0.0
      %1760 = vmatpush1.msra.mxu0 0.0
      %1761 = vmatprep.subr.mxu0 0.0
      %1762 = vmatpush1.msra.mxu0 0.0
      %1763 = vmatprep.subr.mxu0 0.0
      %1764 = vmatpush1.msra.mxu0 0.0
      %1765 = vmatprep.subr.mxu0 0.0
      %1766 = vmatpush1.msra.mxu0 0.0
      %1767 = vmatprep.subr.mxu0 0.0
      %1768 = vmatpush1.msra.mxu0 0.0
      %1769 = vmatprep.subr.mxu0 0.0
      %1770 = vmatpush1.msra.mxu0 0.0
      %1771 = vmatprep.subr.mxu0 0.0
      %1772 = vmatpush1.msra.mxu0 0.0
      %1773 = vmatprep.subr.mxu0 0.0
      %1774 = vmatpush1.msra.mxu0 0.0
      %1775 = vmatprep.subr.mxu0 0.0
      %1776 = vmatpush1.msra.mxu0 0.0
      %1777 = vmatprep.subr.mxu0 0.0
      %1778 = vmatpush1.msra.mxu0 0.0
      %1779 = vmatprep.subr.mxu0 0.0
      %1780 = vmatpush1.msra.mxu0 0.0
      %1781 = vmatprep.subr.mxu0 0.0
      %1782 = vmatpush1.msra.mxu0 0.0
      %1783 = vmatprep.mubr.f32.mxu0 0.0
      %1784 = vmatmul.mubr.f32.gmra.mrb[0].mxu0 %v691
      %v1785 = vpop.f32.mrb[0].mxu0
      %v1786 = vadd.f32 0.0, %v1785
      %v1787 = vpop.f32.mrb[0].mxu0
      %1788 = vmatprep.mubr.f32.mxu0 0.0
      %1789 = vmatmul.mubr.f32.gmra.mrb[0].mxu0 %v694
      %v1790 = vpop.f32.mrb[0].mxu0
      %v1791 = vadd.f32 0.0, %v1790
      %v1792 = vpop.f32.mrb[0].mxu0
      %1793 = vmatprep.mubr.f32.mxu0 0.0
      %1794 = vmatmul.mubr.f32.gmra.mrb[0].mxu0 %v697
      %v1795 = vpop.f32.mrb[0].mxu0
      %v1796 = vadd.f32 0.0, %v1795
      %v1797 = vpop.f32.mrb[0].mxu0
      %1798 = vmatprep.mubr.f32.mxu0 0.0
      %1799 = vmatmul.mubr.f32.gmra.mrb[0].mxu0 %v700
      %v1800 = vpop.f32.mrb[0].mxu0
      %v1801 = vadd.f32 0.0, %v1800
      %v1802 = vpop.f32.mrb[0].mxu0
      %1803 = vmatprep.mubr.f32.mxu0 0.0
      %1804 = vmatmul.mubr.f32.gmra.mrb[0].mxu0 %v703
      %v1805 = vpop.f32.mrb[0].mxu0
      %v1806 = vadd.f32 0.0, %v1805
      %v1807 = vpop.f32.mrb[0].mxu0
      %1808 = vmatprep.mubr.f32.mxu0 0.0
      %1809 = vmatmul.mubr.f32.gmra.mrb[0].mxu0 %v706
      %v1810 = vpop.f32.mrb[0].mxu0
      %v1811 = vadd.f32 0.0, %v1810
      %v1812 = vpop.f32.mrb[0].mxu0
      %1813 = vmatprep.mubr.f32.mxu0 0.0
      %1814 = vmatmul.mubr.f32.gmra.mrb[0].mxu0 %v709
      %v1815 = vpop.f32.mrb[0].mxu0
      %v1816 = vadd.f32 0.0, %v1815
      %v1817 = vpop.f32.mrb[0].mxu0
      %1818 = vmatprep.mubr.f32.mxu0 0.0
      %1819 = vmatmul.mubr.f32.gmra.mrb[0].mxu0 %v1714
      %v1820 = vpop.f32.mrb[0].mxu0
      %v1821 = vadd.f32 0.0, %v1820
      %v1822 = vpop.f32.mrb[0].mxu0
      %1823 = vdwg.mxu0
      %v1824 = vadd.f32 %v1703, %v1786
      %v1825 = vadd.f32 %v1704, %v1791
      %v1826 = vadd.f32 %v1705, %v1796
      %v1827 = vadd.f32 %v1706, %v1801
      %v1828 = vadd.f32 %v1707, %v1806
      %v1829 = vadd.f32 %v1708, %v1811
      %v1830 = vadd.f32 %v1709, %v1816
      %v1831 = vadd.f32 %v1710, %v1821
      %v1833 = vrot.slane %v660, 1
      %v1834 = vrot.slane %v661, 1
      %v1835 = vsel %vm957, %v1833, %v1834
      %v1837 = vrot.slane %v680, 1
      %v1838 = vrot.slane %v681, 1
      %v1839 = vsel %vm957, %v1837, %v1838
      %s1840 = scalar_lea.vmem %s5, 32
      %v1841 = vld [vmem:[%s1840] sm:$0xff]
      %v1842 = vsel %vm613, %v1835, 0
      %1844 = vmatprep.subr.mxu0 0.0
      %1845 = vmatpush1.msra.mxu0 %v1841
      %1846 = vmatprep.subr.mxu0 0.0
      %1847 = vmatpush1.msra.mxu0 0.0
      %1848 = vmatprep.subr.mxu0 0.0
      %1849 = vmatpush1.msra.mxu0 0.0
      %1850 = vmatprep.subr.mxu0 0.0
      %1851 = vmatpush1.msra.mxu0 0.0
      %1852 = vmatprep.subr.mxu0 0.0
      %1853 = vmatpush1.msra.mxu0 0.0
      %1854 = vmatprep.subr.mxu0 0.0
      %1855 = vmatpush1.msra.mxu0 0.0
      %1856 = vmatprep.subr.mxu0 0.0
      %1857 = vmatpush1.msra.mxu0 0.0
      %1858 = vmatprep.subr.mxu0 0.0
      %1859 = vmatpush1.msra.mxu0 0.0
      %1860 = vmatprep.subr.mxu0 0.0
      %1861 = vmatpush1.msra.mxu0 0.0
      %1862 = vmatprep.subr.mxu0 0.0
      %1863 = vmatpush1.msra.mxu0 0.0
      %1864 = vmatprep.subr.mxu0 0.0
      %1865 = vmatpush1.msra.mxu0 0.0
      %1866 = vmatprep.subr.mxu0 0.0
      %1867 = vmatpush1.msra.mxu0 0.0
      %1868 = vmatprep.subr.mxu0 0.0
      %1869 = vmatpush1.msra.mxu0 0.0
      %1870 = vmatprep.subr.mxu0 0.0
      %1871 = vmatpush1.msra.mxu0 0.0
      %1872 = vmatprep.subr.mxu0 0.0
      %1873 = vmatpush1.msra.mxu0 0.0
      %1874 = vmatprep.subr.mxu0 0.0
      %1875 = vmatpush1.msra.mxu0 0.0
      %1876 = vmatprep.subr.mxu0 0.0
      %1877 = vmatpush1.msra.mxu0 0.0
      %1878 = vmatprep.subr.mxu0 0.0
      %1879 = vmatpush1.msra.mxu0 0.0
      %1880 = vmatprep.subr.mxu0 0.0
      %1881 = vmatpush1.msra.mxu0 0.0
      %1882 = vmatprep.subr.mxu0 0.0
      %1883 = vmatpush1.msra.mxu0 0.0
      %1884 = vmatprep.subr.mxu0 0.0
      %1885 = vmatpush1.msra.mxu0 0.0
      %1886 = vmatprep.subr.mxu0 0.0
      %1887 = vmatpush1.msra.mxu0 0.0
      %1888 = vmatprep.subr.mxu0 0.0
      %1889 = vmatpush1.msra.mxu0 0.0
      %1890 = vmatprep.subr.mxu0 0.0
      %1891 = vmatpush1.msra.mxu0 0.0
      %1892 = vmatprep.subr.mxu0 0.0
      %1893 = vmatpush1.msra.mxu0 0.0
      %1894 = vmatprep.subr.mxu0 0.0
      %1895 = vmatpush1.msra.mxu0 0.0
      %1896 = vmatprep.subr.mxu0 0.0
      %1897 = vmatpush1.msra.mxu0 0.0
      %1898 = vmatprep.subr.mxu0 0.0
      %1899 = vmatpush1.msra.mxu0 0.0
      %1900 = vmatprep.subr.mxu0 0.0
      %1901 = vmatpush1.msra.mxu0 0.0
      %1902 = vmatprep.subr.mxu0 0.0
      %1903 = vmatpush1.msra.mxu0 0.0
      %1904 = vmatprep.subr.mxu0 0.0
      %1905 = vmatpush1.msra.mxu0 0.0
      %1906 = vmatprep.subr.mxu0 0.0
      %1907 = vmatpush1.msra.mxu0 0.0
      %1908 = vmatprep.mubr.f32.mxu0 0.0
      %1909 = vmatmul.mubr.f32.gmra.mrb[0].mxu0 %v1018
      %v1910 = vpop.f32.mrb[0].mxu0
      %v1911 = vadd.f32 0.0, %v1910
      %v1912 = vpop.f32.mrb[0].mxu0
      %1913 = vmatprep.mubr.f32.mxu0 0.0
      %1914 = vmatmul.mubr.f32.gmra.mrb[0].mxu0 %v1020
      %v1915 = vpop.f32.mrb[0].mxu0
      %v1916 = vadd.f32 0.0, %v1915
      %v1917 = vpop.f32.mrb[0].mxu0
      %1918 = vmatprep.mubr.f32.mxu0 0.0
      %1919 = vmatmul.mubr.f32.gmra.mrb[0].mxu0 %v1022
      %v1920 = vpop.f32.mrb[0].mxu0
      %v1921 = vadd.f32 0.0, %v1920
      %v1922 = vpop.f32.mrb[0].mxu0
      %1923 = vmatprep.mubr.f32.mxu0 0.0
      %1924 = vmatmul.mubr.f32.gmra.mrb[0].mxu0 %v1024
      %v1925 = vpop.f32.mrb[0].mxu0
      %v1926 = vadd.f32 0.0, %v1925
      %v1927 = vpop.f32.mrb[0].mxu0
      %1928 = vmatprep.mubr.f32.mxu0 0.0
      %1929 = vmatmul.mubr.f32.gmra.mrb[0].mxu0 %v1026
      %v1930 = vpop.f32.mrb[0].mxu0
      %v1931 = vadd.f32 0.0, %v1930
      %v1932 = vpop.f32.mrb[0].mxu0
      %1933 = vmatprep.mubr.f32.mxu0 0.0
      %1934 = vmatmul.mubr.f32.gmra.mrb[0].mxu0 %v1028
      %v1935 = vpop.f32.mrb[0].mxu0
      %v1936 = vadd.f32 0.0, %v1935
      %v1937 = vpop.f32.mrb[0].mxu0
      %1938 = vmatprep.mubr.f32.mxu0 0.0
      %1939 = vmatmul.mubr.f32.gmra.mrb[0].mxu0 %v1030
      %v1940 = vpop.f32.mrb[0].mxu0
      %v1941 = vadd.f32 0.0, %v1940
      %v1942 = vpop.f32.mrb[0].mxu0
      %1943 = vmatprep.mubr.f32.mxu0 0.0
      %1944 = vmatmul.mubr.f32.gmra.mrb[0].mxu0 %v1842
      %v1945 = vpop.f32.mrb[0].mxu0
      %v1946 = vadd.f32 0.0, %v1945
      %v1947 = vpop.f32.mrb[0].mxu0
      %1948 = vdwg.mxu0
      %v1949 = vadd.f32 %v1824, %v1911
      %v1950 = vadd.f32 %v1825, %v1916
      %v1951 = vadd.f32 %v1826, %v1921
      %v1952 = vadd.f32 %v1827, %v1926
      %v1953 = vadd.f32 %v1828, %v1931
      %v1954 = vadd.f32 %v1829, %v1936
      %v1955 = vadd.f32 %v1830, %v1941
      %v1956 = vadd.f32 %v1831, %v1946
      %s1957 = scalar_lea.vmem %s6, 16
      %v1958 = vld [vmem:[%s1957] sm:$0xf]
      %v1959 = vsel %vm686, %v1839, 0
      %v1962 = vsel %vm711, %v1958, 0
      %1964 = vmatprep.subr.mxu0 0.0
      %1965 = vmatpush1.msra.mxu0 %v1962
      %1966 = vmatprep.subr.mxu0 0.0
      %1967 = vmatpush1.msra.mxu0 0.0
      %1968 = vmatprep.subr.mxu0 0.0
      %1969 = vmatpush1.msra.mxu0 0.0
      %1970 = vmatprep.subr.mxu0 0.0
      %1971 = vmatpush1.msra.mxu0 0.0
      %1972 = vmatprep.subr.mxu0 0.0
      %1973 = vmatpush1.msra.mxu0 0.0
      %1974 = vmatprep.subr.mxu0 0.0
      %1975 = vmatpush1.msra.mxu0 0.0
      %1976 = vmatprep.subr.mxu0 0.0
      %1977 = vmatpush1.msra.mxu0 0.0
      %1978 = vmatprep.subr.mxu0 0.0
      %1979 = vmatpush1.msra.mxu0 0.0
      %1980 = vmatprep.subr.mxu0 0.0
      %1981 = vmatpush1.msra.mxu0 0.0
      %1982 = vmatprep.subr.mxu0 0.0
      %1983 = vmatpush1.msra.mxu0 0.0
      %1984 = vmatprep.subr.mxu0 0.0
      %1985 = vmatpush1.msra.mxu0 0.0
      %1986 = vmatprep.subr.mxu0 0.0
      %1987 = vmatpush1.msra.mxu0 0.0
      %1988 = vmatprep.subr.mxu0 0.0
      %1989 = vmatpush1.msra.mxu0 0.0
      %1990 = vmatprep.subr.mxu0 0.0
      %1991 = vmatpush1.msra.mxu0 0.0
      %1992 = vmatprep.subr.mxu0 0.0
      %1993 = vmatpush1.msra.mxu0 0.0
      %1994 = vmatprep.subr.mxu0 0.0
      %1995 = vmatpush1.msra.mxu0 0.0
      %1996 = vmatprep.subr.mxu0 0.0
      %1997 = vmatpush1.msra.mxu0 0.0
      %1998 = vmatprep.subr.mxu0 0.0
      %1999 = vmatpush1.msra.mxu0 0.0
      %2000 = vmatprep.subr.mxu0 0.0
      %2001 = vmatpush1.msra.mxu0 0.0
      %2002 = vmatprep.subr.mxu0 0.0
      %2003 = vmatpush1.msra.mxu0 0.0
      %2004 = vmatprep.subr.mxu0 0.0
      %2005 = vmatpush1.msra.mxu0 0.0
      %2006 = vmatprep.subr.mxu0 0.0
      %2007 = vmatpush1.msra.mxu0 0.0
      %2008 = vmatprep.subr.mxu0 0.0
      %2009 = vmatpush1.msra.mxu0 0.0
      %2010 = vmatprep.subr.mxu0 0.0
      %2011 = vmatpush1.msra.mxu0 0.0
      %2012 = vmatprep.subr.mxu0 0.0
      %2013 = vmatpush1.msra.mxu0 0.0
      %2014 = vmatprep.subr.mxu0 0.0
      %2015 = vmatpush1.msra.mxu0 0.0
      %2016 = vmatprep.subr.mxu0 0.0
      %2017 = vmatpush1.msra.mxu0 0.0
      %2018 = vmatprep.subr.mxu0 0.0
      %2019 = vmatpush1.msra.mxu0 0.0
      %2020 = vmatprep.subr.mxu0 0.0
      %2021 = vmatpush1.msra.mxu0 0.0
      %2022 = vmatprep.subr.mxu0 0.0
      %2023 = vmatpush1.msra.mxu0 0.0
      %2024 = vmatprep.subr.mxu0 0.0
      %2025 = vmatpush1.msra.mxu0 0.0
      %2026 = vmatprep.subr.mxu0 0.0
      %2027 = vmatpush1.msra.mxu0 0.0
      %2028 = vmatprep.mubr.f32.mxu0 0.0
      %2029 = vmatmul.mubr.f32.gmra.mrb[0].mxu0 %v1149
      %v2030 = vpop.f32.mrb[0].mxu0
      %v2031 = vadd.f32 0.0, %v2030
      %v2032 = vpop.f32.mrb[0].mxu0
      %2033 = vmatprep.mubr.f32.mxu0 0.0
      %2034 = vmatmul.mubr.f32.gmra.mrb[0].mxu0 %v1151
      %v2035 = vpop.f32.mrb[0].mxu0
      %v2036 = vadd.f32 0.0, %v2035
      %v2037 = vpop.f32.mrb[0].mxu0
      %2038 = vmatprep.mubr.f32.mxu0 0.0
      %2039 = vmatmul.mubr.f32.gmra.mrb[0].mxu0 %v1153
      %v2040 = vpop.f32.mrb[0].mxu0
      %v2041 = vadd.f32 0.0, %v2040
      %v2042 = vpop.f32.mrb[0].mxu0
      %2043 = vmatprep.mubr.f32.mxu0 0.0
      %2044 = vmatmul.mubr.f32.gmra.mrb[0].mxu0 %v1155
      %v2045 = vpop.f32.mrb[0].mxu0
      %v2046 = vadd.f32 0.0, %v2045
      %v2047 = vpop.f32.mrb[0].mxu0
      %2048 = vmatprep.mubr.f32.mxu0 0.0
      %2049 = vmatmul.mubr.f32.gmra.mrb[0].mxu0 %v1157
      %v2050 = vpop.f32.mrb[0].mxu0
      %v2051 = vadd.f32 0.0, %v2050
      %v2052 = vpop.f32.mrb[0].mxu0
      %2053 = vmatprep.mubr.f32.mxu0 0.0
      %2054 = vmatmul.mubr.f32.gmra.mrb[0].mxu0 %v1159
      %v2055 = vpop.f32.mrb[0].mxu0
      %v2056 = vadd.f32 0.0, %v2055
      %v2057 = vpop.f32.mrb[0].mxu0
      %2058 = vmatprep.mubr.f32.mxu0 0.0
      %2059 = vmatmul.mubr.f32.gmra.mrb[0].mxu0 %v1161
      %v2060 = vpop.f32.mrb[0].mxu0
      %v2061 = vadd.f32 0.0, %v2060
      %v2062 = vpop.f32.mrb[0].mxu0
      %2063 = vmatprep.mubr.f32.mxu0 0.0
      %2064 = vmatmul.mubr.f32.gmra.mrb[0].mxu0 %v1959
      %v2065 = vpop.f32.mrb[0].mxu0
      %v2066 = vadd.f32 0.0, %v2065
      %v2067 = vpop.f32.mrb[0].mxu0
      %2068 = vdwg.mxu0
      %v2069 = vadd.f32 %v1949, %v2031
      %v2070 = vadd.f32 %v1950, %v2036
      %v2071 = vadd.f32 %v1951, %v2041
      %v2072 = vadd.f32 %v1952, %v2046
      %v2073 = vadd.f32 %v1953, %v2051
      %v2074 = vadd.f32 %v1954, %v2056
      %v2075 = vadd.f32 %v1955, %v2061
      %v2076 = vadd.f32 %v1956, %v2066
      %v2077 = vrot.slane %v660, 2
      %v2078 = vrot.slane %v661, 2
      %v2079 = vsel %vm1279, %v2077, %v2078
      %v2080 = vrot.slane %v680, 2
      %v2081 = vrot.slane %v681, 2
      %v2082 = vsel %vm1279, %v2080, %v2081
      %s2083 = scalar_lea.vmem %s5, 40
      %v2084 = vld [vmem:[%s2083] sm:$0xff]
      %v2085 = vsel %vm613, %v2079, 0
      %2087 = vmatprep.subr.mxu0 0.0
      %2088 = vmatpush1.msra.mxu0 %v2084
      %2089 = vmatprep.subr.mxu0 0.0
      %2090 = vmatpush1.msra.mxu0 0.0
      %2091 = vmatprep.subr.mxu0 0.0
      %2092 = vmatpush1.msra.mxu0 0.0
      %2093 = vmatprep.subr.mxu0 0.0
      %2094 = vmatpush1.msra.mxu0 0.0
      %2095 = vmatprep.subr.mxu0 0.0
      %2096 = vmatpush1.msra.mxu0 0.0
      %2097 = vmatprep.subr.mxu0 0.0
      %2098 = vmatpush1.msra.mxu0 0.0
      %2099 = vmatprep.subr.mxu0 0.0
      %2100 = vmatpush1.msra.mxu0 0.0
      %2101 = vmatprep.subr.mxu0 0.0
      %2102 = vmatpush1.msra.mxu0 0.0
      %2103 = vmatprep.subr.mxu0 0.0
      %2104 = vmatpush1.msra.mxu0 0.0
      %2105 = vmatprep.subr.mxu0 0.0
      %2106 = vmatpush1.msra.mxu0 0.0
      %2107 = vmatprep.subr.mxu0 0.0
      %2108 = vmatpush1.msra.mxu0 0.0
      %2109 = vmatprep.subr.mxu0 0.0
      %2110 = vmatpush1.msra.mxu0 0.0
      %2111 = vmatprep.subr.mxu0 0.0
      %2112 = vmatpush1.msra.mxu0 0.0
      %2113 = vmatprep.subr.mxu0 0.0
      %2114 = vmatpush1.msra.mxu0 0.0
      %2115 = vmatprep.subr.mxu0 0.0
      %2116 = vmatpush1.msra.mxu0 0.0
      %2117 = vmatprep.subr.mxu0 0.0
      %2118 = vmatpush1.msra.mxu0 0.0
      %2119 = vmatprep.subr.mxu0 0.0
      %2120 = vmatpush1.msra.mxu0 0.0
      %2121 = vmatprep.subr.mxu0 0.0
      %2122 = vmatpush1.msra.mxu0 0.0
      %2123 = vmatprep.subr.mxu0 0.0
      %2124 = vmatpush1.msra.mxu0 0.0
      %2125 = vmatprep.subr.mxu0 0.0
      %2126 = vmatpush1.msra.mxu0 0.0
      %2127 = vmatprep.subr.mxu0 0.0
      %2128 = vmatpush1.msra.mxu0 0.0
      %2129 = vmatprep.subr.mxu0 0.0
      %2130 = vmatpush1.msra.mxu0 0.0
      %2131 = vmatprep.subr.mxu0 0.0
      %2132 = vmatpush1.msra.mxu0 0.0
      %2133 = vmatprep.subr.mxu0 0.0
      %2134 = vmatpush1.msra.mxu0 0.0
      %2135 = vmatprep.subr.mxu0 0.0
      %2136 = vmatpush1.msra.mxu0 0.0
      %2137 = vmatprep.subr.mxu0 0.0
      %2138 = vmatpush1.msra.mxu0 0.0
      %2139 = vmatprep.subr.mxu0 0.0
      %2140 = vmatpush1.msra.mxu0 0.0
      %2141 = vmatprep.subr.mxu0 0.0
      %2142 = vmatpush1.msra.mxu0 0.0
      %2143 = vmatprep.subr.mxu0 0.0
      %2144 = vmatpush1.msra.mxu0 0.0
      %2145 = vmatprep.subr.mxu0 0.0
      %2146 = vmatpush1.msra.mxu0 0.0
      %2147 = vmatprep.subr.mxu0 0.0
      %2148 = vmatpush1.msra.mxu0 0.0
      %2149 = vmatprep.subr.mxu0 0.0
      %2150 = vmatpush1.msra.mxu0 0.0
      %2151 = vmatprep.mubr.f32.mxu0 0.0
      %2152 = vmatmul.mubr.f32.gmra.mrb[0].mxu0 %v1332
      %v2153 = vpop.f32.mrb[0].mxu0
      %v2154 = vadd.f32 0.0, %v2153
      %v2155 = vpop.f32.mrb[0].mxu0
      %2156 = vmatprep.mubr.f32.mxu0 0.0
      %2157 = vmatmul.mubr.f32.gmra.mrb[0].mxu0 %v1334
      %v2158 = vpop.f32.mrb[0].mxu0
      %v2159 = vadd.f32 0.0, %v2158
      %v2160 = vpop.f32.mrb[0].mxu0
      %2161 = vmatprep.mubr.f32.mxu0 0.0
      %2162 = vmatmul.mubr.f32.gmra.mrb[0].mxu0 %v1336
      %v2163 = vpop.f32.mrb[0].mxu0
      %v2164 = vadd.f32 0.0, %v2163
      %v2165 = vpop.f32.mrb[0].mxu0
      %2166 = vmatprep.mubr.f32.mxu0 0.0
      %2167 = vmatmul.mubr.f32.gmra.mrb[0].mxu0 %v1338
      %v2168 = vpop.f32.mrb[0].mxu0
      %v2169 = vadd.f32 0.0, %v2168
      %v2170 = vpop.f32.mrb[0].mxu0
      %2171 = vmatprep.mubr.f32.mxu0 0.0
      %2172 = vmatmul.mubr.f32.gmra.mrb[0].mxu0 %v1340
      %v2173 = vpop.f32.mrb[0].mxu0
      %v2174 = vadd.f32 0.0, %v2173
      %v2175 = vpop.f32.mrb[0].mxu0
      %2176 = vmatprep.mubr.f32.mxu0 0.0
      %2177 = vmatmul.mubr.f32.gmra.mrb[0].mxu0 %v1342
      %v2178 = vpop.f32.mrb[0].mxu0
      %v2179 = vadd.f32 0.0, %v2178
      %v2180 = vpop.f32.mrb[0].mxu0
      %2181 = vmatprep.mubr.f32.mxu0 0.0
      %2182 = vmatmul.mubr.f32.gmra.mrb[0].mxu0 %v1344
      %v2183 = vpop.f32.mrb[0].mxu0
      %v2184 = vadd.f32 0.0, %v2183
      %v2185 = vpop.f32.mrb[0].mxu0
      %2186 = vmatprep.mubr.f32.mxu0 0.0
      %2187 = vmatmul.mubr.f32.gmra.mrb[0].mxu0 %v2085
      %v2188 = vpop.f32.mrb[0].mxu0
      %v2189 = vadd.f32 0.0, %v2188
      %v2190 = vpop.f32.mrb[0].mxu0
      %2191 = vdwg.mxu0
      %v2192 = vadd.f32 %v2069, %v2154
      %v2193 = vadd.f32 %v2070, %v2159
      %v2194 = vadd.f32 %v2071, %v2164
      %v2195 = vadd.f32 %v2072, %v2169
      %v2196 = vadd.f32 %v2073, %v2174
      %v2197 = vadd.f32 %v2074, %v2179
      %v2198 = vadd.f32 %v2075, %v2184
      %v2199 = vadd.f32 %v2076, %v2189
      %s2200 = scalar_lea.vmem %s6, 20
      %v2201 = vld [vmem:[%s2200] sm:$0xf]
      %v2202 = vsel %vm686, %v2082, 0
      %v2205 = vsel %vm711, %v2201, 0
      %2207 = vmatprep.subr.mxu0 0.0
      %2208 = vmatpush1.msra.mxu0 %v2205
      %2209 = vmatprep.subr.mxu0 0.0
      %2210 = vmatpush1.msra.mxu0 0.0
      %2211 = vmatprep.subr.mxu0 0.0
      %2212 = vmatpush1.msra.mxu0 0.0
      %2213 = vmatprep.subr.mxu0 0.0
      %2214 = vmatpush1.msra.mxu0 0.0
      %2215 = vmatprep.subr.mxu0 0.0
      %2216 = vmatpush1.msra.mxu0 0.0
      %2217 = vmatprep.subr.mxu0 0.0
      %2218 = vmatpush1.msra.mxu0 0.0
      %2219 = vmatprep.subr.mxu0 0.0
      %2220 = vmatpush1.msra.mxu0 0.0
      %2221 = vmatprep.subr.mxu0 0.0
      %2222 = vmatpush1.msra.mxu0 0.0
      %2223 = vmatprep.subr.mxu0 0.0
      %2224 = vmatpush1.msra.mxu0 0.0
      %2225 = vmatprep.subr.mxu0 0.0
      %2226 = vmatpush1.msra.mxu0 0.0
      %2227 = vmatprep.subr.mxu0 0.0
      %2228 = vmatpush1.msra.mxu0 0.0
      %2229 = vmatprep.subr.mxu0 0.0
      %2230 = vmatpush1.msra.mxu0 0.0
      %2231 = vmatprep.subr.mxu0 0.0
      %2232 = vmatpush1.msra.mxu0 0.0
      %2233 = vmatprep.subr.mxu0 0.0
      %2234 = vmatpush1.msra.mxu0 0.0
      %2235 = vmatprep.subr.mxu0 0.0
      %2236 = vmatpush1.msra.mxu0 0.0
      %2237 = vmatprep.subr.mxu0 0.0
      %2238 = vmatpush1.msra.mxu0 0.0
      %2239 = vmatprep.subr.mxu0 0.0
      %2240 = vmatpush1.msra.mxu0 0.0
      %2241 = vmatprep.subr.mxu0 0.0
      %2242 = vmatpush1.msra.mxu0 0.0
      %2243 = vmatprep.subr.mxu0 0.0
      %2244 = vmatpush1.msra.mxu0 0.0
      %2245 = vmatprep.subr.mxu0 0.0
      %2246 = vmatpush1.msra.mxu0 0.0
      %2247 = vmatprep.subr.mxu0 0.0
      %2248 = vmatpush1.msra.mxu0 0.0
      %2249 = vmatprep.subr.mxu0 0.0
      %2250 = vmatpush1.msra.mxu0 0.0
      %2251 = vmatprep.subr.mxu0 0.0
      %2252 = vmatpush1.msra.mxu0 0.0
      %2253 = vmatprep.subr.mxu0 0.0
      %2254 = vmatpush1.msra.mxu0 0.0
      %2255 = vmatprep.subr.mxu0 0.0
      %2256 = vmatpush1.msra.mxu0 0.0
      %2257 = vmatprep.subr.mxu0 0.0
      %2258 = vmatpush1.msra.mxu0 0.0
      %2259 = vmatprep.subr.mxu0 0.0
      %2260 = vmatpush1.msra.mxu0 0.0
      %2261 = vmatprep.subr.mxu0 0.0
      %2262 = vmatpush1.msra.mxu0 0.0
      %2263 = vmatprep.subr.mxu0 0.0
      %2264 = vmatpush1.msra.mxu0 0.0
      %2265 = vmatprep.subr.mxu0 0.0
      %2266 = vmatpush1.msra.mxu0 0.0
      %2267 = vmatprep.subr.mxu0 0.0
      %2268 = vmatpush1.msra.mxu0 0.0
      %2269 = vmatprep.subr.mxu0 0.0
      %2270 = vmatpush1.msra.mxu0 0.0
      %2271 = vmatprep.mubr.f32.mxu0 0.0
      %2272 = vmatmul.mubr.f32.gmra.mrb[0].mxu0 %v1463
      %v2273 = vpop.f32.mrb[0].mxu0
      %v2274 = vadd.f32 0.0, %v2273
      %v2275 = vpop.f32.mrb[0].mxu0
      %2276 = vmatprep.mubr.f32.mxu0 0.0
      %2277 = vmatmul.mubr.f32.gmra.mrb[0].mxu0 %v1465
      %v2278 = vpop.f32.mrb[0].mxu0
      %v2279 = vadd.f32 0.0, %v2278
      %v2280 = vpop.f32.mrb[0].mxu0
      %2281 = vmatprep.mubr.f32.mxu0 0.0
      %2282 = vmatmul.mubr.f32.gmra.mrb[0].mxu0 %v1467
      %v2283 = vpop.f32.mrb[0].mxu0
      %v2284 = vadd.f32 0.0, %v2283
      %v2285 = vpop.f32.mrb[0].mxu0
      %2286 = vmatprep.mubr.f32.mxu0 0.0
      %2287 = vmatmul.mubr.f32.gmra.mrb[0].mxu0 %v1469
      %v2288 = vpop.f32.mrb[0].mxu0
      %v2289 = vadd.f32 0.0, %v2288
      %v2290 = vpop.f32.mrb[0].mxu0
      %2291 = vmatprep.mubr.f32.mxu0 0.0
      %2292 = vmatmul.mubr.f32.gmra.mrb[0].mxu0 %v1471
      %v2293 = vpop.f32.mrb[0].mxu0
      %v2294 = vadd.f32 0.0, %v2293
      %v2295 = vpop.f32.mrb[0].mxu0
      %2296 = vmatprep.mubr.f32.mxu0 0.0
      %2297 = vmatmul.mubr.f32.gmra.mrb[0].mxu0 %v1473
      %v2298 = vpop.f32.mrb[0].mxu0
      %v2299 = vadd.f32 0.0, %v2298
      %v2300 = vpop.f32.mrb[0].mxu0
      %2301 = vmatprep.mubr.f32.mxu0 0.0
      %2302 = vmatmul.mubr.f32.gmra.mrb[0].mxu0 %v1475
      %v2303 = vpop.f32.mrb[0].mxu0
      %v2304 = vadd.f32 0.0, %v2303
      %v2305 = vpop.f32.mrb[0].mxu0
      %2306 = vmatprep.mubr.f32.mxu0 0.0
      %2307 = vmatmul.mubr.f32.gmra.mrb[0].mxu0 %v2202
      %v2308 = vpop.f32.mrb[0].mxu0
      %v2309 = vadd.f32 0.0, %v2308
      %v2310 = vpop.f32.mrb[0].mxu0
      %2311 = vdwg.mxu0
      %v2312 = vadd.f32 %v2192, %v2274
      %v2313 = vadd.f32 %v2193, %v2279
      %v2314 = vadd.f32 %v2194, %v2284
      %v2315 = vadd.f32 %v2195, %v2289
      %v2316 = vadd.f32 %v2196, %v2294
      %v2317 = vadd.f32 %v2197, %v2299
      %v2318 = vadd.f32 %v2198, %v2304
      %v2319 = vadd.f32 %v2199, %v2309
      %s2320 = scalar_lea.vmem %s5, 48
      %v2321 = vld [vmem:[%s2320] sm:$0xff]
      %v2323 = vsel %vm613, %v662, 0
      %2325 = vmatprep.subr.mxu0 0.0
      %2326 = vmatpush1.msra.mxu0 %v2321
      %2327 = vmatprep.subr.mxu0 0.0
      %2328 = vmatpush1.msra.mxu0 0.0
      %2329 = vmatprep.subr.mxu0 0.0
      %2330 = vmatpush1.msra.mxu0 0.0
      %2331 = vmatprep.subr.mxu0 0.0
      %2332 = vmatpush1.msra.mxu0 0.0
      %2333 = vmatprep.subr.mxu0 0.0
      %2334 = vmatpush1.msra.mxu0 0.0
      %2335 = vmatprep.subr.mxu0 0.0
      %2336 = vmatpush1.msra.mxu0 0.0
      %2337 = vmatprep.subr.mxu0 0.0
      %2338 = vmatpush1.msra.mxu0 0.0
      %2339 = vmatprep.subr.mxu0 0.0
      %2340 = vmatpush1.msra.mxu0 0.0
      %2341 = vmatprep.subr.mxu0 0.0
      %2342 = vmatpush1.msra.mxu0 0.0
      %2343 = vmatprep.subr.mxu0 0.0
      %2344 = vmatpush1.msra.mxu0 0.0
      %2345 = vmatprep.subr.mxu0 0.0
      %2346 = vmatpush1.msra.mxu0 0.0
      %2347 = vmatprep.subr.mxu0 0.0
      %2348 = vmatpush1.msra.mxu0 0.0
      %2349 = vmatprep.subr.mxu0 0.0
      %2350 = vmatpush1.msra.mxu0 0.0
      %2351 = vmatprep.subr.mxu0 0.0
      %2352 = vmatpush1.msra.mxu0 0.0
      %2353 = vmatprep.subr.mxu0 0.0
      %2354 = vmatpush1.msra.mxu0 0.0
      %2355 = vmatprep.subr.mxu0 0.0
      %2356 = vmatpush1.msra.mxu0 0.0
      %2357 = vmatprep.subr.mxu0 0.0
      %2358 = vmatpush1.msra.mxu0 0.0
      %2359 = vmatprep.subr.mxu0 0.0
      %2360 = vmatpush1.msra.mxu0 0.0
      %2361 = vmatprep.subr.mxu0 0.0
      %2362 = vmatpush1.msra.mxu0 0.0
      %2363 = vmatprep.subr.mxu0 0.0
      %2364 = vmatpush1.msra.mxu0 0.0
      %2365 = vmatprep.subr.mxu0 0.0
      %2366 = vmatpush1.msra.mxu0 0.0
      %2367 = vmatprep.subr.mxu0 0.0
      %2368 = vmatpush1.msra.mxu0 0.0
      %2369 = vmatprep.subr.mxu0 0.0
      %2370 = vmatpush1.msra.mxu0 0.0
      %2371 = vmatprep.subr.mxu0 0.0
      %2372 = vmatpush1.msra.mxu0 0.0
      %2373 = vmatprep.subr.mxu0 0.0
      %2374 = vmatpush1.msra.mxu0 0.0
      %2375 = vmatprep.subr.mxu0 0.0
      %2376 = vmatpush1.msra.mxu0 0.0
      %2377 = vmatprep.subr.mxu0 0.0
      %2378 = vmatpush1.msra.mxu0 0.0
      %2379 = vmatprep.subr.mxu0 0.0
      %2380 = vmatpush1.msra.mxu0 0.0
      %2381 = vmatprep.subr.mxu0 0.0
      %2382 = vmatpush1.msra.mxu0 0.0
      %2383 = vmatprep.subr.mxu0 0.0
      %2384 = vmatpush1.msra.mxu0 0.0
      %2385 = vmatprep.subr.mxu0 0.0
      %2386 = vmatpush1.msra.mxu0 0.0
      %2387 = vmatprep.subr.mxu0 0.0
      %2388 = vmatpush1.msra.mxu0 0.0
      %2389 = vmatprep.mubr.f32.mxu0 0.0
      %2390 = vmatmul.mubr.f32.gmra.mrb[0].mxu0 %v827
      %v2391 = vpop.f32.mrb[0].mxu0
      %v2392 = vadd.f32 0.0, %v2391
      %v2393 = vpop.f32.mrb[0].mxu0
      %2394 = vmatprep.mubr.f32.mxu0 0.0
      %2395 = vmatmul.mubr.f32.gmra.mrb[0].mxu0 %v830
      %v2396 = vpop.f32.mrb[0].mxu0
      %v2397 = vadd.f32 0.0, %v2396
      %v2398 = vpop.f32.mrb[0].mxu0
      %2399 = vmatprep.mubr.f32.mxu0 0.0
      %2400 = vmatmul.mubr.f32.gmra.mrb[0].mxu0 %v833
      %v2401 = vpop.f32.mrb[0].mxu0
      %v2402 = vadd.f32 0.0, %v2401
      %v2403 = vpop.f32.mrb[0].mxu0
      %2404 = vmatprep.mubr.f32.mxu0 0.0
      %2405 = vmatmul.mubr.f32.gmra.mrb[0].mxu0 %v836
      %v2406 = vpop.f32.mrb[0].mxu0
      %v2407 = vadd.f32 0.0, %v2406
      %v2408 = vpop.f32.mrb[0].mxu0
      %2409 = vmatprep.mubr.f32.mxu0 0.0
      %2410 = vmatmul.mubr.f32.gmra.mrb[0].mxu0 %v839
      %v2411 = vpop.f32.mrb[0].mxu0
      %v2412 = vadd.f32 0.0, %v2411
      %v2413 = vpop.f32.mrb[0].mxu0
      %2414 = vmatprep.mubr.f32.mxu0 0.0
      %2415 = vmatmul.mubr.f32.gmra.mrb[0].mxu0 %v842
      %v2416 = vpop.f32.mrb[0].mxu0
      %v2417 = vadd.f32 0.0, %v2416
      %v2418 = vpop.f32.mrb[0].mxu0
      %2419 = vmatprep.mubr.f32.mxu0 0.0
      %2420 = vmatmul.mubr.f32.gmra.mrb[0].mxu0 %v1596
      %v2421 = vpop.f32.mrb[0].mxu0
      %v2422 = vadd.f32 0.0, %v2421
      %v2423 = vpop.f32.mrb[0].mxu0
      %2424 = vmatprep.mubr.f32.mxu0 0.0
      %2425 = vmatmul.mubr.f32.gmra.mrb[0].mxu0 %v2323
      %v2426 = vpop.f32.mrb[0].mxu0
      %v2427 = vadd.f32 0.0, %v2426
      %v2428 = vpop.f32.mrb[0].mxu0
      %2429 = vdwg.mxu0
      %v2430 = vadd.f32 %v2312, %v2392
      %v2431 = vadd.f32 %v2313, %v2397
      %v2432 = vadd.f32 %v2314, %v2402
      %v2433 = vadd.f32 %v2315, %v2407
      %v2434 = vadd.f32 %v2316, %v2412
      %v2435 = vadd.f32 %v2317, %v2417
      %v2436 = vadd.f32 %v2318, %v2422
      %v2437 = vadd.f32 %v2319, %v2427
      %s2438 = scalar_lea.vmem %s6, 24
      %v2439 = vld [vmem:[%s2438] sm:$0xf]
      %v2441 = vsel %vm686, %v682, 0
      %v2444 = vsel %vm711, %v2439, 0
      %2446 = vmatprep.subr.mxu0 0.0
      %2447 = vmatpush1.msra.mxu0 %v2444
      %2448 = vmatprep.subr.mxu0 0.0
      %2449 = vmatpush1.msra.mxu0 0.0
      %2450 = vmatprep.subr.mxu0 0.0
      %2451 = vmatpush1.msra.mxu0 0.0
      %2452 = vmatprep.subr.mxu0 0.0
      %2453 = vmatpush1.msra.mxu0 0.0
      %2454 = vmatprep.subr.mxu0 0.0
      %2455 = vmatpush1.msra.mxu0 0.0
      %2456 = vmatprep.subr.mxu0 0.0
      %2457 = vmatpush1.msra.mxu0 0.0
      %2458 = vmatprep.subr.mxu0 0.0
      %2459 = vmatpush1.msra.mxu0 0.0
      %2460 = vmatprep.subr.mxu0 0.0
      %2461 = vmatpush1.msra.mxu0 0.0
      %2462 = vmatprep.subr.mxu0 0.0
      %2463 = vmatpush1.msra.mxu0 0.0
      %2464 = vmatprep.subr.mxu0 0.0
      %2465 = vmatpush1.msra.mxu0 0.0
      %2466 = vmatprep.subr.mxu0 0.0
      %2467 = vmatpush1.msra.mxu0 0.0
      %2468 = vmatprep.subr.mxu0 0.0
      %2469 = vmatpush1.msra.mxu0 0.0
      %2470 = vmatprep.subr.mxu0 0.0
      %2471 = vmatpush1.msra.mxu0 0.0
      %2472 = vmatprep.subr.mxu0 0.0
      %2473 = vmatpush1.msra.mxu0 0.0
      %2474 = vmatprep.subr.mxu0 0.0
      %2475 = vmatpush1.msra.mxu0 0.0
      %2476 = vmatprep.subr.mxu0 0.0
      %2477 = vmatpush1.msra.mxu0 0.0
      %2478 = vmatprep.subr.mxu0 0.0
      %2479 = vmatpush1.msra.mxu0 0.0
      %2480 = vmatprep.subr.mxu0 0.0
      %2481 = vmatpush1.msra.mxu0 0.0
      %2482 = vmatprep.subr.mxu0 0.0
      %2483 = vmatpush1.msra.mxu0 0.0
      %2484 = vmatprep.subr.mxu0 0.0
      %2485 = vmatpush1.msra.mxu0 0.0
      %2486 = vmatprep.subr.mxu0 0.0
      %2487 = vmatpush1.msra.mxu0 0.0
      %2488 = vmatprep.subr.mxu0 0.0
      %2489 = vmatpush1.msra.mxu0 0.0
      %2490 = vmatprep.subr.mxu0 0.0
      %2491 = vmatpush1.msra.mxu0 0.0
      %2492 = vmatprep.subr.mxu0 0.0
      %2493 = vmatpush1.msra.mxu0 0.0
      %2494 = vmatprep.subr.mxu0 0.0
      %2495 = vmatpush1.msra.mxu0 0.0
      %2496 = vmatprep.subr.mxu0 0.0
      %2497 = vmatpush1.msra.mxu0 0.0
      %2498 = vmatprep.subr.mxu0 0.0
      %2499 = vmatpush1.msra.mxu0 0.0
      %2500 = vmatprep.subr.mxu0 0.0
      %2501 = vmatpush1.msra.mxu0 0.0
      %2502 = vmatprep.subr.mxu0 0.0
      %2503 = vmatpush1.msra.mxu0 0.0
      %2504 = vmatprep.subr.mxu0 0.0
      %2505 = vmatpush1.msra.mxu0 0.0
      %2506 = vmatprep.subr.mxu0 0.0
      %2507 = vmatpush1.msra.mxu0 0.0
      %2508 = vmatprep.subr.mxu0 0.0
      %2509 = vmatpush1.msra.mxu0 0.0
      %2510 = vmatprep.mubr.f32.mxu0 0.0
      %2511 = vmatmul.mubr.f32.gmra.mrb[0].mxu0 %v694
      %v2512 = vpop.f32.mrb[0].mxu0
      %v2513 = vadd.f32 0.0, %v2512
      %v2514 = vpop.f32.mrb[0].mxu0
      %2515 = vmatprep.mubr.f32.mxu0 0.0
      %2516 = vmatmul.mubr.f32.gmra.mrb[0].mxu0 %v697
      %v2517 = vpop.f32.mrb[0].mxu0
      %v2518 = vadd.f32 0.0, %v2517
      %v2519 = vpop.f32.mrb[0].mxu0
      %2520 = vmatprep.mubr.f32.mxu0 0.0
      %2521 = vmatmul.mubr.f32.gmra.mrb[0].mxu0 %v700
      %v2522 = vpop.f32.mrb[0].mxu0
      %v2523 = vadd.f32 0.0, %v2522
      %v2524 = vpop.f32.mrb[0].mxu0
      %2525 = vmatprep.mubr.f32.mxu0 0.0
      %2526 = vmatmul.mubr.f32.gmra.mrb[0].mxu0 %v703
      %v2527 = vpop.f32.mrb[0].mxu0
      %v2528 = vadd.f32 0.0, %v2527
      %v2529 = vpop.f32.mrb[0].mxu0
      %2530 = vmatprep.mubr.f32.mxu0 0.0
      %2531 = vmatmul.mubr.f32.gmra.mrb[0].mxu0 %v706
      %v2532 = vpop.f32.mrb[0].mxu0
      %v2533 = vadd.f32 0.0, %v2532
      %v2534 = vpop.f32.mrb[0].mxu0
      %2535 = vmatprep.mubr.f32.mxu0 0.0
      %2536 = vmatmul.mubr.f32.gmra.mrb[0].mxu0 %v709
      %v2537 = vpop.f32.mrb[0].mxu0
      %v2538 = vadd.f32 0.0, %v2537
      %v2539 = vpop.f32.mrb[0].mxu0
      %2540 = vmatprep.mubr.f32.mxu0 0.0
      %2541 = vmatmul.mubr.f32.gmra.mrb[0].mxu0 %v1714
      %v2542 = vpop.f32.mrb[0].mxu0
      %v2543 = vadd.f32 0.0, %v2542
      %v2544 = vpop.f32.mrb[0].mxu0
      %2545 = vmatprep.mubr.f32.mxu0 0.0
      %2546 = vmatmul.mubr.f32.gmra.mrb[0].mxu0 %v2441
      %v2547 = vpop.f32.mrb[0].mxu0
      %v2548 = vadd.f32 0.0, %v2547
      %v2549 = vpop.f32.mrb[0].mxu0
      %2550 = vdwg.mxu0
      %v2551 = vadd.f32 %v2430, %v2513
      %v2552 = vadd.f32 %v2431, %v2518
      %v2553 = vadd.f32 %v2432, %v2523
      %v2554 = vadd.f32 %v2433, %v2528
      %v2555 = vadd.f32 %v2434, %v2533
      %v2556 = vadd.f32 %v2435, %v2538
      %v2557 = vadd.f32 %v2436, %v2543
      %v2558 = vadd.f32 %v2437, %v2548
      %v2560 = vrot.slane %v662, 1
      %v2561 = vrot.slane %v663, 1
      %v2562 = vsel %vm957, %v2560, %v2561
      %v2564 = vrot.slane %v682, 1
      %v2565 = vrot.slane %v683, 1
      %v2566 = vsel %vm957, %v2564, %v2565
      %s2567 = scalar_lea.vmem %s5, 56
      %v2568 = vld [vmem:[%s2567] sm:$0xff]
      %v2569 = vsel %vm613, %v2562, 0
      %2571 = vmatprep.subr.mxu0 0.0
      %2572 = vmatpush1.msra.mxu0 %v2568
      %2573 = vmatprep.subr.mxu0 0.0
      %2574 = vmatpush1.msra.mxu0 0.0
      %2575 = vmatprep.subr.mxu0 0.0
      %2576 = vmatpush1.msra.mxu0 0.0
      %2577 = vmatprep.subr.mxu0 0.0
      %2578 = vmatpush1.msra.mxu0 0.0
      %2579 = vmatprep.subr.mxu0 0.0
      %2580 = vmatpush1.msra.mxu0 0.0
      %2581 = vmatprep.subr.mxu0 0.0
      %2582 = vmatpush1.msra.mxu0 0.0
      %2583 = vmatprep.subr.mxu0 0.0
      %2584 = vmatpush1.msra.mxu0 0.0
      %2585 = vmatprep.subr.mxu0 0.0
      %2586 = vmatpush1.msra.mxu0 0.0
      %2587 = vmatprep.subr.mxu0 0.0
      %2588 = vmatpush1.msra.mxu0 0.0
      %2589 = vmatprep.subr.mxu0 0.0
      %2590 = vmatpush1.msra.mxu0 0.0
      %2591 = vmatprep.subr.mxu0 0.0
      %2592 = vmatpush1.msra.mxu0 0.0
      %2593 = vmatprep.subr.mxu0 0.0
      %2594 = vmatpush1.msra.mxu0 0.0
      %2595 = vmatprep.subr.mxu0 0.0
      %2596 = vmatpush1.msra.mxu0 0.0
      %2597 = vmatprep.subr.mxu0 0.0
      %2598 = vmatpush1.msra.mxu0 0.0
      %2599 = vmatprep.subr.mxu0 0.0
      %2600 = vmatpush1.msra.mxu0 0.0
      %2601 = vmatprep.subr.mxu0 0.0
      %2602 = vmatpush1.msra.mxu0 0.0
      %2603 = vmatprep.subr.mxu0 0.0
      %2604 = vmatpush1.msra.mxu0 0.0
      %2605 = vmatprep.subr.mxu0 0.0
      %2606 = vmatpush1.msra.mxu0 0.0
      %2607 = vmatprep.subr.mxu0 0.0
      %2608 = vmatpush1.msra.mxu0 0.0
      %2609 = vmatprep.subr.mxu0 0.0
      %2610 = vmatpush1.msra.mxu0 0.0
      %2611 = vmatprep.subr.mxu0 0.0
      %2612 = vmatpush1.msra.mxu0 0.0
      %2613 = vmatprep.subr.mxu0 0.0
      %2614 = vmatpush1.msra.mxu0 0.0
      %2615 = vmatprep.subr.mxu0 0.0
      %2616 = vmatpush1.msra.mxu0 0.0
      %2617 = vmatprep.subr.mxu0 0.0
      %2618 = vmatpush1.msra.mxu0 0.0
      %2619 = vmatprep.subr.mxu0 0.0
      %2620 = vmatpush1.msra.mxu0 0.0
      %2621 = vmatprep.subr.mxu0 0.0
      %2622 = vmatpush1.msra.mxu0 0.0
      %2623 = vmatprep.subr.mxu0 0.0
      %2624 = vmatpush1.msra.mxu0 0.0
      %2625 = vmatprep.subr.mxu0 0.0
      %2626 = vmatpush1.msra.mxu0 0.0
      %2627 = vmatprep.subr.mxu0 0.0
      %2628 = vmatpush1.msra.mxu0 0.0
      %2629 = vmatprep.subr.mxu0 0.0
      %2630 = vmatpush1.msra.mxu0 0.0
      %2631 = vmatprep.subr.mxu0 0.0
      %2632 = vmatpush1.msra.mxu0 0.0
      %2633 = vmatprep.subr.mxu0 0.0
      %2634 = vmatpush1.msra.mxu0 0.0
      %2635 = vmatprep.mubr.f32.mxu0 0.0
      %2636 = vmatmul.mubr.f32.gmra.mrb[0].mxu0 %v1020
      %v2637 = vpop.f32.mrb[0].mxu0
      %v2638 = vadd.f32 0.0, %v2637
      %v2639 = vpop.f32.mrb[0].mxu0
      %2640 = vmatprep.mubr.f32.mxu0 0.0
      %2641 = vmatmul.mubr.f32.gmra.mrb[0].mxu0 %v1022
      %v2642 = vpop.f32.mrb[0].mxu0
      %v2643 = vadd.f32 0.0, %v2642
      %v2644 = vpop.f32.mrb[0].mxu0
      %2645 = vmatprep.mubr.f32.mxu0 0.0
      %2646 = vmatmul.mubr.f32.gmra.mrb[0].mxu0 %v1024
      %v2647 = vpop.f32.mrb[0].mxu0
      %v2648 = vadd.f32 0.0, %v2647
      %v2649 = vpop.f32.mrb[0].mxu0
      %2650 = vmatprep.mubr.f32.mxu0 0.0
      %2651 = vmatmul.mubr.f32.gmra.mrb[0].mxu0 %v1026
      %v2652 = vpop.f32.mrb[0].mxu0
      %v2653 = vadd.f32 0.0, %v2652
      %v2654 = vpop.f32.mrb[0].mxu0
      %2655 = vmatprep.mubr.f32.mxu0 0.0
      %2656 = vmatmul.mubr.f32.gmra.mrb[0].mxu0 %v1028
      %v2657 = vpop.f32.mrb[0].mxu0
      %v2658 = vadd.f32 0.0, %v2657
      %v2659 = vpop.f32.mrb[0].mxu0
      %2660 = vmatprep.mubr.f32.mxu0 0.0
      %2661 = vmatmul.mubr.f32.gmra.mrb[0].mxu0 %v1030
      %v2662 = vpop.f32.mrb[0].mxu0
      %v2663 = vadd.f32 0.0, %v2662
      %v2664 = vpop.f32.mrb[0].mxu0
      %2665 = vmatprep.mubr.f32.mxu0 0.0
      %2666 = vmatmul.mubr.f32.gmra.mrb[0].mxu0 %v1842
      %v2667 = vpop.f32.mrb[0].mxu0
      %v2668 = vadd.f32 0.0, %v2667
      %v2669 = vpop.f32.mrb[0].mxu0
      %2670 = vmatprep.mubr.f32.mxu0 0.0
      %2671 = vmatmul.mubr.f32.gmra.mrb[0].mxu0 %v2569
      %v2672 = vpop.f32.mrb[0].mxu0
      %v2673 = vadd.f32 0.0, %v2672
      %v2674 = vpop.f32.mrb[0].mxu0
      %2675 = vdwg.mxu0
      %v2676 = vadd.f32 %v2551, %v2638
      %v2677 = vadd.f32 %v2552, %v2643
      %v2678 = vadd.f32 %v2553, %v2648
      %v2679 = vadd.f32 %v2554, %v2653
      %v2680 = vadd.f32 %v2555, %v2658
      %v2681 = vadd.f32 %v2556, %v2663
      %v2682 = vadd.f32 %v2557, %v2668
      %v2683 = vadd.f32 %v2558, %v2673
      %s2684 = scalar_lea.vmem %s6, 28
      %v2685 = vld [vmem:[%s2684] sm:$0xf]
      %v2686 = vsel %vm686, %v2566, 0
      %v2689 = vsel %vm711, %v2685, 0
      %2691 = vmatprep.subr.mxu0 0.0
      %2692 = vmatpush1.msra.mxu0 %v2689
      %2693 = vmatprep.subr.mxu0 0.0
      %2694 = vmatpush1.msra.mxu0 0.0
      %2695 = vmatprep.subr.mxu0 0.0
      %2696 = vmatpush1.msra.mxu0 0.0
      %2697 = vmatprep.subr.mxu0 0.0
      %2698 = vmatpush1.msra.mxu0 0.0
      %2699 = vmatprep.subr.mxu0 0.0
      %2700 = vmatpush1.msra.mxu0 0.0
      %2701 = vmatprep.subr.mxu0 0.0
      %2702 = vmatpush1.msra.mxu0 0.0
      %2703 = vmatprep.subr.mxu0 0.0
      %2704 = vmatpush1.msra.mxu0 0.0
      %2705 = vmatprep.subr.mxu0 0.0
      %2706 = vmatpush1.msra.mxu0 0.0
      %2707 = vmatprep.subr.mxu0 0.0
      %2708 = vmatpush1.msra.mxu0 0.0
      %2709 = vmatprep.subr.mxu0 0.0
      %2710 = vmatpush1.msra.mxu0 0.0
      %2711 = vmatprep.subr.mxu0 0.0
      %2712 = vmatpush1.msra.mxu0 0.0
      %2713 = vmatprep.subr.mxu0 0.0
      %2714 = vmatpush1.msra.mxu0 0.0
      %2715 = vmatprep.subr.mxu0 0.0
      %2716 = vmatpush1.msra.mxu0 0.0
      %2717 = vmatprep.subr.mxu0 0.0
      %2718 = vmatpush1.msra.mxu0 0.0
      %2719 = vmatprep.subr.mxu0 0.0
      %2720 = vmatpush1.msra.mxu0 0.0
      %2721 = vmatprep.subr.mxu0 0.0
      %2722 = vmatpush1.msra.mxu0 0.0
      %2723 = vmatprep.subr.mxu0 0.0
      %2724 = vmatpush1.msra.mxu0 0.0
      %2725 = vmatprep.subr.mxu0 0.0
      %2726 = vmatpush1.msra.mxu0 0.0
      %2727 = vmatprep.subr.mxu0 0.0
      %2728 = vmatpush1.msra.mxu0 0.0
      %2729 = vmatprep.subr.mxu0 0.0
      %2730 = vmatpush1.msra.mxu0 0.0
      %2731 = vmatprep.subr.mxu0 0.0
      %2732 = vmatpush1.msra.mxu0 0.0
      %2733 = vmatprep.subr.mxu0 0.0
      %2734 = vmatpush1.msra.mxu0 0.0
      %2735 = vmatprep.subr.mxu0 0.0
      %2736 = vmatpush1.msra.mxu0 0.0
      %2737 = vmatprep.subr.mxu0 0.0
      %2738 = vmatpush1.msra.mxu0 0.0
      %2739 = vmatprep.subr.mxu0 0.0
      %2740 = vmatpush1.msra.mxu0 0.0
      %2741 = vmatprep.subr.mxu0 0.0
      %2742 = vmatpush1.msra.mxu0 0.0
      %2743 = vmatprep.subr.mxu0 0.0
      %2744 = vmatpush1.msra.mxu0 0.0
      %2745 = vmatprep.subr.mxu0 0.0
      %2746 = vmatpush1.msra.mxu0 0.0
      %2747 = vmatprep.subr.mxu0 0.0
      %2748 = vmatpush1.msra.mxu0 0.0
      %2749 = vmatprep.subr.mxu0 0.0
      %2750 = vmatpush1.msra.mxu0 0.0
      %2751 = vmatprep.subr.mxu0 0.0
      %2752 = vmatpush1.msra.mxu0 0.0
      %2753 = vmatprep.subr.mxu0 0.0
      %2754 = vmatpush1.msra.mxu0 0.0
      %2755 = vmatprep.mubr.f32.mxu0 0.0
      %2756 = vmatmul.mubr.f32.gmra.mrb[0].mxu0 %v1151
      %v2757 = vpop.f32.mrb[0].mxu0
      %v2758 = vadd.f32 0.0, %v2757
      %v2759 = vpop.f32.mrb[0].mxu0
      %2760 = vmatprep.mubr.f32.mxu0 0.0
      %2761 = vmatmul.mubr.f32.gmra.mrb[0].mxu0 %v1153
      %v2762 = vpop.f32.mrb[0].mxu0
      %v2763 = vadd.f32 0.0, %v2762
      %v2764 = vpop.f32.mrb[0].mxu0
      %2765 = vmatprep.mubr.f32.mxu0 0.0
      %2766 = vmatmul.mubr.f32.gmra.mrb[0].mxu0 %v1155
      %v2767 = vpop.f32.mrb[0].mxu0
      %v2768 = vadd.f32 0.0, %v2767
      %v2769 = vpop.f32.mrb[0].mxu0
      %2770 = vmatprep.mubr.f32.mxu0 0.0
      %2771 = vmatmul.mubr.f32.gmra.mrb[0].mxu0 %v1157
      %v2772 = vpop.f32.mrb[0].mxu0
      %v2773 = vadd.f32 0.0, %v2772
      %v2774 = vpop.f32.mrb[0].mxu0
      %2775 = vmatprep.mubr.f32.mxu0 0.0
      %2776 = vmatmul.mubr.f32.gmra.mrb[0].mxu0 %v1159
      %v2777 = vpop.f32.mrb[0].mxu0
      %v2778 = vadd.f32 0.0, %v2777
      %v2779 = vpop.f32.mrb[0].mxu0
      %2780 = vmatprep.mubr.f32.mxu0 0.0
      %2781 = vmatmul.mubr.f32.gmra.mrb[0].mxu0 %v1161
      %v2782 = vpop.f32.mrb[0].mxu0
      %v2783 = vadd.f32 0.0, %v2782
      %v2784 = vpop.f32.mrb[0].mxu0
      %2785 = vmatprep.mubr.f32.mxu0 0.0
      %2786 = vmatmul.mubr.f32.gmra.mrb[0].mxu0 %v1959
      %v2787 = vpop.f32.mrb[0].mxu0
      %v2788 = vadd.f32 0.0, %v2787
      %v2789 = vpop.f32.mrb[0].mxu0
      %2790 = vmatprep.mubr.f32.mxu0 0.0
      %2791 = vmatmul.mubr.f32.gmra.mrb[0].mxu0 %v2686
      %v2792 = vpop.f32.mrb[0].mxu0
      %v2793 = vadd.f32 0.0, %v2792
      %v2794 = vpop.f32.mrb[0].mxu0
      %2795 = vdwg.mxu0
      %v2796 = vadd.f32 %v2676, %v2758
      %v2797 = vadd.f32 %v2677, %v2763
      %v2798 = vadd.f32 %v2678, %v2768
      %v2799 = vadd.f32 %v2679, %v2773
      %v2800 = vadd.f32 %v2680, %v2778
      %v2801 = vadd.f32 %v2681, %v2783
      %v2802 = vadd.f32 %v2682, %v2788
      %v2803 = vadd.f32 %v2683, %v2793
      %v2804 = vrot.slane %v662, 2
      %v2805 = vrot.slane %v663, 2
      %v2806 = vsel %vm1279, %v2804, %v2805
      %v2807 = vrot.slane %v682, 2
      %v2808 = vrot.slane %v683, 2
      %v2809 = vsel %vm1279, %v2807, %v2808
      %s2810 = scalar_lea.vmem %s5, 64
      %v2811 = vld [vmem:[%s2810] sm:$0xff]
      %v2812 = vsel %vm613, %v2806, 0
      %2814 = vmatprep.subr.mxu0 0.0
      %2815 = vmatpush1.msra.mxu0 %v2811
      %2816 = vmatprep.subr.mxu0 0.0
      %2817 = vmatpush1.msra.mxu0 0.0
      %2818 = vmatprep.subr.mxu0 0.0
      %2819 = vmatpush1.msra.mxu0 0.0
      %2820 = vmatprep.subr.mxu0 0.0
      %2821 = vmatpush1.msra.mxu0 0.0
      %2822 = vmatprep.subr.mxu0 0.0
      %2823 = vmatpush1.msra.mxu0 0.0
      %2824 = vmatprep.subr.mxu0 0.0
      %2825 = vmatpush1.msra.mxu0 0.0
      %2826 = vmatprep.subr.mxu0 0.0
      %2827 = vmatpush1.msra.mxu0 0.0
      %2828 = vmatprep.subr.mxu0 0.0
      %2829 = vmatpush1.msra.mxu0 0.0
      %2830 = vmatprep.subr.mxu0 0.0
      %2831 = vmatpush1.msra.mxu0 0.0
      %2832 = vmatprep.subr.mxu0 0.0
      %2833 = vmatpush1.msra.mxu0 0.0
      %2834 = vmatprep.subr.mxu0 0.0
      %2835 = vmatpush1.msra.mxu0 0.0
      %2836 = vmatprep.subr.mxu0 0.0
      %2837 = vmatpush1.msra.mxu0 0.0
      %2838 = vmatprep.subr.mxu0 0.0
      %2839 = vmatpush1.msra.mxu0 0.0
      %2840 = vmatprep.subr.mxu0 0.0
      %2841 = vmatpush1.msra.mxu0 0.0
      %2842 = vmatprep.subr.mxu0 0.0
      %2843 = vmatpush1.msra.mxu0 0.0
      %2844 = vmatprep.subr.mxu0 0.0
      %2845 = vmatpush1.msra.mxu0 0.0
      %2846 = vmatprep.subr.mxu0 0.0
      %2847 = vmatpush1.msra.mxu0 0.0
      %2848 = vmatprep.subr.mxu0 0.0
      %2849 = vmatpush1.msra.mxu0 0.0
      %2850 = vmatprep.subr.mxu0 0.0
      %2851 = vmatpush1.msra.mxu0 0.0
      %2852 = vmatprep.subr.mxu0 0.0
      %2853 = vmatpush1.msra.mxu0 0.0
      %2854 = vmatprep.subr.mxu0 0.0
      %2855 = vmatpush1.msra.mxu0 0.0
      %2856 = vmatprep.subr.mxu0 0.0
      %2857 = vmatpush1.msra.mxu0 0.0
      %2858 = vmatprep.subr.mxu0 0.0
      %2859 = vmatpush1.msra.mxu0 0.0
      %2860 = vmatprep.subr.mxu0 0.0
      %2861 = vmatpush1.msra.mxu0 0.0
      %2862 = vmatprep.subr.mxu0 0.0
      %2863 = vmatpush1.msra.mxu0 0.0
      %2864 = vmatprep.subr.mxu0 0.0
      %2865 = vmatpush1.msra.mxu0 0.0
      %2866 = vmatprep.subr.mxu0 0.0
      %2867 = vmatpush1.msra.mxu0 0.0
      %2868 = vmatprep.subr.mxu0 0.0
      %2869 = vmatpush1.msra.mxu0 0.0
      %2870 = vmatprep.subr.mxu0 0.0
      %2871 = vmatpush1.msra.mxu0 0.0
      %2872 = vmatprep.subr.mxu0 0.0
      %2873 = vmatpush1.msra.mxu0 0.0
      %2874 = vmatprep.subr.mxu0 0.0
      %2875 = vmatpush1.msra.mxu0 0.0
      %2876 = vmatprep.subr.mxu0 0.0
      %2877 = vmatpush1.msra.mxu0 0.0
      %2878 = vmatprep.mubr.f32.mxu0 0.0
      %2879 = vmatmul.mubr.f32.gmra.mrb[0].mxu0 %v1334
      %v2880 = vpop.f32.mrb[0].mxu0
      %v2881 = vadd.f32 0.0, %v2880
      %v2882 = vpop.f32.mrb[0].mxu0
      %2883 = vmatprep.mubr.f32.mxu0 0.0
      %2884 = vmatmul.mubr.f32.gmra.mrb[0].mxu0 %v1336
      %v2885 = vpop.f32.mrb[0].mxu0
      %v2886 = vadd.f32 0.0, %v2885
      %v2887 = vpop.f32.mrb[0].mxu0
      %2888 = vmatprep.mubr.f32.mxu0 0.0
      %2889 = vmatmul.mubr.f32.gmra.mrb[0].mxu0 %v1338
      %v2890 = vpop.f32.mrb[0].mxu0
      %v2891 = vadd.f32 0.0, %v2890
      %v2892 = vpop.f32.mrb[0].mxu0
      %2893 = vmatprep.mubr.f32.mxu0 0.0
      %2894 = vmatmul.mubr.f32.gmra.mrb[0].mxu0 %v1340
      %v2895 = vpop.f32.mrb[0].mxu0
      %v2896 = vadd.f32 0.0, %v2895
      %v2897 = vpop.f32.mrb[0].mxu0
      %2898 = vmatprep.mubr.f32.mxu0 0.0
      %2899 = vmatmul.mubr.f32.gmra.mrb[0].mxu0 %v1342
      %v2900 = vpop.f32.mrb[0].mxu0
      %v2901 = vadd.f32 0.0, %v2900
      %v2902 = vpop.f32.mrb[0].mxu0
      %2903 = vmatprep.mubr.f32.mxu0 0.0
      %2904 = vmatmul.mubr.f32.gmra.mrb[0].mxu0 %v1344
      %v2905 = vpop.f32.mrb[0].mxu0
      %v2906 = vadd.f32 0.0, %v2905
      %v2907 = vpop.f32.mrb[0].mxu0
      %2908 = vmatprep.mubr.f32.mxu0 0.0
      %2909 = vmatmul.mubr.f32.gmra.mrb[0].mxu0 %v2085
      %v2910 = vpop.f32.mrb[0].mxu0
      %v2911 = vadd.f32 0.0, %v2910
      %v2912 = vpop.f32.mrb[0].mxu0
      %2913 = vmatprep.mubr.f32.mxu0 0.0
      %2914 = vmatmul.mubr.f32.gmra.mrb[0].mxu0 %v2812
      %v2915 = vpop.f32.mrb[0].mxu0
      %v2916 = vadd.f32 0.0, %v2915
      %v2917 = vpop.f32.mrb[0].mxu0
      %2918 = vdwg.mxu0
      %v2919 = vadd.f32 %v2796, %v2881
      %v2920 = vadd.f32 %v2797, %v2886
      %v2921 = vadd.f32 %v2798, %v2891
      %v2922 = vadd.f32 %v2799, %v2896
      %v2923 = vadd.f32 %v2800, %v2901
      %v2924 = vadd.f32 %v2801, %v2906
      %v2925 = vadd.f32 %v2802, %v2911
      %v2926 = vadd.f32 %v2803, %v2916
      %s2927 = scalar_lea.vmem %s6, 32
      %v2928 = vld [vmem:[%s2927] sm:$0xf]
      %v2929 = vsel %vm686, %v2809, 0
      %v2932 = vsel %vm711, %v2928, 0
      %2934 = vmatprep.subr.mxu0 0.0
      %2935 = vmatpush1.msra.mxu0 %v2932
      %2936 = vmatprep.subr.mxu0 0.0
      %2937 = vmatpush1.msra.mxu0 0.0
      %2938 = vmatprep.subr.mxu0 0.0
      %2939 = vmatpush1.msra.mxu0 0.0
      %2940 = vmatprep.subr.mxu0 0.0
      %2941 = vmatpush1.msra.mxu0 0.0
      %2942 = vmatprep.subr.mxu0 0.0
      %2943 = vmatpush1.msra.mxu0 0.0
      %2944 = vmatprep.subr.mxu0 0.0
      %2945 = vmatpush1.msra.mxu0 0.0
      %2946 = vmatprep.subr.mxu0 0.0
      %2947 = vmatpush1.msra.mxu0 0.0
      %2948 = vmatprep.subr.mxu0 0.0
      %2949 = vmatpush1.msra.mxu0 0.0
      %2950 = vmatprep.subr.mxu0 0.0
      %2951 = vmatpush1.msra.mxu0 0.0
      %2952 = vmatprep.subr.mxu0 0.0
      %2953 = vmatpush1.msra.mxu0 0.0
      %2954 = vmatprep.subr.mxu0 0.0
      %2955 = vmatpush1.msra.mxu0 0.0
      %2956 = vmatprep.subr.mxu0 0.0
      %2957 = vmatpush1.msra.mxu0 0.0
      %2958 = vmatprep.subr.mxu0 0.0
      %2959 = vmatpush1.msra.mxu0 0.0
      %2960 = vmatprep.subr.mxu0 0.0
      %2961 = vmatpush1.msra.mxu0 0.0
      %2962 = vmatprep.subr.mxu0 0.0
      %2963 = vmatpush1.msra.mxu0 0.0
      %2964 = vmatprep.subr.mxu0 0.0
      %2965 = vmatpush1.msra.mxu0 0.0
      %2966 = vmatprep.subr.mxu0 0.0
      %2967 = vmatpush1.msra.mxu0 0.0
      %2968 = vmatprep.subr.mxu0 0.0
      %2969 = vmatpush1.msra.mxu0 0.0
      %2970 = vmatprep.subr.mxu0 0.0
      %2971 = vmatpush1.msra.mxu0 0.0
      %2972 = vmatprep.subr.mxu0 0.0
      %2973 = vmatpush1.msra.mxu0 0.0
      %2974 = vmatprep.subr.mxu0 0.0
      %2975 = vmatpush1.msra.mxu0 0.0
      %2976 = vmatprep.subr.mxu0 0.0
      %2977 = vmatpush1.msra.mxu0 0.0
      %2978 = vmatprep.subr.mxu0 0.0
      %2979 = vmatpush1.msra.mxu0 0.0
      %2980 = vmatprep.subr.mxu0 0.0
      %2981 = vmatpush1.msra.mxu0 0.0
      %2982 = vmatprep.subr.mxu0 0.0
      %2983 = vmatpush1.msra.mxu0 0.0
      %2984 = vmatprep.subr.mxu0 0.0
      %2985 = vmatpush1.msra.mxu0 0.0
      %2986 = vmatprep.subr.mxu0 0.0
      %2987 = vmatpush1.msra.mxu0 0.0
      %2988 = vmatprep.subr.mxu0 0.0
      %2989 = vmatpush1.msra.mxu0 0.0
      %2990 = vmatprep.subr.mxu0 0.0
      %2991 = vmatpush1.msra.mxu0 0.0
      %2992 = vmatprep.subr.mxu0 0.0
      %2993 = vmatpush1.msra.mxu0 0.0
      %2994 = vmatprep.subr.mxu0 0.0
      %2995 = vmatpush1.msra.mxu0 0.0
      %2996 = vmatprep.subr.mxu0 0.0
      %2997 = vmatpush1.msra.mxu0 0.0
      %2998 = vmatprep.mubr.f32.mxu0 0.0
      %2999 = vmatmul.mubr.f32.gmra.mrb[0].mxu0 %v1465
      %v3000 = vpop.f32.mrb[0].mxu0
      %v3001 = vadd.f32 0.0, %v3000
      %v3002 = vpop.f32.mrb[0].mxu0
      %3003 = vmatprep.mubr.f32.mxu0 0.0
      %3004 = vmatmul.mubr.f32.gmra.mrb[0].mxu0 %v1467
      %v3005 = vpop.f32.mrb[0].mxu0
      %v3006 = vadd.f32 0.0, %v3005
      %v3007 = vpop.f32.mrb[0].mxu0
      %3008 = vmatprep.mubr.f32.mxu0 0.0
      %3009 = vmatmul.mubr.f32.gmra.mrb[0].mxu0 %v1469
      %v3010 = vpop.f32.mrb[0].mxu0
      %v3011 = vadd.f32 0.0, %v3010
      %v3012 = vpop.f32.mrb[0].mxu0
      %3013 = vmatprep.mubr.f32.mxu0 0.0
      %3014 = vmatmul.mubr.f32.gmra.mrb[0].mxu0 %v1471
      %v3015 = vpop.f32.mrb[0].mxu0
      %v3016 = vadd.f32 0.0, %v3015
      %v3017 = vpop.f32.mrb[0].mxu0
      %3018 = vmatprep.mubr.f32.mxu0 0.0
      %3019 = vmatmul.mubr.f32.gmra.mrb[0].mxu0 %v1473
      %v3020 = vpop.f32.mrb[0].mxu0
      %v3021 = vadd.f32 0.0, %v3020
      %v3022 = vpop.f32.mrb[0].mxu0
      %3023 = vmatprep.mubr.f32.mxu0 0.0
      %3024 = vmatmul.mubr.f32.gmra.mrb[0].mxu0 %v1475
      %v3025 = vpop.f32.mrb[0].mxu0
      %v3026 = vadd.f32 0.0, %v3025
      %v3027 = vpop.f32.mrb[0].mxu0
      %3028 = vmatprep.mubr.f32.mxu0 0.0
      %3029 = vmatmul.mubr.f32.gmra.mrb[0].mxu0 %v2202
      %v3030 = vpop.f32.mrb[0].mxu0
      %v3031 = vadd.f32 0.0, %v3030
      %v3032 = vpop.f32.mrb[0].mxu0
      %3033 = vmatprep.mubr.f32.mxu0 0.0
      %3034 = vmatmul.mubr.f32.gmra.mrb[0].mxu0 %v2929
      %v3035 = vpop.f32.mrb[0].mxu0
      %v3036 = vadd.f32 0.0, %v3035
      %v3037 = vpop.f32.mrb[0].mxu0
      %3038 = vdwg.mxu0
      %v3039 = vadd.f32 %v2919, %v3001
      %v3040 = vadd.f32 %v2920, %v3006
      %v3041 = vadd.f32 %v2921, %v3011
      %v3042 = vadd.f32 %v2922, %v3016
      %v3043 = vadd.f32 %v2923, %v3021
      %v3044 = vadd.f32 %v2924, %v3026
      %v3045 = vadd.f32 %v2925, %v3031
      %v3046 = vadd.f32 %v2926, %v3036
      %v3047 = vld [vmem:[%s7] sm:$0x1]
      %v3049 = vlaneseq
      %v3050 = vshrl.u32 %v3049, 7
      %v3051 = vsub.s32 0, %v3050
      %v3052 = vrot.slane %v3047, %v3051
      %v3054 = vadd.f32 %v3039, %v3052
      %v3055 = vadd.f32 %v3040, %v3052
      %v3056 = vadd.f32 %v3041, %v3052
      %v3057 = vadd.f32 %v3042, %v3052
      %v3058 = vadd.f32 %v3043, %v3052
      %v3059 = vadd.f32 %v3044, %v3052
      %v3060 = vadd.f32 %v3045, %v3052
      %v3061 = vadd.f32 %v3046, %v3052
      %vm3062 = vcmp.gt.f32.partialorder %v3054, 0.0
      %vm3063 = vcmp.gt.f32.partialorder %v3055, 0.0
      %vm3064 = vcmp.gt.f32.partialorder %v3056, 0.0
      %vm3065 = vcmp.gt.f32.partialorder %v3057, 0.0
      %vm3066 = vcmp.gt.f32.partialorder %v3058, 0.0
      %vm3067 = vcmp.gt.f32.partialorder %v3059, 0.0
      %vm3068 = vcmp.gt.f32.partialorder %v3060, 0.0
      %vm3069 = vcmp.gt.f32.partialorder %v3061, 0.0
      %v3070 = vmin.f32 %v3054, 0.0
      %v3071 = vmin.f32 %v3055, 0.0
      %v3072 = vmin.f32 %v3056, 0.0
      %v3073 = vmin.f32 %v3057, 0.0
      %v3074 = vmin.f32 %v3058, 0.0
      %v3075 = vmin.f32 %v3059, 0.0
      %v3076 = vmin.f32 %v3060, 0.0
      %v3077 = vmin.f32 %v3061, 0.0
      %v3078 = vmul.f32 %v3070, 1.442695
      %v3079 = vpow.pop %v3078
      %v3080 = vmul.f32 %v3071, 1.442695
      %v3081 = vpow.pop %v3080
      %v3082 = vmul.f32 %v3072, 1.442695
      %v3083 = vpow.pop %v3082
      %v3084 = vmul.f32 %v3073, 1.442695
      %v3085 = vpow.pop %v3084
      %v3086 = vmul.f32 %v3074, 1.442695
      %v3087 = vpow.pop %v3086
      %v3088 = vmul.f32 %v3075, 1.442695
      %v3089 = vpow.pop %v3088
      %v3090 = vmul.f32 %v3076, 1.442695
      %v3091 = vpow.pop %v3090
      %v3092 = vmul.f32 %v3077, 1.442695
      %v3093 = vpow.pop %v3092
      %v3094 = vsub.f32 %v3079, 1.0
      %v3095 = vsub.f32 %v3081, 1.0
      %v3096 = vsub.f32 %v3083, 1.0
      %v3097 = vsub.f32 %v3085, 1.0
      %v3098 = vsub.f32 %v3087, 1.0
      %v3099 = vsub.f32 %v3089, 1.0
      %v3100 = vsub.f32 %v3091, 1.0
      %v3101 = vsub.f32 %v3093, 1.0
      %v3102 = vsel %vm3062, %v3054, %v3094
      %v3103 = vsel %vm3063, %v3055, %v3095
      %v3104 = vsel %vm3064, %v3056, %v3096
      %v3105 = vsel %vm3065, %v3057, %v3097
      %v3106 = vsel %vm3066, %v3058, %v3098
      %v3107 = vsel %vm3067, %v3059, %v3099
      %v3108 = vsel %vm3068, %v3060, %v3100
      %v3109 = vsel %vm3069, %v3061, %v3101
      %vm3110 = vcmask 261120
      %3111 = vst.msk [vmem:[#allocation3] sm:$0xff] %vm3110, 0.0
      %vm3112 = vcmask 254976
      %3113 = vst.msk [vmem:[#allocation3 + $0x8] sm:$0x3] %vm3112, 0.0
      %3114 = vst.msk [vmem:[#allocation3 + $0x10] sm:$0xff] %vm3110, 0.0
      %3115 = vst.msk [vmem:[#allocation3 + $0x18] sm:$0x3] %vm3112, 0.0
      %3116 = vst.msk [vmem:[#allocation3 + $0x20] sm:$0xff] %vm3110, 0.0
      %3117 = vst.msk [vmem:[#allocation3 + $0x28] sm:$0x3] %vm3112, 0.0
      %3118 = vst.msk [vmem:[#allocation3 + $0x30] sm:$0xff] %vm3110, 0.0
      %3119 = vst.msk [vmem:[#allocation3 + $0x38] sm:$0x3] %vm3112, 0.0
      %3120 = vst.msk [vmem:[#allocation3 + $0x40] sm:$0xff] %vm3110, 0.0
      %3121 = vst.msk [vmem:[#allocation3 + $0x48] sm:$0x3] %vm3112, 0.0
      %3122 = vst.msk [vmem:[#allocation3 + $0x50] sm:$0xff] %vm3110, 0.0
      %3123 = vst.msk [vmem:[#allocation3 + $0x58] sm:$0x3] %vm3112, 0.0
      %3124 = vst.msk [vmem:[#allocation3 + $0x60] sm:$0xff] %vm3110, 0.0
      %3125 = vst.msk [vmem:[#allocation3 + $0x68] sm:$0x3] %vm3112, 0.0
      %3126 = vst.msk [vmem:[#allocation3 + $0x70] sm:$0xff] %vm3110, 0.0
      %3127 = vst.msk [vmem:[#allocation3 + $0x78] sm:$0x3] %vm3112, 0.0
      %3128 = vst.msk [vmem:[#allocation3 + $0x80] sm:$0xff] %vm3110, 0.0
      %3129 = vst.msk [vmem:[#allocation3 + $0x88] sm:$0x3] %vm3112, 0.0
      %3130 = vst.msk [vmem:[#allocation3 + $0x90] sm:$0xff] %vm3110, 0.0
      %3131 = vst.msk [vmem:[#allocation3 + $0x98] sm:$0x3] %vm3112, 0.0
      %s3132 = scalar_lea.vmem [#allocation3], 16
      %3133 = vst.msk [vmem:[%s3132 + $0x1] sm:$0xff] %vm3110, %v3102
      %3134 = vst.msk [vmem:[%s3132 + $0x11] sm:$0xff] %vm3110, %v3103
      %3135 = vst.msk [vmem:[%s3132 + $0x21] sm:$0xff] %vm3110, %v3104
      %3136 = vst.msk [vmem:[%s3132 + $0x31] sm:$0xff] %vm3110, %v3105
      %3137 = vst.msk [vmem:[%s3132 + $0x41] sm:$0xff] %vm3110, %v3106
      %3138 = vst.msk [vmem:[%s3132 + $0x51] sm:$0xff] %vm3110, %v3107
      %3139 = vst.msk [vmem:[%s3132 + $0x61] sm:$0xff] %vm3110, %v3108
      %3140 = vst.msk [vmem:[%s3132 + $0x71] sm:$0xff] %vm3110, %v3109
      %v3141 = vld [vmem:[#allocation3] sm:$0xff]
      %v3142 = vld [vmem:[#allocation3 + $0x8] sm:$0x3]
      %v3143 = vld [vmem:[#allocation3 + $0x10] sm:$0xff]
      %v3144 = vld [vmem:[#allocation3 + $0x18] sm:$0x3]
      %v3145 = vld [vmem:[#allocation3 + $0x20] sm:$0xff]
      %v3146 = vld [vmem:[#allocation3 + $0x28] sm:$0x3]
      %v3147 = vld [vmem:[#allocation3 + $0x30] sm:$0xff]
      %v3148 = vld [vmem:[#allocation3 + $0x38] sm:$0x3]
      %v3149 = vld [vmem:[#allocation3 + $0x40] sm:$0xff]
      %v3150 = vld [vmem:[#allocation3 + $0x48] sm:$0x3]
      %v3151 = vld [vmem:[#allocation3 + $0x50] sm:$0xff]
      %v3152 = vld [vmem:[#allocation3 + $0x58] sm:$0x3]
      %v3153 = vld [vmem:[#allocation3 + $0x60] sm:$0xff]
      %v3154 = vld [vmem:[#allocation3 + $0x68] sm:$0x3]
      %v3155 = vld [vmem:[#allocation3 + $0x70] sm:$0xff]
      %v3156 = vld [vmem:[#allocation3 + $0x78] sm:$0x3]
      %v3157 = vld [vmem:[#allocation3 + $0x80] sm:$0xff]
      %v3158 = vld [vmem:[#allocation3 + $0x88] sm:$0x3]
      %v3159 = vld [vmem:[#allocation3 + $0x90] sm:$0xff]
      %v3160 = vld [vmem:[#allocation3 + $0x98] sm:$0x3]
      %v3161 = vld [vmem:[%s8] sm:$0xff]
      %v3162 = vld [vmem:[%s8 + $0x8] sm:$0xff]
      %v3163 = vld [vmem:[%s8 + $0x10] sm:$0xff]
      %v3164 = vld [vmem:[%s8 + $0x18] sm:$0xff]
      %v3181 = vrot.slane %v3141, 1
      %v3182 = vrot.slane %v3142, 1
      %v3183 = vsel %vm957, %v3181, %v3182
      %v3184 = vrot.slane %v3143, 1
      %v3185 = vrot.slane %v3144, 1
      %v3186 = vsel %vm957, %v3184, %v3185
      %v3187 = vrot.slane %v3145, 1
      %v3188 = vrot.slane %v3146, 1
      %v3189 = vsel %vm957, %v3187, %v3188
      %v3190 = vrot.slane %v3147, 1
      %v3191 = vrot.slane %v3148, 1
      %v3192 = vsel %vm957, %v3190, %v3191
      %v3193 = vrot.slane %v3149, 1
      %v3194 = vrot.slane %v3150, 1
      %v3195 = vsel %vm957, %v3193, %v3194
      %v3196 = vrot.slane %v3151, 1
      %v3197 = vrot.slane %v3152, 1
      %v3198 = vsel %vm957, %v3196, %v3197
      %v3199 = vrot.slane %v3153, 1
      %v3200 = vrot.slane %v3154, 1
      %v3201 = vsel %vm957, %v3199, %v3200
      %v3202 = vrot.slane %v3155, 1
      %v3203 = vrot.slane %v3156, 1
      %v3204 = vsel %vm957, %v3202, %v3203
      %s3205 = scalar_lea.vmem %s8, 32
      %v3206 = vld [vmem:[%s3205] sm:$0xff]
      %v3207 = vld [vmem:[%s3205 + $0x8] sm:$0xff]
      %v3208 = vld [vmem:[%s3205 + $0x10] sm:$0xff]
      %v3209 = vld [vmem:[%s3205 + $0x18] sm:$0xff]
      %v3210 = vsel %vm3110, %v3183, 0
      %v3212 = vsel %vm3110, %v3186, 0
      %v3214 = vsel %vm3110, %v3189, 0
      %v3216 = vsel %vm3110, %v3192, 0
      %v3218 = vsel %vm3110, %v3195, 0
      %v3220 = vsel %vm3110, %v3198, 0
      %v3222 = vsel %vm3110, %v3201, 0
      %v3224 = vsel %vm3110, %v3204, 0
      %3226 = vmatprep.subr.mxu0 0.0
      %3227 = vmatpush1.msra.mxu0 %v3206
      %3228 = vmatprep.subr.mxu0 0.0
      %3229 = vmatpush1.msra.mxu0 %v3207
      %3230 = vmatprep.subr.mxu0 0.0
      %3231 = vmatpush1.msra.mxu0 %v3208
      %3232 = vmatprep.subr.mxu0 0.0
      %3233 = vmatpush1.msra.mxu0 %v3209
      %3234 = vmatprep.subr.mxu0 0.0
      %3235 = vmatpush1.msra.mxu0 0.0
      %3236 = vmatprep.subr.mxu0 0.0
      %3237 = vmatpush1.msra.mxu0 0.0
      %3238 = vmatprep.subr.mxu0 0.0
      %3239 = vmatpush1.msra.mxu0 0.0
      %3240 = vmatprep.subr.mxu0 0.0
      %3241 = vmatpush1.msra.mxu0 0.0
      %3242 = vmatprep.subr.mxu0 0.0
      %3243 = vmatpush1.msra.mxu0 0.0
      %3244 = vmatprep.subr.mxu0 0.0
      %3245 = vmatpush1.msra.mxu0 0.0
      %3246 = vmatprep.subr.mxu0 0.0
      %3247 = vmatpush1.msra.mxu0 0.0
      %3248 = vmatprep.subr.mxu0 0.0
      %3249 = vmatpush1.msra.mxu0 0.0
      %3250 = vmatprep.subr.mxu0 0.0
      %3251 = vmatpush1.msra.mxu0 0.0
      %3252 = vmatprep.subr.mxu0 0.0
      %3253 = vmatpush1.msra.mxu0 0.0
      %3254 = vmatprep.subr.mxu0 0.0
      %3255 = vmatpush1.msra.mxu0 0.0
      %3256 = vmatprep.subr.mxu0 0.0
      %3257 = vmatpush1.msra.mxu0 0.0
      %3258 = vmatprep.subr.mxu0 0.0
      %3259 = vmatpush1.msra.mxu0 0.0
      %3260 = vmatprep.subr.mxu0 0.0
      %3261 = vmatpush1.msra.mxu0 0.0
      %3262 = vmatprep.subr.mxu0 0.0
      %3263 = vmatpush1.msra.mxu0 0.0
      %3264 = vmatprep.subr.mxu0 0.0
      %3265 = vmatpush1.msra.mxu0 0.0
      %3266 = vmatprep.subr.mxu0 0.0
      %3267 = vmatpush1.msra.mxu0 0.0
      %3268 = vmatprep.subr.mxu0 0.0
      %3269 = vmatpush1.msra.mxu0 0.0
      %3270 = vmatprep.subr.mxu0 0.0
      %3271 = vmatpush1.msra.mxu0 0.0
      %3272 = vmatprep.subr.mxu0 0.0
      %3273 = vmatpush1.msra.mxu0 0.0
      %3274 = vmatprep.subr.mxu0 0.0
      %3275 = vmatpush1.msra.mxu0 0.0
      %3276 = vmatprep.subr.mxu0 0.0
      %3277 = vmatpush1.msra.mxu0 0.0
      %3278 = vmatprep.subr.mxu0 0.0
      %3279 = vmatpush1.msra.mxu0 0.0
      %3280 = vmatprep.subr.mxu0 0.0
      %3281 = vmatpush1.msra.mxu0 0.0
      %3282 = vmatprep.subr.mxu0 0.0
      %3283 = vmatpush1.msra.mxu0 0.0
      %3284 = vmatprep.subr.mxu0 0.0
      %3285 = vmatpush1.msra.mxu0 0.0
      %3286 = vmatprep.subr.mxu0 0.0
      %3287 = vmatpush1.msra.mxu0 0.0
      %3288 = vmatprep.subr.mxu0 0.0
      %3289 = vmatpush1.msra.mxu0 0.0
      %3290 = vmatprep.mubr.f32.mxu0 0.0
      %3291 = vmatmul.mubr.f32.gmra.mrb[0].mxu0 %v3210
      %v3292 = vpop.f32.mrb[0].mxu0
      %v3293 = vadd.f32 0.0, %v3292
      %v3294 = vpop.f32.mrb[0].mxu0
      %3295 = vmatprep.mubr.f32.mxu0 0.0
      %3296 = vmatmul.mubr.f32.gmra.mrb[0].mxu0 %v3212
      %v3297 = vpop.f32.mrb[0].mxu0
      %v3298 = vadd.f32 0.0, %v3297
      %v3299 = vpop.f32.mrb[0].mxu0
      %3300 = vmatprep.mubr.f32.mxu0 0.0
      %3301 = vmatmul.mubr.f32.gmra.mrb[0].mxu0 %v3214
      %v3302 = vpop.f32.mrb[0].mxu0
      %v3303 = vadd.f32 0.0, %v3302
      %v3304 = vpop.f32.mrb[0].mxu0
      %3305 = vmatprep.mubr.f32.mxu0 0.0
      %3306 = vmatmul.mubr.f32.gmra.mrb[0].mxu0 %v3216
      %v3307 = vpop.f32.mrb[0].mxu0
      %v3308 = vadd.f32 0.0, %v3307
      %v3309 = vpop.f32.mrb[0].mxu0
      %3310 = vmatprep.mubr.f32.mxu0 0.0
      %3311 = vmatmul.mubr.f32.gmra.mrb[0].mxu0 %v3218
      %v3312 = vpop.f32.mrb[0].mxu0
      %v3313 = vadd.f32 0.0, %v3312
      %v3314 = vpop.f32.mrb[0].mxu0
      %3315 = vmatprep.mubr.f32.mxu0 0.0
      %3316 = vmatmul.mubr.f32.gmra.mrb[0].mxu0 %v3220
      %v3317 = vpop.f32.mrb[0].mxu0
      %v3318 = vadd.f32 0.0, %v3317
      %v3319 = vpop.f32.mrb[0].mxu0
      %3320 = vmatprep.mubr.f32.mxu0 0.0
      %3321 = vmatmul.mubr.f32.gmra.mrb[0].mxu0 %v3222
      %v3322 = vpop.f32.mrb[0].mxu0
      %v3323 = vadd.f32 0.0, %v3322
      %v3324 = vpop.f32.mrb[0].mxu0
      %3325 = vmatprep.mubr.f32.mxu0 0.0
      %3326 = vmatmul.mubr.f32.gmra.mrb[0].mxu0 %v3224
      %v3327 = vpop.f32.mrb[0].mxu0
      %v3328 = vadd.f32 0.0, %v3327
      %v3329 = vpop.f32.mrb[0].mxu0
      %3330 = vdwg.mxu0
      %v3331 = vsel %vm3110, %v3141, 0
      %v3333 = vsel %vm3110, %v3143, 0
      %v3335 = vsel %vm3110, %v3145, 0
      %v3337 = vsel %vm3110, %v3147, 0
      %v3339 = vsel %vm3110, %v3149, 0
      %v3341 = vsel %vm3110, %v3151, 0
      %v3343 = vsel %vm3110, %v3153, 0
      %v3345 = vsel %vm3110, %v3155, 0
      %3347 = vmatprep.subr.mxu0 0.0
      %3348 = vmatpush1.msra.mxu0 %v3161
      %3349 = vmatprep.subr.mxu0 0.0
      %3350 = vmatpush1.msra.mxu0 %v3162
      %3351 = vmatprep.subr.mxu0 0.0
      %3352 = vmatpush1.msra.mxu0 %v3163
      %3353 = vmatprep.subr.mxu0 0.0
      %3354 = vmatpush1.msra.mxu0 %v3164
      %3355 = vmatprep.subr.mxu0 0.0
      %3356 = vmatpush1.msra.mxu0 0.0
      %3357 = vmatprep.subr.mxu0 0.0
      %3358 = vmatpush1.msra.mxu0 0.0
      %3359 = vmatprep.subr.mxu0 0.0
      %3360 = vmatpush1.msra.mxu0 0.0
      %3361 = vmatprep.subr.mxu0 0.0
      %3362 = vmatpush1.msra.mxu0 0.0
      %3363 = vmatprep.subr.mxu0 0.0
      %3364 = vmatpush1.msra.mxu0 0.0
      %3365 = vmatprep.subr.mxu0 0.0
      %3366 = vmatpush1.msra.mxu0 0.0
      %3367 = vmatprep.subr.mxu0 0.0
      %3368 = vmatpush1.msra.mxu0 0.0
      %3369 = vmatprep.subr.mxu0 0.0
      %3370 = vmatpush1.msra.mxu0 0.0
      %3371 = vmatprep.subr.mxu0 0.0
      %3372 = vmatpush1.msra.mxu0 0.0
      %3373 = vmatprep.subr.mxu0 0.0
      %3374 = vmatpush1.msra.mxu0 0.0
      %3375 = vmatprep.subr.mxu0 0.0
      %3376 = vmatpush1.msra.mxu0 0.0
      %3377 = vmatprep.subr.mxu0 0.0
      %3378 = vmatpush1.msra.mxu0 0.0
      %3379 = vmatprep.subr.mxu0 0.0
      %3380 = vmatpush1.msra.mxu0 0.0
      %3381 = vmatprep.subr.mxu0 0.0
      %3382 = vmatpush1.msra.mxu0 0.0
      %3383 = vmatprep.subr.mxu0 0.0
      %3384 = vmatpush1.msra.mxu0 0.0
      %3385 = vmatprep.subr.mxu0 0.0
      %3386 = vmatpush1.msra.mxu0 0.0
      %3387 = vmatprep.subr.mxu0 0.0
      %3388 = vmatpush1.msra.mxu0 0.0
      %3389 = vmatprep.subr.mxu0 0.0
      %3390 = vmatpush1.msra.mxu0 0.0
      %3391 = vmatprep.subr.mxu0 0.0
      %3392 = vmatpush1.msra.mxu0 0.0
      %3393 = vmatprep.subr.mxu0 0.0
      %3394 = vmatpush1.msra.mxu0 0.0
      %3395 = vmatprep.subr.mxu0 0.0
      %3396 = vmatpush1.msra.mxu0 0.0
      %3397 = vmatprep.subr.mxu0 0.0
      %3398 = vmatpush1.msra.mxu0 0.0
      %3399 = vmatprep.subr.mxu0 0.0
      %3400 = vmatpush1.msra.mxu0 0.0
      %3401 = vmatprep.subr.mxu0 0.0
      %3402 = vmatpush1.msra.mxu0 0.0
      %3403 = vmatprep.subr.mxu0 0.0
      %3404 = vmatpush1.msra.mxu0 0.0
      %3405 = vmatprep.subr.mxu0 0.0
      %3406 = vmatpush1.msra.mxu0 0.0
      %3407 = vmatprep.subr.mxu0 0.0
      %3408 = vmatpush1.msra.mxu0 0.0
      %3409 = vmatprep.subr.mxu0 0.0
      %3410 = vmatpush1.msra.mxu0 0.0
      %3411 = vmatprep.mubr.f32.mxu0 0.0
      %3412 = vmatmul.mubr.f32.gmra.mrb[0].mxu0 %v3331
      %v3413 = vpop.f32.mrb[0].mxu0
      %v3414 = vadd.f32 %v3293, %v3413
      %v3415 = vpop.f32.mrb[0].mxu0
      %3416 = vmatprep.mubr.f32.mxu0 0.0
      %3417 = vmatmul.mubr.f32.gmra.mrb[0].mxu0 %v3333
      %v3418 = vpop.f32.mrb[0].mxu0
      %v3419 = vadd.f32 %v3298, %v3418
      %v3420 = vpop.f32.mrb[0].mxu0
      %3421 = vmatprep.mubr.f32.mxu0 0.0
      %3422 = vmatmul.mubr.f32.gmra.mrb[0].mxu0 %v3335
      %v3423 = vpop.f32.mrb[0].mxu0
      %v3424 = vadd.f32 %v3303, %v3423
      %v3425 = vpop.f32.mrb[0].mxu0
      %3426 = vmatprep.mubr.f32.mxu0 0.0
      %3427 = vmatmul.mubr.f32.gmra.mrb[0].mxu0 %v3337
      %v3428 = vpop.f32.mrb[0].mxu0
      %v3429 = vadd.f32 %v3308, %v3428
      %v3430 = vpop.f32.mrb[0].mxu0
      %3431 = vmatprep.mubr.f32.mxu0 0.0
      %3432 = vmatmul.mubr.f32.gmra.mrb[0].mxu0 %v3339
      %v3433 = vpop.f32.mrb[0].mxu0
      %v3434 = vadd.f32 %v3313, %v3433
      %v3435 = vpop.f32.mrb[0].mxu0
      %3436 = vmatprep.mubr.f32.mxu0 0.0
      %3437 = vmatmul.mubr.f32.gmra.mrb[0].mxu0 %v3341
      %v3438 = vpop.f32.mrb[0].mxu0
      %v3439 = vadd.f32 %v3318, %v3438
      %v3440 = vpop.f32.mrb[0].mxu0
      %3441 = vmatprep.mubr.f32.mxu0 0.0
      %3442 = vmatmul.mubr.f32.gmra.mrb[0].mxu0 %v3343
      %v3443 = vpop.f32.mrb[0].mxu0
      %v3444 = vadd.f32 %v3323, %v3443
      %v3445 = vpop.f32.mrb[0].mxu0
      %3446 = vmatprep.mubr.f32.mxu0 0.0
      %3447 = vmatmul.mubr.f32.gmra.mrb[0].mxu0 %v3345
      %v3448 = vpop.f32.mrb[0].mxu0
      %v3449 = vadd.f32 %v3328, %v3448
      %v3450 = vpop.f32.mrb[0].mxu0
      %3451 = vdwg.mxu0
      %v3452 = vrot.slane %v3141, 2
      %v3453 = vrot.slane %v3142, 2
      %v3454 = vsel %vm1279, %v3452, %v3453
      %v3455 = vrot.slane %v3143, 2
      %v3456 = vrot.slane %v3144, 2
      %v3457 = vsel %vm1279, %v3455, %v3456
      %v3458 = vrot.slane %v3145, 2
      %v3459 = vrot.slane %v3146, 2
      %v3460 = vsel %vm1279, %v3458, %v3459
      %v3461 = vrot.slane %v3147, 2
      %v3462 = vrot.slane %v3148, 2
      %v3463 = vsel %vm1279, %v3461, %v3462
      %v3464 = vrot.slane %v3149, 2
      %v3465 = vrot.slane %v3150, 2
      %v3466 = vsel %vm1279, %v3464, %v3465
      %v3467 = vrot.slane %v3151, 2
      %v3468 = vrot.slane %v3152, 2
      %v3469 = vsel %vm1279, %v3467, %v3468
      %v3470 = vrot.slane %v3153, 2
      %v3471 = vrot.slane %v3154, 2
      %v3472 = vsel %vm1279, %v3470, %v3471
      %v3473 = vrot.slane %v3155, 2
      %v3474 = vrot.slane %v3156, 2
      %v3475 = vsel %vm1279, %v3473, %v3474
      %s3476 = scalar_lea.vmem %s8, 64
      %v3477 = vld [vmem:[%s3476] sm:$0xff]
      %v3478 = vld [vmem:[%s3476 + $0x8] sm:$0xff]
      %v3479 = vld [vmem:[%s3476 + $0x10] sm:$0xff]
      %v3480 = vld [vmem:[%s3476 + $0x18] sm:$0xff]
      %v3481 = vsel %vm3110, %v3454, 0
      %v3483 = vsel %vm3110, %v3457, 0
      %v3485 = vsel %vm3110, %v3460, 0
      %v3487 = vsel %vm3110, %v3463, 0
      %v3489 = vsel %vm3110, %v3466, 0
      %v3491 = vsel %vm3110, %v3469, 0
      %v3493 = vsel %vm3110, %v3472, 0
      %v3495 = vsel %vm3110, %v3475, 0
      %3497 = vmatprep.subr.mxu0 0.0
      %3498 = vmatpush1.msra.mxu0 %v3477
      %3499 = vmatprep.subr.mxu0 0.0
      %3500 = vmatpush1.msra.mxu0 %v3478
      %3501 = vmatprep.subr.mxu0 0.0
      %3502 = vmatpush1.msra.mxu0 %v3479
      %3503 = vmatprep.subr.mxu0 0.0
      %3504 = vmatpush1.msra.mxu0 %v3480
      %3505 = vmatprep.subr.mxu0 0.0
      %3506 = vmatpush1.msra.mxu0 0.0
      %3507 = vmatprep.subr.mxu0 0.0
      %3508 = vmatpush1.msra.mxu0 0.0
      %3509 = vmatprep.subr.mxu0 0.0
      %3510 = vmatpush1.msra.mxu0 0.0
      %3511 = vmatprep.subr.mxu0 0.0
      %3512 = vmatpush1.msra.mxu0 0.0
      %3513 = vmatprep.subr.mxu0 0.0
      %3514 = vmatpush1.msra.mxu0 0.0
      %3515 = vmatprep.subr.mxu0 0.0
      %3516 = vmatpush1.msra.mxu0 0.0
      %3517 = vmatprep.subr.mxu0 0.0
      %3518 = vmatpush1.msra.mxu0 0.0
      %3519 = vmatprep.subr.mxu0 0.0
      %3520 = vmatpush1.msra.mxu0 0.0
      %3521 = vmatprep.subr.mxu0 0.0
      %3522 = vmatpush1.msra.mxu0 0.0
      %3523 = vmatprep.subr.mxu0 0.0
      %3524 = vmatpush1.msra.mxu0 0.0
      %3525 = vmatprep.subr.mxu0 0.0
      %3526 = vmatpush1.msra.mxu0 0.0
      %3527 = vmatprep.subr.mxu0 0.0
      %3528 = vmatpush1.msra.mxu0 0.0
      %3529 = vmatprep.subr.mxu0 0.0
      %3530 = vmatpush1.msra.mxu0 0.0
      %3531 = vmatprep.subr.mxu0 0.0
      %3532 = vmatpush1.msra.mxu0 0.0
      %3533 = vmatprep.subr.mxu0 0.0
      %3534 = vmatpush1.msra.mxu0 0.0
      %3535 = vmatprep.subr.mxu0 0.0
      %3536 = vmatpush1.msra.mxu0 0.0
      %3537 = vmatprep.subr.mxu0 0.0
      %3538 = vmatpush1.msra.mxu0 0.0
      %3539 = vmatprep.subr.mxu0 0.0
      %3540 = vmatpush1.msra.mxu0 0.0
      %3541 = vmatprep.subr.mxu0 0.0
      %3542 = vmatpush1.msra.mxu0 0.0
      %3543 = vmatprep.subr.mxu0 0.0
      %3544 = vmatpush1.msra.mxu0 0.0
      %3545 = vmatprep.subr.mxu0 0.0
      %3546 = vmatpush1.msra.mxu0 0.0
      %3547 = vmatprep.subr.mxu0 0.0
      %3548 = vmatpush1.msra.mxu0 0.0
      %3549 = vmatprep.subr.mxu0 0.0
      %3550 = vmatpush1.msra.mxu0 0.0
      %3551 = vmatprep.subr.mxu0 0.0
      %3552 = vmatpush1.msra.mxu0 0.0
      %3553 = vmatprep.subr.mxu0 0.0
      %3554 = vmatpush1.msra.mxu0 0.0
      %3555 = vmatprep.subr.mxu0 0.0
      %3556 = vmatpush1.msra.mxu0 0.0
      %3557 = vmatprep.subr.mxu0 0.0
      %3558 = vmatpush1.msra.mxu0 0.0
      %3559 = vmatprep.subr.mxu0 0.0
      %3560 = vmatpush1.msra.mxu0 0.0
      %3561 = vmatprep.mubr.f32.mxu0 0.0
      %3562 = vmatmul.mubr.f32.gmra.mrb[0].mxu0 %v3481
      %v3563 = vpop.f32.mrb[0].mxu0
      %v3564 = vadd.f32 0.0, %v3563
      %v3565 = vpop.f32.mrb[0].mxu0
      %3566 = vmatprep.mubr.f32.mxu0 0.0
      %3567 = vmatmul.mubr.f32.gmra.mrb[0].mxu0 %v3483
      %v3568 = vpop.f32.mrb[0].mxu0
      %v3569 = vadd.f32 0.0, %v3568
      %v3570 = vpop.f32.mrb[0].mxu0
      %3571 = vmatprep.mubr.f32.mxu0 0.0
      %3572 = vmatmul.mubr.f32.gmra.mrb[0].mxu0 %v3485
      %v3573 = vpop.f32.mrb[0].mxu0
      %v3574 = vadd.f32 0.0, %v3573
      %v3575 = vpop.f32.mrb[0].mxu0
      %3576 = vmatprep.mubr.f32.mxu0 0.0
      %3577 = vmatmul.mubr.f32.gmra.mrb[0].mxu0 %v3487
      %v3578 = vpop.f32.mrb[0].mxu0
      %v3579 = vadd.f32 0.0, %v3578
      %v3580 = vpop.f32.mrb[0].mxu0
      %3581 = vmatprep.mubr.f32.mxu0 0.0
      %3582 = vmatmul.mubr.f32.gmra.mrb[0].mxu0 %v3489
      %v3583 = vpop.f32.mrb[0].mxu0
      %v3584 = vadd.f32 0.0, %v3583
      %v3585 = vpop.f32.mrb[0].mxu0
      %3586 = vmatprep.mubr.f32.mxu0 0.0
      %3587 = vmatmul.mubr.f32.gmra.mrb[0].mxu0 %v3491
      %v3588 = vpop.f32.mrb[0].mxu0
      %v3589 = vadd.f32 0.0, %v3588
      %v3590 = vpop.f32.mrb[0].mxu0
      %3591 = vmatprep.mubr.f32.mxu0 0.0
      %3592 = vmatmul.mubr.f32.gmra.mrb[0].mxu0 %v3493
      %v3593 = vpop.f32.mrb[0].mxu0
      %v3594 = vadd.f32 0.0, %v3593
      %v3595 = vpop.f32.mrb[0].mxu0
      %3596 = vmatprep.mubr.f32.mxu0 0.0
      %3597 = vmatmul.mubr.f32.gmra.mrb[0].mxu0 %v3495
      %v3598 = vpop.f32.mrb[0].mxu0
      %v3599 = vadd.f32 0.0, %v3598
      %v3600 = vpop.f32.mrb[0].mxu0
      %3601 = vdwg.mxu0
      %v3602 = vadd.f32 %v3414, %v3564
      %v3603 = vadd.f32 %v3419, %v3569
      %v3604 = vadd.f32 %v3424, %v3574
      %v3605 = vadd.f32 %v3429, %v3579
      %v3606 = vadd.f32 %v3434, %v3584
      %v3607 = vadd.f32 %v3439, %v3589
      %v3608 = vadd.f32 %v3444, %v3594
      %v3609 = vadd.f32 %v3449, %v3599
      %s3610 = scalar_lea.vmem %s8, 96
      %v3611 = vld [vmem:[%s3610] sm:$0xff]
      %v3612 = vld [vmem:[%s3610 + $0x8] sm:$0xff]
      %v3613 = vld [vmem:[%s3610 + $0x10] sm:$0xff]
      %v3614 = vld [vmem:[%s3610 + $0x18] sm:$0xff]
      %v3616 = vsel %vm3110, %v3157, 0
      %3618 = vmatprep.subr.mxu0 0.0
      %3619 = vmatpush1.msra.mxu0 %v3611
      %3620 = vmatprep.subr.mxu0 0.0
      %3621 = vmatpush1.msra.mxu0 %v3612
      %3622 = vmatprep.subr.mxu0 0.0
      %3623 = vmatpush1.msra.mxu0 %v3613
      %3624 = vmatprep.subr.mxu0 0.0
      %3625 = vmatpush1.msra.mxu0 %v3614
      %3626 = vmatprep.subr.mxu0 0.0
      %3627 = vmatpush1.msra.mxu0 0.0
      %3628 = vmatprep.subr.mxu0 0.0
      %3629 = vmatpush1.msra.mxu0 0.0
      %3630 = vmatprep.subr.mxu0 0.0
      %3631 = vmatpush1.msra.mxu0 0.0
      %3632 = vmatprep.subr.mxu0 0.0
      %3633 = vmatpush1.msra.mxu0 0.0
      %3634 = vmatprep.subr.mxu0 0.0
      %3635 = vmatpush1.msra.mxu0 0.0
      %3636 = vmatprep.subr.mxu0 0.0
      %3637 = vmatpush1.msra.mxu0 0.0
      %3638 = vmatprep.subr.mxu0 0.0
      %3639 = vmatpush1.msra.mxu0 0.0
      %3640 = vmatprep.subr.mxu0 0.0
      %3641 = vmatpush1.msra.mxu0 0.0
      %3642 = vmatprep.subr.mxu0 0.0
      %3643 = vmatpush1.msra.mxu0 0.0
      %3644 = vmatprep.subr.mxu0 0.0
      %3645 = vmatpush1.msra.mxu0 0.0
      %3646 = vmatprep.subr.mxu0 0.0
      %3647 = vmatpush1.msra.mxu0 0.0
      %3648 = vmatprep.subr.mxu0 0.0
      %3649 = vmatpush1.msra.mxu0 0.0
      %3650 = vmatprep.subr.mxu0 0.0
      %3651 = vmatpush1.msra.mxu0 0.0
      %3652 = vmatprep.subr.mxu0 0.0
      %3653 = vmatpush1.msra.mxu0 0.0
      %3654 = vmatprep.subr.mxu0 0.0
      %3655 = vmatpush1.msra.mxu0 0.0
      %3656 = vmatprep.subr.mxu0 0.0
      %3657 = vmatpush1.msra.mxu0 0.0
      %3658 = vmatprep.subr.mxu0 0.0
      %3659 = vmatpush1.msra.mxu0 0.0
      %3660 = vmatprep.subr.mxu0 0.0
      %3661 = vmatpush1.msra.mxu0 0.0
      %3662 = vmatprep.subr.mxu0 0.0
      %3663 = vmatpush1.msra.mxu0 0.0
      %3664 = vmatprep.subr.mxu0 0.0
      %3665 = vmatpush1.msra.mxu0 0.0
      %3666 = vmatprep.subr.mxu0 0.0
      %3667 = vmatpush1.msra.mxu0 0.0
      %3668 = vmatprep.subr.mxu0 0.0
      %3669 = vmatpush1.msra.mxu0 0.0
      %3670 = vmatprep.subr.mxu0 0.0
      %3671 = vmatpush1.msra.mxu0 0.0
      %3672 = vmatprep.subr.mxu0 0.0
      %3673 = vmatpush1.msra.mxu0 0.0
      %3674 = vmatprep.subr.mxu0 0.0
      %3675 = vmatpush1.msra.mxu0 0.0
      %3676 = vmatprep.subr.mxu0 0.0
      %3677 = vmatpush1.msra.mxu0 0.0
      %3678 = vmatprep.subr.mxu0 0.0
      %3679 = vmatpush1.msra.mxu0 0.0
      %3680 = vmatprep.subr.mxu0 0.0
      %3681 = vmatpush1.msra.mxu0 0.0
      %3682 = vmatprep.mubr.f32.mxu0 0.0
      %3683 = vmatmul.mubr.f32.gmra.mrb[0].mxu0 %v3333
      %v3684 = vpop.f32.mrb[0].mxu0
      %v3685 = vadd.f32 0.0, %v3684
      %v3686 = vpop.f32.mrb[0].mxu0
      %3687 = vmatprep.mubr.f32.mxu0 0.0
      %3688 = vmatmul.mubr.f32.gmra.mrb[0].mxu0 %v3335
      %v3689 = vpop.f32.mrb[0].mxu0
      %v3690 = vadd.f32 0.0, %v3689
      %v3691 = vpop.f32.mrb[0].mxu0
      %3692 = vmatprep.mubr.f32.mxu0 0.0
      %3693 = vmatmul.mubr.f32.gmra.mrb[0].mxu0 %v3337
      %v3694 = vpop.f32.mrb[0].mxu0
      %v3695 = vadd.f32 0.0, %v3694
      %v3696 = vpop.f32.mrb[0].mxu0
      %3697 = vmatprep.mubr.f32.mxu0 0.0
      %3698 = vmatmul.mubr.f32.gmra.mrb[0].mxu0 %v3339
      %v3699 = vpop.f32.mrb[0].mxu0
      %v3700 = vadd.f32 0.0, %v3699
      %v3701 = vpop.f32.mrb[0].mxu0
      %3702 = vmatprep.mubr.f32.mxu0 0.0
      %3703 = vmatmul.mubr.f32.gmra.mrb[0].mxu0 %v3341
      %v3704 = vpop.f32.mrb[0].mxu0
      %v3705 = vadd.f32 0.0, %v3704
      %v3706 = vpop.f32.mrb[0].mxu0
      %3707 = vmatprep.mubr.f32.mxu0 0.0
      %3708 = vmatmul.mubr.f32.gmra.mrb[0].mxu0 %v3343
      %v3709 = vpop.f32.mrb[0].mxu0
      %v3710 = vadd.f32 0.0, %v3709
      %v3711 = vpop.f32.mrb[0].mxu0
      %3712 = vmatprep.mubr.f32.mxu0 0.0
      %3713 = vmatmul.mubr.f32.gmra.mrb[0].mxu0 %v3345
      %v3714 = vpop.f32.mrb[0].mxu0
      %v3715 = vadd.f32 0.0, %v3714
      %v3716 = vpop.f32.mrb[0].mxu0
      %3717 = vmatprep.mubr.f32.mxu0 0.0
      %3718 = vmatmul.mubr.f32.gmra.mrb[0].mxu0 %v3616
      %v3719 = vpop.f32.mrb[0].mxu0
      %v3720 = vadd.f32 0.0, %v3719
      %v3721 = vpop.f32.mrb[0].mxu0
      %3722 = vdwg.mxu0
      %v3723 = vadd.f32 %v3602, %v3685
      %v3724 = vadd.f32 %v3603, %v3690
      %v3725 = vadd.f32 %v3604, %v3695
      %v3726 = vadd.f32 %v3605, %v3700
      %v3727 = vadd.f32 %v3606, %v3705
      %v3728 = vadd.f32 %v3607, %v3710
      %v3729 = vadd.f32 %v3608, %v3715
      %v3730 = vadd.f32 %v3609, %v3720
      %v3732 = vrot.slane %v3157, 1
      %v3733 = vrot.slane %v3158, 1
      %v3734 = vsel %vm957, %v3732, %v3733
      %s3735 = scalar_lea.vmem %s8, 128
      %v3736 = vld [vmem:[%s3735] sm:$0xff]
      %v3737 = vld [vmem:[%s3735 + $0x8] sm:$0xff]
      %v3738 = vld [vmem:[%s3735 + $0x10] sm:$0xff]
      %v3739 = vld [vmem:[%s3735 + $0x18] sm:$0xff]
      %v3740 = vsel %vm3110, %v3734, 0
      %3742 = vmatprep.subr.mxu0 0.0
      %3743 = vmatpush1.msra.mxu0 %v3736
      %3744 = vmatprep.subr.mxu0 0.0
      %3745 = vmatpush1.msra.mxu0 %v3737
      %3746 = vmatprep.subr.mxu0 0.0
      %3747 = vmatpush1.msra.mxu0 %v3738
      %3748 = vmatprep.subr.mxu0 0.0
      %3749 = vmatpush1.msra.mxu0 %v3739
      %3750 = vmatprep.subr.mxu0 0.0
      %3751 = vmatpush1.msra.mxu0 0.0
      %3752 = vmatprep.subr.mxu0 0.0
      %3753 = vmatpush1.msra.mxu0 0.0
      %3754 = vmatprep.subr.mxu0 0.0
      %3755 = vmatpush1.msra.mxu0 0.0
      %3756 = vmatprep.subr.mxu0 0.0
      %3757 = vmatpush1.msra.mxu0 0.0
      %3758 = vmatprep.subr.mxu0 0.0
      %3759 = vmatpush1.msra.mxu0 0.0
      %3760 = vmatprep.subr.mxu0 0.0
      %3761 = vmatpush1.msra.mxu0 0.0
      %3762 = vmatprep.subr.mxu0 0.0
      %3763 = vmatpush1.msra.mxu0 0.0
      %3764 = vmatprep.subr.mxu0 0.0
      %3765 = vmatpush1.msra.mxu0 0.0
      %3766 = vmatprep.subr.mxu0 0.0
      %3767 = vmatpush1.msra.mxu0 0.0
      %3768 = vmatprep.subr.mxu0 0.0
      %3769 = vmatpush1.msra.mxu0 0.0
      %3770 = vmatprep.subr.mxu0 0.0
      %3771 = vmatpush1.msra.mxu0 0.0
      %3772 = vmatprep.subr.mxu0 0.0
      %3773 = vmatpush1.msra.mxu0 0.0
      %3774 = vmatprep.subr.mxu0 0.0
      %3775 = vmatpush1.msra.mxu0 0.0
      %3776 = vmatprep.subr.mxu0 0.0
      %3777 = vmatpush1.msra.mxu0 0.0
      %3778 = vmatprep.subr.mxu0 0.0
      %3779 = vmatpush1.msra.mxu0 0.0
      %3780 = vmatprep.subr.mxu0 0.0
      %3781 = vmatpush1.msra.mxu0 0.0
      %3782 = vmatprep.subr.mxu0 0.0
      %3783 = vmatpush1.msra.mxu0 0.0
      %3784 = vmatprep.subr.mxu0 0.0
      %3785 = vmatpush1.msra.mxu0 0.0
      %3786 = vmatprep.subr.mxu0 0.0
      %3787 = vmatpush1.msra.mxu0 0.0
      %3788 = vmatprep.subr.mxu0 0.0
      %3789 = vmatpush1.msra.mxu0 0.0
      %3790 = vmatprep.subr.mxu0 0.0
      %3791 = vmatpush1.msra.mxu0 0.0
      %3792 = vmatprep.subr.mxu0 0.0
      %3793 = vmatpush1.msra.mxu0 0.0
      %3794 = vmatprep.subr.mxu0 0.0
      %3795 = vmatpush1.msra.mxu0 0.0
      %3796 = vmatprep.subr.mxu0 0.0
      %3797 = vmatpush1.msra.mxu0 0.0
      %3798 = vmatprep.subr.mxu0 0.0
      %3799 = vmatpush1.msra.mxu0 0.0
      %3800 = vmatprep.subr.mxu0 0.0
      %3801 = vmatpush1.msra.mxu0 0.0
      %3802 = vmatprep.subr.mxu0 0.0
      %3803 = vmatpush1.msra.mxu0 0.0
      %3804 = vmatprep.subr.mxu0 0.0
      %3805 = vmatpush1.msra.mxu0 0.0
      %3806 = vmatprep.mubr.f32.mxu0 0.0
      %3807 = vmatmul.mubr.f32.gmra.mrb[0].mxu0 %v3212
      %v3808 = vpop.f32.mrb[0].mxu0
      %v3809 = vadd.f32 0.0, %v3808
      %v3810 = vpop.f32.mrb[0].mxu0
      %3811 = vmatprep.mubr.f32.mxu0 0.0
      %3812 = vmatmul.mubr.f32.gmra.mrb[0].mxu0 %v3214
      %v3813 = vpop.f32.mrb[0].mxu0
      %v3814 = vadd.f32 0.0, %v3813
      %v3815 = vpop.f32.mrb[0].mxu0
      %3816 = vmatprep.mubr.f32.mxu0 0.0
      %3817 = vmatmul.mubr.f32.gmra.mrb[0].mxu0 %v3216
      %v3818 = vpop.f32.mrb[0].mxu0
      %v3819 = vadd.f32 0.0, %v3818
      %v3820 = vpop.f32.mrb[0].mxu0
      %3821 = vmatprep.mubr.f32.mxu0 0.0
      %3822 = vmatmul.mubr.f32.gmra.mrb[0].mxu0 %v3218
      %v3823 = vpop.f32.mrb[0].mxu0
      %v3824 = vadd.f32 0.0, %v3823
      %v3825 = vpop.f32.mrb[0].mxu0
      %3826 = vmatprep.mubr.f32.mxu0 0.0
      %3827 = vmatmul.mubr.f32.gmra.mrb[0].mxu0 %v3220
      %v3828 = vpop.f32.mrb[0].mxu0
      %v3829 = vadd.f32 0.0, %v3828
      %v3830 = vpop.f32.mrb[0].mxu0
      %3831 = vmatprep.mubr.f32.mxu0 0.0
      %3832 = vmatmul.mubr.f32.gmra.mrb[0].mxu0 %v3222
      %v3833 = vpop.f32.mrb[0].mxu0
      %v3834 = vadd.f32 0.0, %v3833
      %v3835 = vpop.f32.mrb[0].mxu0
      %3836 = vmatprep.mubr.f32.mxu0 0.0
      %3837 = vmatmul.mubr.f32.gmra.mrb[0].mxu0 %v3224
      %v3838 = vpop.f32.mrb[0].mxu0
      %v3839 = vadd.f32 0.0, %v3838
      %v3840 = vpop.f32.mrb[0].mxu0
      %3841 = vmatprep.mubr.f32.mxu0 0.0
      %3842 = vmatmul.mubr.f32.gmra.mrb[0].mxu0 %v3740
      %v3843 = vpop.f32.mrb[0].mxu0
      %v3844 = vadd.f32 0.0, %v3843
      %v3845 = vpop.f32.mrb[0].mxu0
      %3846 = vdwg.mxu0
      %v3847 = vadd.f32 %v3723, %v3809
      %v3848 = vadd.f32 %v3724, %v3814
      %v3849 = vadd.f32 %v3725, %v3819
      %v3850 = vadd.f32 %v3726, %v3824
      %v3851 = vadd.f32 %v3727, %v3829
      %v3852 = vadd.f32 %v3728, %v3834
      %v3853 = vadd.f32 %v3729, %v3839
      %v3854 = vadd.f32 %v3730, %v3844
      %v3855 = vrot.slane %v3157, 2
      %v3856 = vrot.slane %v3158, 2
      %v3857 = vsel %vm1279, %v3855, %v3856
      %s3858 = scalar_lea.vmem %s8, 160
      %v3859 = vld [vmem:[%s3858] sm:$0xff]
      %v3860 = vld [vmem:[%s3858 + $0x8] sm:$0xff]
      %v3861 = vld [vmem:[%s3858 + $0x10] sm:$0xff]
      %v3862 = vld [vmem:[%s3858 + $0x18] sm:$0xff]
      %v3863 = vsel %vm3110, %v3857, 0
      %3865 = vmatprep.subr.mxu0 0.0
      %3866 = vmatpush1.msra.mxu0 %v3859
      %3867 = vmatprep.subr.mxu0 0.0
      %3868 = vmatpush1.msra.mxu0 %v3860
      %3869 = vmatprep.subr.mxu0 0.0
      %3870 = vmatpush1.msra.mxu0 %v3861
      %3871 = vmatprep.subr.mxu0 0.0
      %3872 = vmatpush1.msra.mxu0 %v3862
      %3873 = vmatprep.subr.mxu0 0.0
      %3874 = vmatpush1.msra.mxu0 0.0
      %3875 = vmatprep.subr.mxu0 0.0
      %3876 = vmatpush1.msra.mxu0 0.0
      %3877 = vmatprep.subr.mxu0 0.0
      %3878 = vmatpush1.msra.mxu0 0.0
      %3879 = vmatprep.subr.mxu0 0.0
      %3880 = vmatpush1.msra.mxu0 0.0
      %3881 = vmatprep.subr.mxu0 0.0
      %3882 = vmatpush1.msra.mxu0 0.0
      %3883 = vmatprep.subr.mxu0 0.0
      %3884 = vmatpush1.msra.mxu0 0.0
      %3885 = vmatprep.subr.mxu0 0.0
      %3886 = vmatpush1.msra.mxu0 0.0
      %3887 = vmatprep.subr.mxu0 0.0
      %3888 = vmatpush1.msra.mxu0 0.0
      %3889 = vmatprep.subr.mxu0 0.0
      %3890 = vmatpush1.msra.mxu0 0.0
      %3891 = vmatprep.subr.mxu0 0.0
      %3892 = vmatpush1.msra.mxu0 0.0
      %3893 = vmatprep.subr.mxu0 0.0
      %3894 = vmatpush1.msra.mxu0 0.0
      %3895 = vmatprep.subr.mxu0 0.0
      %3896 = vmatpush1.msra.mxu0 0.0
      %3897 = vmatprep.subr.mxu0 0.0
      %3898 = vmatpush1.msra.mxu0 0.0
      %3899 = vmatprep.subr.mxu0 0.0
      %3900 = vmatpush1.msra.mxu0 0.0
      %3901 = vmatprep.subr.mxu0 0.0
      %3902 = vmatpush1.msra.mxu0 0.0
      %3903 = vmatprep.subr.mxu0 0.0
      %3904 = vmatpush1.msra.mxu0 0.0
      %3905 = vmatprep.subr.mxu0 0.0
      %3906 = vmatpush1.msra.mxu0 0.0
      %3907 = vmatprep.subr.mxu0 0.0
      %3908 = vmatpush1.msra.mxu0 0.0
      %3909 = vmatprep.subr.mxu0 0.0
      %3910 = vmatpush1.msra.mxu0 0.0
      %3911 = vmatprep.subr.mxu0 0.0
      %3912 = vmatpush1.msra.mxu0 0.0
      %3913 = vmatprep.subr.mxu0 0.0
      %3914 = vmatpush1.msra.mxu0 0.0
      %3915 = vmatprep.subr.mxu0 0.0
      %3916 = vmatpush1.msra.mxu0 0.0
      %3917 = vmatprep.subr.mxu0 0.0
      %3918 = vmatpush1.msra.mxu0 0.0
      %3919 = vmatprep.subr.mxu0 0.0
      %3920 = vmatpush1.msra.mxu0 0.0
      %3921 = vmatprep.subr.mxu0 0.0
      %3922 = vmatpush1.msra.mxu0 0.0
      %3923 = vmatprep.subr.mxu0 0.0
      %3924 = vmatpush1.msra.mxu0 0.0
      %3925 = vmatprep.subr.mxu0 0.0
      %3926 = vmatpush1.msra.mxu0 0.0
      %3927 = vmatprep.subr.mxu0 0.0
      %3928 = vmatpush1.msra.mxu0 0.0
      %3929 = vmatprep.mubr.f32.mxu0 0.0
      %3930 = vmatmul.mubr.f32.gmra.mrb[0].mxu0 %v3483
      %v3931 = vpop.f32.mrb[0].mxu0
      %v3932 = vadd.f32 0.0, %v3931
      %v3933 = vpop.f32.mrb[0].mxu0
      %3934 = vmatprep.mubr.f32.mxu0 0.0
      %3935 = vmatmul.mubr.f32.gmra.mrb[0].mxu0 %v3485
      %v3936 = vpop.f32.mrb[0].mxu0
      %v3937 = vadd.f32 0.0, %v3936
      %v3938 = vpop.f32.mrb[0].mxu0
      %3939 = vmatprep.mubr.f32.mxu0 0.0
      %3940 = vmatmul.mubr.f32.gmra.mrb[0].mxu0 %v3487
      %v3941 = vpop.f32.mrb[0].mxu0
      %v3942 = vadd.f32 0.0, %v3941
      %v3943 = vpop.f32.mrb[0].mxu0
      %3944 = vmatprep.mubr.f32.mxu0 0.0
      %3945 = vmatmul.mubr.f32.gmra.mrb[0].mxu0 %v3489
      %v3946 = vpop.f32.mrb[0].mxu0
      %v3947 = vadd.f32 0.0, %v3946
      %v3948 = vpop.f32.mrb[0].mxu0
      %3949 = vmatprep.mubr.f32.mxu0 0.0
      %3950 = vmatmul.mubr.f32.gmra.mrb[0].mxu0 %v3491
      %v3951 = vpop.f32.mrb[0].mxu0
      %v3952 = vadd.f32 0.0, %v3951
      %v3953 = vpop.f32.mrb[0].mxu0
      %3954 = vmatprep.mubr.f32.mxu0 0.0
      %3955 = vmatmul.mubr.f32.gmra.mrb[0].mxu0 %v3493
      %v3956 = vpop.f32.mrb[0].mxu0
      %v3957 = vadd.f32 0.0, %v3956
      %v3958 = vpop.f32.mrb[0].mxu0
      %3959 = vmatprep.mubr.f32.mxu0 0.0
      %3960 = vmatmul.mubr.f32.gmra.mrb[0].mxu0 %v3495
      %v3961 = vpop.f32.mrb[0].mxu0
      %v3962 = vadd.f32 0.0, %v3961
      %v3963 = vpop.f32.mrb[0].mxu0
      %3964 = vmatprep.mubr.f32.mxu0 0.0
      %3965 = vmatmul.mubr.f32.gmra.mrb[0].mxu0 %v3863
      %v3966 = vpop.f32.mrb[0].mxu0
      %v3967 = vadd.f32 0.0, %v3966
      %v3968 = vpop.f32.mrb[0].mxu0
      %3969 = vdwg.mxu0
      %v3970 = vadd.f32 %v3847, %v3932
      %v3971 = vadd.f32 %v3848, %v3937
      %v3972 = vadd.f32 %v3849, %v3942
      %v3973 = vadd.f32 %v3850, %v3947
      %v3974 = vadd.f32 %v3851, %v3952
      %v3975 = vadd.f32 %v3852, %v3957
      %v3976 = vadd.f32 %v3853, %v3962
      %v3977 = vadd.f32 %v3854, %v3967
      %s3978 = scalar_lea.vmem %s8, 192
      %v3979 = vld [vmem:[%s3978] sm:$0xff]
      %v3980 = vld [vmem:[%s3978 + $0x8] sm:$0xff]
      %v3981 = vld [vmem:[%s3978 + $0x10] sm:$0xff]
      %v3982 = vld [vmem:[%s3978 + $0x18] sm:$0xff]
      %v3984 = vsel %vm3110, %v3159, 0
      %3986 = vmatprep.subr.mxu0 0.0
      %3987 = vmatpush1.msra.mxu0 %v3979
      %3988 = vmatprep.subr.mxu0 0.0
      %3989 = vmatpush1.msra.mxu0 %v3980
      %3990 = vmatprep.subr.mxu0 0.0
      %3991 = vmatpush1.msra.mxu0 %v3981
      %3992 = vmatprep.subr.mxu0 0.0
      %3993 = vmatpush1.msra.mxu0 %v3982
      %3994 = vmatprep.subr.mxu0 0.0
      %3995 = vmatpush1.msra.mxu0 0.0
      %3996 = vmatprep.subr.mxu0 0.0
      %3997 = vmatpush1.msra.mxu0 0.0
      %3998 = vmatprep.subr.mxu0 0.0
      %3999 = vmatpush1.msra.mxu0 0.0
      %4000 = vmatprep.subr.mxu0 0.0
      %4001 = vmatpush1.msra.mxu0 0.0
      %4002 = vmatprep.subr.mxu0 0.0
      %4003 = vmatpush1.msra.mxu0 0.0
      %4004 = vmatprep.subr.mxu0 0.0
      %4005 = vmatpush1.msra.mxu0 0.0
      %4006 = vmatprep.subr.mxu0 0.0
      %4007 = vmatpush1.msra.mxu0 0.0
      %4008 = vmatprep.subr.mxu0 0.0
      %4009 = vmatpush1.msra.mxu0 0.0
      %4010 = vmatprep.subr.mxu0 0.0
      %4011 = vmatpush1.msra.mxu0 0.0
      %4012 = vmatprep.subr.mxu0 0.0
      %4013 = vmatpush1.msra.mxu0 0.0
      %4014 = vmatprep.subr.mxu0 0.0
      %4015 = vmatpush1.msra.mxu0 0.0
      %4016 = vmatprep.subr.mxu0 0.0
      %4017 = vmatpush1.msra.mxu0 0.0
      %4018 = vmatprep.subr.mxu0 0.0
      %4019 = vmatpush1.msra.mxu0 0.0
      %4020 = vmatprep.subr.mxu0 0.0
      %4021 = vmatpush1.msra.mxu0 0.0
      %4022 = vmatprep.subr.mxu0 0.0
      %4023 = vmatpush1.msra.mxu0 0.0
      %4024 = vmatprep.subr.mxu0 0.0
      %4025 = vmatpush1.msra.mxu0 0.0
      %4026 = vmatprep.subr.mxu0 0.0
      %4027 = vmatpush1.msra.mxu0 0.0
      %4028 = vmatprep.subr.mxu0 0.0
      %4029 = vmatpush1.msra.mxu0 0.0
      %4030 = vmatprep.subr.mxu0 0.0
      %4031 = vmatpush1.msra.mxu0 0.0
      %4032 = vmatprep.subr.mxu0 0.0
      %4033 = vmatpush1.msra.mxu0 0.0
      %4034 = vmatprep.subr.mxu0 0.0
      %4035 = vmatpush1.msra.mxu0 0.0
      %4036 = vmatprep.subr.mxu0 0.0
      %4037 = vmatpush1.msra.mxu0 0.0
      %4038 = vmatprep.subr.mxu0 0.0
      %4039 = vmatpush1.msra.mxu0 0.0
      %4040 = vmatprep.subr.mxu0 0.0
      %4041 = vmatpush1.msra.mxu0 0.0
      %4042 = vmatprep.subr.mxu0 0.0
      %4043 = vmatpush1.msra.mxu0 0.0
      %4044 = vmatprep.subr.mxu0 0.0
      %4045 = vmatpush1.msra.mxu0 0.0
      %4046 = vmatprep.subr.mxu0 0.0
      %4047 = vmatpush1.msra.mxu0 0.0
      %4048 = vmatprep.subr.mxu0 0.0
      %4049 = vmatpush1.msra.mxu0 0.0
      %4050 = vmatprep.mubr.f32.mxu0 0.0
      %4051 = vmatmul.mubr.f32.gmra.mrb[0].mxu0 %v3335
      %v4052 = vpop.f32.mrb[0].mxu0
      %v4053 = vadd.f32 0.0, %v4052
      %v4054 = vpop.f32.mrb[0].mxu0
      %4055 = vmatprep.mubr.f32.mxu0 0.0
      %4056 = vmatmul.mubr.f32.gmra.mrb[0].mxu0 %v3337
      %v4057 = vpop.f32.mrb[0].mxu0
      %v4058 = vadd.f32 0.0, %v4057
      %v4059 = vpop.f32.mrb[0].mxu0
      %4060 = vmatprep.mubr.f32.mxu0 0.0
      %4061 = vmatmul.mubr.f32.gmra.mrb[0].mxu0 %v3339
      %v4062 = vpop.f32.mrb[0].mxu0
      %v4063 = vadd.f32 0.0, %v4062
      %v4064 = vpop.f32.mrb[0].mxu0
      %4065 = vmatprep.mubr.f32.mxu0 0.0
      %4066 = vmatmul.mubr.f32.gmra.mrb[0].mxu0 %v3341
      %v4067 = vpop.f32.mrb[0].mxu0
      %v4068 = vadd.f32 0.0, %v4067
      %v4069 = vpop.f32.mrb[0].mxu0
      %4070 = vmatprep.mubr.f32.mxu0 0.0
      %4071 = vmatmul.mubr.f32.gmra.mrb[0].mxu0 %v3343
      %v4072 = vpop.f32.mrb[0].mxu0
      %v4073 = vadd.f32 0.0, %v4072
      %v4074 = vpop.f32.mrb[0].mxu0
      %4075 = vmatprep.mubr.f32.mxu0 0.0
      %4076 = vmatmul.mubr.f32.gmra.mrb[0].mxu0 %v3345
      %v4077 = vpop.f32.mrb[0].mxu0
      %v4078 = vadd.f32 0.0, %v4077
      %v4079 = vpop.f32.mrb[0].mxu0
      %4080 = vmatprep.mubr.f32.mxu0 0.0
      %4081 = vmatmul.mubr.f32.gmra.mrb[0].mxu0 %v3616
      %v4082 = vpop.f32.mrb[0].mxu0
      %v4083 = vadd.f32 0.0, %v4082
      %v4084 = vpop.f32.mrb[0].mxu0
      %4085 = vmatprep.mubr.f32.mxu0 0.0
      %4086 = vmatmul.mubr.f32.gmra.mrb[0].mxu0 %v3984
      %v4087 = vpop.f32.mrb[0].mxu0
      %v4088 = vadd.f32 0.0, %v4087
      %v4089 = vpop.f32.mrb[0].mxu0
      %4090 = vdwg.mxu0
      %v4091 = vadd.f32 %v3970, %v4053
      %v4092 = vadd.f32 %v3971, %v4058
      %v4093 = vadd.f32 %v3972, %v4063
      %v4094 = vadd.f32 %v3973, %v4068
      %v4095 = vadd.f32 %v3974, %v4073
      %v4096 = vadd.f32 %v3975, %v4078
      %v4097 = vadd.f32 %v3976, %v4083
      %v4098 = vadd.f32 %v3977, %v4088
      %v4100 = vrot.slane %v3159, 1
      %v4101 = vrot.slane %v3160, 1
      %v4102 = vsel %vm957, %v4100, %v4101
      %s4103 = scalar_lea.vmem %s8, 224
      %v4104 = vld [vmem:[%s4103] sm:$0xff]
      %v4105 = vld [vmem:[%s4103 + $0x8] sm:$0xff]
      %v4106 = vld [vmem:[%s4103 + $0x10] sm:$0xff]
      %v4107 = vld [vmem:[%s4103 + $0x18] sm:$0xff]
      %v4108 = vsel %vm3110, %v4102, 0
      %4110 = vmatprep.subr.mxu0 0.0
      %4111 = vmatpush1.msra.mxu0 %v4104
      %4112 = vmatprep.subr.mxu0 0.0
      %4113 = vmatpush1.msra.mxu0 %v4105
      %4114 = vmatprep.subr.mxu0 0.0
      %4115 = vmatpush1.msra.mxu0 %v4106
      %4116 = vmatprep.subr.mxu0 0.0
      %4117 = vmatpush1.msra.mxu0 %v4107
      %4118 = vmatprep.subr.mxu0 0.0
      %4119 = vmatpush1.msra.mxu0 0.0
      %4120 = vmatprep.subr.mxu0 0.0
      %4121 = vmatpush1.msra.mxu0 0.0
      %4122 = vmatprep.subr.mxu0 0.0
      %4123 = vmatpush1.msra.mxu0 0.0
      %4124 = vmatprep.subr.mxu0 0.0
      %4125 = vmatpush1.msra.mxu0 0.0
      %4126 = vmatprep.subr.mxu0 0.0
      %4127 = vmatpush1.msra.mxu0 0.0
      %4128 = vmatprep.subr.mxu0 0.0
      %4129 = vmatpush1.msra.mxu0 0.0
      %4130 = vmatprep.subr.mxu0 0.0
      %4131 = vmatpush1.msra.mxu0 0.0
      %4132 = vmatprep.subr.mxu0 0.0
      %4133 = vmatpush1.msra.mxu0 0.0
      %4134 = vmatprep.subr.mxu0 0.0
      %4135 = vmatpush1.msra.mxu0 0.0
      %4136 = vmatprep.subr.mxu0 0.0
      %4137 = vmatpush1.msra.mxu0 0.0
      %4138 = vmatprep.subr.mxu0 0.0
      %4139 = vmatpush1.msra.mxu0 0.0
      %4140 = vmatprep.subr.mxu0 0.0
      %4141 = vmatpush1.msra.mxu0 0.0
      %4142 = vmatprep.subr.mxu0 0.0
      %4143 = vmatpush1.msra.mxu0 0.0
      %4144 = vmatprep.subr.mxu0 0.0
      %4145 = vmatpush1.msra.mxu0 0.0
      %4146 = vmatprep.subr.mxu0 0.0
      %4147 = vmatpush1.msra.mxu0 0.0
      %4148 = vmatprep.subr.mxu0 0.0
      %4149 = vmatpush1.msra.mxu0 0.0
      %4150 = vmatprep.subr.mxu0 0.0
      %4151 = vmatpush1.msra.mxu0 0.0
      %4152 = vmatprep.subr.mxu0 0.0
      %4153 = vmatpush1.msra.mxu0 0.0
      %4154 = vmatprep.subr.mxu0 0.0
      %4155 = vmatpush1.msra.mxu0 0.0
      %4156 = vmatprep.subr.mxu0 0.0
      %4157 = vmatpush1.msra.mxu0 0.0
      %4158 = vmatprep.subr.mxu0 0.0
      %4159 = vmatpush1.msra.mxu0 0.0
      %4160 = vmatprep.subr.mxu0 0.0
      %4161 = vmatpush1.msra.mxu0 0.0
      %4162 = vmatprep.subr.mxu0 0.0
      %4163 = vmatpush1.msra.mxu0 0.0
      %4164 = vmatprep.subr.mxu0 0.0
      %4165 = vmatpush1.msra.mxu0 0.0
      %4166 = vmatprep.subr.mxu0 0.0
      %4167 = vmatpush1.msra.mxu0 0.0
      %4168 = vmatprep.subr.mxu0 0.0
      %4169 = vmatpush1.msra.mxu0 0.0
      %4170 = vmatprep.subr.mxu0 0.0
      %4171 = vmatpush1.msra.mxu0 0.0
      %4172 = vmatprep.subr.mxu0 0.0
      %4173 = vmatpush1.msra.mxu0 0.0
      %4174 = vmatprep.mubr.f32.mxu0 0.0
      %4175 = vmatmul.mubr.f32.gmra.mrb[0].mxu0 %v3214
      %v4176 = vpop.f32.mrb[0].mxu0
      %v4177 = vadd.f32 0.0, %v4176
      %v4178 = vpop.f32.mrb[0].mxu0
      %4179 = vmatprep.mubr.f32.mxu0 0.0
      %4180 = vmatmul.mubr.f32.gmra.mrb[0].mxu0 %v3216
      %v4181 = vpop.f32.mrb[0].mxu0
      %v4182 = vadd.f32 0.0, %v4181
      %v4183 = vpop.f32.mrb[0].mxu0
      %4184 = vmatprep.mubr.f32.mxu0 0.0
      %4185 = vmatmul.mubr.f32.gmra.mrb[0].mxu0 %v3218
      %v4186 = vpop.f32.mrb[0].mxu0
      %v4187 = vadd.f32 0.0, %v4186
      %v4188 = vpop.f32.mrb[0].mxu0
      %4189 = vmatprep.mubr.f32.mxu0 0.0
      %4190 = vmatmul.mubr.f32.gmra.mrb[0].mxu0 %v3220
      %v4191 = vpop.f32.mrb[0].mxu0
      %v4192 = vadd.f32 0.0, %v4191
      %v4193 = vpop.f32.mrb[0].mxu0
      %4194 = vmatprep.mubr.f32.mxu0 0.0
      %4195 = vmatmul.mubr.f32.gmra.mrb[0].mxu0 %v3222
      %v4196 = vpop.f32.mrb[0].mxu0
      %v4197 = vadd.f32 0.0, %v4196
      %v4198 = vpop.f32.mrb[0].mxu0
      %4199 = vmatprep.mubr.f32.mxu0 0.0
      %4200 = vmatmul.mubr.f32.gmra.mrb[0].mxu0 %v3224
      %v4201 = vpop.f32.mrb[0].mxu0
      %v4202 = vadd.f32 0.0, %v4201
      %v4203 = vpop.f32.mrb[0].mxu0
      %4204 = vmatprep.mubr.f32.mxu0 0.0
      %4205 = vmatmul.mubr.f32.gmra.mrb[0].mxu0 %v3740
      %v4206 = vpop.f32.mrb[0].mxu0
      %v4207 = vadd.f32 0.0, %v4206
      %v4208 = vpop.f32.mrb[0].mxu0
      %4209 = vmatprep.mubr.f32.mxu0 0.0
      %4210 = vmatmul.mubr.f32.gmra.mrb[0].mxu0 %v4108
      %v4211 = vpop.f32.mrb[0].mxu0
      %v4212 = vadd.f32 0.0, %v4211
      %v4213 = vpop.f32.mrb[0].mxu0
      %4214 = vdwg.mxu0
      %v4215 = vadd.f32 %v4091, %v4177
      %v4216 = vadd.f32 %v4092, %v4182
      %v4217 = vadd.f32 %v4093, %v4187
      %v4218 = vadd.f32 %v4094, %v4192
      %v4219 = vadd.f32 %v4095, %v4197
      %v4220 = vadd.f32 %v4096, %v4202
      %v4221 = vadd.f32 %v4097, %v4207
      %v4222 = vadd.f32 %v4098, %v4212
      %v4223 = vrot.slane %v3159, 2
      %v4224 = vrot.slane %v3160, 2
      %v4225 = vsel %vm1279, %v4223, %v4224
      %s4226 = scalar_lea.vmem %s8, 256
      %v4227 = vld [vmem:[%s4226] sm:$0xff]
      %v4228 = vld [vmem:[%s4226 + $0x8] sm:$0xff]
      %v4229 = vld [vmem:[%s4226 + $0x10] sm:$0xff]
      %v4230 = vld [vmem:[%s4226 + $0x18] sm:$0xff]
      %v4231 = vsel %vm3110, %v4225, 0
      %4233 = vmatprep.subr.mxu0 0.0
      %4234 = vmatpush1.msra.mxu0 %v4227
      %4235 = vmatprep.subr.mxu0 0.0
      %4236 = vmatpush1.msra.mxu0 %v4228
      %4237 = vmatprep.subr.mxu0 0.0
      %4238 = vmatpush1.msra.mxu0 %v4229
      %4239 = vmatprep.subr.mxu0 0.0
      %4240 = vmatpush1.msra.mxu0 %v4230
      %4241 = vmatprep.subr.mxu0 0.0
      %4242 = vmatpush1.msra.mxu0 0.0
      %4243 = vmatprep.subr.mxu0 0.0
      %4244 = vmatpush1.msra.mxu0 0.0
      %4245 = vmatprep.subr.mxu0 0.0
      %4246 = vmatpush1.msra.mxu0 0.0
      %4247 = vmatprep.subr.mxu0 0.0
      %4248 = vmatpush1.msra.mxu0 0.0
      %4249 = vmatprep.subr.mxu0 0.0
      %4250 = vmatpush1.msra.mxu0 0.0
      %4251 = vmatprep.subr.mxu0 0.0
      %4252 = vmatpush1.msra.mxu0 0.0
      %4253 = vmatprep.subr.mxu0 0.0
      %4254 = vmatpush1.msra.mxu0 0.0
      %4255 = vmatprep.subr.mxu0 0.0
      %4256 = vmatpush1.msra.mxu0 0.0
      %4257 = vmatprep.subr.mxu0 0.0
      %4258 = vmatpush1.msra.mxu0 0.0
      %4259 = vmatprep.subr.mxu0 0.0
      %4260 = vmatpush1.msra.mxu0 0.0
      %4261 = vmatprep.subr.mxu0 0.0
      %4262 = vmatpush1.msra.mxu0 0.0
      %4263 = vmatprep.subr.mxu0 0.0
      %4264 = vmatpush1.msra.mxu0 0.0
      %4265 = vmatprep.subr.mxu0 0.0
      %4266 = vmatpush1.msra.mxu0 0.0
      %4267 = vmatprep.subr.mxu0 0.0
      %4268 = vmatpush1.msra.mxu0 0.0
      %4269 = vmatprep.subr.mxu0 0.0
      %4270 = vmatpush1.msra.mxu0 0.0
      %4271 = vmatprep.subr.mxu0 0.0
      %4272 = vmatpush1.msra.mxu0 0.0
      %4273 = vmatprep.subr.mxu0 0.0
      %4274 = vmatpush1.msra.mxu0 0.0
      %4275 = vmatprep.subr.mxu0 0.0
      %4276 = vmatpush1.msra.mxu0 0.0
      %4277 = vmatprep.subr.mxu0 0.0
      %4278 = vmatpush1.msra.mxu0 0.0
      %4279 = vmatprep.subr.mxu0 0.0
      %4280 = vmatpush1.msra.mxu0 0.0
      %4281 = vmatprep.subr.mxu0 0.0
      %4282 = vmatpush1.msra.mxu0 0.0
      %4283 = vmatprep.subr.mxu0 0.0
      %4284 = vmatpush1.msra.mxu0 0.0
      %4285 = vmatprep.subr.mxu0 0.0
      %4286 = vmatpush1.msra.mxu0 0.0
      %4287 = vmatprep.subr.mxu0 0.0
      %4288 = vmatpush1.msra.mxu0 0.0
      %4289 = vmatprep.subr.mxu0 0.0
      %4290 = vmatpush1.msra.mxu0 0.0
      %4291 = vmatprep.subr.mxu0 0.0
      %4292 = vmatpush1.msra.mxu0 0.0
      %4293 = vmatprep.subr.mxu0 0.0
      %4294 = vmatpush1.msra.mxu0 0.0
      %4295 = vmatprep.subr.mxu0 0.0
      %4296 = vmatpush1.msra.mxu0 0.0
      %4297 = vmatprep.mubr.f32.mxu0 0.0
      %4298 = vmatmul.mubr.f32.gmra.mrb[0].mxu0 %v3485
      %v4299 = vpop.f32.mrb[0].mxu0
      %v4300 = vadd.f32 0.0, %v4299
      %v4301 = vpop.f32.mrb[0].mxu0
      %4302 = vmatprep.mubr.f32.mxu0 0.0
      %4303 = vmatmul.mubr.f32.gmra.mrb[0].mxu0 %v3487
      %v4304 = vpop.f32.mrb[0].mxu0
      %v4305 = vadd.f32 0.0, %v4304
      %v4306 = vpop.f32.mrb[0].mxu0
      %4307 = vmatprep.mubr.f32.mxu0 0.0
      %4308 = vmatmul.mubr.f32.gmra.mrb[0].mxu0 %v3489
      %v4309 = vpop.f32.mrb[0].mxu0
      %v4310 = vadd.f32 0.0, %v4309
      %v4311 = vpop.f32.mrb[0].mxu0
      %4312 = vmatprep.mubr.f32.mxu0 0.0
      %4313 = vmatmul.mubr.f32.gmra.mrb[0].mxu0 %v3491
      %v4314 = vpop.f32.mrb[0].mxu0
      %v4315 = vadd.f32 0.0, %v4314
      %v4316 = vpop.f32.mrb[0].mxu0
      %4317 = vmatprep.mubr.f32.mxu0 0.0
      %4318 = vmatmul.mubr.f32.gmra.mrb[0].mxu0 %v3493
      %v4319 = vpop.f32.mrb[0].mxu0
      %v4320 = vadd.f32 0.0, %v4319
      %v4321 = vpop.f32.mrb[0].mxu0
      %4322 = vmatprep.mubr.f32.mxu0 0.0
      %4323 = vmatmul.mubr.f32.gmra.mrb[0].mxu0 %v3495
      %v4324 = vpop.f32.mrb[0].mxu0
      %v4325 = vadd.f32 0.0, %v4324
      %v4326 = vpop.f32.mrb[0].mxu0
      %4327 = vmatprep.mubr.f32.mxu0 0.0
      %4328 = vmatmul.mubr.f32.gmra.mrb[0].mxu0 %v3863
      %v4329 = vpop.f32.mrb[0].mxu0
      %v4330 = vadd.f32 0.0, %v4329
      %v4331 = vpop.f32.mrb[0].mxu0
      %4332 = vmatprep.mubr.f32.mxu0 0.0
      %4333 = vmatmul.mubr.f32.gmra.mrb[0].mxu0 %v4231
      %v4334 = vpop.f32.mrb[0].mxu0
      %v4335 = vadd.f32 0.0, %v4334
      %v4336 = vpop.f32.mrb[0].mxu0
      %4337 = vdwg.mxu0
      %v4338 = vadd.f32 %v4215, %v4300
      %v4339 = vadd.f32 %v4216, %v4305
      %v4340 = vadd.f32 %v4217, %v4310
      %v4341 = vadd.f32 %v4218, %v4315
      %v4342 = vadd.f32 %v4219, %v4320
      %v4343 = vadd.f32 %v4220, %v4325
      %v4344 = vadd.f32 %v4221, %v4330
      %v4345 = vadd.f32 %v4222, %v4335
      %v4346 = vld [vmem:[%s9] sm:$0x1]
      %v4348 = vlaneseq
      %v4349 = vshrl.u32 %v4348, 7
      %v4350 = vsub.s32 0, %v4349
      %v4351 = vrot.slane %v4346, %v4350
      %v4353 = vadd.f32 %v4338, %v4351
      %v4354 = vadd.f32 %v4339, %v4351
      %v4355 = vadd.f32 %v4340, %v4351
      %v4356 = vadd.f32 %v4341, %v4351
      %v4357 = vadd.f32 %v4342, %v4351
      %v4358 = vadd.f32 %v4343, %v4351
      %v4359 = vadd.f32 %v4344, %v4351
      %v4360 = vadd.f32 %v4345, %v4351
      %v4361 = vld [vmem:[%s10] sm:$0x1]
      %v4362 = vadd.f32 %v4353, 2.0
      %v4363 = vadd.f32 %v4354, 2.0
      %v4364 = vadd.f32 %v4355, 2.0
      %v4365 = vadd.f32 %v4356, 2.0
      %v4366 = vadd.f32 %v4357, 2.0
      %v4367 = vadd.f32 %v4358, 2.0
      %v4368 = vadd.f32 %v4359, 2.0
      %v4369 = vadd.f32 %v4360, 2.0
      %v4370 = vsub.f32 0.0, %v4362
      %v4371 = vsub.f32 0.0, %v4363
      %v4372 = vsub.f32 0.0, %v4364
      %v4373 = vsub.f32 0.0, %v4365
      %v4374 = vsub.f32 0.0, %v4366
      %v4375 = vsub.f32 0.0, %v4367
      %v4376 = vsub.f32 0.0, %v4368
      %v4377 = vsub.f32 0.0, %v4369
      %v4378 = vmax.f32 %v4370, 0.0
      %v4379 = vmax.f32 %v4371, 0.0
      %v4380 = vmax.f32 %v4372, 0.0
      %v4381 = vmax.f32 %v4373, 0.0
      %v4382 = vmax.f32 %v4374, 0.0
      %v4383 = vmax.f32 %v4375, 0.0
      %v4384 = vmax.f32 %v4376, 0.0
      %v4385 = vmax.f32 %v4377, 0.0
      %vm4386 = vcmp.ne.f32.partialorder %v4370, %v4370
      %vm4387 = vcmp.ne.f32.partialorder %v4371, %v4371
      %vm4388 = vcmp.ne.f32.partialorder %v4372, %v4372
      %vm4389 = vcmp.ne.f32.partialorder %v4373, %v4373
      %vm4390 = vcmp.ne.f32.partialorder %v4374, %v4374
      %vm4391 = vcmp.ne.f32.partialorder %v4375, %v4375
      %vm4392 = vcmp.ne.f32.partialorder %v4376, %v4376
      %vm4393 = vcmp.ne.f32.partialorder %v4377, %v4377
      %v4394 = vadd.f32 %v4370, 0.0
      %v4395 = vadd.f32 %v4371, 0.0
      %v4396 = vadd.f32 %v4372, 0.0
      %v4397 = vadd.f32 %v4373, 0.0
      %v4398 = vadd.f32 %v4374, 0.0
      %v4399 = vadd.f32 %v4375, 0.0
      %v4400 = vadd.f32 %v4376, 0.0
      %v4401 = vadd.f32 %v4377, 0.0
      %v4402 = vand.u32 2147483647, %v4370
      %v4403 = vand.u32 2147483647, %v4371
      %v4404 = vand.u32 2147483647, %v4372
      %v4405 = vand.u32 2147483647, %v4373
      %v4406 = vand.u32 2147483647, %v4374
      %v4407 = vand.u32 2147483647, %v4375
      %v4408 = vand.u32 2147483647, %v4376
      %v4409 = vand.u32 2147483647, %v4377
      %v4410 = vsub.f32 0.0, %v4402
      %v4411 = vsub.f32 0.0, %v4403
      %v4412 = vsub.f32 0.0, %v4404
      %v4413 = vsub.f32 0.0, %v4405
      %v4414 = vsub.f32 0.0, %v4406
      %v4415 = vsub.f32 0.0, %v4407
      %v4416 = vsub.f32 0.0, %v4408
      %v4417 = vsub.f32 0.0, %v4409
      %v4418 = vmul.f32 %v4410, 1.442695
      %v4419 = vpow.pop %v4418
      %v4420 = vmul.f32 %v4411, 1.442695
      %v4421 = vpow.pop %v4420
      %v4422 = vmul.f32 %v4412, 1.442695
      %v4423 = vpow.pop %v4422
      %v4424 = vmul.f32 %v4413, 1.442695
      %v4425 = vpow.pop %v4424
      %v4426 = vmul.f32 %v4414, 1.442695
      %v4427 = vpow.pop %v4426
      %v4428 = vmul.f32 %v4415, 1.442695
      %v4429 = vpow.pop %v4428
      %v4430 = vmul.f32 %v4416, 1.442695
      %v4431 = vpow.pop %v4430
      %v4432 = vmul.f32 %v4417, 1.442695
      %v4433 = vpow.pop %v4432
      %v4434 = vadd.f32 %v4419, 1.0
      %v4435 = vlog2.pop %v4434
      %v4436 = vmul.f32 %v4435, 0.6931472
      %v4437 = vmul.f32 -0.5, %v4419
      %v4438 = vadd.f32 %v4437, 1.0
      %v4439 = vmul.f32 %v4438, %v4419
      %v4440 = vand.u32 2147483647, %v4419
      %vm4441 = vcmp.lt.f32.partialorder %v4440, 0.0004427343
      %v4442 = vsel %vm4441, %v4439, %v4436
      %v4443 = vadd.f32 %v4421, 1.0
      %v4444 = vlog2.pop %v4443
      %v4445 = vmul.f32 %v4444, 0.6931472
      %v4446 = vmul.f32 -0.5, %v4421
      %v4447 = vadd.f32 %v4446, 1.0
      %v4448 = vmul.f32 %v4447, %v4421
      %v4449 = vand.u32 2147483647, %v4421
      %vm4450 = vcmp.lt.f32.partialorder %v4449, 0.0004427343
      %v4451 = vsel %vm4450, %v4448, %v4445
      %v4452 = vadd.f32 %v4423, 1.0
      %v4453 = vlog2.pop %v4452
      %v4454 = vmul.f32 %v4453, 0.6931472
      %v4455 = vmul.f32 -0.5, %v4423
      %v4456 = vadd.f32 %v4455, 1.0
      %v4457 = vmul.f32 %v4456, %v4423
      %v4458 = vand.u32 2147483647, %v4423
      %vm4459 = vcmp.lt.f32.partialorder %v4458, 0.0004427343
      %v4460 = vsel %vm4459, %v4457, %v4454
      %v4461 = vadd.f32 %v4425, 1.0
      %v4462 = vlog2.pop %v4461
      %v4463 = vmul.f32 %v4462, 0.6931472
      %v4464 = vmul.f32 -0.5, %v4425
      %v4465 = vadd.f32 %v4464, 1.0
      %v4466 = vmul.f32 %v4465, %v4425
      %v4467 = vand.u32 2147483647, %v4425
      %vm4468 = vcmp.lt.f32.partialorder %v4467, 0.0004427343
      %v4469 = vsel %vm4468, %v4466, %v4463
      %v4470 = vadd.f32 %v4427, 1.0
      %v4471 = vlog2.pop %v4470
      %v4472 = vmul.f32 %v4471, 0.6931472
      %v4473 = vmul.f32 -0.5, %v4427
      %v4474 = vadd.f32 %v4473, 1.0
      %v4475 = vmul.f32 %v4474, %v4427
      %v4476 = vand.u32 2147483647, %v4427
      %vm4477 = vcmp.lt.f32.partialorder %v4476, 0.0004427343
      %v4478 = vsel %vm4477, %v4475, %v4472
      %v4479 = vadd.f32 %v4429, 1.0
      %v4480 = vlog2.pop %v4479
      %v4481 = vmul.f32 %v4480, 0.6931472
      %v4482 = vmul.f32 -0.5, %v4429
      %v4483 = vadd.f32 %v4482, 1.0
      %v4484 = vmul.f32 %v4483, %v4429
      %v4485 = vand.u32 2147483647, %v4429
      %vm4486 = vcmp.lt.f32.partialorder %v4485, 0.0004427343
      %v4487 = vsel %vm4486, %v4484, %v4481
      %v4488 = vadd.f32 %v4431, 1.0
      %v4489 = vlog2.pop %v4488
      %v4490 = vmul.f32 %v4489, 0.6931472
      %v4491 = vmul.f32 -0.5, %v4431
      %v4492 = vadd.f32 %v4491, 1.0
      %v4493 = vmul.f32 %v4492, %v4431
      %v4494 = vand.u32 2147483647, %v4431
      %vm4495 = vcmp.lt.f32.partialorder %v4494, 0.0004427343
      %v4496 = vsel %vm4495, %v4493, %v4490
      %v4497 = vadd.f32 %v4433, 1.0
      %v4498 = vlog2.pop %v4497
      %v4499 = vmul.f32 %v4498, 0.6931472
      %v4500 = vmul.f32 -0.5, %v4433
      %v4501 = vadd.f32 %v4500, 1.0
      %v4502 = vmul.f32 %v4501, %v4433
      %v4503 = vand.u32 2147483647, %v4433
      %vm4504 = vcmp.lt.f32.partialorder %v4503, 0.0004427343
      %v4505 = vsel %vm4504, %v4502, %v4499
      %v4506 = vadd.f32 %v4378, %v4442
      %v4507 = vadd.f32 %v4379, %v4451
      %v4508 = vadd.f32 %v4380, %v4460
      %v4509 = vadd.f32 %v4381, %v4469
      %v4510 = vadd.f32 %v4382, %v4478
      %v4511 = vadd.f32 %v4383, %v4487
      %v4512 = vadd.f32 %v4384, %v4496
      %v4513 = vadd.f32 %v4385, %v4505
      %v4514 = vsel %vm4386, %v4394, %v4506
      %v4515 = vsel %vm4387, %v4395, %v4507
      %v4516 = vsel %vm4388, %v4396, %v4508
      %v4517 = vsel %vm4389, %v4397, %v4509
      %v4518 = vsel %vm4390, %v4398, %v4510
      %v4519 = vsel %vm4391, %v4399, %v4511
      %v4520 = vsel %vm4392, %v4400, %v4512
      %v4521 = vsel %vm4393, %v4401, %v4513
      %v4522 = vsub.f32 0.0, %v4514
      %v4523 = vsub.f32 0.0, %v4515
      %v4524 = vsub.f32 0.0, %v4516
      %v4525 = vsub.f32 0.0, %v4517
      %v4526 = vsub.f32 0.0, %v4518
      %v4527 = vsub.f32 0.0, %v4519
      %v4528 = vsub.f32 0.0, %v4520
      %v4529 = vsub.f32 0.0, %v4521
      %v4531 = vlaneseq
      %v4532 = vshrl.u32 %v4531, 7
      %v4533 = vsub.s32 0, %v4532
      %v4534 = vrot.slane %v4361, %v4533
      %v4536 = vmul.f32 %v4534, %v4522
      %v4537 = vmul.f32 %v4534, %v4523
      %v4538 = vmul.f32 %v4534, %v4524
      %v4539 = vmul.f32 %v4534, %v4525
      %v4540 = vmul.f32 %v4534, %v4526
      %v4541 = vmul.f32 %v4534, %v4527
      %v4542 = vmul.f32 %v4534, %v4528
      %v4543 = vmul.f32 %v4534, %v4529
      %v4544 = vmul.f32 %v4536, 1.442695
      %v4545 = vpow.pop %v4544
      %v4546 = vmul.f32 %v4537, 1.442695
      %v4547 = vpow.pop %v4546
      %v4548 = vmul.f32 %v4538, 1.442695
      %v4549 = vpow.pop %v4548
      %v4550 = vmul.f32 %v4539, 1.442695
      %v4551 = vpow.pop %v4550
      %v4552 = vmul.f32 %v4540, 1.442695
      %v4553 = vpow.pop %v4552
      %v4554 = vmul.f32 %v4541, 1.442695
      %v4555 = vpow.pop %v4554
      %v4556 = vmul.f32 %v4542, 1.442695
      %v4557 = vpow.pop %v4556
      %v4558 = vmul.f32 %v4543, 1.442695
      %v4559 = vpow.pop %v4558
      %v4560 = vmul.f32 %v575, %v4545
      %v4561 = vmul.f32 %v580, %v4547
      %v4562 = vmul.f32 %v585, %v4549
      %v4563 = vmul.f32 %v590, %v4551
      %v4564 = vmul.f32 %v595, %v4553
      %v4565 = vmul.f32 %v600, %v4555
      %v4566 = vmul.f32 %v605, %v4557
      %v4567 = vmul.f32 %v610, %v4559
      %4576 = vrot.lane.b32.xlu0 %v4353, 112
      %v4577 = vpop.permute.xlu0 %4576
      %4578 = vrot.lane.b32.xlu0 %v4354, 112
      %v4579 = vpop.permute.xlu0 %4578
      %4580 = vrot.lane.b32.xlu0 %v4355, 112
      %v4581 = vpop.permute.xlu0 %4580
      %4582 = vrot.lane.b32.xlu0 %v4356, 112
      %v4583 = vpop.permute.xlu0 %4582
      %4584 = vrot.lane.b32.xlu0 %v4357, 112
      %v4585 = vpop.permute.xlu0 %4584
      %4586 = vrot.lane.b32.xlu0 %v4358, 112
      %v4587 = vpop.permute.xlu0 %4586
      %4588 = vrot.lane.b32.xlu0 %v4359, 112
      %v4589 = vpop.permute.xlu0 %4588
      %4590 = vrot.lane.b32.xlu0 %v4360, 112
      %v4591 = vpop.permute.xlu0 %4590
      %v4600 = vadd.f32 %v4560, %v4577
      %v4601 = vadd.f32 %v4561, %v4579
      %v4602 = vadd.f32 %v4562, %v4581
      %v4603 = vadd.f32 %v4563, %v4583
      %v4604 = vadd.f32 %v4564, %v4585
      %v4605 = vadd.f32 %v4565, %v4587
      %v4606 = vadd.f32 %v4566, %v4589
      %v4607 = vadd.f32 %v4567, %v4591
      %4608 = vst.msk [vmem:[%s439] sm:$0xff] %vm483, %v4600
      %4609 = vst.msk [vmem:[%s439 + $0x8] sm:$0xff] %vm483, %v4601
      %4610 = vst.msk [vmem:[%s439 + $0x10] sm:$0xff] %vm483, %v4602
      %4611 = vst.msk [vmem:[%s439 + $0x18] sm:$0xff] %vm483, %v4603
      %4612 = vst.msk [vmem:[%s439 + $0x20] sm:$0xff] %vm483, %v4604
      %4613 = vst.msk [vmem:[%s439 + $0x28] sm:$0xff] %vm483, %v4605
      %4614 = vst.msk [vmem:[%s439 + $0x30] sm:$0xff] %vm483, %v4606
      %4615 = vst.msk [vmem:[%s439 + $0x38] sm:$0xff] %vm483, %v4607
      %v4616 = vsel %vm483, %v4536, 0.0
      %v4617 = vsel %vm483, %v4537, 0.0
      %v4618 = vadd.f32 %v4616, %v4617
      %v4619 = vsel %vm483, %v4538, 0.0
      %v4620 = vadd.f32 %v4618, %v4619
      %v4621 = vsel %vm483, %v4539, 0.0
      %v4622 = vadd.f32 %v4620, %v4621
      %v4623 = vsel %vm483, %v4540, 0.0
      %v4624 = vadd.f32 %v4622, %v4623
      %v4625 = vsel %vm483, %v4541, 0.0
      %v4626 = vadd.f32 %v4624, %v4625
      %v4627 = vsel %vm483, %v4542, 0.0
      %v4628 = vadd.f32 %v4626, %v4627
      %v4629 = vsel %vm483, %v4543, 0.0
      %v4630 = vadd.f32 %v4628, %v4629
      %4631 = vadd.xlane.f32.xlu0 %v4630
      %v4632 = vpop.xlane.xlu0 %4631
      %v4633 = vrot.slane %v4632, 4
      %v4634 = vadd.f32 %v4632, %v4633
      %v4635 = vrot.slane %v4634, 2
      %v4636 = vadd.f32 %v4634, %v4635
      %v4637 = vrot.slane %v4636, 1
      %v4638 = vadd.f32 %v4636, %v4637
      %s4639 = vtos %v4638
      %v4640 = vstv %s4639
      %vm4641 = vcmask 0
      %4642 = vst.msk [vmem:[%s442] sm:$0x1] %vm4641, %v4640
      %p4643 = scmp.lt.s32.totalorder %s24, 1
      %s4644 = scalar_select %p4643, %s24, 1
      %s4645 = smul.addr %s4644, 8
      %s4646 = smul.addr %s4645, 8
      %s4647 = scalar_lea.vmem %s11, %s4646
      %p4648 = scmp.lt.s32.totalorder %s24, 1
      %s4649 = scalar_select %p4648, %s24, 1
      %s4650 = scalar_lea.vmem %s12, %s4649
      // Predicated region
      $region65: #{_lambda_.4} parent=63 // pred_check
        %p4651 = pneg %p283
      $region66: #{_lambda_.4} parent=63 // pred_check_branch
        %4653 = sbr.rel (%p4651) target = $region68
      $region67: #{_lambda_.4} parent=63 // pred_region
        _
      $region68: #{_lambda_.4} parent=63 // pred_fallthru
        _
      // Predicated region
      $region69: #{_lambda_.4} parent=63 // pred_check
        %p4654 = pneg %p309
      $region70: #{_lambda_.4} parent=63 // pred_check_branch
        %4656 = sbr.rel (%p4654) target = $region72
      $region71: #{_lambda_.4} parent=63 // pred_region
        _
      $region72: #{_lambda_.4} parent=63 // pred_fallthru
        _
    $region64: #{_lambda_.4} parent=5 // pred_fallthru
      _
    %p4657 = scmp.le.s32.totalorder 2, %s19
    // Predicated region
    $region73: #{_lambda_.4} parent=5 // pred_check
      %p4658 = pneg %p4657
    $region74: #{_lambda_.4} parent=5 // pred_check_branch
      %4660 = sbr.rel (%p4658) target = $region76
    $region75: #{_lambda_.4} parent=5 // pred_region
      %s4661 = ssub.s32 %s19, 2
      // Predicated region
      $region77: #{_lambda_.4} parent=75 // pred_check
        %p4662 = pneg %p289
      $region78: #{_lambda_.4} parent=75 // pred_check_branch
        %4664 = sbr.rel (%p4662) target = $region80
      $region79: #{_lambda_.4} parent=75 // pred_region
        %p4665 = scmp.lt.s32.totalorder %s25, 1
        %s4666 = scalar_select %p4665, %s25, 1
        %s4667 = smul.addr %s4666, 8
        %s4668 = smul.addr %s4667, 8
        %s4669 = scalar_lea.vmem %s11, %s4668
      $region80: #{_lambda_.4} parent=75 // pred_fallthru
        _
      // Predicated region
      $region81: #{_lambda_.4} parent=75 // pred_check
        %p4670 = pneg %p315
      $region82: #{_lambda_.4} parent=75 // pred_check_branch
        %4672 = sbr.rel (%p4670) target = $region84
      $region83: #{_lambda_.4} parent=75 // pred_region
        %p4673 = scmp.lt.s32.totalorder %s25, 1
        %s4674 = scalar_select %p4673, %s25, 1
        %s4675 = scalar_lea.vmem %s12, %s4674
      $region84: #{_lambda_.4} parent=75 // pred_fallthru
        _
    $region76: #{_lambda_.4} parent=5 // pred_fallthru
      _
  $region6: #{_lambda_.4} parent=0 // loop_footer
    %s23 = sadd.s32 1, %s19
  $region7: #{_lambda_.4} parent=0 // loop_footer_branch
    %18 = sbr.rel target = $region3
  $region8: #{_lambda_.4} parent=0 // loop_exit
    _

// kernel: custom-call.20
$region0: #{custom-call.20}
  %s0 = inlined_call_operand.vmem [shape: f32[32,32], index: 0, kind: input, shape index: {}]
  %s1 = inlined_call_operand.vmem [shape: f32[32,32], index: 1, kind: output, shape index: {0}]
  %s2 = inlined_call_operand.hbm [shape: s32[32], index: 2, kind: output, shape index: {1}]
  %s3 = inlined_call_operand.hbm [shape: s32[32], index: 3, kind: output, shape index: {2}]
  %4 = xla_tuple %s1, %s2, %s3
  $region1: #{custom-call.20} parent=0
    #allocation0 [shape = 'u8[16384]{0}', space=vmem, size = 0x4000, scoped, tag = 'operand span for operand 0']
    #allocation1 [shape = 'u8[16384]{0}', space=vmem, size = 0x4000, scoped, tag = 'operand span for operand 1']
    #allocation2 [shape = 'u8[4096]{0}', space=vmem, size = 0x1000, scoped, tag = 'operand span for operand 2']
    #allocation3 [shape = 'u8[512]{0}', space=vmem, size = 0x400, scoped, tag = 'packed  for operand 2']
    #allocation4 [shape = 's32[1]{0}', space=sflag, size = 0x4, scoped, tag = 'scoped memory for custom-call.20']
    #allocation5 [shape = 'u8[4096]{0}', space=vmem, size = 0x1000, scoped, tag = 'operand span for operand 3']
    #allocation6 [shape = 'u8[512]{0}', space=vmem, size = 0x400, scoped, tag = 'packed  for operand 3']
    #allocation7 [shape = 's32[1]{0}', space=sflag, size = 0x4, scoped, tag = 'scoped memory for custom-call.20']
    #allocation8 [shape = 's32[32,128]{1,0}', space=vmem, size = 0x4000, scoped, tag = 'scratch for permutations']
    %5 = vsyncpa [#allocation4], 0
    %6 = vsyncpa [#allocation7], 0
    %p8 = scmp.gt.s32.totalorder 32, 0
    // Predicated region
    $region2: #{custom-call.20} parent=1 // pred_check
      %p9 = pneg %p8
    $region3: #{custom-call.20} parent=1 // pred_check_branch
      %11 = sbr.rel (%p9) target = $region5
    $region4: #{custom-call.20} parent=1 // pred_region
      %s12 = sshra.s32 32, 3
      %p13 = scmp.gt.s32.totalorder %s12, 0
      // Predicated region
      $region6: #{custom-call.20} parent=4 // pred_check
        %p14 = pneg %p13
      $region7: #{custom-call.20} parent=4 // pred_check_branch
        %16 = sbr.rel (%p14) target = $region9
      $region8: #{custom-call.20} parent=4 // pred_region
        %s17 = ssub.s32 %s12, 1
        %s18 = smul.u32 %s17, 128
        %s19 = sshra.s32 %s18, 4
        %s20 = scalar_lea.vmem %s0, %s19
        %v21 = vld [vmem:[%s0] sm:$0xff]
        // While loop
        $region10: #{custom-call.20} parent=8 // loop_pre_header
          _
        $region11: #{custom-call.20} parent=8 // loop_header
          %s22 = sphi %s0, %s44
          %s23 = sphi [#allocation0], %s45
          %v24 = vphi %v21, %v46
          %s25 = ssub.s32 %s20, 64
          %p26 = scmp.gt.s32.totalorder %s22, %s25
        $region12: #{custom-call.20} parent=8 // loop_header_branch
          %28 = sbr.rel (%p26) target = $region16
        $region13: #{custom-call.20} parent=8 // loop_body
          %29 = vst [vmem:[%s23] sm:$0xff] %v24
          %v30 = vld [vmem:[%s22 + $0x8] sm:$0xff]
          %31 = vst [vmem:[%s23 + $0x8] sm:$0xff] %v30
          %v32 = vld [vmem:[%s22 + $0x10] sm:$0xff]
          %33 = vst [vmem:[%s23 + $0x10] sm:$0xff] %v32
          %v34 = vld [vmem:[%s22 + $0x18] sm:$0xff]
          %35 = vst [vmem:[%s23 + $0x18] sm:$0xff] %v34
          %v36 = vld [vmem:[%s22 + $0x20] sm:$0xff]
          %37 = vst [vmem:[%s23 + $0x20] sm:$0xff] %v36
          %v38 = vld [vmem:[%s22 + $0x28] sm:$0xff]
          %39 = vst [vmem:[%s23 + $0x28] sm:$0xff] %v38
          %v40 = vld [vmem:[%s22 + $0x30] sm:$0xff]
          %41 = vst [vmem:[%s23 + $0x30] sm:$0xff] %v40
          %v42 = vld [vmem:[%s22 + $0x38] sm:$0xff]
          %43 = vst [vmem:[%s23 + $0x38] sm:$0xff] %v42
        $region14: #{custom-call.20} parent=8 // loop_footer
          %s44 = scalar_lea.vmem %s22, 64
          %s45 = scalar_lea.vmem %s23, 64
          %v46 = vld [vmem:[%s22 + $0x40] sm:$0xff]
        $region15: #{custom-call.20} parent=8 // loop_footer_branch
          %47 = sbr.rel target = $region11
        $region16: #{custom-call.20} parent=8 // loop_exit
          _
        // While loop
        $region17: #{custom-call.20} parent=8 // loop_pre_header
          _
        $region18: #{custom-call.20} parent=8 // loop_header
          %s48 = sphi %s22, %s56
          %s49 = sphi %s23, %s57
          %v50 = vphi %v24, %v50
          %p51 = scmp.gt.s32.totalorder %s48, %s20
        $region19: #{custom-call.20} parent=8 // loop_header_branch
          %53 = sbr.rel (%p51) target = $region23
        $region20: #{custom-call.20} parent=8 // loop_body
          %v54 = vld [vmem:[%s48] sm:$0xff]
          %55 = vst [vmem:[%s49] sm:$0xff] %v54
        $region21: #{custom-call.20} parent=8 // loop_footer
          %s56 = scalar_lea.vmem %s48, 8
          %s57 = scalar_lea.vmem %s49, 8
        $region22: #{custom-call.20} parent=8 // loop_footer_branch
          %58 = sbr.rel target = $region18
        $region23: #{custom-call.20} parent=8 // loop_exit
          _
      $region9: #{custom-call.20} parent=4 // pred_fallthru
        _
      %s59 = sand.u32 32, 7
      %s60 = sshllo.u32 0, %s59
      %s61 = smul.u32 %s12, 128
      %s62 = sshra.s32 %s61, 4
      %s63 = scalar_lea.vmem [#allocation0], %s62
      %s64 = smul.u32 %s12, 128
      %s65 = sshra.s32 %s64, 4
      %s66 = scalar_lea.vmem %s0, %s65
      %v67 = vld [vmem:[%s66] sm:%s60]
      %68 = vst [vmem:[%s63] sm:%s60] %v67
    $region5: #{custom-call.20} parent=1 // pred_fallthru
      _
    %v69 = vld [vmem:[#allocation0] sm:$0xff]
    %70 = vst [vmem:[#allocation1] sm:$0xff] %v69
    %s71 = scalar_lea.vmem [#allocation1], 8
    %s72 = scalar_lea.vmem [#allocation0], 8
    %v73 = vld [vmem:[%s72] sm:$0xff]
    %74 = vst [vmem:[%s71] sm:$0xff] %v73
    %s75 = scalar_lea.vmem [#allocation1], 16
    %s76 = scalar_lea.vmem [#allocation0], 16
    %v77 = vld [vmem:[%s76] sm:$0xff]
    %78 = vst [vmem:[%s75] sm:$0xff] %v77
    %s79 = scalar_lea.vmem [#allocation1], 24
    %s80 = scalar_lea.vmem [#allocation0], 24
    %v81 = vld [vmem:[%s80] sm:$0xff]
    %82 = vst [vmem:[%s79] sm:$0xff] %v81
    %83 = vst [vmem:[#allocation2] sm:$0x1] 0
    %v84 = vlaneseq
    %v85 = vshrl.u32 %v84, 7
    %v86 = vmov %v85
    loop: start=0, step=1, limit=4
    $region24: #{custom-call.20} parent=1 // loop_pre_header
      _
    $region25: #{custom-call.20} parent=1 // loop_header
      %s88 = sphi 0, %s92
      %p89 = scmp.ge.s32.totalorder %s88, 4
    $region26: #{custom-call.20} parent=1 // loop_header_branch
      %91 = sbr.rel (%p89) target = $region30
    $region27: #{custom-call.20} parent=1 // loop_body
      %s93 = smul.addr %s88, 8
      %s94 = scalar_lea.vmem [#allocation8], %s93
      %s95 = smul.u32 %s88, 8
      %v96 = vstv %s95
      %v97 = vadd.s32 %v86, %v96
      %98 = vst [vmem:[%s94] sm:$0xff] %v97
    $region28: #{custom-call.20} parent=1 // loop_footer
      %s92 = sadd.s32 1, %s88
    $region29: #{custom-call.20} parent=1 // loop_footer_branch
      %87 = sbr.rel target = $region25
    $region30: #{custom-call.20} parent=1 // loop_exit
      _
    loop: start=0, step=1, limit=32
    $region31: #{custom-call.20} parent=1 // loop_pre_header
      _
    $region32: #{custom-call.20} parent=1 // loop_header
      %s100 = sphi 0, %s104
      %p101 = scmp.ge.s32.totalorder %s100, 32
    $region33: #{custom-call.20} parent=1 // loop_header_branch
      %103 = sbr.rel (%p101) target = $region37
    $region34: #{custom-call.20} parent=1 // loop_body
      %v105 = vstv %s100
      %v106 = vlaneseq
      %v107 = vshrl.u32 %v106, 7
      %v108 = vmov %v107
      %v109 = vld [vmem:[#allocation1] sm:$0xff]
      %v110 = vand.u32 2147483647, %v109
      %v112 = vstv %s100
      %vm113 = vcmp.ge.s32.totalorder %v108, %v112
      %vm114 = vcmp.lt.s32.totalorder %v108, 32
      %vm115 = vmand %vm113, %vm114
      %vm116 = vcmp.lt.f32.partialorder -inf, %v110
      %vm117 = vmand %vm115, %vm116
      %v118 = vsel %vm117, %v108, %v105
      %v119 = vsel %vm117, %v110, -inf
      %s120 = scalar_lea.vmem [#allocation1], 8
      %v121 = vld [vmem:[%s120] sm:$0xff]
      %v122 = vand.u32 2147483647, %v121
      %v123 = vadd.s32 %v108, 8
      %v124 = vstv %s100
      %vm125 = vcmp.ge.s32.totalorder %v123, %v124
      %vm126 = vcmp.lt.s32.totalorder %v123, 32
      %vm127 = vmand %vm125, %vm126
      %vm128 = vcmp.lt.f32.partialorder %v119, %v122
      %vm129 = vmand %vm127, %vm128
      %v130 = vsel %vm129, %v123, %v118
      %v131 = vsel %vm129, %v122, %v119
      %s132 = scalar_lea.vmem [#allocation1], 16
      %v133 = vld [vmem:[%s132] sm:$0xff]
      %v134 = vand.u32 2147483647, %v133
      %v135 = vadd.s32 %v108, 16
      %v136 = vstv %s100
      %vm137 = vcmp.ge.s32.totalorder %v135, %v136
      %vm138 = vcmp.lt.s32.totalorder %v135, 32
      %vm139 = vmand %vm137, %vm138
      %vm140 = vcmp.lt.f32.partialorder %v131, %v134
      %vm141 = vmand %vm139, %vm140
      %v142 = vsel %vm141, %v135, %v130
      %v143 = vsel %vm141, %v134, %v131
      %s144 = scalar_lea.vmem [#allocation1], 24
      %v145 = vld [vmem:[%s144] sm:$0xff]
      %v146 = vand.u32 2147483647, %v145
      %v147 = vadd.s32 %v108, 24
      %v148 = vstv %s100
      %vm149 = vcmp.ge.s32.totalorder %v147, %v148
      %vm150 = vcmp.lt.s32.totalorder %v147, 32
      %vm151 = vmand %vm149, %vm150
      %vm152 = vcmp.lt.f32.partialorder %v143, %v146
      %vm153 = vmand %vm151, %vm152
      %v154 = vsel %vm153, %v147, %v142
      %v155 = vsel %vm153, %v146, %v143
      %v156 = vrot.slane %v155, 1
      %v157 = vrot.slane %v154, 1
      %vm158 = vcmp.ge.f32.partialorder %v156, %v155
      %v159 = vsel %vm158, %v156, %v155
      %v160 = vsel %vm158, %v157, %v154
      %v161 = vrot.slane %v156, 1
      %v162 = vrot.slane %v157, 1
      %vm163 = vcmp.ge.f32.partialorder %v161, %v159
      %v164 = vsel %vm163, %v161, %v159
      %v165 = vsel %vm163, %v162, %v160
      %v166 = vrot.slane %v161, 1
      %v167 = vrot.slane %v162, 1
      %vm168 = vcmp.ge.f32.partialorder %v166, %v164
      %v169 = vsel %vm168, %v166, %v164
      %v170 = vsel %vm168, %v167, %v165
      %v171 = vrot.slane %v166, 1
      %v172 = vrot.slane %v167, 1
      %vm173 = vcmp.ge.f32.partialorder %v171, %v169
      %v174 = vsel %vm173, %v171, %v169
      %v175 = vsel %vm173, %v172, %v170
      %v176 = vrot.slane %v171, 1
      %v177 = vrot.slane %v172, 1
      %vm178 = vcmp.ge.f32.partialorder %v176, %v174
      %v179 = vsel %vm178, %v176, %v174
      %v180 = vsel %vm178, %v177, %v175
      %v181 = vrot.slane %v176, 1
      %v182 = vrot.slane %v177, 1
      %vm183 = vcmp.ge.f32.partialorder %v181, %v179
      %v184 = vsel %vm183, %v181, %v179
      %v185 = vsel %vm183, %v182, %v180
      %v186 = vrot.slane %v181, 1
      %v187 = vrot.slane %v182, 1
      %vm188 = vcmp.ge.f32.partialorder %v186, %v184
      %v189 = vsel %vm188, %v186, %v184
      %v190 = vsel %vm188, %v187, %v185
      %s191 = ssub.s32 128, %s100
      %192 = vrot.lane.b32.xlu0 %v190, %s191
      %v193 = vpop.permute.xlu0 %192
      %s194 = vtos %v193
      %v195 = vstv %s100
      %v196 = vlaneseq
      %v197 = vand.u32 %v196, 127
      %vm198 = vcmp.eq.s32.totalorder %v197, %v195
      %v199 = vstv %s194
      %v200 = vld [vmem:[#allocation2] ss:$0 sm:$0xff]
      %v201 = vsel %vm198, %v199, %v200
      %202 = vst [vmem:[#allocation2] sm:$0x1] %v201
      %s203 = scalar_lea.vmem [#allocation1], %s100
      %s204 = scalar_lea.vmem [#allocation1], %s194
      %v205 = vld [vmem:[%s203] ss:$0 sm:$0xff]
      %v206 = vld [vmem:[%s204] ss:$0 sm:$0xff]
      %207 = vst [vmem:[%s204] sm:$0x1] %v205
      %208 = vst [vmem:[%s203] sm:$0x1] %v206
      %s209 = scalar_lea.vmem [#allocation8], %s100
      %s210 = scalar_lea.vmem [#allocation8], %s194
      %v211 = vld [vmem:[%s209] ss:$0 sm:$0xff]
      %v212 = vld [vmem:[%s210] ss:$0 sm:$0xff]
      %213 = vst [vmem:[%s210] sm:$0x1] %v211
      %214 = vst [vmem:[%s209] sm:$0x1] %v212
      %vm215 = vcmp.ne.f32.partialorder %v206, 0.0
      %vm216 = vmand %vm198, %vm215
      %v217 = vsel %vm216, %v206, 1.0
      %v218 = vlaneseq
      %v219 = vand.u32 %v218, 127
      %v220 = vstv %s100
      %vm221 = vcmp.gt.s32.totalorder %v219, %v220
      %v222 = vsel %vm221, %v206, 0.0
      %v223 = vlaneseq
      %v224 = vshrl.u32 %v223, 7
      %v225 = vmov %v224
      %v226 = vld [vmem:[#allocation1] sm:$0xff]
      %v228 = vstv %s100
      %vm229 = vcmp.gt.s32.totalorder %v225, %v228
      %v230 = vsel %vm229, %v217, 1.0
      %v231 = vrcp.pop %v230
      %v232 = vmul.f32 %v226, %v231
      %vm233 = vmand %vm229, %vm198
      %v234 = vsel %vm233, %v232, 0.0
      %235 = vadd.xlane.f32.xlu0 %v234
      %v236 = vpop.xlane.xlu0 %235
      %v237 = vmul.f32 %v236, %v222
      %v238 = vsub.f32 %v232, %v237
      %239 = vst [vmem:[#allocation1] sm:$0xff] %v238
      %s240 = scalar_lea.vmem [#allocation1], 8
      %v241 = vld [vmem:[%s240] sm:$0xff]
      %v242 = vadd.s32 %v225, 8
      %v243 = vstv %s100
      %vm244 = vcmp.gt.s32.totalorder %v242, %v243
      %v245 = vsel %vm244, %v217, 1.0
      %v246 = vrcp.pop %v245
      %v247 = vmul.f32 %v241, %v246
      %vm248 = vmand %vm244, %vm198
      %v249 = vsel %vm248, %v247, 0.0
      %250 = vadd.xlane.f32.xlu0 %v249
      %v251 = vpop.xlane.xlu0 %250
      %v252 = vmul.f32 %v251, %v222
      %v253 = vsub.f32 %v247, %v252
      %254 = vst [vmem:[%s240] sm:$0xff] %v253
      %s255 = scalar_lea.vmem [#allocation1], 16
      %v256 = vld [vmem:[%s255] sm:$0xff]
      %v257 = vadd.s32 %v225, 16
      %v258 = vstv %s100
      %vm259 = vcmp.gt.s32.totalorder %v257, %v258
      %v260 = vsel %vm259, %v217, 1.0
      %v261 = vrcp.pop %v260
      %v262 = vmul.f32 %v256, %v261
      %vm263 = vmand %vm259, %vm198
      %v264 = vsel %vm263, %v262, 0.0
      %265 = vadd.xlane.f32.xlu0 %v264
      %v266 = vpop.xlane.xlu0 %265
      %v267 = vmul.f32 %v266, %v222
      %v268 = vsub.f32 %v262, %v267
      %269 = vst [vmem:[%s255] sm:$0xff] %v268
      %s270 = scalar_lea.vmem [#allocation1], 24
      %v271 = vld [vmem:[%s270] sm:$0xff]
      %v272 = vadd.s32 %v225, 24
      %v273 = vstv %s100
      %vm274 = vcmp.gt.s32.totalorder %v272, %v273
      %v275 = vsel %vm274, %v217, 1.0
      %v276 = vrcp.pop %v275
      %v277 = vmul.f32 %v271, %v276
      %vm278 = vmand %vm274, %vm198
      %v279 = vsel %vm278, %v277, 0.0
      %280 = vadd.xlane.f32.xlu0 %v279
      %v281 = vpop.xlane.xlu0 %280
      %v282 = vmul.f32 %v281, %v222
      %v283 = vsub.f32 %v277, %v282
      %284 = vst [vmem:[%s270] sm:$0xff] %v283
    $region35: #{custom-call.20} parent=1 // loop_footer
      %s104 = sadd.s32 1, %s100
    $region36: #{custom-call.20} parent=1 // loop_footer_branch
      %99 = sbr.rel target = $region32
    $region37: #{custom-call.20} parent=1 // loop_exit
      _
    %v285 = vld [vmem:[#allocation8] sm:$0xff]
    %s286 = scalar_lea.vmem [#allocation8], 8
    %v287 = vld [vmem:[%s286] sm:$0xff]
    %s288 = scalar_lea.vmem [#allocation8], 16
    %v289 = vld [vmem:[%s288] sm:$0xff]
    %s290 = scalar_lea.vmem [#allocation8], 24
    %v291 = vld [vmem:[%s290] sm:$0xff]
    %s292 = scalar_lea.vmem [#allocation8], 32
    %s293 = scalar_lea.vmem [#allocation8], 40
    %s294 = scalar_lea.vmem [#allocation8], 48
    %s295 = scalar_lea.vmem [#allocation8], 56
    %s296 = scalar_lea.vmem [#allocation8], 64
    %s297 = scalar_lea.vmem [#allocation8], 72
    %s298 = scalar_lea.vmem [#allocation8], 80
    %s299 = scalar_lea.vmem [#allocation8], 88
    %s300 = scalar_lea.vmem [#allocation8], 96
    %s301 = scalar_lea.vmem [#allocation8], 104
    %s302 = scalar_lea.vmem [#allocation8], 112
    %s303 = scalar_lea.vmem [#allocation8], 120
    %304 = vxpose.xlu0.b32.start [1/16] %v285, 128
    %305 = vxpose.xlu0.b32.cont [2/16] %v287, 128
    %306 = vxpose.xlu0.b32.cont [3/16] %v289, 128
    %307 = vxpose.xlu0.b32.cont [4/16] %v291, 128
    %308 = vxpose.xlu0.b32.cont [5/16] 0, 128
    %309 = vxpose.xlu0.b32.cont [6/16] 0, 128
    %310 = vxpose.xlu0.b32.cont [7/16] 0, 128
    %311 = vxpose.xlu0.b32.cont [8/16] 0, 128
    %312 = vxpose.xlu0.b32.cont [9/16] 0, 128
    %313 = vxpose.xlu0.b32.cont [10/16] 0, 128
    %314 = vxpose.xlu0.b32.cont [11/16] 0, 128
    %315 = vxpose.xlu0.b32.cont [12/16] 0, 128
    %316 = vxpose.xlu0.b32.cont [13/16] 0, 128
    %317 = vxpose.xlu0.b32.cont [14/16] 0, 128
    %318 = vxpose.xlu0.b32.cont [15/16] 0, 128
    %319 = vxpose.xlu0.b32.end [16/16] 0, 128
    %v320 = vpop.trf.xlu0
    %v321 = vpop.trf.xlu0
    %v322 = vpop.trf.xlu0
    %v323 = vpop.trf.xlu0
    %v324 = vpop.trf.xlu0
    %v325 = vpop.trf.xlu0
    %v326 = vpop.trf.xlu0
    %v327 = vpop.trf.xlu0
    %v328 = vpop.trf.xlu0
    %v329 = vpop.trf.xlu0
    %v330 = vpop.trf.xlu0
    %v331 = vpop.trf.xlu0
    %v332 = vpop.trf.xlu0
    %v333 = vpop.trf.xlu0
    %v334 = vpop.trf.xlu0
    %v335 = vpop.trf.xlu0
    %336 = vst [vmem:[#allocation5] sm:$0x1] %v320
    %s338 = sshllo.u32 0, 1
    %v340 = vld [vmem:[#allocation2] sm:%s338]
    %s341 = sshllo.u32 0, 1
    %342 = vst [vmem:[#allocation3] sm:%s341] %v340
    %s344 = sshllo.u32 0, 1
    %v346 = vld [vmem:[#allocation5] sm:%s344]
    %s347 = sshllo.u32 0, 1
    %348 = vst [vmem:[#allocation6] sm:%s347] %v346
    %p350 = scmp.gt.s32.totalorder 32, 0
    // Predicated region
    $region38: #{custom-call.20} parent=1 // pred_check
      %p351 = pneg %p350
    $region39: #{custom-call.20} parent=1 // pred_check_branch
      %353 = sbr.rel (%p351) target = $region41
    $region40: #{custom-call.20} parent=1 // pred_region
      %s354 = sshra.s32 32, 3
      %p355 = scmp.gt.s32.totalorder %s354, 0
      // Predicated region
      $region42: #{custom-call.20} parent=40 // pred_check
        %p356 = pneg %p355
      $region43: #{custom-call.20} parent=40 // pred_check_branch
        %358 = sbr.rel (%p356) target = $region45
      $region44: #{custom-call.20} parent=40 // pred_region
        %s359 = ssub.s32 %s354, 1
        %s360 = smul.u32 %s359, 128
        %s361 = sshra.s32 %s360, 4
        %s362 = scalar_lea.vmem [#allocation1], %s361
        %v363 = vld [vmem:[#allocation1] sm:$0xff]
        // While loop
        $region46: #{custom-call.20} parent=44 // loop_pre_header
          _
        $region47: #{custom-call.20} parent=44 // loop_header
          %s364 = sphi [#allocation1], %s386
          %s365 = sphi %s1, %s387
          %v366 = vphi %v363, %v388
          %s367 = ssub.s32 %s362, 64
          %p368 = scmp.gt.s32.totalorder %s364, %s367
        $region48: #{custom-call.20} parent=44 // loop_header_branch
          %370 = sbr.rel (%p368) target = $region52
        $region49: #{custom-call.20} parent=44 // loop_body
          %371 = vst [vmem:[%s365] sm:$0xff] %v366
          %v372 = vld [vmem:[%s364 + $0x8] sm:$0xff]
          %373 = vst [vmem:[%s365 + $0x8] sm:$0xff] %v372
          %v374 = vld [vmem:[%s364 + $0x10] sm:$0xff]
          %375 = vst [vmem:[%s365 + $0x10] sm:$0xff] %v374
          %v376 = vld [vmem:[%s364 + $0x18] sm:$0xff]
          %377 = vst [vmem:[%s365 + $0x18] sm:$0xff] %v376
          %v378 = vld [vmem:[%s364 + $0x20] sm:$0xff]
          %379 = vst [vmem:[%s365 + $0x20] sm:$0xff] %v378
          %v380 = vld [vmem:[%s364 + $0x28] sm:$0xff]
          %381 = vst [vmem:[%s365 + $0x28] sm:$0xff] %v380
          %v382 = vld [vmem:[%s364 + $0x30] sm:$0xff]
          %383 = vst [vmem:[%s365 + $0x30] sm:$0xff] %v382
          %v384 = vld [vmem:[%s364 + $0x38] sm:$0xff]
          %385 = vst [vmem:[%s365 + $0x38] sm:$0xff] %v384
        $region50: #{custom-call.20} parent=44 // loop_footer
          %s386 = scalar_lea.vmem %s364, 64
          %s387 = scalar_lea.vmem %s365, 64
          %v388 = vld [vmem:[%s364 + $0x40] sm:$0xff]
        $region51: #{custom-call.20} parent=44 // loop_footer_branch
          %389 = sbr.rel target = $region47
        $region52: #{custom-call.20} parent=44 // loop_exit
          _
        // While loop
        $region53: #{custom-call.20} parent=44 // loop_pre_header
          _
        $region54: #{custom-call.20} parent=44 // loop_header
          %s390 = sphi %s364, %s398
          %s391 = sphi %s365, %s399
          %v392 = vphi %v366, %v392
          %p393 = scmp.gt.s32.totalorder %s390, %s362
        $region55: #{custom-call.20} parent=44 // loop_header_branch
          %395 = sbr.rel (%p393) target = $region59
        $region56: #{custom-call.20} parent=44 // loop_body
          %v396 = vld [vmem:[%s390] sm:$0xff]
          %397 = vst [vmem:[%s391] sm:$0xff] %v396
        $region57: #{custom-call.20} parent=44 // loop_footer
          %s398 = scalar_lea.vmem %s390, 8
          %s399 = scalar_lea.vmem %s391, 8
        $region58: #{custom-call.20} parent=44 // loop_footer_branch
          %400 = sbr.rel target = $region54
        $region59: #{custom-call.20} parent=44 // loop_exit
          _
      $region45: #{custom-call.20} parent=40 // pred_fallthru
        _
      %s401 = sand.u32 32, 7
      %s402 = sshllo.u32 0, %s401
      %s403 = smul.u32 %s354, 128
      %s404 = sshra.s32 %s403, 4
      %s405 = scalar_lea.vmem %s1, %s404
      %s406 = smul.u32 %s354, 128
      %s407 = sshra.s32 %s406, 4
      %s408 = scalar_lea.vmem [#allocation1], %s407
      %v409 = vld [vmem:[%s408] sm:%s402]
      %410 = vst [vmem:[%s405] sm:%s402] %v409
    $region41: #{custom-call.20} parent=1 // pred_fallthru
      _
    // Predicated region
    $region60: #{custom-call.20} parent=1 // pred_check
      _
    $region61: #{custom-call.20} parent=1 // pred_check_branch
      %412 = sbr.rel (0) target = $region63
    $region62: #{custom-call.20} parent=1 // pred_region
      %s414 = ssub.s32 16, 16
      %415 = vsyncadd [#allocation4], %s414
      %s416 = sshll.u32 [#allocation3], 4
      %s417 = int_to_ptr.vmem [resolvable:$true] %s416
      %419 = dma.vmem_to_hbm [thread:$0]  %s417, 16, %s2, [#allocation4]
    $region63: #{custom-call.20} parent=1 // pred_fallthru
      _
    // Predicated region
    $region64: #{custom-call.20} parent=1 // pred_check
      _
    $region65: #{custom-call.20} parent=1 // pred_check_branch
      %421 = sbr.rel (0) target = $region67
    $region66: #{custom-call.20} parent=1 // pred_region
      %s423 = ssub.s32 16, 16
      %424 = vsyncadd [#allocation7], %s423
      %s425 = sshll.u32 [#allocation6], 4
      %s426 = int_to_ptr.vmem [resolvable:$true] %s425
      %428 = dma.vmem_to_hbm [thread:$0]  %s426, 16, %s3, [#allocation7]
    $region67: #{custom-call.20} parent=1 // pred_fallthru
      _
    // Predicated region
    $region68: #{custom-call.20} parent=1 // pred_check
      _
    $region69: #{custom-call.20} parent=1 // pred_check_branch
      %430 = sbr.rel (0) target = $region71
    $region70: #{custom-call.20} parent=1 // pred_region
      %431 = dma.done [#allocation4], 16
    $region71: #{custom-call.20} parent=1 // pred_fallthru
      _
    // Predicated region
    $region72: #{custom-call.20} parent=1 // pred_check
      _
    $region73: #{custom-call.20} parent=1 // pred_check_branch
      %433 = sbr.rel (0) target = $region75
    $region74: #{custom-call.20} parent=1 // pred_region
      %434 = dma.done [#allocation7], 16
    $region75: #{custom-call.20} parent=1 // pred_fallthru
      _
    %435 = vsyncpa [#allocation4], 1
    %436 = vsyncpa [#allocation7], 1

// kernel: custom-call.16
$region0: #{custom-call.16}
  %s0 = inlined_call_operand.vmem [shape: f32[16,16], index: 0, kind: input, shape index: {}]
  %s1 = inlined_call_operand.vmem [shape: f32[16,16], index: 1, kind: output, shape index: {0}]
  %s2 = inlined_call_operand.hbm [shape: s32[16], index: 2, kind: output, shape index: {1}]
  %s3 = inlined_call_operand.hbm [shape: s32[16], index: 3, kind: output, shape index: {2}]
  %4 = xla_tuple %s1, %s2, %s3
  $region1: #{custom-call.16} parent=0
    #allocation0 [shape = 'u8[8192]{0}', space=vmem, size = 0x2000, scoped, tag = 'operand span for operand 0']
    #allocation1 [shape = 'u8[8192]{0}', space=vmem, size = 0x2000, scoped, tag = 'operand span for operand 1']
    #allocation2 [shape = 'u8[4096]{0}', space=vmem, size = 0x1000, scoped, tag = 'operand span for operand 2']
    #allocation3 [shape = 'u8[512]{0}', space=vmem, size = 0x400, scoped, tag = 'packed  for operand 2']
    #allocation4 [shape = 's32[1]{0}', space=sflag, size = 0x4, scoped, tag = 'scoped memory for custom-call.16']
    #allocation5 [shape = 'u8[4096]{0}', space=vmem, size = 0x1000, scoped, tag = 'operand span for operand 3']
    #allocation6 [shape = 'u8[512]{0}', space=vmem, size = 0x400, scoped, tag = 'packed  for operand 3']
    #allocation7 [shape = 's32[1]{0}', space=sflag, size = 0x4, scoped, tag = 'scoped memory for custom-call.16']
    #allocation8 [shape = 's32[16,128]{1,0}', space=vmem, size = 0x2000, scoped, tag = 'scratch for permutations']
    %5 = vsyncpa [#allocation4], 0
    %6 = vsyncpa [#allocation7], 0
    %p8 = scmp.gt.s32.totalorder 16, 0
    // Predicated region
    $region2: #{custom-call.16} parent=1 // pred_check
      %p9 = pneg %p8
    $region3: #{custom-call.16} parent=1 // pred_check_branch
      %11 = sbr.rel (%p9) target = $region5
    $region4: #{custom-call.16} parent=1 // pred_region
      %s12 = sshra.s32 16, 3
      %p13 = scmp.gt.s32.totalorder %s12, 0
      // Predicated region
      $region6: #{custom-call.16} parent=4 // pred_check
        %p14 = pneg %p13
      $region7: #{custom-call.16} parent=4 // pred_check_branch
        %16 = sbr.rel (%p14) target = $region9
      $region8: #{custom-call.16} parent=4 // pred_region
        %s17 = ssub.s32 %s12, 1
        %s18 = smul.u32 %s17, 128
        %s19 = sshra.s32 %s18, 4
        %s20 = scalar_lea.vmem %s0, %s19
        %v21 = vld [vmem:[%s0] sm:$0xff]
        // While loop
        $region10: #{custom-call.16} parent=8 // loop_pre_header
          _
        $region11: #{custom-call.16} parent=8 // loop_header
          %s22 = sphi %s0, %s44
          %s23 = sphi [#allocation0], %s45
          %v24 = vphi %v21, %v46
          %s25 = ssub.s32 %s20, 64
          %p26 = scmp.gt.s32.totalorder %s22, %s25
        $region12: #{custom-call.16} parent=8 // loop_header_branch
          %28 = sbr.rel (%p26) target = $region16
        $region13: #{custom-call.16} parent=8 // loop_body
          %29 = vst [vmem:[%s23] sm:$0xff] %v24
          %v30 = vld [vmem:[%s22 + $0x8] sm:$0xff]
          %31 = vst [vmem:[%s23 + $0x8] sm:$0xff] %v30
          %v32 = vld [vmem:[%s22 + $0x10] sm:$0xff]
          %33 = vst [vmem:[%s23 + $0x10] sm:$0xff] %v32
          %v34 = vld [vmem:[%s22 + $0x18] sm:$0xff]
          %35 = vst [vmem:[%s23 + $0x18] sm:$0xff] %v34
          %v36 = vld [vmem:[%s22 + $0x20] sm:$0xff]
          %37 = vst [vmem:[%s23 + $0x20] sm:$0xff] %v36
          %v38 = vld [vmem:[%s22 + $0x28] sm:$0xff]
          %39 = vst [vmem:[%s23 + $0x28] sm:$0xff] %v38
          %v40 = vld [vmem:[%s22 + $0x30] sm:$0xff]
          %41 = vst [vmem:[%s23 + $0x30] sm:$0xff] %v40
          %v42 = vld [vmem:[%s22 + $0x38] sm:$0xff]
          %43 = vst [vmem:[%s23 + $0x38] sm:$0xff] %v42
        $region14: #{custom-call.16} parent=8 // loop_footer
          %s44 = scalar_lea.vmem %s22, 64
          %s45 = scalar_lea.vmem %s23, 64
          %v46 = vld [vmem:[%s22 + $0x40] sm:$0xff]
        $region15: #{custom-call.16} parent=8 // loop_footer_branch
          %47 = sbr.rel target = $region11
        $region16: #{custom-call.16} parent=8 // loop_exit
          _
        // While loop
        $region17: #{custom-call.16} parent=8 // loop_pre_header
          _
        $region18: #{custom-call.16} parent=8 // loop_header
          %s48 = sphi %s22, %s56
          %s49 = sphi %s23, %s57
          %v50 = vphi %v24, %v50
          %p51 = scmp.gt.s32.totalorder %s48, %s20
        $region19: #{custom-call.16} parent=8 // loop_header_branch
          %53 = sbr.rel (%p51) target = $region23
        $region20: #{custom-call.16} parent=8 // loop_body
          %v54 = vld [vmem:[%s48] sm:$0xff]
          %55 = vst [vmem:[%s49] sm:$0xff] %v54
        $region21: #{custom-call.16} parent=8 // loop_footer
          %s56 = scalar_lea.vmem %s48, 8
          %s57 = scalar_lea.vmem %s49, 8
        $region22: #{custom-call.16} parent=8 // loop_footer_branch
          %58 = sbr.rel target = $region18
        $region23: #{custom-call.16} parent=8 // loop_exit
          _
      $region9: #{custom-call.16} parent=4 // pred_fallthru
        _
      %s59 = sand.u32 16, 7
      %s60 = sshllo.u32 0, %s59
      %s61 = smul.u32 %s12, 128
      %s62 = sshra.s32 %s61, 4
      %s63 = scalar_lea.vmem [#allocation0], %s62
      %s64 = smul.u32 %s12, 128
      %s65 = sshra.s32 %s64, 4
      %s66 = scalar_lea.vmem %s0, %s65
      %v67 = vld [vmem:[%s66] sm:%s60]
      %68 = vst [vmem:[%s63] sm:%s60] %v67
    $region5: #{custom-call.16} parent=1 // pred_fallthru
      _
    %v69 = vld [vmem:[#allocation0] sm:$0xff]
    %70 = vst [vmem:[#allocation1] sm:$0xff] %v69
    %s71 = scalar_lea.vmem [#allocation1], 8
    %s72 = scalar_lea.vmem [#allocation0], 8
    %v73 = vld [vmem:[%s72] sm:$0xff]
    %74 = vst [vmem:[%s71] sm:$0xff] %v73
    %75 = vst [vmem:[#allocation2] sm:$0x1] 0
    %v76 = vlaneseq
    %v77 = vshrl.u32 %v76, 7
    %v78 = vmov %v77
    loop: start=0, step=1, limit=2
    $region24: #{custom-call.16} parent=1 // loop_pre_header
      _
    $region25: #{custom-call.16} parent=1 // loop_header
      %s80 = sphi 0, %s84
      %p81 = scmp.ge.s32.totalorder %s80, 2
    $region26: #{custom-call.16} parent=1 // loop_header_branch
      %83 = sbr.rel (%p81) target = $region30
    $region27: #{custom-call.16} parent=1 // loop_body
      %s85 = smul.addr %s80, 8
      %s86 = scalar_lea.vmem [#allocation8], %s85
      %s87 = smul.u32 %s80, 8
      %v88 = vstv %s87
      %v89 = vadd.s32 %v78, %v88
      %90 = vst [vmem:[%s86] sm:$0xff] %v89
    $region28: #{custom-call.16} parent=1 // loop_footer
      %s84 = sadd.s32 1, %s80
    $region29: #{custom-call.16} parent=1 // loop_footer_branch
      %79 = sbr.rel target = $region25
    $region30: #{custom-call.16} parent=1 // loop_exit
      _
    loop: start=0, step=1, limit=16
    $region31: #{custom-call.16} parent=1 // loop_pre_header
      _
    $region32: #{custom-call.16} parent=1 // loop_header
      %s92 = sphi 0, %s96
      %p93 = scmp.ge.s32.totalorder %s92, 16
    $region33: #{custom-call.16} parent=1 // loop_header_branch
      %95 = sbr.rel (%p93) target = $region37
    $region34: #{custom-call.16} parent=1 // loop_body
      %v97 = vstv %s92
      %v98 = vlaneseq
      %v99 = vshrl.u32 %v98, 7
      %v100 = vmov %v99
      %v101 = vld [vmem:[#allocation1] sm:$0xff]
      %v102 = vand.u32 2147483647, %v101
      %v104 = vstv %s92
      %vm105 = vcmp.ge.s32.totalorder %v100, %v104
      %vm106 = vcmp.lt.s32.totalorder %v100, 16
      %vm107 = vmand %vm105, %vm106
      %vm108 = vcmp.lt.f32.partialorder -inf, %v102
      %vm109 = vmand %vm107, %vm108
      %v110 = vsel %vm109, %v100, %v97
      %v111 = vsel %vm109, %v102, -inf
      %s112 = scalar_lea.vmem [#allocation1], 8
      %v113 = vld [vmem:[%s112] sm:$0xff]
      %v114 = vand.u32 2147483647, %v113
      %v115 = vadd.s32 %v100, 8
      %v116 = vstv %s92
      %vm117 = vcmp.ge.s32.totalorder %v115, %v116
      %vm118 = vcmp.lt.s32.totalorder %v115, 16
      %vm119 = vmand %vm117, %vm118
      %vm120 = vcmp.lt.f32.partialorder %v111, %v114
      %vm121 = vmand %vm119, %vm120
      %v122 = vsel %vm121, %v115, %v110
      %v123 = vsel %vm121, %v114, %v111
      %v124 = vrot.slane %v123, 1
      %v125 = vrot.slane %v122, 1
      %vm126 = vcmp.ge.f32.partialorder %v124, %v123
      %v127 = vsel %vm126, %v124, %v123
      %v128 = vsel %vm126, %v125, %v122
      %v129 = vrot.slane %v124, 1
      %v130 = vrot.slane %v125, 1
      %vm131 = vcmp.ge.f32.partialorder %v129, %v127
      %v132 = vsel %vm131, %v129, %v127
      %v133 = vsel %vm131, %v130, %v128
      %v134 = vrot.slane %v129, 1
      %v135 = vrot.slane %v130, 1
      %vm136 = vcmp.ge.f32.partialorder %v134, %v132
      %v137 = vsel %vm136, %v134, %v132
      %v138 = vsel %vm136, %v135, %v133
      %v139 = vrot.slane %v134, 1
      %v140 = vrot.slane %v135, 1
      %vm141 = vcmp.ge.f32.partialorder %v139, %v137
      %v142 = vsel %vm141, %v139, %v137
      %v143 = vsel %vm141, %v140, %v138
      %v144 = vrot.slane %v139, 1
      %v145 = vrot.slane %v140, 1
      %vm146 = vcmp.ge.f32.partialorder %v144, %v142
      %v147 = vsel %vm146, %v144, %v142
      %v148 = vsel %vm146, %v145, %v143
      %v149 = vrot.slane %v144, 1
      %v150 = vrot.slane %v145, 1
      %vm151 = vcmp.ge.f32.partialorder %v149, %v147
      %v152 = vsel %vm151, %v149, %v147
      %v153 = vsel %vm151, %v150, %v148
      %v154 = vrot.slane %v149, 1
      %v155 = vrot.slane %v150, 1
      %vm156 = vcmp.ge.f32.partialorder %v154, %v152
      %v157 = vsel %vm156, %v154, %v152
      %v158 = vsel %vm156, %v155, %v153
      %s159 = ssub.s32 128, %s92
      %160 = vrot.lane.b32.xlu0 %v158, %s159
      %v161 = vpop.permute.xlu0 %160
      %s162 = vtos %v161
      %v163 = vstv %s92
      %v164 = vlaneseq
      %v165 = vand.u32 %v164, 127
      %vm166 = vcmp.eq.s32.totalorder %v165, %v163
      %v167 = vstv %s162
      %v168 = vld [vmem:[#allocation2] ss:$0 sm:$0xff]
      %v169 = vsel %vm166, %v167, %v168
      %170 = vst [vmem:[#allocation2] sm:$0x1] %v169
      %s171 = scalar_lea.vmem [#allocation1], %s92
      %s172 = scalar_lea.vmem [#allocation1], %s162
      %v173 = vld [vmem:[%s171] ss:$0 sm:$0xff]
      %v174 = vld [vmem:[%s172] ss:$0 sm:$0xff]
      %175 = vst [vmem:[%s172] sm:$0x1] %v173
      %176 = vst [vmem:[%s171] sm:$0x1] %v174
      %s177 = scalar_lea.vmem [#allocation8], %s92
      %s178 = scalar_lea.vmem [#allocation8], %s162
      %v179 = vld [vmem:[%s177] ss:$0 sm:$0xff]
      %v180 = vld [vmem:[%s178] ss:$0 sm:$0xff]
      %181 = vst [vmem:[%s178] sm:$0x1] %v179
      %182 = vst [vmem:[%s177] sm:$0x1] %v180
      %vm183 = vcmp.ne.f32.partialorder %v174, 0.0
      %vm184 = vmand %vm166, %vm183
      %v185 = vsel %vm184, %v174, 1.0
      %v186 = vlaneseq
      %v187 = vand.u32 %v186, 127
      %v188 = vstv %s92
      %vm189 = vcmp.gt.s32.totalorder %v187, %v188
      %v190 = vsel %vm189, %v174, 0.0
      %v191 = vlaneseq
      %v192 = vshrl.u32 %v191, 7
      %v193 = vmov %v192
      %v194 = vld [vmem:[#allocation1] sm:$0xff]
      %v196 = vstv %s92
      %vm197 = vcmp.gt.s32.totalorder %v193, %v196
      %v198 = vsel %vm197, %v185, 1.0
      %v199 = vrcp.pop %v198
      %v200 = vmul.f32 %v194, %v199
      %vm201 = vmand %vm197, %vm166
      %v202 = vsel %vm201, %v200, 0.0
      %203 = vadd.xlane.f32.xlu0 %v202
      %v204 = vpop.xlane.xlu0 %203
      %v205 = vmul.f32 %v204, %v190
      %v206 = vsub.f32 %v200, %v205
      %207 = vst [vmem:[#allocation1] sm:$0xff] %v206
      %s208 = scalar_lea.vmem [#allocation1], 8
      %v209 = vld [vmem:[%s208] sm:$0xff]
      %v210 = vadd.s32 %v193, 8
      %v211 = vstv %s92
      %vm212 = vcmp.gt.s32.totalorder %v210, %v211
      %v213 = vsel %vm212, %v185, 1.0
      %v214 = vrcp.pop %v213
      %v215 = vmul.f32 %v209, %v214
      %vm216 = vmand %vm212, %vm166
      %v217 = vsel %vm216, %v215, 0.0
      %218 = vadd.xlane.f32.xlu0 %v217
      %v219 = vpop.xlane.xlu0 %218
      %v220 = vmul.f32 %v219, %v190
      %v221 = vsub.f32 %v215, %v220
      %222 = vst [vmem:[%s208] sm:$0xff] %v221
    $region35: #{custom-call.16} parent=1 // loop_footer
      %s96 = sadd.s32 1, %s92
    $region36: #{custom-call.16} parent=1 // loop_footer_branch
      %91 = sbr.rel target = $region32
    $region37: #{custom-call.16} parent=1 // loop_exit
      _
    %v223 = vld [vmem:[#allocation8] sm:$0xff]
    %s224 = scalar_lea.vmem [#allocation8], 8
    %v225 = vld [vmem:[%s224] sm:$0xff]
    %s226 = scalar_lea.vmem [#allocation8], 16
    %s227 = scalar_lea.vmem [#allocation8], 24
    %s228 = scalar_lea.vmem [#allocation8], 32
    %s229 = scalar_lea.vmem [#allocation8], 40
    %s230 = scalar_lea.vmem [#allocation8], 48
    %s231 = scalar_lea.vmem [#allocation8], 56
    %s232 = scalar_lea.vmem [#allocation8], 64
    %s233 = scalar_lea.vmem [#allocation8], 72
    %s234 = scalar_lea.vmem [#allocation8], 80
    %s235 = scalar_lea.vmem [#allocation8], 88
    %s236 = scalar_lea.vmem [#allocation8], 96
    %s237 = scalar_lea.vmem [#allocation8], 104
    %s238 = scalar_lea.vmem [#allocation8], 112
    %s239 = scalar_lea.vmem [#allocation8], 120
    %240 = vxpose.xlu0.b32.start [1/16] %v223, 128
    %241 = vxpose.xlu0.b32.cont [2/16] %v225, 128
    %242 = vxpose.xlu0.b32.cont [3/16] 0, 128
    %243 = vxpose.xlu0.b32.cont [4/16] 0, 128
    %244 = vxpose.xlu0.b32.cont [5/16] 0, 128
    %245 = vxpose.xlu0.b32.cont [6/16] 0, 128
    %246 = vxpose.xlu0.b32.cont [7/16] 0, 128
    %247 = vxpose.xlu0.b32.cont [8/16] 0, 128
    %248 = vxpose.xlu0.b32.cont [9/16] 0, 128
    %249 = vxpose.xlu0.b32.cont [10/16] 0, 128
    %250 = vxpose.xlu0.b32.cont [11/16] 0, 128
    %251 = vxpose.xlu0.b32.cont [12/16] 0, 128
    %252 = vxpose.xlu0.b32.cont [13/16] 0, 128
    %253 = vxpose.xlu0.b32.cont [14/16] 0, 128
    %254 = vxpose.xlu0.b32.cont [15/16] 0, 128
    %255 = vxpose.xlu0.b32.end [16/16] 0, 128
    %v256 = vpop.trf.xlu0
    %v257 = vpop.trf.xlu0
    %v258 = vpop.trf.xlu0
    %v259 = vpop.trf.xlu0
    %v260 = vpop.trf.xlu0
    %v261 = vpop.trf.xlu0
    %v262 = vpop.trf.xlu0
    %v263 = vpop.trf.xlu0
    %v264 = vpop.trf.xlu0
    %v265 = vpop.trf.xlu0
    %v266 = vpop.trf.xlu0
    %v267 = vpop.trf.xlu0
    %v268 = vpop.trf.xlu0
    %v269 = vpop.trf.xlu0
    %v270 = vpop.trf.xlu0
    %v271 = vpop.trf.xlu0
    %272 = vst [vmem:[#allocation5] sm:$0x1] %v256
    %s274 = sshllo.u32 0, 1
    %v276 = vld [vmem:[#allocation2] sm:%s274]
    %s277 = sshllo.u32 0, 1
    %278 = vst [vmem:[#allocation3] sm:%s277] %v276
    %s280 = sshllo.u32 0, 1
    %v282 = vld [vmem:[#allocation5] sm:%s280]
    %s283 = sshllo.u32 0, 1
    %284 = vst [vmem:[#allocation6] sm:%s283] %v282
    %p286 = scmp.gt.s32.totalorder 16, 0
    // Predicated region
    $region38: #{custom-call.16} parent=1 // pred_check
      %p287 = pneg %p286
    $region39: #{custom-call.16} parent=1 // pred_check_branch
      %289 = sbr.rel (%p287) target = $region41
    $region40: #{custom-call.16} parent=1 // pred_region
      %s290 = sshra.s32 16, 3
      %p291 = scmp.gt.s32.totalorder %s290, 0
      // Predicated region
      $region42: #{custom-call.16} parent=40 // pred_check
        %p292 = pneg %p291
      $region43: #{custom-call.16} parent=40 // pred_check_branch
        %294 = sbr.rel (%p292) target = $region45
      $region44: #{custom-call.16} parent=40 // pred_region
        %s295 = ssub.s32 %s290, 1
        %s296 = smul.u32 %s295, 128
        %s297 = sshra.s32 %s296, 4
        %s298 = scalar_lea.vmem [#allocation1], %s297
        %v299 = vld [vmem:[#allocation1] sm:$0xff]
        // While loop
        $region46: #{custom-call.16} parent=44 // loop_pre_header
          _
        $region47: #{custom-call.16} parent=44 // loop_header
          %s300 = sphi [#allocation1], %s322
          %s301 = sphi %s1, %s323
          %v302 = vphi %v299, %v324
          %s303 = ssub.s32 %s298, 64
          %p304 = scmp.gt.s32.totalorder %s300, %s303
        $region48: #{custom-call.16} parent=44 // loop_header_branch
          %306 = sbr.rel (%p304) target = $region52
        $region49: #{custom-call.16} parent=44 // loop_body
          %307 = vst [vmem:[%s301] sm:$0xff] %v302
          %v308 = vld [vmem:[%s300 + $0x8] sm:$0xff]
          %309 = vst [vmem:[%s301 + $0x8] sm:$0xff] %v308
          %v310 = vld [vmem:[%s300 + $0x10] sm:$0xff]
          %311 = vst [vmem:[%s301 + $0x10] sm:$0xff] %v310
          %v312 = vld [vmem:[%s300 + $0x18] sm:$0xff]
          %313 = vst [vmem:[%s301 + $0x18] sm:$0xff] %v312
          %v314 = vld [vmem:[%s300 + $0x20] sm:$0xff]
          %315 = vst [vmem:[%s301 + $0x20] sm:$0xff] %v314
          %v316 = vld [vmem:[%s300 + $0x28] sm:$0xff]
          %317 = vst [vmem:[%s301 + $0x28] sm:$0xff] %v316
          %v318 = vld [vmem:[%s300 + $0x30] sm:$0xff]
          %319 = vst [vmem:[%s301 + $0x30] sm:$0xff] %v318
          %v320 = vld [vmem:[%s300 + $0x38] sm:$0xff]
          %321 = vst [vmem:[%s301 + $0x38] sm:$0xff] %v320
        $region50: #{custom-call.16} parent=44 // loop_footer
          %s322 = scalar_lea.vmem %s300, 64
          %s323 = scalar_lea.vmem %s301, 64
          %v324 = vld [vmem:[%s300 + $0x40] sm:$0xff]
        $region51: #{custom-call.16} parent=44 // loop_footer_branch
          %325 = sbr.rel target = $region47
        $region52: #{custom-call.16} parent=44 // loop_exit
          _
        // While loop
        $region53: #{custom-call.16} parent=44 // loop_pre_header
          _
        $region54: #{custom-call.16} parent=44 // loop_header
          %s326 = sphi %s300, %s334
          %s327 = sphi %s301, %s335
          %v328 = vphi %v302, %v328
          %p329 = scmp.gt.s32.totalorder %s326, %s298
        $region55: #{custom-call.16} parent=44 // loop_header_branch
          %331 = sbr.rel (%p329) target = $region59
        $region56: #{custom-call.16} parent=44 // loop_body
          %v332 = vld [vmem:[%s326] sm:$0xff]
          %333 = vst [vmem:[%s327] sm:$0xff] %v332
        $region57: #{custom-call.16} parent=44 // loop_footer
          %s334 = scalar_lea.vmem %s326, 8
          %s335 = scalar_lea.vmem %s327, 8
        $region58: #{custom-call.16} parent=44 // loop_footer_branch
          %336 = sbr.rel target = $region54
        $region59: #{custom-call.16} parent=44 // loop_exit
          _
      $region45: #{custom-call.16} parent=40 // pred_fallthru
        _
      %s337 = sand.u32 16, 7
      %s338 = sshllo.u32 0, %s337
      %s339 = smul.u32 %s290, 128
      %s340 = sshra.s32 %s339, 4
      %s341 = scalar_lea.vmem %s1, %s340
      %s342 = smul.u32 %s290, 128
      %s343 = sshra.s32 %s342, 4
      %s344 = scalar_lea.vmem [#allocation1], %s343
      %v345 = vld [vmem:[%s344] sm:%s338]
      %346 = vst [vmem:[%s341] sm:%s338] %v345
    $region41: #{custom-call.16} parent=1 // pred_fallthru
      _
    // Predicated region
    $region60: #{custom-call.16} parent=1 // pred_check
      _
    $region61: #{custom-call.16} parent=1 // pred_check_branch
      %348 = sbr.rel (0) target = $region63
    $region62: #{custom-call.16} parent=1 // pred_region
      %s350 = ssub.s32 16, 16
      %351 = vsyncadd [#allocation4], %s350
      %s352 = sshll.u32 [#allocation3], 4
      %s353 = int_to_ptr.vmem [resolvable:$true] %s352
      %355 = dma.vmem_to_hbm [thread:$0]  %s353, 16, %s2, [#allocation4]
    $region63: #{custom-call.16} parent=1 // pred_fallthru
      _
    // Predicated region
    $region64: #{custom-call.16} parent=1 // pred_check
      _
    $region65: #{custom-call.16} parent=1 // pred_check_branch
      %357 = sbr.rel (0) target = $region67
    $region66: #{custom-call.16} parent=1 // pred_region
      %s359 = ssub.s32 16, 16
      %360 = vsyncadd [#allocation7], %s359
      %s361 = sshll.u32 [#allocation6], 4
      %s362 = int_to_ptr.vmem [resolvable:$true] %s361
      %364 = dma.vmem_to_hbm [thread:$0]  %s362, 16, %s3, [#allocation7]
    $region67: #{custom-call.16} parent=1 // pred_fallthru
      _
    // Predicated region
    $region68: #{custom-call.16} parent=1 // pred_check
      _
    $region69: #{custom-call.16} parent=1 // pred_check_branch
      %366 = sbr.rel (0) target = $region71
    $region70: #{custom-call.16} parent=1 // pred_region
      %367 = dma.done [#allocation4], 16
    $region71: #{custom-call.16} parent=1 // pred_fallthru
      _
    // Predicated region
    $region72: #{custom-call.16} parent=1 // pred_check
      _
    $region73: #{custom-call.16} parent=1 // pred_check_branch
      %369 = sbr.rel (0) target = $region75
    $region74: #{custom-call.16} parent=1 // pred_region
      %370 = dma.done [#allocation7], 16
    $region75: #{custom-call.16} parent=1 // pred_fallthru
      _
    %371 = vsyncpa [#allocation4], 1
    %372 = vsyncpa [#allocation7], 1

// kernel: _lambda_.6
$region0: #{_lambda_.6}
  #allocation0 [shape = 'u32[]', space=smem, size = 0x4, offset = 0x4, fixed_abs, tag = 'smem constant byte address 0x4 - core index']
  #allocation1 [shape = 'u32[144,128]{1,0:T(1,128)}', space=vmem, size = 0x12000, scoped, tag = 'internal scratch']
  #allocation2 [shape = 'f32[6,6,16]{2,1,0:T(8,128)}', space=vmem, size = 0x6000, scoped, tag = 'scratch operand']
  #allocation3 [shape = 'f32[6,6,32]{2,1,0:T(8,128)}', space=vmem, size = 0x6000, scoped, tag = 'scratch operand']
  %s0 = inlined_call_operand.vmem [shape: f32[2,4,4,32], index: 0, kind: input, shape index: {}]
  %s1 = inlined_call_operand.vmem [shape: f32[2,6,6,4], index: 1, kind: input, shape index: {}]
  %s2 = inlined_call_operand.vmem [shape: f32[1,32], index: 2, kind: input, shape index: {}]
  %s3 = inlined_call_operand.vmem [shape: f32[1,32], index: 3, kind: input, shape index: {}]
  %s4 = inlined_call_operand.vmem [shape: f32[32,32], index: 4, kind: input, shape index: {}]
  %s5 = inlined_call_operand.vmem [shape: f32[9,16,32], index: 5, kind: input, shape index: {}]
  %s6 = inlined_call_operand.vmem [shape: f32[9,4,32], index: 6, kind: input, shape index: {}]
  %s7 = inlined_call_operand.vmem [shape: f32[1,32], index: 7, kind: input, shape index: {}]
  %s8 = inlined_call_operand.vmem [shape: f32[9,32,64], index: 8, kind: input, shape index: {}]
  %s9 = inlined_call_operand.vmem [shape: f32[1,64], index: 9, kind: input, shape index: {}]
  %s10 = inlined_call_operand.vmem [shape: f32[1,32], index: 10, kind: input, shape index: {}]
  %s11 = inlined_call_operand.vmem [shape: f32[2,4,4,32], index: 11, kind: output, shape index: {0}]
  %s12 = inlined_call_operand.vmem [shape: f32[2,1,1], index: 12, kind: output, shape index: {1}]
  %13 = xla_tuple %s11, %s12
  %s14 = sld [smem:[#allocation0]]
  $region85: #{_lambda_.6} parent=0
    _
  %s16 = ssub.s32 1, %s14
  %s17 = scalar_select 0, %s16, %s14
  loop: start=0, step=1, limit=4
  $region2: #{_lambda_.6} parent=0 // loop_pre_header
    _
  $region3: #{_lambda_.6} parent=0 // loop_header
    %s19 = sphi 0, %s23
    %p20 = scmp.ge.s32.totalorder %s19, 4
    %s29 = sphi 0, %s31
    %s32 = sphi 0, %s29
    %s33 = sphi 0, %s32
    %s49 = sphi 0, %s33
    %s55 = sphi 0, %s57
    %s58 = sphi 0, %s55
    %s59 = sphi 0, %s58
    %s75 = sphi 0, %s59
    %s79 = sphi 0, %s79
    %s81 = sphi 0, %s79
    %s82 = sphi 0, %s81
    %s96 = sphi 0, %s82
    %s100 = sphi 0, %s100
    %s102 = sphi 0, %s100
    %s103 = sphi 0, %s102
    %s117 = sphi 0, %s103
    %s121 = sphi 0, %s121
    %s123 = sphi 0, %s121
    %s124 = sphi 0, %s123
    %s138 = sphi 0, %s124
    %s142 = sphi 0, %s142
    %s144 = sphi 0, %s142
    %s145 = sphi 0, %s144
    %s159 = sphi 0, %s145
    %s163 = sphi 0, %s163
    %s165 = sphi 0, %s163
    %s166 = sphi 0, %s165
    %s180 = sphi 0, %s166
    %s184 = sphi 0, %s184
    %s186 = sphi 0, %s184
    %s187 = sphi 0, %s186
    %s201 = sphi 0, %s187
    %s205 = sphi 0, %s205
    %s207 = sphi 0, %s205
    %s208 = sphi 0, %s207
    %s222 = sphi 0, %s208
    %s226 = sphi 0, %s226
    %s228 = sphi 0, %s226
    %s229 = sphi 0, %s228
    %s243 = sphi 0, %s229
    %s247 = sphi 0, %s247
    %s249 = sphi 0, %s247
    %s250 = sphi 0, %s249
    %s264 = sphi 0, %s250
    %s270 = sphi 0, %s272
    %s273 = sphi 0, %s270
    %s274 = sphi 0, %s273
    %s290 = sphi 0, %s274
    %s296 = sphi 0, %s298
    %s299 = sphi 0, %s296
    %s300 = sphi 0, %s299
    %s316 = sphi 0, %s300
  $region4: #{_lambda_.6} parent=0 // loop_header_branch
    %22 = sbr.rel (%p20) target = $region8
  $region5: #{_lambda_.6} parent=0 // loop_body
    %s24 = ssub.s32 %s19, 1
    %s25 = ssub.s32 %s19, 2
    %s26 = sadd.s32 %s19, 1
    %s27 = ssub.s32 %s19, %s26
    %p28 = scmp.eq.s32.totalorder %s27, 0
    %s30 = sadd.s32 %s29, 1
    %s31 = scalar_select %p28, %s29, %s30
    %p34 = pneg %p28
    %p35 = scmp.eq.s32.totalorder %s19, 1
    %p36 = por %p34, %p35
    %p37 = scmp.ne.s32.totalorder %s29, %s32
    %p38 = scmp.eq.s32.totalorder %s19, 0
    %p39 = por %p37, %p38
    %p40 = scmp.ne.s32.totalorder %s29, %s32
    %p41 = scmp.eq.s32.totalorder %s24, 1
    %p42 = por %p40, %p41
    %p43 = scmp.ne.s32.totalorder %s32, %s33
    %p44 = scmp.eq.s32.totalorder %s24, 0
    %p45 = por %p43, %p44
    %p46 = scmp.ne.s32.totalorder %s32, %s33
    %p47 = scmp.eq.s32.totalorder %s25, 1
    %p48 = por %p46, %p47
    %p50 = scmp.ne.s32.totalorder %s33, %s49
    %p51 = scmp.eq.s32.totalorder %s25, 0
    %p52 = por %p50, %p51
    %s53 = ssub.s32 %s19, %s26
    %p54 = scmp.eq.s32.totalorder %s53, 0
    %s56 = sadd.s32 %s55, 1
    %s57 = scalar_select %p54, %s55, %s56
    %p60 = pneg %p54
    %p61 = scmp.eq.s32.totalorder %s19, 1
    %p62 = por %p60, %p61
    %p63 = scmp.ne.s32.totalorder %s55, %s58
    %p64 = scmp.eq.s32.totalorder %s19, 0
    %p65 = por %p63, %p64
    %p66 = scmp.ne.s32.totalorder %s55, %s58
    %p67 = scmp.eq.s32.totalorder %s24, 1
    %p68 = por %p66, %p67
    %p69 = scmp.ne.s32.totalorder %s58, %s59
    %p70 = scmp.eq.s32.totalorder %s24, 0
    %p71 = por %p69, %p70
    %p72 = scmp.ne.s32.totalorder %s58, %s59
    %p73 = scmp.eq.s32.totalorder %s25, 1
    %p74 = por %p72, %p73
    %p76 = scmp.ne.s32.totalorder %s59, %s75
    %p77 = scmp.eq.s32.totalorder %s25, 0
    %p78 = por %p76, %p77
    %s80 = sadd.s32 %s79, 1
    %p83 = scmp.eq.s32.totalorder %s19, 1
    %p84 = scmp.ne.s32.totalorder %s79, %s81
    %p85 = scmp.eq.s32.totalorder %s19, 0
    %p86 = por %p84, %p85
    %p87 = scmp.ne.s32.totalorder %s79, %s81
    %p88 = scmp.eq.s32.totalorder %s24, 1
    %p89 = por %p87, %p88
    %p90 = scmp.ne.s32.totalorder %s81, %s82
    %p91 = scmp.eq.s32.totalorder %s24, 0
    %p92 = por %p90, %p91
    %p93 = scmp.ne.s32.totalorder %s81, %s82
    %p94 = scmp.eq.s32.totalorder %s25, 1
    %p95 = por %p93, %p94
    %p97 = scmp.ne.s32.totalorder %s82, %s96
    %p98 = scmp.eq.s32.totalorder %s25, 0
    %p99 = por %p97, %p98
    %s101 = sadd.s32 %s100, 1
    %p104 = scmp.eq.s32.totalorder %s19, 1
    %p105 = scmp.ne.s32.totalorder %s100, %s102
    %p106 = scmp.eq.s32.totalorder %s19, 0
    %p107 = por %p105, %p106
    %p108 = scmp.ne.s32.totalorder %s100, %s102
    %p109 = scmp.eq.s32.totalorder %s24, 1
    %p110 = por %p108, %p109
    %p111 = scmp.ne.s32.totalorder %s102, %s103
    %p112 = scmp.eq.s32.totalorder %s24, 0
    %p113 = por %p111, %p112
    %p114 = scmp.ne.s32.totalorder %s102, %s103
    %p115 = scmp.eq.s32.totalorder %s25, 1
    %p116 = por %p114, %p115
    %p118 = scmp.ne.s32.totalorder %s103, %s117
    %p119 = scmp.eq.s32.totalorder %s25, 0
    %p120 = por %p118, %p119
    %s122 = sadd.s32 %s121, 1
    %p125 = scmp.eq.s32.totalorder %s19, 1
    %p126 = scmp.ne.s32.totalorder %s121, %s123
    %p127 = scmp.eq.s32.totalorder %s19, 0
    %p128 = por %p126, %p127
    %p129 = scmp.ne.s32.totalorder %s121, %s123
    %p130 = scmp.eq.s32.totalorder %s24, 1
    %p131 = por %p129, %p130
    %p132 = scmp.ne.s32.totalorder %s123, %s124
    %p133 = scmp.eq.s32.totalorder %s24, 0
    %p134 = por %p132, %p133
    %p135 = scmp.ne.s32.totalorder %s123, %s124
    %p136 = scmp.eq.s32.totalorder %s25, 1
    %p137 = por %p135, %p136
    %p139 = scmp.ne.s32.totalorder %s124, %s138
    %p140 = scmp.eq.s32.totalorder %s25, 0
    %p141 = por %p139, %p140
    %s143 = sadd.s32 %s142, 1
    %p146 = scmp.eq.s32.totalorder %s19, 1
    %p147 = scmp.ne.s32.totalorder %s142, %s144
    %p148 = scmp.eq.s32.totalorder %s19, 0
    %p149 = por %p147, %p148
    %p150 = scmp.ne.s32.totalorder %s142, %s144
    %p151 = scmp.eq.s32.totalorder %s24, 1
    %p152 = por %p150, %p151
    %p153 = scmp.ne.s32.totalorder %s144, %s145
    %p154 = scmp.eq.s32.totalorder %s24, 0
    %p155 = por %p153, %p154
    %p156 = scmp.ne.s32.totalorder %s144, %s145
    %p157 = scmp.eq.s32.totalorder %s25, 1
    %p158 = por %p156, %p157
    %p160 = scmp.ne.s32.totalorder %s145, %s159
    %p161 = scmp.eq.s32.totalorder %s25, 0
    %p162 = por %p160, %p161
    %s164 = sadd.s32 %s163, 1
    %p167 = scmp.eq.s32.totalorder %s19, 1
    %p168 = scmp.ne.s32.totalorder %s163, %s165
    %p169 = scmp.eq.s32.totalorder %s19, 0
    %p170 = por %p168, %p169
    %p171 = scmp.ne.s32.totalorder %s163, %s165
    %p172 = scmp.eq.s32.totalorder %s24, 1
    %p173 = por %p171, %p172
    %p174 = scmp.ne.s32.totalorder %s165, %s166
    %p175 = scmp.eq.s32.totalorder %s24, 0
    %p176 = por %p174, %p175
    %p177 = scmp.ne.s32.totalorder %s165, %s166
    %p178 = scmp.eq.s32.totalorder %s25, 1
    %p179 = por %p177, %p178
    %p181 = scmp.ne.s32.totalorder %s166, %s180
    %p182 = scmp.eq.s32.totalorder %s25, 0
    %p183 = por %p181, %p182
    %s185 = sadd.s32 %s184, 1
    %p188 = scmp.eq.s32.totalorder %s19, 1
    %p189 = scmp.ne.s32.totalorder %s184, %s186
    %p190 = scmp.eq.s32.totalorder %s19, 0
    %p191 = por %p189, %p190
    %p192 = scmp.ne.s32.totalorder %s184, %s186
    %p193 = scmp.eq.s32.totalorder %s24, 1
    %p194 = por %p192, %p193
    %p195 = scmp.ne.s32.totalorder %s186, %s187
    %p196 = scmp.eq.s32.totalorder %s24, 0
    %p197 = por %p195, %p196
    %p198 = scmp.ne.s32.totalorder %s186, %s187
    %p199 = scmp.eq.s32.totalorder %s25, 1
    %p200 = por %p198, %p199
    %p202 = scmp.ne.s32.totalorder %s187, %s201
    %p203 = scmp.eq.s32.totalorder %s25, 0
    %p204 = por %p202, %p203
    %s206 = sadd.s32 %s205, 1
    %p209 = scmp.eq.s32.totalorder %s19, 1
    %p210 = scmp.ne.s32.totalorder %s205, %s207
    %p211 = scmp.eq.s32.totalorder %s19, 0
    %p212 = por %p210, %p211
    %p213 = scmp.ne.s32.totalorder %s205, %s207
    %p214 = scmp.eq.s32.totalorder %s24, 1
    %p215 = por %p213, %p214
    %p216 = scmp.ne.s32.totalorder %s207, %s208
    %p217 = scmp.eq.s32.totalorder %s24, 0
    %p218 = por %p216, %p217
    %p219 = scmp.ne.s32.totalorder %s207, %s208
    %p220 = scmp.eq.s32.totalorder %s25, 1
    %p221 = por %p219, %p220
    %p223 = scmp.ne.s32.totalorder %s208, %s222
    %p224 = scmp.eq.s32.totalorder %s25, 0
    %p225 = por %p223, %p224
    %s227 = sadd.s32 %s226, 1
    %p230 = scmp.eq.s32.totalorder %s19, 1
    %p231 = scmp.ne.s32.totalorder %s226, %s228
    %p232 = scmp.eq.s32.totalorder %s19, 0
    %p233 = por %p231, %p232
    %p234 = scmp.ne.s32.totalorder %s226, %s228
    %p235 = scmp.eq.s32.totalorder %s24, 1
    %p236 = por %p234, %p235
    %p237 = scmp.ne.s32.totalorder %s228, %s229
    %p238 = scmp.eq.s32.totalorder %s24, 0
    %p239 = por %p237, %p238
    %p240 = scmp.ne.s32.totalorder %s228, %s229
    %p241 = scmp.eq.s32.totalorder %s25, 1
    %p242 = por %p240, %p241
    %p244 = scmp.ne.s32.totalorder %s229, %s243
    %p245 = scmp.eq.s32.totalorder %s25, 0
    %p246 = por %p244, %p245
    %s248 = sadd.s32 %s247, 1
    %p251 = scmp.eq.s32.totalorder %s19, 1
    %p252 = scmp.ne.s32.totalorder %s247, %s249
    %p253 = scmp.eq.s32.totalorder %s19, 0
    %p254 = por %p252, %p253
    %p255 = scmp.ne.s32.totalorder %s247, %s249
    %p256 = scmp.eq.s32.totalorder %s24, 1
    %p257 = por %p255, %p256
    %p258 = scmp.ne.s32.totalorder %s249, %s250
    %p259 = scmp.eq.s32.totalorder %s24, 0
    %p260 = por %p258, %p259
    %p261 = scmp.ne.s32.totalorder %s249, %s250
    %p262 = scmp.eq.s32.totalorder %s25, 1
    %p263 = por %p261, %p262
    %p265 = scmp.ne.s32.totalorder %s250, %s264
    %p266 = scmp.eq.s32.totalorder %s25, 0
    %p267 = por %p265, %p266
    %s268 = ssub.s32 %s19, %s26
    %p269 = scmp.eq.s32.totalorder %s268, 0
    %s271 = sadd.s32 %s270, 1
    %s272 = scalar_select %p269, %s270, %s271
    %p275 = pneg %p269
    %p276 = scmp.eq.s32.totalorder %s19, 1
    %p277 = por %p275, %p276
    %p278 = scmp.ne.s32.totalorder %s270, %s273
    %p279 = scmp.eq.s32.totalorder %s19, 0
    %p280 = por %p278, %p279
    %p281 = scmp.ne.s32.totalorder %s270, %s273
    %p282 = scmp.eq.s32.totalorder %s24, 1
    %p283 = por %p281, %p282
    %p284 = scmp.ne.s32.totalorder %s273, %s274
    %p285 = scmp.eq.s32.totalorder %s24, 0
    %p286 = por %p284, %p285
    %p287 = scmp.ne.s32.totalorder %s273, %s274
    %p288 = scmp.eq.s32.totalorder %s25, 1
    %p289 = por %p287, %p288
    %p291 = scmp.ne.s32.totalorder %s274, %s290
    %p292 = scmp.eq.s32.totalorder %s25, 0
    %p293 = por %p291, %p292
    %s294 = ssub.s32 %s19, %s26
    %p295 = scmp.eq.s32.totalorder %s294, 0
    %s297 = sadd.s32 %s296, 1
    %s298 = scalar_select %p295, %s296, %s297
    %p301 = pneg %p295
    %p302 = scmp.eq.s32.totalorder %s19, 1
    %p303 = por %p301, %p302
    %p304 = scmp.ne.s32.totalorder %s296, %s299
    %p305 = scmp.eq.s32.totalorder %s19, 0
    %p306 = por %p304, %p305
    %p307 = scmp.ne.s32.totalorder %s296, %s299
    %p308 = scmp.eq.s32.totalorder %s24, 1
    %p309 = por %p307, %p308
    %p310 = scmp.ne.s32.totalorder %s299, %s300
    %p311 = scmp.eq.s32.totalorder %s24, 0
    %p312 = por %p310, %p311
    %p313 = scmp.ne.s32.totalorder %s299, %s300
    %p314 = scmp.eq.s32.totalorder %s25, 1
    %p315 = por %p313, %p314
    %p317 = scmp.ne.s32.totalorder %s300, %s316
    %p318 = scmp.eq.s32.totalorder %s25, 0
    %p319 = por %p317, %p318
    %p320 = scmp.le.s32.totalorder 1, %s19
    %p321 = scmp.lt.s32.totalorder %s19, 3
    %p322 = pnand %p320, %p321
    %p323 = pneg %p322
    // Predicated region
    $region9: #{_lambda_.6} parent=5 // pred_check
      _
    $region10: #{_lambda_.6} parent=5 // pred_check_branch
      %325 = sbr.rel (%p322) target = $region12
    $region11: #{_lambda_.6} parent=5 // pred_region
      %s326 = ssub.s32 %s19, 1
      // Predicated region
      $region13: #{_lambda_.6} parent=11 // pred_check
        %p327 = pneg %p92
      $region14: #{_lambda_.6} parent=11 // pred_check_branch
        %329 = sbr.rel (%p327) target = $region16
      $region15: #{_lambda_.6} parent=11 // pred_region
        _
      $region16: #{_lambda_.6} parent=11 // pred_fallthru
        _
      // Predicated region
      $region17: #{_lambda_.6} parent=11 // pred_check
        %p330 = pneg %p113
      $region18: #{_lambda_.6} parent=11 // pred_check_branch
        %332 = sbr.rel (%p330) target = $region20
      $region19: #{_lambda_.6} parent=11 // pred_region
        _
      $region20: #{_lambda_.6} parent=11 // pred_fallthru
        _
      // Predicated region
      $region21: #{_lambda_.6} parent=11 // pred_check
        %p333 = pneg %p134
      $region22: #{_lambda_.6} parent=11 // pred_check_branch
        %335 = sbr.rel (%p333) target = $region24
      $region23: #{_lambda_.6} parent=11 // pred_region
        _
      $region24: #{_lambda_.6} parent=11 // pred_fallthru
        _
      // Predicated region
      $region25: #{_lambda_.6} parent=11 // pred_check
        %p336 = pneg %p155
      $region26: #{_lambda_.6} parent=11 // pred_check_branch
        %338 = sbr.rel (%p336) target = $region28
      $region27: #{_lambda_.6} parent=11 // pred_region
        _
      $region28: #{_lambda_.6} parent=11 // pred_fallthru
        _
      // Predicated region
      $region29: #{_lambda_.6} parent=11 // pred_check
        %p339 = pneg %p176
      $region30: #{_lambda_.6} parent=11 // pred_check_branch
        %341 = sbr.rel (%p339) target = $region32
      $region31: #{_lambda_.6} parent=11 // pred_region
        _
      $region32: #{_lambda_.6} parent=11 // pred_fallthru
        _
      // Predicated region
      $region33: #{_lambda_.6} parent=11 // pred_check
        %p342 = pneg %p197
      $region34: #{_lambda_.6} parent=11 // pred_check_branch
        %344 = sbr.rel (%p342) target = $region36
      $region35: #{_lambda_.6} parent=11 // pred_region
        _
      $region36: #{_lambda_.6} parent=11 // pred_fallthru
        _
      // Predicated region
      $region37: #{_lambda_.6} parent=11 // pred_check
        %p345 = pneg %p218
      $region38: #{_lambda_.6} parent=11 // pred_check_branch
        %347 = sbr.rel (%p345) target = $region40
      $region39: #{_lambda_.6} parent=11 // pred_region
        _
      $region40: #{_lambda_.6} parent=11 // pred_fallthru
        _
      // Predicated region
      $region41: #{_lambda_.6} parent=11 // pred_check
        %p348 = pneg %p239
      $region42: #{_lambda_.6} parent=11 // pred_check_branch
        %350 = sbr.rel (%p348) target = $region44
      $region43: #{_lambda_.6} parent=11 // pred_region
        _
      $region44: #{_lambda_.6} parent=11 // pred_fallthru
        _
      // Predicated region
      $region45: #{_lambda_.6} parent=11 // pred_check
        %p351 = pneg %p260
      $region46: #{_lambda_.6} parent=11 // pred_check_branch
        %353 = sbr.rel (%p351) target = $region48
      $region47: #{_lambda_.6} parent=11 // pred_region
        _
      $region48: #{_lambda_.6} parent=11 // pred_fallthru
        _
    $region12: #{_lambda_.6} parent=5 // pred_fallthru
      _
    %p354 = scmp.lt.s32.totalorder %s19, 2
    // Predicated region
    $region49: #{_lambda_.6} parent=5 // pred_check
      %p355 = pneg %p354
    $region50: #{_lambda_.6} parent=5 // pred_check_branch
      %357 = sbr.rel (%p355) target = $region52
    $region51: #{_lambda_.6} parent=5 // pred_region
      // Predicated region
      $region53: #{_lambda_.6} parent=51 // pred_check
        %p358 = pneg %p39
      $region54: #{_lambda_.6} parent=51 // pred_check_branch
        %360 = sbr.rel (%p358) target = $region56
      $region55: #{_lambda_.6} parent=51 // pred_region
        %p361 = scmp.lt.s32.totalorder %s19, 1
        %s362 = scalar_select %p361, %s19, 1
        %s363 = smul.addr %s362, 4
        %s364 = smul.addr %s363, 4
        %s365 = scalar_lea.vmem %s0, %s364
      $region56: #{_lambda_.6} parent=51 // pred_fallthru
        _
      // Predicated region
      $region57: #{_lambda_.6} parent=51 // pred_check
        %p366 = pneg %p65
      $region58: #{_lambda_.6} parent=51 // pred_check_branch
        %368 = sbr.rel (%p366) target = $region60
      $region59: #{_lambda_.6} parent=51 // pred_region
        %p369 = scmp.lt.s32.totalorder %s19, 1
        %s370 = scalar_select %p369, %s19, 1
        %s371 = smul.addr %s370, 6
        %s372 = smul.addr %s371, 8
        %s373 = scalar_lea.vmem %s1, %s372
      $region60: #{_lambda_.6} parent=51 // pred_fallthru
        _
    $region52: #{_lambda_.6} parent=5 // pred_fallthru
      _
    %p374 = scmp.le.s32.totalorder 1, %s19
    %p375 = scmp.lt.s32.totalorder %s19, 3
    %p376 = pnand %p374, %p375
    %p377 = pneg %p376
    // Predicated region
    $region61: #{_lambda_.6} parent=5 // pred_check
      _
    $region62: #{_lambda_.6} parent=5 // pred_check_branch
      %379 = sbr.rel (%p376) target = $region64
    $region63: #{_lambda_.6} parent=5 // pred_region
      %s380 = ssub.s32 %s19, 1
      %p381 = scmp.lt.s32.totalorder %s24, 1
      %s382 = scalar_select %p381, %s24, 1
      %s383 = smul.addr %s382, 4
      %s384 = smul.addr %s383, 4
      %s385 = scalar_lea.vmem %s0, %s384
      %p386 = pneg %p45
      %p387 = pneg %p42
      %p388 = scmp.lt.s32.totalorder %s24, 1
      %s389 = scalar_select %p388, %s24, 1
      %s390 = smul.addr %s389, 6
      %s391 = smul.addr %s390, 8
      %s392 = scalar_lea.vmem %s1, %s391
      %p393 = pneg %p71
      %p394 = pneg %p68
      %p395 = pneg %p92
      %p396 = pneg %p89
      %p397 = pneg %p113
      %p398 = pneg %p110
      %p399 = pneg %p134
      %p400 = pneg %p131
      %p401 = pneg %p155
      %p402 = pneg %p152
      %p403 = pneg %p176
      %p404 = pneg %p173
      %p405 = pneg %p197
      %p406 = pneg %p194
      %p407 = pneg %p218
      %p408 = pneg %p215
      %p409 = pneg %p239
      %p410 = pneg %p236
      %p411 = pneg %p260
      %p412 = pneg %p257
      %p413 = pneg %p286
      %p414 = pneg %p283
      %p415 = scmp.lt.s32.totalorder %s24, 1
      %s416 = scalar_select %p415, %s24, 1
      %s417 = smul.addr %s416, 4
      %s418 = smul.addr %s417, 4
      %s419 = scalar_lea.vmem %s11, %s418
      %p420 = pneg %p312
      %p421 = pneg %p309
      %p422 = scmp.lt.s32.totalorder %s24, 1
      %s423 = scalar_select %p422, %s24, 1
      %s424 = scalar_lea.vmem %s12, %s423
      %p425 = scmp.lt.s32.totalorder %s24, 1
      %s426 = scalar_select %p425, %s24, 1
      %s427 = smul.addr %s426, 4
      %s428 = smul.addr %s427, 4
      %s429 = scalar_lea.vmem %s0, %s428
      %p430 = scmp.lt.s32.totalorder %s24, 1
      %s431 = scalar_select %p430, %s24, 1
      %s432 = smul.addr %s431, 6
      %s433 = smul.addr %s432, 8
      %s434 = scalar_lea.vmem %s1, %s433
      %p435 = scmp.lt.s32.totalorder %s24, 1
      %s436 = scalar_select %p435, %s24, 1
      %s437 = smul.addr %s436, 4
      %s438 = smul.addr %s437, 4
      %s439 = scalar_lea.vmem %s11, %s438
      %p440 = scmp.lt.s32.totalorder %s24, 1
      %s441 = scalar_select %p440, %s24, 1
      %s442 = scalar_lea.vmem %s12, %s441
      %v443 = vld [vmem:[%s429] sm:$0xf]
      %v444 = vld [vmem:[%s429 + $0x4] sm:$0xf]
      %v445 = vld [vmem:[%s429 + $0x8] sm:$0xf]
      %v446 = vld [vmem:[%s429 + $0xc] sm:$0xf]
      %v447 = vld [vmem:[%s2] sm:$0x1]
      %v449 = vlaneseq
      %v450 = vshrl.u32 %v449, 7
      %v451 = vsub.s32 0, %v450
      %v452 = vrot.slane %v447, %v451
      %v454 = vcombine.high %v452, %v452
      %v456 = vadd.f32 %v443, %v452
      %v457 = vadd.f32 %v444, %v454
      %v458 = vadd.f32 %v445, %v452
      %v459 = vadd.f32 %v446, %v454
      %v460 = vld [vmem:[%s3] sm:$0x1]
      %v462 = vlaneseq
      %v463 = vshrl.u32 %v462, 7
      %v464 = vsub.s32 0, %v463
      %v465 = vrot.slane %v460, %v464
      %v467 = vcombine.high %v465, %v465
      %v469 = vmul.f32 %v456, %v465
      %v470 = vmul.f32 %v457, %v467
      %v471 = vmul.f32 %v458, %v465
      %v472 = vmul.f32 %v459, %v467
      %v473 = vld [vmem:[%s4] sm:$0xff]
      %v474 = vld [vmem:[%s4 + $0x8] sm:$0xff]
      %v475 = vld [vmem:[%s4 + $0x10] sm:$0xff]
      %v476 = vld [vmem:[%s4 + $0x18] sm:$0xff]
      %v481 = vcombine.low %v469, %v470
      %v482 = vcombine.low %v471, %v472
      %vm483 = vcmask 261120
      %v484 = vsel %vm483, %v481, 0
      %v486 = vsel %vm483, %v482, 0
      %488 = vmatprep.subr.mxu0 0.0
      %489 = vmatpush1.msra.mxu0 %v473
      %490 = vmatprep.subr.mxu0 0.0
      %491 = vmatpush1.msra.mxu0 %v474
      %492 = vmatprep.subr.mxu0 0.0
      %493 = vmatpush1.msra.mxu0 %v475
      %494 = vmatprep.subr.mxu0 0.0
      %495 = vmatpush1.msra.mxu0 %v476
      %496 = vmatprep.subr.mxu0 0.0
      %497 = vmatpush1.msra.mxu0 0.0
      %498 = vmatprep.subr.mxu0 0.0
      %499 = vmatpush1.msra.mxu0 0.0
      %500 = vmatprep.subr.mxu0 0.0
      %501 = vmatpush1.msra.mxu0 0.0
      %502 = vmatprep.subr.mxu0 0.0
      %503 = vmatpush1.msra.mxu0 0.0
      %504 = vmatprep.subr.mxu0 0.0
      %505 = vmatpush1.msra.mxu0 0.0
      %506 = vmatprep.subr.mxu0 0.0
      %507 = vmatpush1.msra.mxu0 0.0
      %508 = vmatprep.subr.mxu0 0.0
      %509 = vmatpush1.msra.mxu0 0.0
      %510 = vmatprep.subr.mxu0 0.0
      %511 = vmatpush1.msra.mxu0 0.0
      %512 = vmatprep.subr.mxu0 0.0
      %513 = vmatpush1.msra.mxu0 0.0
      %514 = vmatprep.subr.mxu0 0.0
      %515 = vmatpush1.msra.mxu0 0.0
      %516 = vmatprep.subr.mxu0 0.0
      %517 = vmatpush1.msra.mxu0 0.0
      %518 = vmatprep.subr.mxu0 0.0
      %519 = vmatpush1.msra.mxu0 0.0
      %520 = vmatprep.subr.mxu0 0.0
      %521 = vmatpush1.msra.mxu0 0.0
      %522 = vmatprep.subr.mxu0 0.0
      %523 = vmatpush1.msra.mxu0 0.0
      %524 = vmatprep.subr.mxu0 0.0
      %525 = vmatpush1.msra.mxu0 0.0
      %526 = vmatprep.subr.mxu0 0.0
      %527 = vmatpush1.msra.mxu0 0.0
      %528 = vmatprep.subr.mxu0 0.0
      %529 = vmatpush1.msra.mxu0 0.0
      %530 = vmatprep.subr.mxu0 0.0
      %531 = vmatpush1.msra.mxu0 0.0
      %532 = vmatprep.subr.mxu0 0.0
      %533 = vmatpush1.msra.mxu0 0.0
      %534 = vmatprep.subr.mxu0 0.0
      %535 = vmatpush1.msra.mxu0 0.0
      %536 = vmatprep.subr.mxu0 0.0
      %537 = vmatpush1.msra.mxu0 0.0
      %538 = vmatprep.subr.mxu0 0.0
      %539 = vmatpush1.msra.mxu0 0.0
      %540 = vmatprep.subr.mxu0 0.0
      %541 = vmatpush1.msra.mxu0 0.0
      %542 = vmatprep.subr.mxu0 0.0
      %543 = vmatpush1.msra.mxu0 0.0
      %544 = vmatprep.subr.mxu0 0.0
      %545 = vmatpush1.msra.mxu0 0.0
      %546 = vmatprep.subr.mxu0 0.0
      %547 = vmatpush1.msra.mxu0 0.0
      %548 = vmatprep.subr.mxu0 0.0
      %549 = vmatpush1.msra.mxu0 0.0
      %550 = vmatprep.subr.mxu0 0.0
      %551 = vmatpush1.msra.mxu0 0.0
      %552 = vmatprep.mubr.f32.mxu0 0.0
      %553 = vmatmul.mubr.f32.gmra.mrb[0].mxu0 %v484
      %v554 = vpop.f32.mrb[0].mxu0
      %v555 = vadd.f32 0.0, %v554
      %v556 = vpop.f32.mrb[0].mxu0
      %557 = vmatprep.mubr.f32.mxu0 0.0
      %558 = vmatmul.mubr.f32.gmra.mrb[0].mxu0 %v486
      %v559 = vpop.f32.mrb[0].mxu0
      %v560 = vadd.f32 0.0, %v559
      %v561 = vpop.f32.mrb[0].mxu0
      %562 = vdwg.mxu0
      %vm563 = vcmask 128000
      %564 = vst.msk [vmem:[#allocation2] sm:$0x3f] %vm563, 0.0
      %565 = vst.msk [vmem:[#allocation2 + $0x8] sm:$0x3f] %vm563, 0.0
      %566 = vst.msk [vmem:[#allocation2 + $0x10] sm:$0x3f] %vm563, 0.0
      %567 = vst.msk [vmem:[#allocation2 + $0x18] sm:$0x3f] %vm563, 0.0
      %568 = vst.msk [vmem:[#allocation2 + $0x20] sm:$0x3f] %vm563, 0.0
      %569 = vst.msk [vmem:[#allocation2 + $0x28] sm:$0x3f] %vm563, 0.0
      %v572 = vcombine.high %v555, %v555
      %v573 = vcombine.high %v560, %v560
      %s576 = scalar_lea.vmem [#allocation2], 8
      %vm577 = vcmask 125952
      %578 = vst.msk [vmem:[%s576 + $0x1] sm:$0xf] %vm577, %v555
      %579 = vst.msk [vmem:[%s576 + $0x9] sm:$0xf] %vm577, %v572
      %580 = vst.msk [vmem:[%s576 + $0x11] sm:$0xf] %vm577, %v560
      %581 = vst.msk [vmem:[%s576 + $0x19] sm:$0xf] %vm577, %v573
      %v582 = vld [vmem:[#allocation2] sm:$0x3f]
      %v583 = vld [vmem:[#allocation2 + $0x8] sm:$0x3f]
      %v584 = vld [vmem:[#allocation2 + $0x10] sm:$0x3f]
      %v585 = vld [vmem:[#allocation2 + $0x18] sm:$0x3f]
      %v586 = vld [vmem:[#allocation2 + $0x20] sm:$0x3f]
      %v587 = vld [vmem:[#allocation2 + $0x28] sm:$0x3f]
      %v588 = vld [vmem:[%s434] sm:$0x3f]
      %v589 = vld [vmem:[%s434 + $0x8] sm:$0x3f]
      %v590 = vld [vmem:[%s434 + $0x10] sm:$0x3f]
      %v591 = vld [vmem:[%s434 + $0x18] sm:$0x3f]
      %v592 = vld [vmem:[%s434 + $0x20] sm:$0x3f]
      %v593 = vld [vmem:[%s434 + $0x28] sm:$0x3f]
      %v594 = vld [vmem:[%s5] sm:$0xff]
      %v595 = vld [vmem:[%s5 + $0x8] sm:$0xff]
      %v596 = vld [vmem:[%s6] sm:$0xf]
      %v601 = vcombine.low %v588, %v589
      %v602 = vcombine.low %v590, %v591
      %vm603 = vcmask 31744
      %v604 = vsel %vm603, %v601, 0
      %v606 = vsel %vm603, %v602, 0
      %vm608 = vcmask 1043456
      %v610 = vsel %vm608, %v596, 0
      %612 = vmatprep.subr.mxu0 0.0
      %613 = vmatpush1.msra.mxu0 %v610
      %614 = vmatprep.subr.mxu0 0.0
      %615 = vmatpush1.msra.mxu0 0.0
      %616 = vmatprep.subr.mxu0 0.0
      %617 = vmatpush1.msra.mxu0 0.0
      %618 = vmatprep.subr.mxu0 0.0
      %619 = vmatpush1.msra.mxu0 0.0
      %620 = vmatprep.subr.mxu0 0.0
      %621 = vmatpush1.msra.mxu0 0.0
      %622 = vmatprep.subr.mxu0 0.0
      %623 = vmatpush1.msra.mxu0 0.0
      %624 = vmatprep.subr.mxu0 0.0
      %625 = vmatpush1.msra.mxu0 0.0
      %626 = vmatprep.subr.mxu0 0.0
      %627 = vmatpush1.msra.mxu0 0.0
      %628 = vmatprep.subr.mxu0 0.0
      %629 = vmatpush1.msra.mxu0 0.0
      %630 = vmatprep.subr.mxu0 0.0
      %631 = vmatpush1.msra.mxu0 0.0
      %632 = vmatprep.subr.mxu0 0.0
      %633 = vmatpush1.msra.mxu0 0.0
      %634 = vmatprep.subr.mxu0 0.0
      %635 = vmatpush1.msra.mxu0 0.0
      %636 = vmatprep.subr.mxu0 0.0
      %637 = vmatpush1.msra.mxu0 0.0
      %638 = vmatprep.subr.mxu0 0.0
      %639 = vmatpush1.msra.mxu0 0.0
      %640 = vmatprep.subr.mxu0 0.0
      %641 = vmatpush1.msra.mxu0 0.0
      %642 = vmatprep.subr.mxu0 0.0
      %643 = vmatpush1.msra.mxu0 0.0
      %644 = vmatprep.subr.mxu0 0.0
      %645 = vmatpush1.msra.mxu0 0.0
      %646 = vmatprep.subr.mxu0 0.0
      %647 = vmatpush1.msra.mxu0 0.0
      %648 = vmatprep.subr.mxu0 0.0
      %649 = vmatpush1.msra.mxu0 0.0
      %650 = vmatprep.subr.mxu0 0.0
      %651 = vmatpush1.msra.mxu0 0.0
      %652 = vmatprep.subr.mxu0 0.0
      %653 = vmatpush1.msra.mxu0 0.0
      %654 = vmatprep.subr.mxu0 0.0
      %655 = vmatpush1.msra.mxu0 0.0
      %656 = vmatprep.subr.mxu0 0.0
      %657 = vmatpush1.msra.mxu0 0.0
      %658 = vmatprep.subr.mxu0 0.0
      %659 = vmatpush1.msra.mxu0 0.0
      %660 = vmatprep.subr.mxu0 0.0
      %661 = vmatpush1.msra.mxu0 0.0
      %662 = vmatprep.subr.mxu0 0.0
      %663 = vmatpush1.msra.mxu0 0.0
      %664 = vmatprep.subr.mxu0 0.0
      %665 = vmatpush1.msra.mxu0 0.0
      %666 = vmatprep.subr.mxu0 0.0
      %667 = vmatpush1.msra.mxu0 0.0
      %668 = vmatprep.subr.mxu0 0.0
      %669 = vmatpush1.msra.mxu0 0.0
      %670 = vmatprep.subr.mxu0 0.0
      %671 = vmatpush1.msra.mxu0 0.0
      %672 = vmatprep.subr.mxu0 0.0
      %673 = vmatpush1.msra.mxu0 0.0
      %674 = vmatprep.subr.mxu0 0.0
      %675 = vmatpush1.msra.mxu0 0.0
      %676 = vmatprep.mubr.f32.mxu0 0.0
      %677 = vmatmul.mubr.f32.gmra.mrb[0].mxu0 %v604
      %v678 = vpop.f32.mrb[0].mxu0
      %v679 = vadd.f32 0.0, %v678
      %v680 = vpop.f32.mrb[0].mxu0
      %681 = vmatprep.mubr.f32.mxu0 0.0
      %682 = vmatmul.mubr.f32.gmra.mrb[0].mxu0 %v606
      %v683 = vpop.f32.mrb[0].mxu0
      %v684 = vadd.f32 0.0, %v683
      %v685 = vpop.f32.mrb[0].mxu0
      %686 = vdwg.mxu0
      %v691 = vcombine.low %v582, %v583
      %v692 = vcombine.low %v584, %v585
      %vm693 = vcmask 130048
      %v694 = vsel %vm693, %v691, 0
      %v696 = vsel %vm693, %v692, 0
      %698 = vmatprep.subr.mxu0 0.0
      %699 = vmatpush1.msra.mxu0 %v594
      %700 = vmatprep.subr.mxu0 0.0
      %701 = vmatpush1.msra.mxu0 %v595
      %702 = vmatprep.subr.mxu0 0.0
      %703 = vmatpush1.msra.mxu0 0.0
      %704 = vmatprep.subr.mxu0 0.0
      %705 = vmatpush1.msra.mxu0 0.0
      %706 = vmatprep.subr.mxu0 0.0
      %707 = vmatpush1.msra.mxu0 0.0
      %708 = vmatprep.subr.mxu0 0.0
      %709 = vmatpush1.msra.mxu0 0.0
      %710 = vmatprep.subr.mxu0 0.0
      %711 = vmatpush1.msra.mxu0 0.0
      %712 = vmatprep.subr.mxu0 0.0
      %713 = vmatpush1.msra.mxu0 0.0
      %714 = vmatprep.subr.mxu0 0.0
      %715 = vmatpush1.msra.mxu0 0.0
      %716 = vmatprep.subr.mxu0 0.0
      %717 = vmatpush1.msra.mxu0 0.0
      %718 = vmatprep.subr.mxu0 0.0
      %719 = vmatpush1.msra.mxu0 0.0
      %720 = vmatprep.subr.mxu0 0.0
      %721 = vmatpush1.msra.mxu0 0.0
      %722 = vmatprep.subr.mxu0 0.0
      %723 = vmatpush1.msra.mxu0 0.0
      %724 = vmatprep.subr.mxu0 0.0
      %725 = vmatpush1.msra.mxu0 0.0
      %726 = vmatprep.subr.mxu0 0.0
      %727 = vmatpush1.msra.mxu0 0.0
      %728 = vmatprep.subr.mxu0 0.0
      %729 = vmatpush1.msra.mxu0 0.0
      %730 = vmatprep.subr.mxu0 0.0
      %731 = vmatpush1.msra.mxu0 0.0
      %732 = vmatprep.subr.mxu0 0.0
      %733 = vmatpush1.msra.mxu0 0.0
      %734 = vmatprep.subr.mxu0 0.0
      %735 = vmatpush1.msra.mxu0 0.0
      %736 = vmatprep.subr.mxu0 0.0
      %737 = vmatpush1.msra.mxu0 0.0
      %738 = vmatprep.subr.mxu0 0.0
      %739 = vmatpush1.msra.mxu0 0.0
      %740 = vmatprep.subr.mxu0 0.0
      %741 = vmatpush1.msra.mxu0 0.0
      %742 = vmatprep.subr.mxu0 0.0
      %743 = vmatpush1.msra.mxu0 0.0
      %744 = vmatprep.subr.mxu0 0.0
      %745 = vmatpush1.msra.mxu0 0.0
      %746 = vmatprep.subr.mxu0 0.0
      %747 = vmatpush1.msra.mxu0 0.0
      %748 = vmatprep.subr.mxu0 0.0
      %749 = vmatpush1.msra.mxu0 0.0
      %750 = vmatprep.subr.mxu0 0.0
      %751 = vmatpush1.msra.mxu0 0.0
      %752 = vmatprep.subr.mxu0 0.0
      %753 = vmatpush1.msra.mxu0 0.0
      %754 = vmatprep.subr.mxu0 0.0
      %755 = vmatpush1.msra.mxu0 0.0
      %756 = vmatprep.subr.mxu0 0.0
      %757 = vmatpush1.msra.mxu0 0.0
      %758 = vmatprep.subr.mxu0 0.0
      %759 = vmatpush1.msra.mxu0 0.0
      %760 = vmatprep.subr.mxu0 0.0
      %761 = vmatpush1.msra.mxu0 0.0
      %762 = vmatprep.mubr.f32.mxu0 0.0
      %763 = vmatmul.mubr.f32.gmra.mrb[0].mxu0 %v694
      %v764 = vpop.f32.mrb[0].mxu0
      %v765 = vadd.f32 %v679, %v764
      %v766 = vpop.f32.mrb[0].mxu0
      %767 = vmatprep.mubr.f32.mxu0 0.0
      %768 = vmatmul.mubr.f32.gmra.mrb[0].mxu0 %v696
      %v769 = vpop.f32.mrb[0].mxu0
      %v770 = vadd.f32 %v684, %v769
      %v771 = vpop.f32.mrb[0].mxu0
      %772 = vdwg.mxu0
      %v773 = vcombine.high %v582, %v582
      %v774 = vcombine.high %v583, %v583
      %v775 = vcombine.high %v584, %v584
      %v776 = vcombine.high %v585, %v585
      %vm777 = vcmask 1042432
      %vm778 = vcmask 1046532
      %vm779 = vmor %vm777, %vm778
      %v780 = vrot.slane %v582, 5
      %v781 = vrot.slane %v780, 4
      %v782 = vrot.slane %v773, 5
      %v783 = vsel %vm779, %v781, %v782
      %v784 = vrot.slane %v583, 5
      %v785 = vrot.slane %v784, 4
      %v786 = vrot.slane %v774, 5
      %v787 = vsel %vm779, %v785, %v786
      %v788 = vrot.slane %v584, 5
      %v789 = vrot.slane %v788, 4
      %v790 = vrot.slane %v775, 5
      %v791 = vsel %vm779, %v789, %v790
      %v792 = vrot.slane %v585, 5
      %v793 = vrot.slane %v792, 4
      %v794 = vrot.slane %v776, 5
      %v795 = vsel %vm779, %v793, %v794
      %v796 = vcombine.high %v588, %v588
      %v797 = vcombine.high %v589, %v589
      %v798 = vcombine.high %v590, %v590
      %v799 = vcombine.high %v591, %v591
      %v800 = vrot.slane %v588, 5
      %v801 = vrot.slane %v800, 4
      %v802 = vrot.slane %v796, 5
      %v803 = vsel %vm779, %v801, %v802
      %v804 = vrot.slane %v589, 5
      %v805 = vrot.slane %v804, 4
      %v806 = vrot.slane %v797, 5
      %v807 = vsel %vm779, %v805, %v806
      %v808 = vrot.slane %v590, 5
      %v809 = vrot.slane %v808, 4
      %v810 = vrot.slane %v798, 5
      %v811 = vsel %vm779, %v809, %v810
      %v812 = vrot.slane %v591, 5
      %v813 = vrot.slane %v812, 4
      %v814 = vrot.slane %v799, 5
      %v815 = vsel %vm779, %v813, %v814
      %s816 = scalar_lea.vmem %s5, 16
      %v817 = vld [vmem:[%s816] sm:$0xff]
      %v818 = vld [vmem:[%s816 + $0x8] sm:$0xff]
      %v819 = vcombine.low %v783, %v787
      %v820 = vcombine.low %v791, %v795
      %v821 = vsel %vm693, %v819, 0
      %v823 = vsel %vm693, %v820, 0
      %825 = vmatprep.subr.mxu0 0.0
      %826 = vmatpush1.msra.mxu0 %v817
      %827 = vmatprep.subr.mxu0 0.0
      %828 = vmatpush1.msra.mxu0 %v818
      %829 = vmatprep.subr.mxu0 0.0
      %830 = vmatpush1.msra.mxu0 0.0
      %831 = vmatprep.subr.mxu0 0.0
      %832 = vmatpush1.msra.mxu0 0.0
      %833 = vmatprep.subr.mxu0 0.0
      %834 = vmatpush1.msra.mxu0 0.0
      %835 = vmatprep.subr.mxu0 0.0
      %836 = vmatpush1.msra.mxu0 0.0
      %837 = vmatprep.subr.mxu0 0.0
      %838 = vmatpush1.msra.mxu0 0.0
      %839 = vmatprep.subr.mxu0 0.0
      %840 = vmatpush1.msra.mxu0 0.0
      %841 = vmatprep.subr.mxu0 0.0
      %842 = vmatpush1.msra.mxu0 0.0
      %843 = vmatprep.subr.mxu0 0.0
      %844 = vmatpush1.msra.mxu0 0.0
      %845 = vmatprep.subr.mxu0 0.0
      %846 = vmatpush1.msra.mxu0 0.0
      %847 = vmatprep.subr.mxu0 0.0
      %848 = vmatpush1.msra.mxu0 0.0
      %849 = vmatprep.subr.mxu0 0.0
      %850 = vmatpush1.msra.mxu0 0.0
      %851 = vmatprep.subr.mxu0 0.0
      %852 = vmatpush1.msra.mxu0 0.0
      %853 = vmatprep.subr.mxu0 0.0
      %854 = vmatpush1.msra.mxu0 0.0
      %855 = vmatprep.subr.mxu0 0.0
      %856 = vmatpush1.msra.mxu0 0.0
      %857 = vmatprep.subr.mxu0 0.0
      %858 = vmatpush1.msra.mxu0 0.0
      %859 = vmatprep.subr.mxu0 0.0
      %860 = vmatpush1.msra.mxu0 0.0
      %861 = vmatprep.subr.mxu0 0.0
      %862 = vmatpush1.msra.mxu0 0.0
      %863 = vmatprep.subr.mxu0 0.0
      %864 = vmatpush1.msra.mxu0 0.0
      %865 = vmatprep.subr.mxu0 0.0
      %866 = vmatpush1.msra.mxu0 0.0
      %867 = vmatprep.subr.mxu0 0.0
      %868 = vmatpush1.msra.mxu0 0.0
      %869 = vmatprep.subr.mxu0 0.0
      %870 = vmatpush1.msra.mxu0 0.0
      %871 = vmatprep.subr.mxu0 0.0
      %872 = vmatpush1.msra.mxu0 0.0
      %873 = vmatprep.subr.mxu0 0.0
      %874 = vmatpush1.msra.mxu0 0.0
      %875 = vmatprep.subr.mxu0 0.0
      %876 = vmatpush1.msra.mxu0 0.0
      %877 = vmatprep.subr.mxu0 0.0
      %878 = vmatpush1.msra.mxu0 0.0
      %879 = vmatprep.subr.mxu0 0.0
      %880 = vmatpush1.msra.mxu0 0.0
      %881 = vmatprep.subr.mxu0 0.0
      %882 = vmatpush1.msra.mxu0 0.0
      %883 = vmatprep.subr.mxu0 0.0
      %884 = vmatpush1.msra.mxu0 0.0
      %885 = vmatprep.subr.mxu0 0.0
      %886 = vmatpush1.msra.mxu0 0.0
      %887 = vmatprep.subr.mxu0 0.0
      %888 = vmatpush1.msra.mxu0 0.0
      %889 = vmatprep.mubr.f32.mxu0 0.0
      %890 = vmatmul.mubr.f32.gmra.mrb[0].mxu0 %v821
      %v891 = vpop.f32.mrb[0].mxu0
      %v892 = vadd.f32 0.0, %v891
      %v893 = vpop.f32.mrb[0].mxu0
      %894 = vmatprep.mubr.f32.mxu0 0.0
      %895 = vmatmul.mubr.f32.gmra.mrb[0].mxu0 %v823
      %v896 = vpop.f32.mrb[0].mxu0
      %v897 = vadd.f32 0.0, %v896
      %v898 = vpop.f32.mrb[0].mxu0
      %899 = vdwg.mxu0
      %v900 = vadd.f32 %v765, %v892
      %v901 = vadd.f32 %v770, %v897
      %s902 = scalar_lea.vmem %s6, 4
      %v903 = vld [vmem:[%s902] sm:$0xf]
      %v904 = vcombine.low %v803, %v807
      %v905 = vcombine.low %v811, %v815
      %v906 = vsel %vm603, %v904, 0
      %v908 = vsel %vm603, %v905, 0
      %v911 = vsel %vm608, %v903, 0
      %913 = vmatprep.subr.mxu0 0.0
      %914 = vmatpush1.msra.mxu0 %v911
      %915 = vmatprep.subr.mxu0 0.0
      %916 = vmatpush1.msra.mxu0 0.0
      %917 = vmatprep.subr.mxu0 0.0
      %918 = vmatpush1.msra.mxu0 0.0
      %919 = vmatprep.subr.mxu0 0.0
      %920 = vmatpush1.msra.mxu0 0.0
      %921 = vmatprep.subr.mxu0 0.0
      %922 = vmatpush1.msra.mxu0 0.0
      %923 = vmatprep.subr.mxu0 0.0
      %924 = vmatpush1.msra.mxu0 0.0
      %925 = vmatprep.subr.mxu0 0.0
      %926 = vmatpush1.msra.mxu0 0.0
      %927 = vmatprep.subr.mxu0 0.0
      %928 = vmatpush1.msra.mxu0 0.0
      %929 = vmatprep.subr.mxu0 0.0
      %930 = vmatpush1.msra.mxu0 0.0
      %931 = vmatprep.subr.mxu0 0.0
      %932 = vmatpush1.msra.mxu0 0.0
      %933 = vmatprep.subr.mxu0 0.0
      %934 = vmatpush1.msra.mxu0 0.0
      %935 = vmatprep.subr.mxu0 0.0
      %936 = vmatpush1.msra.mxu0 0.0
      %937 = vmatprep.subr.mxu0 0.0
      %938 = vmatpush1.msra.mxu0 0.0
      %939 = vmatprep.subr.mxu0 0.0
      %940 = vmatpush1.msra.mxu0 0.0
      %941 = vmatprep.subr.mxu0 0.0
      %942 = vmatpush1.msra.mxu0 0.0
      %943 = vmatprep.subr.mxu0 0.0
      %944 = vmatpush1.msra.mxu0 0.0
      %945 = vmatprep.subr.mxu0 0.0
      %946 = vmatpush1.msra.mxu0 0.0
      %947 = vmatprep.subr.mxu0 0.0
      %948 = vmatpush1.msra.mxu0 0.0
      %949 = vmatprep.subr.mxu0 0.0
      %950 = vmatpush1.msra.mxu0 0.0
      %951 = vmatprep.subr.mxu0 0.0
      %952 = vmatpush1.msra.mxu0 0.0
      %953 = vmatprep.subr.mxu0 0.0
      %954 = vmatpush1.msra.mxu0 0.0
      %955 = vmatprep.subr.mxu0 0.0
      %956 = vmatpush1.msra.mxu0 0.0
      %957 = vmatprep.subr.mxu0 0.0
      %958 = vmatpush1.msra.mxu0 0.0
      %959 = vmatprep.subr.mxu0 0.0
      %960 = vmatpush1.msra.mxu0 0.0
      %961 = vmatprep.subr.mxu0 0.0
      %962 = vmatpush1.msra.mxu0 0.0
      %963 = vmatprep.subr.mxu0 0.0
      %964 = vmatpush1.msra.mxu0 0.0
      %965 = vmatprep.subr.mxu0 0.0
      %966 = vmatpush1.msra.mxu0 0.0
      %967 = vmatprep.subr.mxu0 0.0
      %968 = vmatpush1.msra.mxu0 0.0
      %969 = vmatprep.subr.mxu0 0.0
      %970 = vmatpush1.msra.mxu0 0.0
      %971 = vmatprep.subr.mxu0 0.0
      %972 = vmatpush1.msra.mxu0 0.0
      %973 = vmatprep.subr.mxu0 0.0
      %974 = vmatpush1.msra.mxu0 0.0
      %975 = vmatprep.subr.mxu0 0.0
      %976 = vmatpush1.msra.mxu0 0.0
      %977 = vmatprep.mubr.f32.mxu0 0.0
      %978 = vmatmul.mubr.f32.gmra.mrb[0].mxu0 %v906
      %v979 = vpop.f32.mrb[0].mxu0
      %v980 = vadd.f32 0.0, %v979
      %v981 = vpop.f32.mrb[0].mxu0
      %982 = vmatprep.mubr.f32.mxu0 0.0
      %983 = vmatmul.mubr.f32.gmra.mrb[0].mxu0 %v908
      %v984 = vpop.f32.mrb[0].mxu0
      %v985 = vadd.f32 0.0, %v984
      %v986 = vpop.f32.mrb[0].mxu0
      %987 = vdwg.mxu0
      %v988 = vadd.f32 %v900, %v980
      %v989 = vadd.f32 %v901, %v985
      %vm990 = vcmask 1041408
      %vm991 = vcmask 1045508
      %vm992 = vmor %vm990, %vm991
      %v993 = vrot.slane %v582, 6
      %v994 = vrot.slane %v993, 4
      %v995 = vrot.slane %v773, 6
      %v996 = vsel %vm992, %v994, %v995
      %v997 = vrot.slane %v583, 6
      %v998 = vrot.slane %v997, 4
      %v999 = vrot.slane %v774, 6
      %v1000 = vsel %vm992, %v998, %v999
      %v1001 = vrot.slane %v584, 6
      %v1002 = vrot.slane %v1001, 4
      %v1003 = vrot.slane %v775, 6
      %v1004 = vsel %vm992, %v1002, %v1003
      %v1005 = vrot.slane %v585, 6
      %v1006 = vrot.slane %v1005, 4
      %v1007 = vrot.slane %v776, 6
      %v1008 = vsel %vm992, %v1006, %v1007
      %v1009 = vrot.slane %v588, 6
      %v1010 = vrot.slane %v1009, 4
      %v1011 = vrot.slane %v796, 6
      %v1012 = vsel %vm992, %v1010, %v1011
      %v1013 = vrot.slane %v589, 6
      %v1014 = vrot.slane %v1013, 4
      %v1015 = vrot.slane %v797, 6
      %v1016 = vsel %vm992, %v1014, %v1015
      %v1017 = vrot.slane %v590, 6
      %v1018 = vrot.slane %v1017, 4
      %v1019 = vrot.slane %v798, 6
      %v1020 = vsel %vm992, %v1018, %v1019
      %v1021 = vrot.slane %v591, 6
      %v1022 = vrot.slane %v1021, 4
      %v1023 = vrot.slane %v799, 6
      %v1024 = vsel %vm992, %v1022, %v1023
      %s1025 = scalar_lea.vmem %s5, 32
      %v1026 = vld [vmem:[%s1025] sm:$0xff]
      %v1027 = vld [vmem:[%s1025 + $0x8] sm:$0xff]
      %v1028 = vcombine.low %v996, %v1000
      %v1029 = vcombine.low %v1004, %v1008
      %v1030 = vsel %vm693, %v1028, 0
      %v1032 = vsel %vm693, %v1029, 0
      %1034 = vmatprep.subr.mxu0 0.0
      %1035 = vmatpush1.msra.mxu0 %v1026
      %1036 = vmatprep.subr.mxu0 0.0
      %1037 = vmatpush1.msra.mxu0 %v1027
      %1038 = vmatprep.subr.mxu0 0.0
      %1039 = vmatpush1.msra.mxu0 0.0
      %1040 = vmatprep.subr.mxu0 0.0
      %1041 = vmatpush1.msra.mxu0 0.0
      %1042 = vmatprep.subr.mxu0 0.0
      %1043 = vmatpush1.msra.mxu0 0.0
      %1044 = vmatprep.subr.mxu0 0.0
      %1045 = vmatpush1.msra.mxu0 0.0
      %1046 = vmatprep.subr.mxu0 0.0
      %1047 = vmatpush1.msra.mxu0 0.0
      %1048 = vmatprep.subr.mxu0 0.0
      %1049 = vmatpush1.msra.mxu0 0.0
      %1050 = vmatprep.subr.mxu0 0.0
      %1051 = vmatpush1.msra.mxu0 0.0
      %1052 = vmatprep.subr.mxu0 0.0
      %1053 = vmatpush1.msra.mxu0 0.0
      %1054 = vmatprep.subr.mxu0 0.0
      %1055 = vmatpush1.msra.mxu0 0.0
      %1056 = vmatprep.subr.mxu0 0.0
      %1057 = vmatpush1.msra.mxu0 0.0
      %1058 = vmatprep.subr.mxu0 0.0
      %1059 = vmatpush1.msra.mxu0 0.0
      %1060 = vmatprep.subr.mxu0 0.0
      %1061 = vmatpush1.msra.mxu0 0.0
      %1062 = vmatprep.subr.mxu0 0.0
      %1063 = vmatpush1.msra.mxu0 0.0
      %1064 = vmatprep.subr.mxu0 0.0
      %1065 = vmatpush1.msra.mxu0 0.0
      %1066 = vmatprep.subr.mxu0 0.0
      %1067 = vmatpush1.msra.mxu0 0.0
      %1068 = vmatprep.subr.mxu0 0.0
      %1069 = vmatpush1.msra.mxu0 0.0
      %1070 = vmatprep.subr.mxu0 0.0
      %1071 = vmatpush1.msra.mxu0 0.0
      %1072 = vmatprep.subr.mxu0 0.0
      %1073 = vmatpush1.msra.mxu0 0.0
      %1074 = vmatprep.subr.mxu0 0.0
      %1075 = vmatpush1.msra.mxu0 0.0
      %1076 = vmatprep.subr.mxu0 0.0
      %1077 = vmatpush1.msra.mxu0 0.0
      %1078 = vmatprep.subr.mxu0 0.0
      %1079 = vmatpush1.msra.mxu0 0.0
      %1080 = vmatprep.subr.mxu0 0.0
      %1081 = vmatpush1.msra.mxu0 0.0
      %1082 = vmatprep.subr.mxu0 0.0
      %1083 = vmatpush1.msra.mxu0 0.0
      %1084 = vmatprep.subr.mxu0 0.0
      %1085 = vmatpush1.msra.mxu0 0.0
      %1086 = vmatprep.subr.mxu0 0.0
      %1087 = vmatpush1.msra.mxu0 0.0
      %1088 = vmatprep.subr.mxu0 0.0
      %1089 = vmatpush1.msra.mxu0 0.0
      %1090 = vmatprep.subr.mxu0 0.0
      %1091 = vmatpush1.msra.mxu0 0.0
      %1092 = vmatprep.subr.mxu0 0.0
      %1093 = vmatpush1.msra.mxu0 0.0
      %1094 = vmatprep.subr.mxu0 0.0
      %1095 = vmatpush1.msra.mxu0 0.0
      %1096 = vmatprep.subr.mxu0 0.0
      %1097 = vmatpush1.msra.mxu0 0.0
      %1098 = vmatprep.mubr.f32.mxu0 0.0
      %1099 = vmatmul.mubr.f32.gmra.mrb[0].mxu0 %v1030
      %v1100 = vpop.f32.mrb[0].mxu0
      %v1101 = vadd.f32 0.0, %v1100
      %v1102 = vpop.f32.mrb[0].mxu0
      %1103 = vmatprep.mubr.f32.mxu0 0.0
      %1104 = vmatmul.mubr.f32.gmra.mrb[0].mxu0 %v1032
      %v1105 = vpop.f32.mrb[0].mxu0
      %v1106 = vadd.f32 0.0, %v1105
      %v1107 = vpop.f32.mrb[0].mxu0
      %1108 = vdwg.mxu0
      %v1109 = vadd.f32 %v988, %v1101
      %v1110 = vadd.f32 %v989, %v1106
      %s1111 = scalar_lea.vmem %s6, 8
      %v1112 = vld [vmem:[%s1111] sm:$0xf]
      %v1113 = vcombine.low %v1012, %v1016
      %v1114 = vcombine.low %v1020, %v1024
      %v1115 = vsel %vm603, %v1113, 0
      %v1117 = vsel %vm603, %v1114, 0
      %v1120 = vsel %vm608, %v1112, 0
      %1122 = vmatprep.subr.mxu0 0.0
      %1123 = vmatpush1.msra.mxu0 %v1120
      %1124 = vmatprep.subr.mxu0 0.0
      %1125 = vmatpush1.msra.mxu0 0.0
      %1126 = vmatprep.subr.mxu0 0.0
      %1127 = vmatpush1.msra.mxu0 0.0
      %1128 = vmatprep.subr.mxu0 0.0
      %1129 = vmatpush1.msra.mxu0 0.0
      %1130 = vmatprep.subr.mxu0 0.0
      %1131 = vmatpush1.msra.mxu0 0.0
      %1132 = vmatprep.subr.mxu0 0.0
      %1133 = vmatpush1.msra.mxu0 0.0
      %1134 = vmatprep.subr.mxu0 0.0
      %1135 = vmatpush1.msra.mxu0 0.0
      %1136 = vmatprep.subr.mxu0 0.0
      %1137 = vmatpush1.msra.mxu0 0.0
      %1138 = vmatprep.subr.mxu0 0.0
      %1139 = vmatpush1.msra.mxu0 0.0
      %1140 = vmatprep.subr.mxu0 0.0
      %1141 = vmatpush1.msra.mxu0 0.0
      %1142 = vmatprep.subr.mxu0 0.0
      %1143 = vmatpush1.msra.mxu0 0.0
      %1144 = vmatprep.subr.mxu0 0.0
      %1145 = vmatpush1.msra.mxu0 0.0
      %1146 = vmatprep.subr.mxu0 0.0
      %1147 = vmatpush1.msra.mxu0 0.0
      %1148 = vmatprep.subr.mxu0 0.0
      %1149 = vmatpush1.msra.mxu0 0.0
      %1150 = vmatprep.subr.mxu0 0.0
      %1151 = vmatpush1.msra.mxu0 0.0
      %1152 = vmatprep.subr.mxu0 0.0
      %1153 = vmatpush1.msra.mxu0 0.0
      %1154 = vmatprep.subr.mxu0 0.0
      %1155 = vmatpush1.msra.mxu0 0.0
      %1156 = vmatprep.subr.mxu0 0.0
      %1157 = vmatpush1.msra.mxu0 0.0
      %1158 = vmatprep.subr.mxu0 0.0
      %1159 = vmatpush1.msra.mxu0 0.0
      %1160 = vmatprep.subr.mxu0 0.0
      %1161 = vmatpush1.msra.mxu0 0.0
      %1162 = vmatprep.subr.mxu0 0.0
      %1163 = vmatpush1.msra.mxu0 0.0
      %1164 = vmatprep.subr.mxu0 0.0
      %1165 = vmatpush1.msra.mxu0 0.0
      %1166 = vmatprep.subr.mxu0 0.0
      %1167 = vmatpush1.msra.mxu0 0.0
      %1168 = vmatprep.subr.mxu0 0.0
      %1169 = vmatpush1.msra.mxu0 0.0
      %1170 = vmatprep.subr.mxu0 0.0
      %1171 = vmatpush1.msra.mxu0 0.0
      %1172 = vmatprep.subr.mxu0 0.0
      %1173 = vmatpush1.msra.mxu0 0.0
      %1174 = vmatprep.subr.mxu0 0.0
      %1175 = vmatpush1.msra.mxu0 0.0
      %1176 = vmatprep.subr.mxu0 0.0
      %1177 = vmatpush1.msra.mxu0 0.0
      %1178 = vmatprep.subr.mxu0 0.0
      %1179 = vmatpush1.msra.mxu0 0.0
      %1180 = vmatprep.subr.mxu0 0.0
      %1181 = vmatpush1.msra.mxu0 0.0
      %1182 = vmatprep.subr.mxu0 0.0
      %1183 = vmatpush1.msra.mxu0 0.0
      %1184 = vmatprep.subr.mxu0 0.0
      %1185 = vmatpush1.msra.mxu0 0.0
      %1186 = vmatprep.mubr.f32.mxu0 0.0
      %1187 = vmatmul.mubr.f32.gmra.mrb[0].mxu0 %v1115
      %v1188 = vpop.f32.mrb[0].mxu0
      %v1189 = vadd.f32 0.0, %v1188
      %v1190 = vpop.f32.mrb[0].mxu0
      %1191 = vmatprep.mubr.f32.mxu0 0.0
      %1192 = vmatmul.mubr.f32.gmra.mrb[0].mxu0 %v1117
      %v1193 = vpop.f32.mrb[0].mxu0
      %v1194 = vadd.f32 0.0, %v1193
      %v1195 = vpop.f32.mrb[0].mxu0
      %1196 = vdwg.mxu0
      %v1197 = vadd.f32 %v1109, %v1189
      %v1198 = vadd.f32 %v1110, %v1194
      %s1199 = scalar_lea.vmem %s5, 48
      %v1200 = vld [vmem:[%s1199] sm:$0xff]
      %v1201 = vld [vmem:[%s1199 + $0x8] sm:$0xff]
      %v1203 = vcombine.low %v583, %v584
      %v1204 = vcombine.low %v585, %v586
      %v1205 = vsel %vm693, %v1203, 0
      %v1207 = vsel %vm693, %v1204, 0
      %1209 = vmatprep.subr.mxu0 0.0
      %1210 = vmatpush1.msra.mxu0 %v1200
      %1211 = vmatprep.subr.mxu0 0.0
      %1212 = vmatpush1.msra.mxu0 %v1201
      %1213 = vmatprep.subr.mxu0 0.0
      %1214 = vmatpush1.msra.mxu0 0.0
      %1215 = vmatprep.subr.mxu0 0.0
      %1216 = vmatpush1.msra.mxu0 0.0
      %1217 = vmatprep.subr.mxu0 0.0
      %1218 = vmatpush1.msra.mxu0 0.0
      %1219 = vmatprep.subr.mxu0 0.0
      %1220 = vmatpush1.msra.mxu0 0.0
      %1221 = vmatprep.subr.mxu0 0.0
      %1222 = vmatpush1.msra.mxu0 0.0
      %1223 = vmatprep.subr.mxu0 0.0
      %1224 = vmatpush1.msra.mxu0 0.0
      %1225 = vmatprep.subr.mxu0 0.0
      %1226 = vmatpush1.msra.mxu0 0.0
      %1227 = vmatprep.subr.mxu0 0.0
      %1228 = vmatpush1.msra.mxu0 0.0
      %1229 = vmatprep.subr.mxu0 0.0
      %1230 = vmatpush1.msra.mxu0 0.0
      %1231 = vmatprep.subr.mxu0 0.0
      %1232 = vmatpush1.msra.mxu0 0.0
      %1233 = vmatprep.subr.mxu0 0.0
      %1234 = vmatpush1.msra.mxu0 0.0
      %1235 = vmatprep.subr.mxu0 0.0
      %1236 = vmatpush1.msra.mxu0 0.0
      %1237 = vmatprep.subr.mxu0 0.0
      %1238 = vmatpush1.msra.mxu0 0.0
      %1239 = vmatprep.subr.mxu0 0.0
      %1240 = vmatpush1.msra.mxu0 0.0
      %1241 = vmatprep.subr.mxu0 0.0
      %1242 = vmatpush1.msra.mxu0 0.0
      %1243 = vmatprep.subr.mxu0 0.0
      %1244 = vmatpush1.msra.mxu0 0.0
      %1245 = vmatprep.subr.mxu0 0.0
      %1246 = vmatpush1.msra.mxu0 0.0
      %1247 = vmatprep.subr.mxu0 0.0
      %1248 = vmatpush1.msra.mxu0 0.0
      %1249 = vmatprep.subr.mxu0 0.0
      %1250 = vmatpush1.msra.mxu0 0.0
      %1251 = vmatprep.subr.mxu0 0.0
      %1252 = vmatpush1.msra.mxu0 0.0
      %1253 = vmatprep.subr.mxu0 0.0
      %1254 = vmatpush1.msra.mxu0 0.0
      %1255 = vmatprep.subr.mxu0 0.0
      %1256 = vmatpush1.msra.mxu0 0.0
      %1257 = vmatprep.subr.mxu0 0.0
      %1258 = vmatpush1.msra.mxu0 0.0
      %1259 = vmatprep.subr.mxu0 0.0
      %1260 = vmatpush1.msra.mxu0 0.0
      %1261 = vmatprep.subr.mxu0 0.0
      %1262 = vmatpush1.msra.mxu0 0.0
      %1263 = vmatprep.subr.mxu0 0.0
      %1264 = vmatpush1.msra.mxu0 0.0
      %1265 = vmatprep.subr.mxu0 0.0
      %1266 = vmatpush1.msra.mxu0 0.0
      %1267 = vmatprep.subr.mxu0 0.0
      %1268 = vmatpush1.msra.mxu0 0.0
      %1269 = vmatprep.subr.mxu0 0.0
      %1270 = vmatpush1.msra.mxu0 0.0
      %1271 = vmatprep.subr.mxu0 0.0
      %1272 = vmatpush1.msra.mxu0 0.0
      %1273 = vmatprep.mubr.f32.mxu0 0.0
      %1274 = vmatmul.mubr.f32.gmra.mrb[0].mxu0 %v1205
      %v1275 = vpop.f32.mrb[0].mxu0
      %v1276 = vadd.f32 0.0, %v1275
      %v1277 = vpop.f32.mrb[0].mxu0
      %1278 = vmatprep.mubr.f32.mxu0 0.0
      %1279 = vmatmul.mubr.f32.gmra.mrb[0].mxu0 %v1207
      %v1280 = vpop.f32.mrb[0].mxu0
      %v1281 = vadd.f32 0.0, %v1280
      %v1282 = vpop.f32.mrb[0].mxu0
      %1283 = vdwg.mxu0
      %v1284 = vadd.f32 %v1197, %v1276
      %v1285 = vadd.f32 %v1198, %v1281
      %s1286 = scalar_lea.vmem %s6, 12
      %v1287 = vld [vmem:[%s1286] sm:$0xf]
      %v1289 = vcombine.low %v589, %v590
      %v1290 = vcombine.low %v591, %v592
      %v1291 = vsel %vm603, %v1289, 0
      %v1293 = vsel %vm603, %v1290, 0
      %v1296 = vsel %vm608, %v1287, 0
      %1298 = vmatprep.subr.mxu0 0.0
      %1299 = vmatpush1.msra.mxu0 %v1296
      %1300 = vmatprep.subr.mxu0 0.0
      %1301 = vmatpush1.msra.mxu0 0.0
      %1302 = vmatprep.subr.mxu0 0.0
      %1303 = vmatpush1.msra.mxu0 0.0
      %1304 = vmatprep.subr.mxu0 0.0
      %1305 = vmatpush1.msra.mxu0 0.0
      %1306 = vmatprep.subr.mxu0 0.0
      %1307 = vmatpush1.msra.mxu0 0.0
      %1308 = vmatprep.subr.mxu0 0.0
      %1309 = vmatpush1.msra.mxu0 0.0
      %1310 = vmatprep.subr.mxu0 0.0
      %1311 = vmatpush1.msra.mxu0 0.0
      %1312 = vmatprep.subr.mxu0 0.0
      %1313 = vmatpush1.msra.mxu0 0.0
      %1314 = vmatprep.subr.mxu0 0.0
      %1315 = vmatpush1.msra.mxu0 0.0
      %1316 = vmatprep.subr.mxu0 0.0
      %1317 = vmatpush1.msra.mxu0 0.0
      %1318 = vmatprep.subr.mxu0 0.0
      %1319 = vmatpush1.msra.mxu0 0.0
      %1320 = vmatprep.subr.mxu0 0.0
      %1321 = vmatpush1.msra.mxu0 0.0
      %1322 = vmatprep.subr.mxu0 0.0
      %1323 = vmatpush1.msra.mxu0 0.0
      %1324 = vmatprep.subr.mxu0 0.0
      %1325 = vmatpush1.msra.mxu0 0.0
      %1326 = vmatprep.subr.mxu0 0.0
      %1327 = vmatpush1.msra.mxu0 0.0
      %1328 = vmatprep.subr.mxu0 0.0
      %1329 = vmatpush1.msra.mxu0 0.0
      %1330 = vmatprep.subr.mxu0 0.0
      %1331 = vmatpush1.msra.mxu0 0.0
      %1332 = vmatprep.subr.mxu0 0.0
      %1333 = vmatpush1.msra.mxu0 0.0
      %1334 = vmatprep.subr.mxu0 0.0
      %1335 = vmatpush1.msra.mxu0 0.0
      %1336 = vmatprep.subr.mxu0 0.0
      %1337 = vmatpush1.msra.mxu0 0.0
      %1338 = vmatprep.subr.mxu0 0.0
      %1339 = vmatpush1.msra.mxu0 0.0
      %1340 = vmatprep.subr.mxu0 0.0
      %1341 = vmatpush1.msra.mxu0 0.0
      %1342 = vmatprep.subr.mxu0 0.0
      %1343 = vmatpush1.msra.mxu0 0.0
      %1344 = vmatprep.subr.mxu0 0.0
      %1345 = vmatpush1.msra.mxu0 0.0
      %1346 = vmatprep.subr.mxu0 0.0
      %1347 = vmatpush1.msra.mxu0 0.0
      %1348 = vmatprep.subr.mxu0 0.0
      %1349 = vmatpush1.msra.mxu0 0.0
      %1350 = vmatprep.subr.mxu0 0.0
      %1351 = vmatpush1.msra.mxu0 0.0
      %1352 = vmatprep.subr.mxu0 0.0
      %1353 = vmatpush1.msra.mxu0 0.0
      %1354 = vmatprep.subr.mxu0 0.0
      %1355 = vmatpush1.msra.mxu0 0.0
      %1356 = vmatprep.subr.mxu0 0.0
      %1357 = vmatpush1.msra.mxu0 0.0
      %1358 = vmatprep.subr.mxu0 0.0
      %1359 = vmatpush1.msra.mxu0 0.0
      %1360 = vmatprep.subr.mxu0 0.0
      %1361 = vmatpush1.msra.mxu0 0.0
      %1362 = vmatprep.mubr.f32.mxu0 0.0
      %1363 = vmatmul.mubr.f32.gmra.mrb[0].mxu0 %v1291
      %v1364 = vpop.f32.mrb[0].mxu0
      %v1365 = vadd.f32 0.0, %v1364
      %v1366 = vpop.f32.mrb[0].mxu0
      %1367 = vmatprep.mubr.f32.mxu0 0.0
      %1368 = vmatmul.mubr.f32.gmra.mrb[0].mxu0 %v1293
      %v1369 = vpop.f32.mrb[0].mxu0
      %v1370 = vadd.f32 0.0, %v1369
      %v1371 = vpop.f32.mrb[0].mxu0
      %1372 = vdwg.mxu0
      %v1373 = vadd.f32 %v1284, %v1365
      %v1374 = vadd.f32 %v1285, %v1370
      %v1375 = vcombine.high %v586, %v586
      %v1376 = vrot.slane %v586, 5
      %v1377 = vrot.slane %v1376, 4
      %v1378 = vrot.slane %v1375, 5
      %v1379 = vsel %vm779, %v1377, %v1378
      %v1380 = vcombine.high %v592, %v592
      %v1381 = vrot.slane %v592, 5
      %v1382 = vrot.slane %v1381, 4
      %v1383 = vrot.slane %v1380, 5
      %v1384 = vsel %vm779, %v1382, %v1383
      %s1385 = scalar_lea.vmem %s5, 64
      %v1386 = vld [vmem:[%s1385] sm:$0xff]
      %v1387 = vld [vmem:[%s1385 + $0x8] sm:$0xff]
      %v1388 = vcombine.low %v787, %v791
      %v1389 = vcombine.low %v795, %v1379
      %v1390 = vsel %vm693, %v1388, 0
      %v1392 = vsel %vm693, %v1389, 0
      %1394 = vmatprep.subr.mxu0 0.0
      %1395 = vmatpush1.msra.mxu0 %v1386
      %1396 = vmatprep.subr.mxu0 0.0
      %1397 = vmatpush1.msra.mxu0 %v1387
      %1398 = vmatprep.subr.mxu0 0.0
      %1399 = vmatpush1.msra.mxu0 0.0
      %1400 = vmatprep.subr.mxu0 0.0
      %1401 = vmatpush1.msra.mxu0 0.0
      %1402 = vmatprep.subr.mxu0 0.0
      %1403 = vmatpush1.msra.mxu0 0.0
      %1404 = vmatprep.subr.mxu0 0.0
      %1405 = vmatpush1.msra.mxu0 0.0
      %1406 = vmatprep.subr.mxu0 0.0
      %1407 = vmatpush1.msra.mxu0 0.0
      %1408 = vmatprep.subr.mxu0 0.0
      %1409 = vmatpush1.msra.mxu0 0.0
      %1410 = vmatprep.subr.mxu0 0.0
      %1411 = vmatpush1.msra.mxu0 0.0
      %1412 = vmatprep.subr.mxu0 0.0
      %1413 = vmatpush1.msra.mxu0 0.0
      %1414 = vmatprep.subr.mxu0 0.0
      %1415 = vmatpush1.msra.mxu0 0.0
      %1416 = vmatprep.subr.mxu0 0.0
      %1417 = vmatpush1.msra.mxu0 0.0
      %1418 = vmatprep.subr.mxu0 0.0
      %1419 = vmatpush1.msra.mxu0 0.0
      %1420 = vmatprep.subr.mxu0 0.0
      %1421 = vmatpush1.msra.mxu0 0.0
      %1422 = vmatprep.subr.mxu0 0.0
      %1423 = vmatpush1.msra.mxu0 0.0
      %1424 = vmatprep.subr.mxu0 0.0
      %1425 = vmatpush1.msra.mxu0 0.0
      %1426 = vmatprep.subr.mxu0 0.0
      %1427 = vmatpush1.msra.mxu0 0.0
      %1428 = vmatprep.subr.mxu0 0.0
      %1429 = vmatpush1.msra.mxu0 0.0
      %1430 = vmatprep.subr.mxu0 0.0
      %1431 = vmatpush1.msra.mxu0 0.0
      %1432 = vmatprep.subr.mxu0 0.0
      %1433 = vmatpush1.msra.mxu0 0.0
      %1434 = vmatprep.subr.mxu0 0.0
      %1435 = vmatpush1.msra.mxu0 0.0
      %1436 = vmatprep.subr.mxu0 0.0
      %1437 = vmatpush1.msra.mxu0 0.0
      %1438 = vmatprep.subr.mxu0 0.0
      %1439 = vmatpush1.msra.mxu0 0.0
      %1440 = vmatprep.subr.mxu0 0.0
      %1441 = vmatpush1.msra.mxu0 0.0
      %1442 = vmatprep.subr.mxu0 0.0
      %1443 = vmatpush1.msra.mxu0 0.0
      %1444 = vmatprep.subr.mxu0 0.0
      %1445 = vmatpush1.msra.mxu0 0.0
      %1446 = vmatprep.subr.mxu0 0.0
      %1447 = vmatpush1.msra.mxu0 0.0
      %1448 = vmatprep.subr.mxu0 0.0
      %1449 = vmatpush1.msra.mxu0 0.0
      %1450 = vmatprep.subr.mxu0 0.0
      %1451 = vmatpush1.msra.mxu0 0.0
      %1452 = vmatprep.subr.mxu0 0.0
      %1453 = vmatpush1.msra.mxu0 0.0
      %1454 = vmatprep.subr.mxu0 0.0
      %1455 = vmatpush1.msra.mxu0 0.0
      %1456 = vmatprep.subr.mxu0 0.0
      %1457 = vmatpush1.msra.mxu0 0.0
      %1458 = vmatprep.mubr.f32.mxu0 0.0
      %1459 = vmatmul.mubr.f32.gmra.mrb[0].mxu0 %v1390
      %v1460 = vpop.f32.mrb[0].mxu0
      %v1461 = vadd.f32 0.0, %v1460
      %v1462 = vpop.f32.mrb[0].mxu0
      %1463 = vmatprep.mubr.f32.mxu0 0.0
      %1464 = vmatmul.mubr.f32.gmra.mrb[0].mxu0 %v1392
      %v1465 = vpop.f32.mrb[0].mxu0
      %v1466 = vadd.f32 0.0, %v1465
      %v1467 = vpop.f32.mrb[0].mxu0
      %1468 = vdwg.mxu0
      %v1469 = vadd.f32 %v1373, %v1461
      %v1470 = vadd.f32 %v1374, %v1466
      %s1471 = scalar_lea.vmem %s6, 16
      %v1472 = vld [vmem:[%s1471] sm:$0xf]
      %v1473 = vcombine.low %v807, %v811
      %v1474 = vcombine.low %v815, %v1384
      %v1475 = vsel %vm603, %v1473, 0
      %v1477 = vsel %vm603, %v1474, 0
      %v1480 = vsel %vm608, %v1472, 0
      %1482 = vmatprep.subr.mxu0 0.0
      %1483 = vmatpush1.msra.mxu0 %v1480
      %1484 = vmatprep.subr.mxu0 0.0
      %1485 = vmatpush1.msra.mxu0 0.0
      %1486 = vmatprep.subr.mxu0 0.0
      %1487 = vmatpush1.msra.mxu0 0.0
      %1488 = vmatprep.subr.mxu0 0.0
      %1489 = vmatpush1.msra.mxu0 0.0
      %1490 = vmatprep.subr.mxu0 0.0
      %1491 = vmatpush1.msra.mxu0 0.0
      %1492 = vmatprep.subr.mxu0 0.0
      %1493 = vmatpush1.msra.mxu0 0.0
      %1494 = vmatprep.subr.mxu0 0.0
      %1495 = vmatpush1.msra.mxu0 0.0
      %1496 = vmatprep.subr.mxu0 0.0
      %1497 = vmatpush1.msra.mxu0 0.0
      %1498 = vmatprep.subr.mxu0 0.0
      %1499 = vmatpush1.msra.mxu0 0.0
      %1500 = vmatprep.subr.mxu0 0.0
      %1501 = vmatpush1.msra.mxu0 0.0
      %1502 = vmatprep.subr.mxu0 0.0
      %1503 = vmatpush1.msra.mxu0 0.0
      %1504 = vmatprep.subr.mxu0 0.0
      %1505 = vmatpush1.msra.mxu0 0.0
      %1506 = vmatprep.subr.mxu0 0.0
      %1507 = vmatpush1.msra.mxu0 0.0
      %1508 = vmatprep.subr.mxu0 0.0
      %1509 = vmatpush1.msra.mxu0 0.0
      %1510 = vmatprep.subr.mxu0 0.0
      %1511 = vmatpush1.msra.mxu0 0.0
      %1512 = vmatprep.subr.mxu0 0.0
      %1513 = vmatpush1.msra.mxu0 0.0
      %1514 = vmatprep.subr.mxu0 0.0
      %1515 = vmatpush1.msra.mxu0 0.0
      %1516 = vmatprep.subr.mxu0 0.0
      %1517 = vmatpush1.msra.mxu0 0.0
      %1518 = vmatprep.subr.mxu0 0.0
      %1519 = vmatpush1.msra.mxu0 0.0
      %1520 = vmatprep.subr.mxu0 0.0
      %1521 = vmatpush1.msra.mxu0 0.0
      %1522 = vmatprep.subr.mxu0 0.0
      %1523 = vmatpush1.msra.mxu0 0.0
      %1524 = vmatprep.subr.mxu0 0.0
      %1525 = vmatpush1.msra.mxu0 0.0
      %1526 = vmatprep.subr.mxu0 0.0
      %1527 = vmatpush1.msra.mxu0 0.0
      %1528 = vmatprep.subr.mxu0 0.0
      %1529 = vmatpush1.msra.mxu0 0.0
      %1530 = vmatprep.subr.mxu0 0.0
      %1531 = vmatpush1.msra.mxu0 0.0
      %1532 = vmatprep.subr.mxu0 0.0
      %1533 = vmatpush1.msra.mxu0 0.0
      %1534 = vmatprep.subr.mxu0 0.0
      %1535 = vmatpush1.msra.mxu0 0.0
      %1536 = vmatprep.subr.mxu0 0.0
      %1537 = vmatpush1.msra.mxu0 0.0
      %1538 = vmatprep.subr.mxu0 0.0
      %1539 = vmatpush1.msra.mxu0 0.0
      %1540 = vmatprep.subr.mxu0 0.0
      %1541 = vmatpush1.msra.mxu0 0.0
      %1542 = vmatprep.subr.mxu0 0.0
      %1543 = vmatpush1.msra.mxu0 0.0
      %1544 = vmatprep.subr.mxu0 0.0
      %1545 = vmatpush1.msra.mxu0 0.0
      %1546 = vmatprep.mubr.f32.mxu0 0.0
      %1547 = vmatmul.mubr.f32.gmra.mrb[0].mxu0 %v1475
      %v1548 = vpop.f32.mrb[0].mxu0
      %v1549 = vadd.f32 0.0, %v1548
      %v1550 = vpop.f32.mrb[0].mxu0
      %1551 = vmatprep.mubr.f32.mxu0 0.0
      %1552 = vmatmul.mubr.f32.gmra.mrb[0].mxu0 %v1477
      %v1553 = vpop.f32.mrb[0].mxu0
      %v1554 = vadd.f32 0.0, %v1553
      %v1555 = vpop.f32.mrb[0].mxu0
      %1556 = vdwg.mxu0
      %v1557 = vadd.f32 %v1469, %v1549
      %v1558 = vadd.f32 %v1470, %v1554
      %v1559 = vrot.slane %v586, 6
      %v1560 = vrot.slane %v1559, 4
      %v1561 = vrot.slane %v1375, 6
      %v1562 = vsel %vm992, %v1560, %v1561
      %v1563 = vrot.slane %v592, 6
      %v1564 = vrot.slane %v1563, 4
      %v1565 = vrot.slane %v1380, 6
      %v1566 = vsel %vm992, %v1564, %v1565
      %s1567 = scalar_lea.vmem %s5, 80
      %v1568 = vld [vmem:[%s1567] sm:$0xff]
      %v1569 = vld [vmem:[%s1567 + $0x8] sm:$0xff]
      %v1570 = vcombine.low %v1000, %v1004
      %v1571 = vcombine.low %v1008, %v1562
      %v1572 = vsel %vm693, %v1570, 0
      %v1574 = vsel %vm693, %v1571, 0
      %1576 = vmatprep.subr.mxu0 0.0
      %1577 = vmatpush1.msra.mxu0 %v1568
      %1578 = vmatprep.subr.mxu0 0.0
      %1579 = vmatpush1.msra.mxu0 %v1569
      %1580 = vmatprep.subr.mxu0 0.0
      %1581 = vmatpush1.msra.mxu0 0.0
      %1582 = vmatprep.subr.mxu0 0.0
      %1583 = vmatpush1.msra.mxu0 0.0
      %1584 = vmatprep.subr.mxu0 0.0
      %1585 = vmatpush1.msra.mxu0 0.0
      %1586 = vmatprep.subr.mxu0 0.0
      %1587 = vmatpush1.msra.mxu0 0.0
      %1588 = vmatprep.subr.mxu0 0.0
      %1589 = vmatpush1.msra.mxu0 0.0
      %1590 = vmatprep.subr.mxu0 0.0
      %1591 = vmatpush1.msra.mxu0 0.0
      %1592 = vmatprep.subr.mxu0 0.0
      %1593 = vmatpush1.msra.mxu0 0.0
      %1594 = vmatprep.subr.mxu0 0.0
      %1595 = vmatpush1.msra.mxu0 0.0
      %1596 = vmatprep.subr.mxu0 0.0
      %1597 = vmatpush1.msra.mxu0 0.0
      %1598 = vmatprep.subr.mxu0 0.0
      %1599 = vmatpush1.msra.mxu0 0.0
      %1600 = vmatprep.subr.mxu0 0.0
      %1601 = vmatpush1.msra.mxu0 0.0
      %1602 = vmatprep.subr.mxu0 0.0
      %1603 = vmatpush1.msra.mxu0 0.0
      %1604 = vmatprep.subr.mxu0 0.0
      %1605 = vmatpush1.msra.mxu0 0.0
      %1606 = vmatprep.subr.mxu0 0.0
      %1607 = vmatpush1.msra.mxu0 0.0
      %1608 = vmatprep.subr.mxu0 0.0
      %1609 = vmatpush1.msra.mxu0 0.0
      %1610 = vmatprep.subr.mxu0 0.0
      %1611 = vmatpush1.msra.mxu0 0.0
      %1612 = vmatprep.subr.mxu0 0.0
      %1613 = vmatpush1.msra.mxu0 0.0
      %1614 = vmatprep.subr.mxu0 0.0
      %1615 = vmatpush1.msra.mxu0 0.0
      %1616 = vmatprep.subr.mxu0 0.0
      %1617 = vmatpush1.msra.mxu0 0.0
      %1618 = vmatprep.subr.mxu0 0.0
      %1619 = vmatpush1.msra.mxu0 0.0
      %1620 = vmatprep.subr.mxu0 0.0
      %1621 = vmatpush1.msra.mxu0 0.0
      %1622 = vmatprep.subr.mxu0 0.0
      %1623 = vmatpush1.msra.mxu0 0.0
      %1624 = vmatprep.subr.mxu0 0.0
      %1625 = vmatpush1.msra.mxu0 0.0
      %1626 = vmatprep.subr.mxu0 0.0
      %1627 = vmatpush1.msra.mxu0 0.0
      %1628 = vmatprep.subr.mxu0 0.0
      %1629 = vmatpush1.msra.mxu0 0.0
      %1630 = vmatprep.subr.mxu0 0.0
      %1631 = vmatpush1.msra.mxu0 0.0
      %1632 = vmatprep.subr.mxu0 0.0
      %1633 = vmatpush1.msra.mxu0 0.0
      %1634 = vmatprep.subr.mxu0 0.0
      %1635 = vmatpush1.msra.mxu0 0.0
      %1636 = vmatprep.subr.mxu0 0.0
      %1637 = vmatpush1.msra.mxu0 0.0
      %1638 = vmatprep.subr.mxu0 0.0
      %1639 = vmatpush1.msra.mxu0 0.0
      %1640 = vmatprep.mubr.f32.mxu0 0.0
      %1641 = vmatmul.mubr.f32.gmra.mrb[0].mxu0 %v1572
      %v1642 = vpop.f32.mrb[0].mxu0
      %v1643 = vadd.f32 0.0, %v1642
      %v1644 = vpop.f32.mrb[0].mxu0
      %1645 = vmatprep.mubr.f32.mxu0 0.0
      %1646 = vmatmul.mubr.f32.gmra.mrb[0].mxu0 %v1574
      %v1647 = vpop.f32.mrb[0].mxu0
      %v1648 = vadd.f32 0.0, %v1647
      %v1649 = vpop.f32.mrb[0].mxu0
      %1650 = vdwg.mxu0
      %v1651 = vadd.f32 %v1557, %v1643
      %v1652 = vadd.f32 %v1558, %v1648
      %s1653 = scalar_lea.vmem %s6, 20
      %v1654 = vld [vmem:[%s1653] sm:$0xf]
      %v1655 = vcombine.low %v1016, %v1020
      %v1656 = vcombine.low %v1024, %v1566
      %v1657 = vsel %vm603, %v1655, 0
      %v1659 = vsel %vm603, %v1656, 0
      %v1662 = vsel %vm608, %v1654, 0
      %1664 = vmatprep.subr.mxu0 0.0
      %1665 = vmatpush1.msra.mxu0 %v1662
      %1666 = vmatprep.subr.mxu0 0.0
      %1667 = vmatpush1.msra.mxu0 0.0
      %1668 = vmatprep.subr.mxu0 0.0
      %1669 = vmatpush1.msra.mxu0 0.0
      %1670 = vmatprep.subr.mxu0 0.0
      %1671 = vmatpush1.msra.mxu0 0.0
      %1672 = vmatprep.subr.mxu0 0.0
      %1673 = vmatpush1.msra.mxu0 0.0
      %1674 = vmatprep.subr.mxu0 0.0
      %1675 = vmatpush1.msra.mxu0 0.0
      %1676 = vmatprep.subr.mxu0 0.0
      %1677 = vmatpush1.msra.mxu0 0.0
      %1678 = vmatprep.subr.mxu0 0.0
      %1679 = vmatpush1.msra.mxu0 0.0
      %1680 = vmatprep.subr.mxu0 0.0
      %1681 = vmatpush1.msra.mxu0 0.0
      %1682 = vmatprep.subr.mxu0 0.0
      %1683 = vmatpush1.msra.mxu0 0.0
      %1684 = vmatprep.subr.mxu0 0.0
      %1685 = vmatpush1.msra.mxu0 0.0
      %1686 = vmatprep.subr.mxu0 0.0
      %1687 = vmatpush1.msra.mxu0 0.0
      %1688 = vmatprep.subr.mxu0 0.0
      %1689 = vmatpush1.msra.mxu0 0.0
      %1690 = vmatprep.subr.mxu0 0.0
      %1691 = vmatpush1.msra.mxu0 0.0
      %1692 = vmatprep.subr.mxu0 0.0
      %1693 = vmatpush1.msra.mxu0 0.0
      %1694 = vmatprep.subr.mxu0 0.0
      %1695 = vmatpush1.msra.mxu0 0.0
      %1696 = vmatprep.subr.mxu0 0.0
      %1697 = vmatpush1.msra.mxu0 0.0
      %1698 = vmatprep.subr.mxu0 0.0
      %1699 = vmatpush1.msra.mxu0 0.0
      %1700 = vmatprep.subr.mxu0 0.0
      %1701 = vmatpush1.msra.mxu0 0.0
      %1702 = vmatprep.subr.mxu0 0.0
      %1703 = vmatpush1.msra.mxu0 0.0
      %1704 = vmatprep.subr.mxu0 0.0
      %1705 = vmatpush1.msra.mxu0 0.0
      %1706 = vmatprep.subr.mxu0 0.0
      %1707 = vmatpush1.msra.mxu0 0.0
      %1708 = vmatprep.subr.mxu0 0.0
      %1709 = vmatpush1.msra.mxu0 0.0
      %1710 = vmatprep.subr.mxu0 0.0
      %1711 = vmatpush1.msra.mxu0 0.0
      %1712 = vmatprep.subr.mxu0 0.0
      %1713 = vmatpush1.msra.mxu0 0.0
      %1714 = vmatprep.subr.mxu0 0.0
      %1715 = vmatpush1.msra.mxu0 0.0
      %1716 = vmatprep.subr.mxu0 0.0
      %1717 = vmatpush1.msra.mxu0 0.0
      %1718 = vmatprep.subr.mxu0 0.0
      %1719 = vmatpush1.msra.mxu0 0.0
      %1720 = vmatprep.subr.mxu0 0.0
      %1721 = vmatpush1.msra.mxu0 0.0
      %1722 = vmatprep.subr.mxu0 0.0
      %1723 = vmatpush1.msra.mxu0 0.0
      %1724 = vmatprep.subr.mxu0 0.0
      %1725 = vmatpush1.msra.mxu0 0.0
      %1726 = vmatprep.subr.mxu0 0.0
      %1727 = vmatpush1.msra.mxu0 0.0
      %1728 = vmatprep.mubr.f32.mxu0 0.0
      %1729 = vmatmul.mubr.f32.gmra.mrb[0].mxu0 %v1657
      %v1730 = vpop.f32.mrb[0].mxu0
      %v1731 = vadd.f32 0.0, %v1730
      %v1732 = vpop.f32.mrb[0].mxu0
      %1733 = vmatprep.mubr.f32.mxu0 0.0
      %1734 = vmatmul.mubr.f32.gmra.mrb[0].mxu0 %v1659
      %v1735 = vpop.f32.mrb[0].mxu0
      %v1736 = vadd.f32 0.0, %v1735
      %v1737 = vpop.f32.mrb[0].mxu0
      %1738 = vdwg.mxu0
      %v1739 = vadd.f32 %v1651, %v1731
      %v1740 = vadd.f32 %v1652, %v1736
      %s1741 = scalar_lea.vmem %s5, 96
      %v1742 = vld [vmem:[%s1741] sm:$0xff]
      %v1743 = vld [vmem:[%s1741 + $0x8] sm:$0xff]
      %v1745 = vcombine.low %v586, %v587
      %v1746 = vsel %vm693, %v1745, 0
      %1748 = vmatprep.subr.mxu0 0.0
      %1749 = vmatpush1.msra.mxu0 %v1742
      %1750 = vmatprep.subr.mxu0 0.0
      %1751 = vmatpush1.msra.mxu0 %v1743
      %1752 = vmatprep.subr.mxu0 0.0
      %1753 = vmatpush1.msra.mxu0 0.0
      %1754 = vmatprep.subr.mxu0 0.0
      %1755 = vmatpush1.msra.mxu0 0.0
      %1756 = vmatprep.subr.mxu0 0.0
      %1757 = vmatpush1.msra.mxu0 0.0
      %1758 = vmatprep.subr.mxu0 0.0
      %1759 = vmatpush1.msra.mxu0 0.0
      %1760 = vmatprep.subr.mxu0 0.0
      %1761 = vmatpush1.msra.mxu0 0.0
      %1762 = vmatprep.subr.mxu0 0.0
      %1763 = vmatpush1.msra.mxu0 0.0
      %1764 = vmatprep.subr.mxu0 0.0
      %1765 = vmatpush1.msra.mxu0 0.0
      %1766 = vmatprep.subr.mxu0 0.0
      %1767 = vmatpush1.msra.mxu0 0.0
      %1768 = vmatprep.subr.mxu0 0.0
      %1769 = vmatpush1.msra.mxu0 0.0
      %1770 = vmatprep.subr.mxu0 0.0
      %1771 = vmatpush1.msra.mxu0 0.0
      %1772 = vmatprep.subr.mxu0 0.0
      %1773 = vmatpush1.msra.mxu0 0.0
      %1774 = vmatprep.subr.mxu0 0.0
      %1775 = vmatpush1.msra.mxu0 0.0
      %1776 = vmatprep.subr.mxu0 0.0
      %1777 = vmatpush1.msra.mxu0 0.0
      %1778 = vmatprep.subr.mxu0 0.0
      %1779 = vmatpush1.msra.mxu0 0.0
      %1780 = vmatprep.subr.mxu0 0.0
      %1781 = vmatpush1.msra.mxu0 0.0
      %1782 = vmatprep.subr.mxu0 0.0
      %1783 = vmatpush1.msra.mxu0 0.0
      %1784 = vmatprep.subr.mxu0 0.0
      %1785 = vmatpush1.msra.mxu0 0.0
      %1786 = vmatprep.subr.mxu0 0.0
      %1787 = vmatpush1.msra.mxu0 0.0
      %1788 = vmatprep.subr.mxu0 0.0
      %1789 = vmatpush1.msra.mxu0 0.0
      %1790 = vmatprep.subr.mxu0 0.0
      %1791 = vmatpush1.msra.mxu0 0.0
      %1792 = vmatprep.subr.mxu0 0.0
      %1793 = vmatpush1.msra.mxu0 0.0
      %1794 = vmatprep.subr.mxu0 0.0
      %1795 = vmatpush1.msra.mxu0 0.0
      %1796 = vmatprep.subr.mxu0 0.0
      %1797 = vmatpush1.msra.mxu0 0.0
      %1798 = vmatprep.subr.mxu0 0.0
      %1799 = vmatpush1.msra.mxu0 0.0
      %1800 = vmatprep.subr.mxu0 0.0
      %1801 = vmatpush1.msra.mxu0 0.0
      %1802 = vmatprep.subr.mxu0 0.0
      %1803 = vmatpush1.msra.mxu0 0.0
      %1804 = vmatprep.subr.mxu0 0.0
      %1805 = vmatpush1.msra.mxu0 0.0
      %1806 = vmatprep.subr.mxu0 0.0
      %1807 = vmatpush1.msra.mxu0 0.0
      %1808 = vmatprep.subr.mxu0 0.0
      %1809 = vmatpush1.msra.mxu0 0.0
      %1810 = vmatprep.subr.mxu0 0.0
      %1811 = vmatpush1.msra.mxu0 0.0
      %1812 = vmatprep.mubr.f32.mxu0 0.0
      %1813 = vmatmul.mubr.f32.gmra.mrb[0].mxu0 %v696
      %v1814 = vpop.f32.mrb[0].mxu0
      %v1815 = vadd.f32 0.0, %v1814
      %v1816 = vpop.f32.mrb[0].mxu0
      %1817 = vmatprep.mubr.f32.mxu0 0.0
      %1818 = vmatmul.mubr.f32.gmra.mrb[0].mxu0 %v1746
      %v1819 = vpop.f32.mrb[0].mxu0
      %v1820 = vadd.f32 0.0, %v1819
      %v1821 = vpop.f32.mrb[0].mxu0
      %1822 = vdwg.mxu0
      %v1823 = vadd.f32 %v1739, %v1815
      %v1824 = vadd.f32 %v1740, %v1820
      %s1825 = scalar_lea.vmem %s6, 24
      %v1826 = vld [vmem:[%s1825] sm:$0xf]
      %v1828 = vcombine.low %v592, %v593
      %v1829 = vsel %vm603, %v1828, 0
      %v1832 = vsel %vm608, %v1826, 0
      %1834 = vmatprep.subr.mxu0 0.0
      %1835 = vmatpush1.msra.mxu0 %v1832
      %1836 = vmatprep.subr.mxu0 0.0
      %1837 = vmatpush1.msra.mxu0 0.0
      %1838 = vmatprep.subr.mxu0 0.0
      %1839 = vmatpush1.msra.mxu0 0.0
      %1840 = vmatprep.subr.mxu0 0.0
      %1841 = vmatpush1.msra.mxu0 0.0
      %1842 = vmatprep.subr.mxu0 0.0
      %1843 = vmatpush1.msra.mxu0 0.0
      %1844 = vmatprep.subr.mxu0 0.0
      %1845 = vmatpush1.msra.mxu0 0.0
      %1846 = vmatprep.subr.mxu0 0.0
      %1847 = vmatpush1.msra.mxu0 0.0
      %1848 = vmatprep.subr.mxu0 0.0
      %1849 = vmatpush1.msra.mxu0 0.0
      %1850 = vmatprep.subr.mxu0 0.0
      %1851 = vmatpush1.msra.mxu0 0.0
      %1852 = vmatprep.subr.mxu0 0.0
      %1853 = vmatpush1.msra.mxu0 0.0
      %1854 = vmatprep.subr.mxu0 0.0
      %1855 = vmatpush1.msra.mxu0 0.0
      %1856 = vmatprep.subr.mxu0 0.0
      %1857 = vmatpush1.msra.mxu0 0.0
      %1858 = vmatprep.subr.mxu0 0.0
      %1859 = vmatpush1.msra.mxu0 0.0
      %1860 = vmatprep.subr.mxu0 0.0
      %1861 = vmatpush1.msra.mxu0 0.0
      %1862 = vmatprep.subr.mxu0 0.0
      %1863 = vmatpush1.msra.mxu0 0.0
      %1864 = vmatprep.subr.mxu0 0.0
      %1865 = vmatpush1.msra.mxu0 0.0
      %1866 = vmatprep.subr.mxu0 0.0
      %1867 = vmatpush1.msra.mxu0 0.0
      %1868 = vmatprep.subr.mxu0 0.0
      %1869 = vmatpush1.msra.mxu0 0.0
      %1870 = vmatprep.subr.mxu0 0.0
      %1871 = vmatpush1.msra.mxu0 0.0
      %1872 = vmatprep.subr.mxu0 0.0
      %1873 = vmatpush1.msra.mxu0 0.0
      %1874 = vmatprep.subr.mxu0 0.0
      %1875 = vmatpush1.msra.mxu0 0.0
      %1876 = vmatprep.subr.mxu0 0.0
      %1877 = vmatpush1.msra.mxu0 0.0
      %1878 = vmatprep.subr.mxu0 0.0
      %1879 = vmatpush1.msra.mxu0 0.0
      %1880 = vmatprep.subr.mxu0 0.0
      %1881 = vmatpush1.msra.mxu0 0.0
      %1882 = vmatprep.subr.mxu0 0.0
      %1883 = vmatpush1.msra.mxu0 0.0
      %1884 = vmatprep.subr.mxu0 0.0
      %1885 = vmatpush1.msra.mxu0 0.0
      %1886 = vmatprep.subr.mxu0 0.0
      %1887 = vmatpush1.msra.mxu0 0.0
      %1888 = vmatprep.subr.mxu0 0.0
      %1889 = vmatpush1.msra.mxu0 0.0
      %1890 = vmatprep.subr.mxu0 0.0
      %1891 = vmatpush1.msra.mxu0 0.0
      %1892 = vmatprep.subr.mxu0 0.0
      %1893 = vmatpush1.msra.mxu0 0.0
      %1894 = vmatprep.subr.mxu0 0.0
      %1895 = vmatpush1.msra.mxu0 0.0
      %1896 = vmatprep.subr.mxu0 0.0
      %1897 = vmatpush1.msra.mxu0 0.0
      %1898 = vmatprep.mubr.f32.mxu0 0.0
      %1899 = vmatmul.mubr.f32.gmra.mrb[0].mxu0 %v606
      %v1900 = vpop.f32.mrb[0].mxu0
      %v1901 = vadd.f32 0.0, %v1900
      %v1902 = vpop.f32.mrb[0].mxu0
      %1903 = vmatprep.mubr.f32.mxu0 0.0
      %1904 = vmatmul.mubr.f32.gmra.mrb[0].mxu0 %v1829
      %v1905 = vpop.f32.mrb[0].mxu0
      %v1906 = vadd.f32 0.0, %v1905
      %v1907 = vpop.f32.mrb[0].mxu0
      %1908 = vdwg.mxu0
      %v1909 = vadd.f32 %v1823, %v1901
      %v1910 = vadd.f32 %v1824, %v1906
      %v1911 = vcombine.high %v587, %v587
      %v1912 = vrot.slane %v587, 5
      %v1913 = vrot.slane %v1912, 4
      %v1914 = vrot.slane %v1911, 5
      %v1915 = vsel %vm779, %v1913, %v1914
      %v1916 = vcombine.high %v593, %v593
      %v1917 = vrot.slane %v593, 5
      %v1918 = vrot.slane %v1917, 4
      %v1919 = vrot.slane %v1916, 5
      %v1920 = vsel %vm779, %v1918, %v1919
      %s1921 = scalar_lea.vmem %s5, 112
      %v1922 = vld [vmem:[%s1921] sm:$0xff]
      %v1923 = vld [vmem:[%s1921 + $0x8] sm:$0xff]
      %v1924 = vcombine.low %v1379, %v1915
      %v1925 = vsel %vm693, %v1924, 0
      %1927 = vmatprep.subr.mxu0 0.0
      %1928 = vmatpush1.msra.mxu0 %v1922
      %1929 = vmatprep.subr.mxu0 0.0
      %1930 = vmatpush1.msra.mxu0 %v1923
      %1931 = vmatprep.subr.mxu0 0.0
      %1932 = vmatpush1.msra.mxu0 0.0
      %1933 = vmatprep.subr.mxu0 0.0
      %1934 = vmatpush1.msra.mxu0 0.0
      %1935 = vmatprep.subr.mxu0 0.0
      %1936 = vmatpush1.msra.mxu0 0.0
      %1937 = vmatprep.subr.mxu0 0.0
      %1938 = vmatpush1.msra.mxu0 0.0
      %1939 = vmatprep.subr.mxu0 0.0
      %1940 = vmatpush1.msra.mxu0 0.0
      %1941 = vmatprep.subr.mxu0 0.0
      %1942 = vmatpush1.msra.mxu0 0.0
      %1943 = vmatprep.subr.mxu0 0.0
      %1944 = vmatpush1.msra.mxu0 0.0
      %1945 = vmatprep.subr.mxu0 0.0
      %1946 = vmatpush1.msra.mxu0 0.0
      %1947 = vmatprep.subr.mxu0 0.0
      %1948 = vmatpush1.msra.mxu0 0.0
      %1949 = vmatprep.subr.mxu0 0.0
      %1950 = vmatpush1.msra.mxu0 0.0
      %1951 = vmatprep.subr.mxu0 0.0
      %1952 = vmatpush1.msra.mxu0 0.0
      %1953 = vmatprep.subr.mxu0 0.0
      %1954 = vmatpush1.msra.mxu0 0.0
      %1955 = vmatprep.subr.mxu0 0.0
      %1956 = vmatpush1.msra.mxu0 0.0
      %1957 = vmatprep.subr.mxu0 0.0
      %1958 = vmatpush1.msra.mxu0 0.0
      %1959 = vmatprep.subr.mxu0 0.0
      %1960 = vmatpush1.msra.mxu0 0.0
      %1961 = vmatprep.subr.mxu0 0.0
      %1962 = vmatpush1.msra.mxu0 0.0
      %1963 = vmatprep.subr.mxu0 0.0
      %1964 = vmatpush1.msra.mxu0 0.0
      %1965 = vmatprep.subr.mxu0 0.0
      %1966 = vmatpush1.msra.mxu0 0.0
      %1967 = vmatprep.subr.mxu0 0.0
      %1968 = vmatpush1.msra.mxu0 0.0
      %1969 = vmatprep.subr.mxu0 0.0
      %1970 = vmatpush1.msra.mxu0 0.0
      %1971 = vmatprep.subr.mxu0 0.0
      %1972 = vmatpush1.msra.mxu0 0.0
      %1973 = vmatprep.subr.mxu0 0.0
      %1974 = vmatpush1.msra.mxu0 0.0
      %1975 = vmatprep.subr.mxu0 0.0
      %1976 = vmatpush1.msra.mxu0 0.0
      %1977 = vmatprep.subr.mxu0 0.0
      %1978 = vmatpush1.msra.mxu0 0.0
      %1979 = vmatprep.subr.mxu0 0.0
      %1980 = vmatpush1.msra.mxu0 0.0
      %1981 = vmatprep.subr.mxu0 0.0
      %1982 = vmatpush1.msra.mxu0 0.0
      %1983 = vmatprep.subr.mxu0 0.0
      %1984 = vmatpush1.msra.mxu0 0.0
      %1985 = vmatprep.subr.mxu0 0.0
      %1986 = vmatpush1.msra.mxu0 0.0
      %1987 = vmatprep.subr.mxu0 0.0
      %1988 = vmatpush1.msra.mxu0 0.0
      %1989 = vmatprep.subr.mxu0 0.0
      %1990 = vmatpush1.msra.mxu0 0.0
      %1991 = vmatprep.mubr.f32.mxu0 0.0
      %1992 = vmatmul.mubr.f32.gmra.mrb[0].mxu0 %v823
      %v1993 = vpop.f32.mrb[0].mxu0
      %v1994 = vadd.f32 0.0, %v1993
      %v1995 = vpop.f32.mrb[0].mxu0
      %1996 = vmatprep.mubr.f32.mxu0 0.0
      %1997 = vmatmul.mubr.f32.gmra.mrb[0].mxu0 %v1925
      %v1998 = vpop.f32.mrb[0].mxu0
      %v1999 = vadd.f32 0.0, %v1998
      %v2000 = vpop.f32.mrb[0].mxu0
      %2001 = vdwg.mxu0
      %v2002 = vadd.f32 %v1909, %v1994
      %v2003 = vadd.f32 %v1910, %v1999
      %s2004 = scalar_lea.vmem %s6, 28
      %v2005 = vld [vmem:[%s2004] sm:$0xf]
      %v2006 = vcombine.low %v1384, %v1920
      %v2007 = vsel %vm603, %v2006, 0
      %v2010 = vsel %vm608, %v2005, 0
      %2012 = vmatprep.subr.mxu0 0.0
      %2013 = vmatpush1.msra.mxu0 %v2010
      %2014 = vmatprep.subr.mxu0 0.0
      %2015 = vmatpush1.msra.mxu0 0.0
      %2016 = vmatprep.subr.mxu0 0.0
      %2017 = vmatpush1.msra.mxu0 0.0
      %2018 = vmatprep.subr.mxu0 0.0
      %2019 = vmatpush1.msra.mxu0 0.0
      %2020 = vmatprep.subr.mxu0 0.0
      %2021 = vmatpush1.msra.mxu0 0.0
      %2022 = vmatprep.subr.mxu0 0.0
      %2023 = vmatpush1.msra.mxu0 0.0
      %2024 = vmatprep.subr.mxu0 0.0
      %2025 = vmatpush1.msra.mxu0 0.0
      %2026 = vmatprep.subr.mxu0 0.0
      %2027 = vmatpush1.msra.mxu0 0.0
      %2028 = vmatprep.subr.mxu0 0.0
      %2029 = vmatpush1.msra.mxu0 0.0
      %2030 = vmatprep.subr.mxu0 0.0
      %2031 = vmatpush1.msra.mxu0 0.0
      %2032 = vmatprep.subr.mxu0 0.0
      %2033 = vmatpush1.msra.mxu0 0.0
      %2034 = vmatprep.subr.mxu0 0.0
      %2035 = vmatpush1.msra.mxu0 0.0
      %2036 = vmatprep.subr.mxu0 0.0
      %2037 = vmatpush1.msra.mxu0 0.0
      %2038 = vmatprep.subr.mxu0 0.0
      %2039 = vmatpush1.msra.mxu0 0.0
      %2040 = vmatprep.subr.mxu0 0.0
      %2041 = vmatpush1.msra.mxu0 0.0
      %2042 = vmatprep.subr.mxu0 0.0
      %2043 = vmatpush1.msra.mxu0 0.0
      %2044 = vmatprep.subr.mxu0 0.0
      %2045 = vmatpush1.msra.mxu0 0.0
      %2046 = vmatprep.subr.mxu0 0.0
      %2047 = vmatpush1.msra.mxu0 0.0
      %2048 = vmatprep.subr.mxu0 0.0
      %2049 = vmatpush1.msra.mxu0 0.0
      %2050 = vmatprep.subr.mxu0 0.0
      %2051 = vmatpush1.msra.mxu0 0.0
      %2052 = vmatprep.subr.mxu0 0.0
      %2053 = vmatpush1.msra.mxu0 0.0
      %2054 = vmatprep.subr.mxu0 0.0
      %2055 = vmatpush1.msra.mxu0 0.0
      %2056 = vmatprep.subr.mxu0 0.0
      %2057 = vmatpush1.msra.mxu0 0.0
      %2058 = vmatprep.subr.mxu0 0.0
      %2059 = vmatpush1.msra.mxu0 0.0
      %2060 = vmatprep.subr.mxu0 0.0
      %2061 = vmatpush1.msra.mxu0 0.0
      %2062 = vmatprep.subr.mxu0 0.0
      %2063 = vmatpush1.msra.mxu0 0.0
      %2064 = vmatprep.subr.mxu0 0.0
      %2065 = vmatpush1.msra.mxu0 0.0
      %2066 = vmatprep.subr.mxu0 0.0
      %2067 = vmatpush1.msra.mxu0 0.0
      %2068 = vmatprep.subr.mxu0 0.0
      %2069 = vmatpush1.msra.mxu0 0.0
      %2070 = vmatprep.subr.mxu0 0.0
      %2071 = vmatpush1.msra.mxu0 0.0
      %2072 = vmatprep.subr.mxu0 0.0
      %2073 = vmatpush1.msra.mxu0 0.0
      %2074 = vmatprep.subr.mxu0 0.0
      %2075 = vmatpush1.msra.mxu0 0.0
      %2076 = vmatprep.mubr.f32.mxu0 0.0
      %2077 = vmatmul.mubr.f32.gmra.mrb[0].mxu0 %v908
      %v2078 = vpop.f32.mrb[0].mxu0
      %v2079 = vadd.f32 0.0, %v2078
      %v2080 = vpop.f32.mrb[0].mxu0
      %2081 = vmatprep.mubr.f32.mxu0 0.0
      %2082 = vmatmul.mubr.f32.gmra.mrb[0].mxu0 %v2007
      %v2083 = vpop.f32.mrb[0].mxu0
      %v2084 = vadd.f32 0.0, %v2083
      %v2085 = vpop.f32.mrb[0].mxu0
      %2086 = vdwg.mxu0
      %v2087 = vadd.f32 %v2002, %v2079
      %v2088 = vadd.f32 %v2003, %v2084
      %v2089 = vrot.slane %v587, 6
      %v2090 = vrot.slane %v2089, 4
      %v2091 = vrot.slane %v1911, 6
      %v2092 = vsel %vm992, %v2090, %v2091
      %v2093 = vrot.slane %v593, 6
      %v2094 = vrot.slane %v2093, 4
      %v2095 = vrot.slane %v1916, 6
      %v2096 = vsel %vm992, %v2094, %v2095
      %s2097 = scalar_lea.vmem %s5, 128
      %v2098 = vld [vmem:[%s2097] sm:$0xff]
      %v2099 = vld [vmem:[%s2097 + $0x8] sm:$0xff]
      %v2100 = vcombine.low %v1562, %v2092
      %v2101 = vsel %vm693, %v2100, 0
      %2103 = vmatprep.subr.mxu0 0.0
      %2104 = vmatpush1.msra.mxu0 %v2098
      %2105 = vmatprep.subr.mxu0 0.0
      %2106 = vmatpush1.msra.mxu0 %v2099
      %2107 = vmatprep.subr.mxu0 0.0
      %2108 = vmatpush1.msra.mxu0 0.0
      %2109 = vmatprep.subr.mxu0 0.0
      %2110 = vmatpush1.msra.mxu0 0.0
      %2111 = vmatprep.subr.mxu0 0.0
      %2112 = vmatpush1.msra.mxu0 0.0
      %2113 = vmatprep.subr.mxu0 0.0
      %2114 = vmatpush1.msra.mxu0 0.0
      %2115 = vmatprep.subr.mxu0 0.0
      %2116 = vmatpush1.msra.mxu0 0.0
      %2117 = vmatprep.subr.mxu0 0.0
      %2118 = vmatpush1.msra.mxu0 0.0
      %2119 = vmatprep.subr.mxu0 0.0
      %2120 = vmatpush1.msra.mxu0 0.0
      %2121 = vmatprep.subr.mxu0 0.0
      %2122 = vmatpush1.msra.mxu0 0.0
      %2123 = vmatprep.subr.mxu0 0.0
      %2124 = vmatpush1.msra.mxu0 0.0
      %2125 = vmatprep.subr.mxu0 0.0
      %2126 = vmatpush1.msra.mxu0 0.0
      %2127 = vmatprep.subr.mxu0 0.0
      %2128 = vmatpush1.msra.mxu0 0.0
      %2129 = vmatprep.subr.mxu0 0.0
      %2130 = vmatpush1.msra.mxu0 0.0
      %2131 = vmatprep.subr.mxu0 0.0
      %2132 = vmatpush1.msra.mxu0 0.0
      %2133 = vmatprep.subr.mxu0 0.0
      %2134 = vmatpush1.msra.mxu0 0.0
      %2135 = vmatprep.subr.mxu0 0.0
      %2136 = vmatpush1.msra.mxu0 0.0
      %2137 = vmatprep.subr.mxu0 0.0
      %2138 = vmatpush1.msra.mxu0 0.0
      %2139 = vmatprep.subr.mxu0 0.0
      %2140 = vmatpush1.msra.mxu0 0.0
      %2141 = vmatprep.subr.mxu0 0.0
      %2142 = vmatpush1.msra.mxu0 0.0
      %2143 = vmatprep.subr.mxu0 0.0
      %2144 = vmatpush1.msra.mxu0 0.0
      %2145 = vmatprep.subr.mxu0 0.0
      %2146 = vmatpush1.msra.mxu0 0.0
      %2147 = vmatprep.subr.mxu0 0.0
      %2148 = vmatpush1.msra.mxu0 0.0
      %2149 = vmatprep.subr.mxu0 0.0
      %2150 = vmatpush1.msra.mxu0 0.0
      %2151 = vmatprep.subr.mxu0 0.0
      %2152 = vmatpush1.msra.mxu0 0.0
      %2153 = vmatprep.subr.mxu0 0.0
      %2154 = vmatpush1.msra.mxu0 0.0
      %2155 = vmatprep.subr.mxu0 0.0
      %2156 = vmatpush1.msra.mxu0 0.0
      %2157 = vmatprep.subr.mxu0 0.0
      %2158 = vmatpush1.msra.mxu0 0.0
      %2159 = vmatprep.subr.mxu0 0.0
      %2160 = vmatpush1.msra.mxu0 0.0
      %2161 = vmatprep.subr.mxu0 0.0
      %2162 = vmatpush1.msra.mxu0 0.0
      %2163 = vmatprep.subr.mxu0 0.0
      %2164 = vmatpush1.msra.mxu0 0.0
      %2165 = vmatprep.subr.mxu0 0.0
      %2166 = vmatpush1.msra.mxu0 0.0
      %2167 = vmatprep.mubr.f32.mxu0 0.0
      %2168 = vmatmul.mubr.f32.gmra.mrb[0].mxu0 %v1032
      %v2169 = vpop.f32.mrb[0].mxu0
      %v2170 = vadd.f32 0.0, %v2169
      %v2171 = vpop.f32.mrb[0].mxu0
      %2172 = vmatprep.mubr.f32.mxu0 0.0
      %2173 = vmatmul.mubr.f32.gmra.mrb[0].mxu0 %v2101
      %v2174 = vpop.f32.mrb[0].mxu0
      %v2175 = vadd.f32 0.0, %v2174
      %v2176 = vpop.f32.mrb[0].mxu0
      %2177 = vdwg.mxu0
      %v2178 = vadd.f32 %v2087, %v2170
      %v2179 = vadd.f32 %v2088, %v2175
      %s2180 = scalar_lea.vmem %s6, 32
      %v2181 = vld [vmem:[%s2180] sm:$0xf]
      %v2182 = vcombine.low %v1566, %v2096
      %v2183 = vsel %vm603, %v2182, 0
      %v2186 = vsel %vm608, %v2181, 0
      %2188 = vmatprep.subr.mxu0 0.0
      %2189 = vmatpush1.msra.mxu0 %v2186
      %2190 = vmatprep.subr.mxu0 0.0
      %2191 = vmatpush1.msra.mxu0 0.0
      %2192 = vmatprep.subr.mxu0 0.0
      %2193 = vmatpush1.msra.mxu0 0.0
      %2194 = vmatprep.subr.mxu0 0.0
      %2195 = vmatpush1.msra.mxu0 0.0
      %2196 = vmatprep.subr.mxu0 0.0
      %2197 = vmatpush1.msra.mxu0 0.0
      %2198 = vmatprep.subr.mxu0 0.0
      %2199 = vmatpush1.msra.mxu0 0.0
      %2200 = vmatprep.subr.mxu0 0.0
      %2201 = vmatpush1.msra.mxu0 0.0
      %2202 = vmatprep.subr.mxu0 0.0
      %2203 = vmatpush1.msra.mxu0 0.0
      %2204 = vmatprep.subr.mxu0 0.0
      %2205 = vmatpush1.msra.mxu0 0.0
      %2206 = vmatprep.subr.mxu0 0.0
      %2207 = vmatpush1.msra.mxu0 0.0
      %2208 = vmatprep.subr.mxu0 0.0
      %2209 = vmatpush1.msra.mxu0 0.0
      %2210 = vmatprep.subr.mxu0 0.0
      %2211 = vmatpush1.msra.mxu0 0.0
      %2212 = vmatprep.subr.mxu0 0.0
      %2213 = vmatpush1.msra.mxu0 0.0
      %2214 = vmatprep.subr.mxu0 0.0
      %2215 = vmatpush1.msra.mxu0 0.0
      %2216 = vmatprep.subr.mxu0 0.0
      %2217 = vmatpush1.msra.mxu0 0.0
      %2218 = vmatprep.subr.mxu0 0.0
      %2219 = vmatpush1.msra.mxu0 0.0
      %2220 = vmatprep.subr.mxu0 0.0
      %2221 = vmatpush1.msra.mxu0 0.0
      %2222 = vmatprep.subr.mxu0 0.0
      %2223 = vmatpush1.msra.mxu0 0.0
      %2224 = vmatprep.subr.mxu0 0.0
      %2225 = vmatpush1.msra.mxu0 0.0
      %2226 = vmatprep.subr.mxu0 0.0
      %2227 = vmatpush1.msra.mxu0 0.0
      %2228 = vmatprep.subr.mxu0 0.0
      %2229 = vmatpush1.msra.mxu0 0.0
      %2230 = vmatprep.subr.mxu0 0.0
      %2231 = vmatpush1.msra.mxu0 0.0
      %2232 = vmatprep.subr.mxu0 0.0
      %2233 = vmatpush1.msra.mxu0 0.0
      %2234 = vmatprep.subr.mxu0 0.0
      %2235 = vmatpush1.msra.mxu0 0.0
      %2236 = vmatprep.subr.mxu0 0.0
      %2237 = vmatpush1.msra.mxu0 0.0
      %2238 = vmatprep.subr.mxu0 0.0
      %2239 = vmatpush1.msra.mxu0 0.0
      %2240 = vmatprep.subr.mxu0 0.0
      %2241 = vmatpush1.msra.mxu0 0.0
      %2242 = vmatprep.subr.mxu0 0.0
      %2243 = vmatpush1.msra.mxu0 0.0
      %2244 = vmatprep.subr.mxu0 0.0
      %2245 = vmatpush1.msra.mxu0 0.0
      %2246 = vmatprep.subr.mxu0 0.0
      %2247 = vmatpush1.msra.mxu0 0.0
      %2248 = vmatprep.subr.mxu0 0.0
      %2249 = vmatpush1.msra.mxu0 0.0
      %2250 = vmatprep.subr.mxu0 0.0
      %2251 = vmatpush1.msra.mxu0 0.0
      %2252 = vmatprep.mubr.f32.mxu0 0.0
      %2253 = vmatmul.mubr.f32.gmra.mrb[0].mxu0 %v1117
      %v2254 = vpop.f32.mrb[0].mxu0
      %v2255 = vadd.f32 0.0, %v2254
      %v2256 = vpop.f32.mrb[0].mxu0
      %2257 = vmatprep.mubr.f32.mxu0 0.0
      %2258 = vmatmul.mubr.f32.gmra.mrb[0].mxu0 %v2183
      %v2259 = vpop.f32.mrb[0].mxu0
      %v2260 = vadd.f32 0.0, %v2259
      %v2261 = vpop.f32.mrb[0].mxu0
      %2262 = vdwg.mxu0
      %v2263 = vadd.f32 %v2178, %v2255
      %v2264 = vadd.f32 %v2179, %v2260
      %v2265 = vld [vmem:[%s7] sm:$0x1]
      %v2267 = vlaneseq
      %v2268 = vshrl.u32 %v2267, 7
      %v2269 = vsub.s32 0, %v2268
      %v2270 = vrot.slane %v2265, %v2269
      %v2272 = vadd.f32 %v2263, %v2270
      %v2273 = vadd.f32 %v2264, %v2270
      %vm2274 = vcmp.gt.f32.partialorder %v2272, 0.0
      %vm2275 = vcmp.gt.f32.partialorder %v2273, 0.0
      %v2276 = vmin.f32 %v2272, 0.0
      %v2277 = vmin.f32 %v2273, 0.0
      %v2278 = vmul.f32 %v2276, 1.442695
      %v2279 = vpow.pop %v2278
      %v2280 = vmul.f32 %v2277, 1.442695
      %v2281 = vpow.pop %v2280
      %v2282 = vsub.f32 %v2279, 1.0
      %v2283 = vsub.f32 %v2281, 1.0
      %v2284 = vsel %vm2274, %v2272, %v2282
      %v2285 = vsel %vm2275, %v2273, %v2283
      %vm2286 = vcmask 259072
      %2287 = vst.msk [vmem:[#allocation3] sm:$0x3f] %vm2286, 0.0
      %2288 = vst.msk [vmem:[#allocation3 + $0x8] sm:$0x3f] %vm2286, 0.0
      %2289 = vst.msk [vmem:[#allocation3 + $0x10] sm:$0x3f] %vm2286, 0.0
      %2290 = vst.msk [vmem:[#allocation3 + $0x18] sm:$0x3f] %vm2286, 0.0
      %2291 = vst.msk [vmem:[#allocation3 + $0x20] sm:$0x3f] %vm2286, 0.0
      %2292 = vst.msk [vmem:[#allocation3 + $0x28] sm:$0x3f] %vm2286, 0.0
      %v2295 = vcombine.high %v2284, %v2284
      %v2296 = vcombine.high %v2285, %v2285
      %s2299 = scalar_lea.vmem [#allocation3], 8
      %vm2300 = vcmask 257024
      %2301 = vst.msk [vmem:[%s2299 + $0x1] sm:$0xf] %vm2300, %v2284
      %2302 = vst.msk [vmem:[%s2299 + $0x9] sm:$0xf] %vm2300, %v2295
      %2303 = vst.msk [vmem:[%s2299 + $0x11] sm:$0xf] %vm2300, %v2285
      %2304 = vst.msk [vmem:[%s2299 + $0x19] sm:$0xf] %vm2300, %v2296
      %v2305 = vld [vmem:[#allocation3] sm:$0x3f]
      %v2306 = vld [vmem:[#allocation3 + $0x8] sm:$0x3f]
      %v2307 = vld [vmem:[#allocation3 + $0x10] sm:$0x3f]
      %v2308 = vld [vmem:[#allocation3 + $0x18] sm:$0x3f]
      %v2309 = vld [vmem:[#allocation3 + $0x20] sm:$0x3f]
      %v2310 = vld [vmem:[#allocation3 + $0x28] sm:$0x3f]
      %v2311 = vld [vmem:[%s8] sm:$0xff]
      %v2312 = vld [vmem:[%s8 + $0x8] sm:$0xff]
      %v2313 = vld [vmem:[%s8 + $0x10] sm:$0xff]
      %v2314 = vld [vmem:[%s8 + $0x18] sm:$0xff]
      %v2319 = vcombine.high %v2305, %v2305
      %v2320 = vcombine.high %v2306, %v2306
      %v2321 = vcombine.high %v2307, %v2307
      %v2322 = vcombine.high %v2308, %v2308
      %v2323 = vrot.slane %v2305, 5
      %v2324 = vrot.slane %v2323, 4
      %v2325 = vrot.slane %v2319, 5
      %v2326 = vsel %vm779, %v2324, %v2325
      %v2327 = vrot.slane %v2306, 5
      %v2328 = vrot.slane %v2327, 4
      %v2329 = vrot.slane %v2320, 5
      %v2330 = vsel %vm779, %v2328, %v2329
      %v2331 = vrot.slane %v2307, 5
      %v2332 = vrot.slane %v2331, 4
      %v2333 = vrot.slane %v2321, 5
      %v2334 = vsel %vm779, %v2332, %v2333
      %v2335 = vrot.slane %v2308, 5
      %v2336 = vrot.slane %v2335, 4
      %v2337 = vrot.slane %v2322, 5
      %v2338 = vsel %vm779, %v2336, %v2337
      %s2339 = scalar_lea.vmem %s8, 32
      %v2340 = vld [vmem:[%s2339] sm:$0xff]
      %v2341 = vld [vmem:[%s2339 + $0x8] sm:$0xff]
      %v2342 = vld [vmem:[%s2339 + $0x10] sm:$0xff]
      %v2343 = vld [vmem:[%s2339 + $0x18] sm:$0xff]
      %v2344 = vcombine.low %v2326, %v2330
      %v2345 = vcombine.low %v2334, %v2338
      %v2346 = vsel %vm483, %v2344, 0
      %v2348 = vsel %vm483, %v2345, 0
      %2350 = vmatprep.subr.mxu0 0.0
      %2351 = vmatpush1.msra.mxu0 %v2340
      %2352 = vmatprep.subr.mxu0 0.0
      %2353 = vmatpush1.msra.mxu0 %v2341
      %2354 = vmatprep.subr.mxu0 0.0
      %2355 = vmatpush1.msra.mxu0 %v2342
      %2356 = vmatprep.subr.mxu0 0.0
      %2357 = vmatpush1.msra.mxu0 %v2343
      %2358 = vmatprep.subr.mxu0 0.0
      %2359 = vmatpush1.msra.mxu0 0.0
      %2360 = vmatprep.subr.mxu0 0.0
      %2361 = vmatpush1.msra.mxu0 0.0
      %2362 = vmatprep.subr.mxu0 0.0
      %2363 = vmatpush1.msra.mxu0 0.0
      %2364 = vmatprep.subr.mxu0 0.0
      %2365 = vmatpush1.msra.mxu0 0.0
      %2366 = vmatprep.subr.mxu0 0.0
      %2367 = vmatpush1.msra.mxu0 0.0
      %2368 = vmatprep.subr.mxu0 0.0
      %2369 = vmatpush1.msra.mxu0 0.0
      %2370 = vmatprep.subr.mxu0 0.0
      %2371 = vmatpush1.msra.mxu0 0.0
      %2372 = vmatprep.subr.mxu0 0.0
      %2373 = vmatpush1.msra.mxu0 0.0
      %2374 = vmatprep.subr.mxu0 0.0
      %2375 = vmatpush1.msra.mxu0 0.0
      %2376 = vmatprep.subr.mxu0 0.0
      %2377 = vmatpush1.msra.mxu0 0.0
      %2378 = vmatprep.subr.mxu0 0.0
      %2379 = vmatpush1.msra.mxu0 0.0
      %2380 = vmatprep.subr.mxu0 0.0
      %2381 = vmatpush1.msra.mxu0 0.0
      %2382 = vmatprep.subr.mxu0 0.0
      %2383 = vmatpush1.msra.mxu0 0.0
      %2384 = vmatprep.subr.mxu0 0.0
      %2385 = vmatpush1.msra.mxu0 0.0
      %2386 = vmatprep.subr.mxu0 0.0
      %2387 = vmatpush1.msra.mxu0 0.0
      %2388 = vmatprep.subr.mxu0 0.0
      %2389 = vmatpush1.msra.mxu0 0.0
      %2390 = vmatprep.subr.mxu0 0.0
      %2391 = vmatpush1.msra.mxu0 0.0
      %2392 = vmatprep.subr.mxu0 0.0
      %2393 = vmatpush1.msra.mxu0 0.0
      %2394 = vmatprep.subr.mxu0 0.0
      %2395 = vmatpush1.msra.mxu0 0.0
      %2396 = vmatprep.subr.mxu0 0.0
      %2397 = vmatpush1.msra.mxu0 0.0
      %2398 = vmatprep.subr.mxu0 0.0
      %2399 = vmatpush1.msra.mxu0 0.0
      %2400 = vmatprep.subr.mxu0 0.0
      %2401 = vmatpush1.msra.mxu0 0.0
      %2402 = vmatprep.subr.mxu0 0.0
      %2403 = vmatpush1.msra.mxu0 0.0
      %2404 = vmatprep.subr.mxu0 0.0
      %2405 = vmatpush1.msra.mxu0 0.0
      %2406 = vmatprep.subr.mxu0 0.0
      %2407 = vmatpush1.msra.mxu0 0.0
      %2408 = vmatprep.subr.mxu0 0.0
      %2409 = vmatpush1.msra.mxu0 0.0
      %2410 = vmatprep.subr.mxu0 0.0
      %2411 = vmatpush1.msra.mxu0 0.0
      %2412 = vmatprep.subr.mxu0 0.0
      %2413 = vmatpush1.msra.mxu0 0.0
      %2414 = vmatprep.mubr.f32.mxu0 0.0
      %2415 = vmatmul.mubr.f32.gmra.mrb[0].mxu0 %v2346
      %v2416 = vpop.f32.mrb[0].mxu0
      %v2417 = vadd.f32 0.0, %v2416
      %v2418 = vpop.f32.mrb[0].mxu0
      %2419 = vmatprep.mubr.f32.mxu0 0.0
      %2420 = vmatmul.mubr.f32.gmra.mrb[0].mxu0 %v2348
      %v2421 = vpop.f32.mrb[0].mxu0
      %v2422 = vadd.f32 0.0, %v2421
      %v2423 = vpop.f32.mrb[0].mxu0
      %2424 = vdwg.mxu0
      %v2425 = vcombine.low %v2305, %v2306
      %v2426 = vcombine.low %v2307, %v2308
      %v2427 = vsel %vm483, %v2425, 0
      %v2429 = vsel %vm483, %v2426, 0
      %2431 = vmatprep.subr.mxu0 0.0
      %2432 = vmatpush1.msra.mxu0 %v2311
      %2433 = vmatprep.subr.mxu0 0.0
      %2434 = vmatpush1.msra.mxu0 %v2312
      %2435 = vmatprep.subr.mxu0 0.0
      %2436 = vmatpush1.msra.mxu0 %v2313
      %2437 = vmatprep.subr.mxu0 0.0
      %2438 = vmatpush1.msra.mxu0 %v2314
      %2439 = vmatprep.subr.mxu0 0.0
      %2440 = vmatpush1.msra.mxu0 0.0
      %2441 = vmatprep.subr.mxu0 0.0
      %2442 = vmatpush1.msra.mxu0 0.0
      %2443 = vmatprep.subr.mxu0 0.0
      %2444 = vmatpush1.msra.mxu0 0.0
      %2445 = vmatprep.subr.mxu0 0.0
      %2446 = vmatpush1.msra.mxu0 0.0
      %2447 = vmatprep.subr.mxu0 0.0
      %2448 = vmatpush1.msra.mxu0 0.0
      %2449 = vmatprep.subr.mxu0 0.0
      %2450 = vmatpush1.msra.mxu0 0.0
      %2451 = vmatprep.subr.mxu0 0.0
      %2452 = vmatpush1.msra.mxu0 0.0
      %2453 = vmatprep.subr.mxu0 0.0
      %2454 = vmatpush1.msra.mxu0 0.0
      %2455 = vmatprep.subr.mxu0 0.0
      %2456 = vmatpush1.msra.mxu0 0.0
      %2457 = vmatprep.subr.mxu0 0.0
      %2458 = vmatpush1.msra.mxu0 0.0
      %2459 = vmatprep.subr.mxu0 0.0
      %2460 = vmatpush1.msra.mxu0 0.0
      %2461 = vmatprep.subr.mxu0 0.0
      %2462 = vmatpush1.msra.mxu0 0.0
      %2463 = vmatprep.subr.mxu0 0.0
      %2464 = vmatpush1.msra.mxu0 0.0
      %2465 = vmatprep.subr.mxu0 0.0
      %2466 = vmatpush1.msra.mxu0 0.0
      %2467 = vmatprep.subr.mxu0 0.0
      %2468 = vmatpush1.msra.mxu0 0.0
      %2469 = vmatprep.subr.mxu0 0.0
      %2470 = vmatpush1.msra.mxu0 0.0
      %2471 = vmatprep.subr.mxu0 0.0
      %2472 = vmatpush1.msra.mxu0 0.0
      %2473 = vmatprep.subr.mxu0 0.0
      %2474 = vmatpush1.msra.mxu0 0.0
      %2475 = vmatprep.subr.mxu0 0.0
      %2476 = vmatpush1.msra.mxu0 0.0
      %2477 = vmatprep.subr.mxu0 0.0
      %2478 = vmatpush1.msra.mxu0 0.0
      %2479 = vmatprep.subr.mxu0 0.0
      %2480 = vmatpush1.msra.mxu0 0.0
      %2481 = vmatprep.subr.mxu0 0.0
      %2482 = vmatpush1.msra.mxu0 0.0
      %2483 = vmatprep.subr.mxu0 0.0
      %2484 = vmatpush1.msra.mxu0 0.0
      %2485 = vmatprep.subr.mxu0 0.0
      %2486 = vmatpush1.msra.mxu0 0.0
      %2487 = vmatprep.subr.mxu0 0.0
      %2488 = vmatpush1.msra.mxu0 0.0
      %2489 = vmatprep.subr.mxu0 0.0
      %2490 = vmatpush1.msra.mxu0 0.0
      %2491 = vmatprep.subr.mxu0 0.0
      %2492 = vmatpush1.msra.mxu0 0.0
      %2493 = vmatprep.subr.mxu0 0.0
      %2494 = vmatpush1.msra.mxu0 0.0
      %2495 = vmatprep.mubr.f32.mxu0 0.0
      %2496 = vmatmul.mubr.f32.gmra.mrb[0].mxu0 %v2427
      %v2497 = vpop.f32.mrb[0].mxu0
      %v2498 = vadd.f32 %v2417, %v2497
      %v2499 = vpop.f32.mrb[0].mxu0
      %2500 = vmatprep.mubr.f32.mxu0 0.0
      %2501 = vmatmul.mubr.f32.gmra.mrb[0].mxu0 %v2429
      %v2502 = vpop.f32.mrb[0].mxu0
      %v2503 = vadd.f32 %v2422, %v2502
      %v2504 = vpop.f32.mrb[0].mxu0
      %2505 = vdwg.mxu0
      %v2506 = vrot.slane %v2305, 6
      %v2507 = vrot.slane %v2506, 4
      %v2508 = vrot.slane %v2319, 6
      %v2509 = vsel %vm992, %v2507, %v2508
      %v2510 = vrot.slane %v2306, 6
      %v2511 = vrot.slane %v2510, 4
      %v2512 = vrot.slane %v2320, 6
      %v2513 = vsel %vm992, %v2511, %v2512
      %v2514 = vrot.slane %v2307, 6
      %v2515 = vrot.slane %v2514, 4
      %v2516 = vrot.slane %v2321, 6
      %v2517 = vsel %vm992, %v2515, %v2516
      %v2518 = vrot.slane %v2308, 6
      %v2519 = vrot.slane %v2518, 4
      %v2520 = vrot.slane %v2322, 6
      %v2521 = vsel %vm992, %v2519, %v2520
      %s2522 = scalar_lea.vmem %s8, 64
      %v2523 = vld [vmem:[%s2522] sm:$0xff]
      %v2524 = vld [vmem:[%s2522 + $0x8] sm:$0xff]
      %v2525 = vld [vmem:[%s2522 + $0x10] sm:$0xff]
      %v2526 = vld [vmem:[%s2522 + $0x18] sm:$0xff]
      %v2527 = vcombine.low %v2509, %v2513
      %v2528 = vcombine.low %v2517, %v2521
      %v2529 = vsel %vm483, %v2527, 0
      %v2531 = vsel %vm483, %v2528, 0
      %2533 = vmatprep.subr.mxu0 0.0
      %2534 = vmatpush1.msra.mxu0 %v2523
      %2535 = vmatprep.subr.mxu0 0.0
      %2536 = vmatpush1.msra.mxu0 %v2524
      %2537 = vmatprep.subr.mxu0 0.0
      %2538 = vmatpush1.msra.mxu0 %v2525
      %2539 = vmatprep.subr.mxu0 0.0
      %2540 = vmatpush1.msra.mxu0 %v2526
      %2541 = vmatprep.subr.mxu0 0.0
      %2542 = vmatpush1.msra.mxu0 0.0
      %2543 = vmatprep.subr.mxu0 0.0
      %2544 = vmatpush1.msra.mxu0 0.0
      %2545 = vmatprep.subr.mxu0 0.0
      %2546 = vmatpush1.msra.mxu0 0.0
      %2547 = vmatprep.subr.mxu0 0.0
      %2548 = vmatpush1.msra.mxu0 0.0
      %2549 = vmatprep.subr.mxu0 0.0
      %2550 = vmatpush1.msra.mxu0 0.0
      %2551 = vmatprep.subr.mxu0 0.0
      %2552 = vmatpush1.msra.mxu0 0.0
      %2553 = vmatprep.subr.mxu0 0.0
      %2554 = vmatpush1.msra.mxu0 0.0
      %2555 = vmatprep.subr.mxu0 0.0
      %2556 = vmatpush1.msra.mxu0 0.0
      %2557 = vmatprep.subr.mxu0 0.0
      %2558 = vmatpush1.msra.mxu0 0.0
      %2559 = vmatprep.subr.mxu0 0.0
      %2560 = vmatpush1.msra.mxu0 0.0
      %2561 = vmatprep.subr.mxu0 0.0
      %2562 = vmatpush1.msra.mxu0 0.0
      %2563 = vmatprep.subr.mxu0 0.0
      %2564 = vmatpush1.msra.mxu0 0.0
      %2565 = vmatprep.subr.mxu0 0.0
      %2566 = vmatpush1.msra.mxu0 0.0
      %2567 = vmatprep.subr.mxu0 0.0
      %2568 = vmatpush1.msra.mxu0 0.0
      %2569 = vmatprep.subr.mxu0 0.0
      %2570 = vmatpush1.msra.mxu0 0.0
      %2571 = vmatprep.subr.mxu0 0.0
      %2572 = vmatpush1.msra.mxu0 0.0
      %2573 = vmatprep.subr.mxu0 0.0
      %2574 = vmatpush1.msra.mxu0 0.0
      %2575 = vmatprep.subr.mxu0 0.0
      %2576 = vmatpush1.msra.mxu0 0.0
      %2577 = vmatprep.subr.mxu0 0.0
      %2578 = vmatpush1.msra.mxu0 0.0
      %2579 = vmatprep.subr.mxu0 0.0
      %2580 = vmatpush1.msra.mxu0 0.0
      %2581 = vmatprep.subr.mxu0 0.0
      %2582 = vmatpush1.msra.mxu0 0.0
      %2583 = vmatprep.subr.mxu0 0.0
      %2584 = vmatpush1.msra.mxu0 0.0
      %2585 = vmatprep.subr.mxu0 0.0
      %2586 = vmatpush1.msra.mxu0 0.0
      %2587 = vmatprep.subr.mxu0 0.0
      %2588 = vmatpush1.msra.mxu0 0.0
      %2589 = vmatprep.subr.mxu0 0.0
      %2590 = vmatpush1.msra.mxu0 0.0
      %2591 = vmatprep.subr.mxu0 0.0
      %2592 = vmatpush1.msra.mxu0 0.0
      %2593 = vmatprep.subr.mxu0 0.0
      %2594 = vmatpush1.msra.mxu0 0.0
      %2595 = vmatprep.subr.mxu0 0.0
      %2596 = vmatpush1.msra.mxu0 0.0
      %2597 = vmatprep.mubr.f32.mxu0 0.0
      %2598 = vmatmul.mubr.f32.gmra.mrb[0].mxu0 %v2529
      %v2599 = vpop.f32.mrb[0].mxu0
      %v2600 = vadd.f32 0.0, %v2599
      %v2601 = vpop.f32.mrb[0].mxu0
      %2602 = vmatprep.mubr.f32.mxu0 0.0
      %2603 = vmatmul.mubr.f32.gmra.mrb[0].mxu0 %v2531
      %v2604 = vpop.f32.mrb[0].mxu0
      %v2605 = vadd.f32 0.0, %v2604
      %v2606 = vpop.f32.mrb[0].mxu0
      %2607 = vdwg.mxu0
      %v2608 = vadd.f32 %v2498, %v2600
      %v2609 = vadd.f32 %v2503, %v2605
      %s2610 = scalar_lea.vmem %s8, 96
      %v2611 = vld [vmem:[%s2610] sm:$0xff]
      %v2612 = vld [vmem:[%s2610 + $0x8] sm:$0xff]
      %v2613 = vld [vmem:[%s2610 + $0x10] sm:$0xff]
      %v2614 = vld [vmem:[%s2610 + $0x18] sm:$0xff]
      %v2616 = vcombine.low %v2306, %v2307
      %v2617 = vcombine.low %v2308, %v2309
      %v2618 = vsel %vm483, %v2616, 0
      %v2620 = vsel %vm483, %v2617, 0
      %2622 = vmatprep.subr.mxu0 0.0
      %2623 = vmatpush1.msra.mxu0 %v2611
      %2624 = vmatprep.subr.mxu0 0.0
      %2625 = vmatpush1.msra.mxu0 %v2612
      %2626 = vmatprep.subr.mxu0 0.0
      %2627 = vmatpush1.msra.mxu0 %v2613
      %2628 = vmatprep.subr.mxu0 0.0
      %2629 = vmatpush1.msra.mxu0 %v2614
      %2630 = vmatprep.subr.mxu0 0.0
      %2631 = vmatpush1.msra.mxu0 0.0
      %2632 = vmatprep.subr.mxu0 0.0
      %2633 = vmatpush1.msra.mxu0 0.0
      %2634 = vmatprep.subr.mxu0 0.0
      %2635 = vmatpush1.msra.mxu0 0.0
      %2636 = vmatprep.subr.mxu0 0.0
      %2637 = vmatpush1.msra.mxu0 0.0
      %2638 = vmatprep.subr.mxu0 0.0
      %2639 = vmatpush1.msra.mxu0 0.0
      %2640 = vmatprep.subr.mxu0 0.0
      %2641 = vmatpush1.msra.mxu0 0.0
      %2642 = vmatprep.subr.mxu0 0.0
      %2643 = vmatpush1.msra.mxu0 0.0
      %2644 = vmatprep.subr.mxu0 0.0
      %2645 = vmatpush1.msra.mxu0 0.0
      %2646 = vmatprep.subr.mxu0 0.0
      %2647 = vmatpush1.msra.mxu0 0.0
      %2648 = vmatprep.subr.mxu0 0.0
      %2649 = vmatpush1.msra.mxu0 0.0
      %2650 = vmatprep.subr.mxu0 0.0
      %2651 = vmatpush1.msra.mxu0 0.0
      %2652 = vmatprep.subr.mxu0 0.0
      %2653 = vmatpush1.msra.mxu0 0.0
      %2654 = vmatprep.subr.mxu0 0.0
      %2655 = vmatpush1.msra.mxu0 0.0
      %2656 = vmatprep.subr.mxu0 0.0
      %2657 = vmatpush1.msra.mxu0 0.0
      %2658 = vmatprep.subr.mxu0 0.0
      %2659 = vmatpush1.msra.mxu0 0.0
      %2660 = vmatprep.subr.mxu0 0.0
      %2661 = vmatpush1.msra.mxu0 0.0
      %2662 = vmatprep.subr.mxu0 0.0
      %2663 = vmatpush1.msra.mxu0 0.0
      %2664 = vmatprep.subr.mxu0 0.0
      %2665 = vmatpush1.msra.mxu0 0.0
      %2666 = vmatprep.subr.mxu0 0.0
      %2667 = vmatpush1.msra.mxu0 0.0
      %2668 = vmatprep.subr.mxu0 0.0
      %2669 = vmatpush1.msra.mxu0 0.0
      %2670 = vmatprep.subr.mxu0 0.0
      %2671 = vmatpush1.msra.mxu0 0.0
      %2672 = vmatprep.subr.mxu0 0.0
      %2673 = vmatpush1.msra.mxu0 0.0
      %2674 = vmatprep.subr.mxu0 0.0
      %2675 = vmatpush1.msra.mxu0 0.0
      %2676 = vmatprep.subr.mxu0 0.0
      %2677 = vmatpush1.msra.mxu0 0.0
      %2678 = vmatprep.subr.mxu0 0.0
      %2679 = vmatpush1.msra.mxu0 0.0
      %2680 = vmatprep.subr.mxu0 0.0
      %2681 = vmatpush1.msra.mxu0 0.0
      %2682 = vmatprep.subr.mxu0 0.0
      %2683 = vmatpush1.msra.mxu0 0.0
      %2684 = vmatprep.subr.mxu0 0.0
      %2685 = vmatpush1.msra.mxu0 0.0
      %2686 = vmatprep.mubr.f32.mxu0 0.0
      %2687 = vmatmul.mubr.f32.gmra.mrb[0].mxu0 %v2618
      %v2688 = vpop.f32.mrb[0].mxu0
      %v2689 = vadd.f32 0.0, %v2688
      %v2690 = vpop.f32.mrb[0].mxu0
      %2691 = vmatprep.mubr.f32.mxu0 0.0
      %2692 = vmatmul.mubr.f32.gmra.mrb[0].mxu0 %v2620
      %v2693 = vpop.f32.mrb[0].mxu0
      %v2694 = vadd.f32 0.0, %v2693
      %v2695 = vpop.f32.mrb[0].mxu0
      %2696 = vdwg.mxu0
      %v2697 = vadd.f32 %v2608, %v2689
      %v2698 = vadd.f32 %v2609, %v2694
      %v2699 = vcombine.high %v2309, %v2309
      %v2700 = vrot.slane %v2309, 5
      %v2701 = vrot.slane %v2700, 4
      %v2702 = vrot.slane %v2699, 5
      %v2703 = vsel %vm779, %v2701, %v2702
      %s2704 = scalar_lea.vmem %s8, 128
      %v2705 = vld [vmem:[%s2704] sm:$0xff]
      %v2706 = vld [vmem:[%s2704 + $0x8] sm:$0xff]
      %v2707 = vld [vmem:[%s2704 + $0x10] sm:$0xff]
      %v2708 = vld [vmem:[%s2704 + $0x18] sm:$0xff]
      %v2709 = vcombine.low %v2330, %v2334
      %v2710 = vcombine.low %v2338, %v2703
      %v2711 = vsel %vm483, %v2709, 0
      %v2713 = vsel %vm483, %v2710, 0
      %2715 = vmatprep.subr.mxu0 0.0
      %2716 = vmatpush1.msra.mxu0 %v2705
      %2717 = vmatprep.subr.mxu0 0.0
      %2718 = vmatpush1.msra.mxu0 %v2706
      %2719 = vmatprep.subr.mxu0 0.0
      %2720 = vmatpush1.msra.mxu0 %v2707
      %2721 = vmatprep.subr.mxu0 0.0
      %2722 = vmatpush1.msra.mxu0 %v2708
      %2723 = vmatprep.subr.mxu0 0.0
      %2724 = vmatpush1.msra.mxu0 0.0
      %2725 = vmatprep.subr.mxu0 0.0
      %2726 = vmatpush1.msra.mxu0 0.0
      %2727 = vmatprep.subr.mxu0 0.0
      %2728 = vmatpush1.msra.mxu0 0.0
      %2729 = vmatprep.subr.mxu0 0.0
      %2730 = vmatpush1.msra.mxu0 0.0
      %2731 = vmatprep.subr.mxu0 0.0
      %2732 = vmatpush1.msra.mxu0 0.0
      %2733 = vmatprep.subr.mxu0 0.0
      %2734 = vmatpush1.msra.mxu0 0.0
      %2735 = vmatprep.subr.mxu0 0.0
      %2736 = vmatpush1.msra.mxu0 0.0
      %2737 = vmatprep.subr.mxu0 0.0
      %2738 = vmatpush1.msra.mxu0 0.0
      %2739 = vmatprep.subr.mxu0 0.0
      %2740 = vmatpush1.msra.mxu0 0.0
      %2741 = vmatprep.subr.mxu0 0.0
      %2742 = vmatpush1.msra.mxu0 0.0
      %2743 = vmatprep.subr.mxu0 0.0
      %2744 = vmatpush1.msra.mxu0 0.0
      %2745 = vmatprep.subr.mxu0 0.0
      %2746 = vmatpush1.msra.mxu0 0.0
      %2747 = vmatprep.subr.mxu0 0.0
      %2748 = vmatpush1.msra.mxu0 0.0
      %2749 = vmatprep.subr.mxu0 0.0
      %2750 = vmatpush1.msra.mxu0 0.0
      %2751 = vmatprep.subr.mxu0 0.0
      %2752 = vmatpush1.msra.mxu0 0.0
      %2753 = vmatprep.subr.mxu0 0.0
      %2754 = vmatpush1.msra.mxu0 0.0
      %2755 = vmatprep.subr.mxu0 0.0
      %2756 = vmatpush1.msra.mxu0 0.0
      %2757 = vmatprep.subr.mxu0 0.0
      %2758 = vmatpush1.msra.mxu0 0.0
      %2759 = vmatprep.subr.mxu0 0.0
      %2760 = vmatpush1.msra.mxu0 0.0
      %2761 = vmatprep.subr.mxu0 0.0
      %2762 = vmatpush1.msra.mxu0 0.0
      %2763 = vmatprep.subr.mxu0 0.0
      %2764 = vmatpush1.msra.mxu0 0.0
      %2765 = vmatprep.subr.mxu0 0.0
      %2766 = vmatpush1.msra.mxu0 0.0
      %2767 = vmatprep.subr.mxu0 0.0
      %2768 = vmatpush1.msra.mxu0 0.0
      %2769 = vmatprep.subr.mxu0 0.0
      %2770 = vmatpush1.msra.mxu0 0.0
      %2771 = vmatprep.subr.mxu0 0.0
      %2772 = vmatpush1.msra.mxu0 0.0
      %2773 = vmatprep.subr.mxu0 0.0
      %2774 = vmatpush1.msra.mxu0 0.0
      %2775 = vmatprep.subr.mxu0 0.0
      %2776 = vmatpush1.msra.mxu0 0.0
      %2777 = vmatprep.subr.mxu0 0.0
      %2778 = vmatpush1.msra.mxu0 0.0
      %2779 = vmatprep.mubr.f32.mxu0 0.0
      %2780 = vmatmul.mubr.f32.gmra.mrb[0].mxu0 %v2711
      %v2781 = vpop.f32.mrb[0].mxu0
      %v2782 = vadd.f32 0.0, %v2781
      %v2783 = vpop.f32.mrb[0].mxu0
      %2784 = vmatprep.mubr.f32.mxu0 0.0
      %2785 = vmatmul.mubr.f32.gmra.mrb[0].mxu0 %v2713
      %v2786 = vpop.f32.mrb[0].mxu0
      %v2787 = vadd.f32 0.0, %v2786
      %v2788 = vpop.f32.mrb[0].mxu0
      %2789 = vdwg.mxu0
      %v2790 = vadd.f32 %v2697, %v2782
      %v2791 = vadd.f32 %v2698, %v2787
      %v2792 = vrot.slane %v2309, 6
      %v2793 = vrot.slane %v2792, 4
      %v2794 = vrot.slane %v2699, 6
      %v2795 = vsel %vm992, %v2793, %v2794
      %s2796 = scalar_lea.vmem %s8, 160
      %v2797 = vld [vmem:[%s2796] sm:$0xff]
      %v2798 = vld [vmem:[%s2796 + $0x8] sm:$0xff]
      %v2799 = vld [vmem:[%s2796 + $0x10] sm:$0xff]
      %v2800 = vld [vmem:[%s2796 + $0x18] sm:$0xff]
      %v2801 = vcombine.low %v2513, %v2517
      %v2802 = vcombine.low %v2521, %v2795
      %v2803 = vsel %vm483, %v2801, 0
      %v2805 = vsel %vm483, %v2802, 0
      %2807 = vmatprep.subr.mxu0 0.0
      %2808 = vmatpush1.msra.mxu0 %v2797
      %2809 = vmatprep.subr.mxu0 0.0
      %2810 = vmatpush1.msra.mxu0 %v2798
      %2811 = vmatprep.subr.mxu0 0.0
      %2812 = vmatpush1.msra.mxu0 %v2799
      %2813 = vmatprep.subr.mxu0 0.0
      %2814 = vmatpush1.msra.mxu0 %v2800
      %2815 = vmatprep.subr.mxu0 0.0
      %2816 = vmatpush1.msra.mxu0 0.0
      %2817 = vmatprep.subr.mxu0 0.0
      %2818 = vmatpush1.msra.mxu0 0.0
      %2819 = vmatprep.subr.mxu0 0.0
      %2820 = vmatpush1.msra.mxu0 0.0
      %2821 = vmatprep.subr.mxu0 0.0
      %2822 = vmatpush1.msra.mxu0 0.0
      %2823 = vmatprep.subr.mxu0 0.0
      %2824 = vmatpush1.msra.mxu0 0.0
      %2825 = vmatprep.subr.mxu0 0.0
      %2826 = vmatpush1.msra.mxu0 0.0
      %2827 = vmatprep.subr.mxu0 0.0
      %2828 = vmatpush1.msra.mxu0 0.0
      %2829 = vmatprep.subr.mxu0 0.0
      %2830 = vmatpush1.msra.mxu0 0.0
      %2831 = vmatprep.subr.mxu0 0.0
      %2832 = vmatpush1.msra.mxu0 0.0
      %2833 = vmatprep.subr.mxu0 0.0
      %2834 = vmatpush1.msra.mxu0 0.0
      %2835 = vmatprep.subr.mxu0 0.0
      %2836 = vmatpush1.msra.mxu0 0.0
      %2837 = vmatprep.subr.mxu0 0.0
      %2838 = vmatpush1.msra.mxu0 0.0
      %2839 = vmatprep.subr.mxu0 0.0
      %2840 = vmatpush1.msra.mxu0 0.0
      %2841 = vmatprep.subr.mxu0 0.0
      %2842 = vmatpush1.msra.mxu0 0.0
      %2843 = vmatprep.subr.mxu0 0.0
      %2844 = vmatpush1.msra.mxu0 0.0
      %2845 = vmatprep.subr.mxu0 0.0
      %2846 = vmatpush1.msra.mxu0 0.0
      %2847 = vmatprep.subr.mxu0 0.0
      %2848 = vmatpush1.msra.mxu0 0.0
      %2849 = vmatprep.subr.mxu0 0.0
      %2850 = vmatpush1.msra.mxu0 0.0
      %2851 = vmatprep.subr.mxu0 0.0
      %2852 = vmatpush1.msra.mxu0 0.0
      %2853 = vmatprep.subr.mxu0 0.0
      %2854 = vmatpush1.msra.mxu0 0.0
      %2855 = vmatprep.subr.mxu0 0.0
      %2856 = vmatpush1.msra.mxu0 0.0
      %2857 = vmatprep.subr.mxu0 0.0
      %2858 = vmatpush1.msra.mxu0 0.0
      %2859 = vmatprep.subr.mxu0 0.0
      %2860 = vmatpush1.msra.mxu0 0.0
      %2861 = vmatprep.subr.mxu0 0.0
      %2862 = vmatpush1.msra.mxu0 0.0
      %2863 = vmatprep.subr.mxu0 0.0
      %2864 = vmatpush1.msra.mxu0 0.0
      %2865 = vmatprep.subr.mxu0 0.0
      %2866 = vmatpush1.msra.mxu0 0.0
      %2867 = vmatprep.subr.mxu0 0.0
      %2868 = vmatpush1.msra.mxu0 0.0
      %2869 = vmatprep.subr.mxu0 0.0
      %2870 = vmatpush1.msra.mxu0 0.0
      %2871 = vmatprep.mubr.f32.mxu0 0.0
      %2872 = vmatmul.mubr.f32.gmra.mrb[0].mxu0 %v2803
      %v2873 = vpop.f32.mrb[0].mxu0
      %v2874 = vadd.f32 0.0, %v2873
      %v2875 = vpop.f32.mrb[0].mxu0
      %2876 = vmatprep.mubr.f32.mxu0 0.0
      %2877 = vmatmul.mubr.f32.gmra.mrb[0].mxu0 %v2805
      %v2878 = vpop.f32.mrb[0].mxu0
      %v2879 = vadd.f32 0.0, %v2878
      %v2880 = vpop.f32.mrb[0].mxu0
      %2881 = vdwg.mxu0
      %v2882 = vadd.f32 %v2790, %v2874
      %v2883 = vadd.f32 %v2791, %v2879
      %s2884 = scalar_lea.vmem %s8, 192
      %v2885 = vld [vmem:[%s2884] sm:$0xff]
      %v2886 = vld [vmem:[%s2884 + $0x8] sm:$0xff]
      %v2887 = vld [vmem:[%s2884 + $0x10] sm:$0xff]
      %v2888 = vld [vmem:[%s2884 + $0x18] sm:$0xff]
      %v2890 = vcombine.low %v2309, %v2310
      %v2891 = vsel %vm483, %v2890, 0
      %2893 = vmatprep.subr.mxu0 0.0
      %2894 = vmatpush1.msra.mxu0 %v2885
      %2895 = vmatprep.subr.mxu0 0.0
      %2896 = vmatpush1.msra.mxu0 %v2886
      %2897 = vmatprep.subr.mxu0 0.0
      %2898 = vmatpush1.msra.mxu0 %v2887
      %2899 = vmatprep.subr.mxu0 0.0
      %2900 = vmatpush1.msra.mxu0 %v2888
      %2901 = vmatprep.subr.mxu0 0.0
      %2902 = vmatpush1.msra.mxu0 0.0
      %2903 = vmatprep.subr.mxu0 0.0
      %2904 = vmatpush1.msra.mxu0 0.0
      %2905 = vmatprep.subr.mxu0 0.0
      %2906 = vmatpush1.msra.mxu0 0.0
      %2907 = vmatprep.subr.mxu0 0.0
      %2908 = vmatpush1.msra.mxu0 0.0
      %2909 = vmatprep.subr.mxu0 0.0
      %2910 = vmatpush1.msra.mxu0 0.0
      %2911 = vmatprep.subr.mxu0 0.0
      %2912 = vmatpush1.msra.mxu0 0.0
      %2913 = vmatprep.subr.mxu0 0.0
      %2914 = vmatpush1.msra.mxu0 0.0
      %2915 = vmatprep.subr.mxu0 0.0
      %2916 = vmatpush1.msra.mxu0 0.0
      %2917 = vmatprep.subr.mxu0 0.0
      %2918 = vmatpush1.msra.mxu0 0.0
      %2919 = vmatprep.subr.mxu0 0.0
      %2920 = vmatpush1.msra.mxu0 0.0
      %2921 = vmatprep.subr.mxu0 0.0
      %2922 = vmatpush1.msra.mxu0 0.0
      %2923 = vmatprep.subr.mxu0 0.0
      %2924 = vmatpush1.msra.mxu0 0.0
      %2925 = vmatprep.subr.mxu0 0.0
      %2926 = vmatpush1.msra.mxu0 0.0
      %2927 = vmatprep.subr.mxu0 0.0
      %2928 = vmatpush1.msra.mxu0 0.0
      %2929 = vmatprep.subr.mxu0 0.0
      %2930 = vmatpush1.msra.mxu0 0.0
      %2931 = vmatprep.subr.mxu0 0.0
      %2932 = vmatpush1.msra.mxu0 0.0
      %2933 = vmatprep.subr.mxu0 0.0
      %2934 = vmatpush1.msra.mxu0 0.0
      %2935 = vmatprep.subr.mxu0 0.0
      %2936 = vmatpush1.msra.mxu0 0.0
      %2937 = vmatprep.subr.mxu0 0.0
      %2938 = vmatpush1.msra.mxu0 0.0
      %2939 = vmatprep.subr.mxu0 0.0
      %2940 = vmatpush1.msra.mxu0 0.0
      %2941 = vmatprep.subr.mxu0 0.0
      %2942 = vmatpush1.msra.mxu0 0.0
      %2943 = vmatprep.subr.mxu0 0.0
      %2944 = vmatpush1.msra.mxu0 0.0
      %2945 = vmatprep.subr.mxu0 0.0
      %2946 = vmatpush1.msra.mxu0 0.0
      %2947 = vmatprep.subr.mxu0 0.0
      %2948 = vmatpush1.msra.mxu0 0.0
      %2949 = vmatprep.subr.mxu0 0.0
      %2950 = vmatpush1.msra.mxu0 0.0
      %2951 = vmatprep.subr.mxu0 0.0
      %2952 = vmatpush1.msra.mxu0 0.0
      %2953 = vmatprep.subr.mxu0 0.0
      %2954 = vmatpush1.msra.mxu0 0.0
      %2955 = vmatprep.subr.mxu0 0.0
      %2956 = vmatpush1.msra.mxu0 0.0
      %2957 = vmatprep.mubr.f32.mxu0 0.0
      %2958 = vmatmul.mubr.f32.gmra.mrb[0].mxu0 %v2429
      %v2959 = vpop.f32.mrb[0].mxu0
      %v2960 = vadd.f32 0.0, %v2959
      %v2961 = vpop.f32.mrb[0].mxu0
      %2962 = vmatprep.mubr.f32.mxu0 0.0
      %2963 = vmatmul.mubr.f32.gmra.mrb[0].mxu0 %v2891
      %v2964 = vpop.f32.mrb[0].mxu0
      %v2965 = vadd.f32 0.0, %v2964
      %v2966 = vpop.f32.mrb[0].mxu0
      %2967 = vdwg.mxu0
      %v2968 = vadd.f32 %v2882, %v2960
      %v2969 = vadd.f32 %v2883, %v2965
      %v2970 = vcombine.high %v2310, %v2310
      %v2971 = vrot.slane %v2310, 5
      %v2972 = vrot.slane %v2971, 4
      %v2973 = vrot.slane %v2970, 5
      %v2974 = vsel %vm779, %v2972, %v2973
      %s2975 = scalar_lea.vmem %s8, 224
      %v2976 = vld [vmem:[%s2975] sm:$0xff]
      %v2977 = vld [vmem:[%s2975 + $0x8] sm:$0xff]
      %v2978 = vld [vmem:[%s2975 + $0x10] sm:$0xff]
      %v2979 = vld [vmem:[%s2975 + $0x18] sm:$0xff]
      %v2980 = vcombine.low %v2703, %v2974
      %v2981 = vsel %vm483, %v2980, 0
      %2983 = vmatprep.subr.mxu0 0.0
      %2984 = vmatpush1.msra.mxu0 %v2976
      %2985 = vmatprep.subr.mxu0 0.0
      %2986 = vmatpush1.msra.mxu0 %v2977
      %2987 = vmatprep.subr.mxu0 0.0
      %2988 = vmatpush1.msra.mxu0 %v2978
      %2989 = vmatprep.subr.mxu0 0.0
      %2990 = vmatpush1.msra.mxu0 %v2979
      %2991 = vmatprep.subr.mxu0 0.0
      %2992 = vmatpush1.msra.mxu0 0.0
      %2993 = vmatprep.subr.mxu0 0.0
      %2994 = vmatpush1.msra.mxu0 0.0
      %2995 = vmatprep.subr.mxu0 0.0
      %2996 = vmatpush1.msra.mxu0 0.0
      %2997 = vmatprep.subr.mxu0 0.0
      %2998 = vmatpush1.msra.mxu0 0.0
      %2999 = vmatprep.subr.mxu0 0.0
      %3000 = vmatpush1.msra.mxu0 0.0
      %3001 = vmatprep.subr.mxu0 0.0
      %3002 = vmatpush1.msra.mxu0 0.0
      %3003 = vmatprep.subr.mxu0 0.0
      %3004 = vmatpush1.msra.mxu0 0.0
      %3005 = vmatprep.subr.mxu0 0.0
      %3006 = vmatpush1.msra.mxu0 0.0
      %3007 = vmatprep.subr.mxu0 0.0
      %3008 = vmatpush1.msra.mxu0 0.0
      %3009 = vmatprep.subr.mxu0 0.0
      %3010 = vmatpush1.msra.mxu0 0.0
      %3011 = vmatprep.subr.mxu0 0.0
      %3012 = vmatpush1.msra.mxu0 0.0
      %3013 = vmatprep.subr.mxu0 0.0
      %3014 = vmatpush1.msra.mxu0 0.0
      %3015 = vmatprep.subr.mxu0 0.0
      %3016 = vmatpush1.msra.mxu0 0.0
      %3017 = vmatprep.subr.mxu0 0.0
      %3018 = vmatpush1.msra.mxu0 0.0
      %3019 = vmatprep.subr.mxu0 0.0
      %3020 = vmatpush1.msra.mxu0 0.0
      %3021 = vmatprep.subr.mxu0 0.0
      %3022 = vmatpush1.msra.mxu0 0.0
      %3023 = vmatprep.subr.mxu0 0.0
      %3024 = vmatpush1.msra.mxu0 0.0
      %3025 = vmatprep.subr.mxu0 0.0
      %3026 = vmatpush1.msra.mxu0 0.0
      %3027 = vmatprep.subr.mxu0 0.0
      %3028 = vmatpush1.msra.mxu0 0.0
      %3029 = vmatprep.subr.mxu0 0.0
      %3030 = vmatpush1.msra.mxu0 0.0
      %3031 = vmatprep.subr.mxu0 0.0
      %3032 = vmatpush1.msra.mxu0 0.0
      %3033 = vmatprep.subr.mxu0 0.0
      %3034 = vmatpush1.msra.mxu0 0.0
      %3035 = vmatprep.subr.mxu0 0.0
      %3036 = vmatpush1.msra.mxu0 0.0
      %3037 = vmatprep.subr.mxu0 0.0
      %3038 = vmatpush1.msra.mxu0 0.0
      %3039 = vmatprep.subr.mxu0 0.0
      %3040 = vmatpush1.msra.mxu0 0.0
      %3041 = vmatprep.subr.mxu0 0.0
      %3042 = vmatpush1.msra.mxu0 0.0
      %3043 = vmatprep.subr.mxu0 0.0
      %3044 = vmatpush1.msra.mxu0 0.0
      %3045 = vmatprep.subr.mxu0 0.0
      %3046 = vmatpush1.msra.mxu0 0.0
      %3047 = vmatprep.mubr.f32.mxu0 0.0
      %3048 = vmatmul.mubr.f32.gmra.mrb[0].mxu0 %v2348
      %v3049 = vpop.f32.mrb[0].mxu0
      %v3050 = vadd.f32 0.0, %v3049
      %v3051 = vpop.f32.mrb[0].mxu0
      %3052 = vmatprep.mubr.f32.mxu0 0.0
      %3053 = vmatmul.mubr.f32.gmra.mrb[0].mxu0 %v2981
      %v3054 = vpop.f32.mrb[0].mxu0
      %v3055 = vadd.f32 0.0, %v3054
      %v3056 = vpop.f32.mrb[0].mxu0
      %3057 = vdwg.mxu0
      %v3058 = vadd.f32 %v2968, %v3050
      %v3059 = vadd.f32 %v2969, %v3055
      %v3060 = vrot.slane %v2310, 6
      %v3061 = vrot.slane %v3060, 4
      %v3062 = vrot.slane %v2970, 6
      %v3063 = vsel %vm992, %v3061, %v3062
      %s3064 = scalar_lea.vmem %s8, 256
      %v3065 = vld [vmem:[%s3064] sm:$0xff]
      %v3066 = vld [vmem:[%s3064 + $0x8] sm:$0xff]
      %v3067 = vld [vmem:[%s3064 + $0x10] sm:$0xff]
      %v3068 = vld [vmem:[%s3064 + $0x18] sm:$0xff]
      %v3069 = vcombine.low %v2795, %v3063
      %v3070 = vsel %vm483, %v3069, 0
      %3072 = vmatprep.subr.mxu0 0.0
      %3073 = vmatpush1.msra.mxu0 %v3065
      %3074 = vmatprep.subr.mxu0 0.0
      %3075 = vmatpush1.msra.mxu0 %v3066
      %3076 = vmatprep.subr.mxu0 0.0
      %3077 = vmatpush1.msra.mxu0 %v3067
      %3078 = vmatprep.subr.mxu0 0.0
      %3079 = vmatpush1.msra.mxu0 %v3068
      %3080 = vmatprep.subr.mxu0 0.0
      %3081 = vmatpush1.msra.mxu0 0.0
      %3082 = vmatprep.subr.mxu0 0.0
      %3083 = vmatpush1.msra.mxu0 0.0
      %3084 = vmatprep.subr.mxu0 0.0
      %3085 = vmatpush1.msra.mxu0 0.0
      %3086 = vmatprep.subr.mxu0 0.0
      %3087 = vmatpush1.msra.mxu0 0.0
      %3088 = vmatprep.subr.mxu0 0.0
      %3089 = vmatpush1.msra.mxu0 0.0
      %3090 = vmatprep.subr.mxu0 0.0
      %3091 = vmatpush1.msra.mxu0 0.0
      %3092 = vmatprep.subr.mxu0 0.0
      %3093 = vmatpush1.msra.mxu0 0.0
      %3094 = vmatprep.subr.mxu0 0.0
      %3095 = vmatpush1.msra.mxu0 0.0
      %3096 = vmatprep.subr.mxu0 0.0
      %3097 = vmatpush1.msra.mxu0 0.0
      %3098 = vmatprep.subr.mxu0 0.0
      %3099 = vmatpush1.msra.mxu0 0.0
      %3100 = vmatprep.subr.mxu0 0.0
      %3101 = vmatpush1.msra.mxu0 0.0
      %3102 = vmatprep.subr.mxu0 0.0
      %3103 = vmatpush1.msra.mxu0 0.0
      %3104 = vmatprep.subr.mxu0 0.0
      %3105 = vmatpush1.msra.mxu0 0.0
      %3106 = vmatprep.subr.mxu0 0.0
      %3107 = vmatpush1.msra.mxu0 0.0
      %3108 = vmatprep.subr.mxu0 0.0
      %3109 = vmatpush1.msra.mxu0 0.0
      %3110 = vmatprep.subr.mxu0 0.0
      %3111 = vmatpush1.msra.mxu0 0.0
      %3112 = vmatprep.subr.mxu0 0.0
      %3113 = vmatpush1.msra.mxu0 0.0
      %3114 = vmatprep.subr.mxu0 0.0
      %3115 = vmatpush1.msra.mxu0 0.0
      %3116 = vmatprep.subr.mxu0 0.0
      %3117 = vmatpush1.msra.mxu0 0.0
      %3118 = vmatprep.subr.mxu0 0.0
      %3119 = vmatpush1.msra.mxu0 0.0
      %3120 = vmatprep.subr.mxu0 0.0
      %3121 = vmatpush1.msra.mxu0 0.0
      %3122 = vmatprep.subr.mxu0 0.0
      %3123 = vmatpush1.msra.mxu0 0.0
      %3124 = vmatprep.subr.mxu0 0.0
      %3125 = vmatpush1.msra.mxu0 0.0
      %3126 = vmatprep.subr.mxu0 0.0
      %3127 = vmatpush1.msra.mxu0 0.0
      %3128 = vmatprep.subr.mxu0 0.0
      %3129 = vmatpush1.msra.mxu0 0.0
      %3130 = vmatprep.subr.mxu0 0.0
      %3131 = vmatpush1.msra.mxu0 0.0
      %3132 = vmatprep.subr.mxu0 0.0
      %3133 = vmatpush1.msra.mxu0 0.0
      %3134 = vmatprep.subr.mxu0 0.0
      %3135 = vmatpush1.msra.mxu0 0.0
      %3136 = vmatprep.mubr.f32.mxu0 0.0
      %3137 = vmatmul.mubr.f32.gmra.mrb[0].mxu0 %v2531
      %v3138 = vpop.f32.mrb[0].mxu0
      %v3139 = vadd.f32 0.0, %v3138
      %v3140 = vpop.f32.mrb[0].mxu0
      %3141 = vmatprep.mubr.f32.mxu0 0.0
      %3142 = vmatmul.mubr.f32.gmra.mrb[0].mxu0 %v3070
      %v3143 = vpop.f32.mrb[0].mxu0
      %v3144 = vadd.f32 0.0, %v3143
      %v3145 = vpop.f32.mrb[0].mxu0
      %3146 = vdwg.mxu0
      %v3147 = vadd.f32 %v3058, %v3139
      %v3148 = vadd.f32 %v3059, %v3144
      %v3149 = vld [vmem:[%s9] sm:$0x1]
      %v3151 = vlaneseq
      %v3152 = vshrl.u32 %v3151, 7
      %v3153 = vsub.s32 0, %v3152
      %v3154 = vrot.slane %v3149, %v3153
      %v3156 = vadd.f32 %v3147, %v3154
      %v3157 = vadd.f32 %v3148, %v3154
      %v3158 = vld [vmem:[%s10] sm:$0x1]
      %v3159 = vadd.f32 %v3156, 2.0
      %v3160 = vadd.f32 %v3157, 2.0
      %v3161 = vsub.f32 0.0, %v3159
      %v3162 = vsub.f32 0.0, %v3160
      %v3163 = vmax.f32 %v3161, 0.0
      %v3164 = vmax.f32 %v3162, 0.0
      %vm3165 = vcmp.ne.f32.partialorder %v3161, %v3161
      %vm3166 = vcmp.ne.f32.partialorder %v3162, %v3162
      %v3167 = vadd.f32 %v3161, 0.0
      %v3168 = vadd.f32 %v3162, 0.0
      %v3169 = vand.u32 2147483647, %v3161
      %v3170 = vand.u32 2147483647, %v3162
      %v3171 = vsub.f32 0.0, %v3169
      %v3172 = vsub.f32 0.0, %v3170
      %v3173 = vmul.f32 %v3171, 1.442695
      %v3174 = vpow.pop %v3173
      %v3175 = vmul.f32 %v3172, 1.442695
      %v3176 = vpow.pop %v3175
      %v3177 = vadd.f32 %v3174, 1.0
      %v3178 = vlog2.pop %v3177
      %v3179 = vmul.f32 %v3178, 0.6931472
      %v3180 = vmul.f32 -0.5, %v3174
      %v3181 = vadd.f32 %v3180, 1.0
      %v3182 = vmul.f32 %v3181, %v3174
      %v3183 = vand.u32 2147483647, %v3174
      %vm3184 = vcmp.lt.f32.partialorder %v3183, 0.0004427343
      %v3185 = vsel %vm3184, %v3182, %v3179
      %v3186 = vadd.f32 %v3176, 1.0
      %v3187 = vlog2.pop %v3186
      %v3188 = vmul.f32 %v3187, 0.6931472
      %v3189 = vmul.f32 -0.5, %v3176
      %v3190 = vadd.f32 %v3189, 1.0
      %v3191 = vmul.f32 %v3190, %v3176
      %v3192 = vand.u32 2147483647, %v3176
      %vm3193 = vcmp.lt.f32.partialorder %v3192, 0.0004427343
      %v3194 = vsel %vm3193, %v3191, %v3188
      %v3195 = vadd.f32 %v3163, %v3185
      %v3196 = vadd.f32 %v3164, %v3194
      %v3197 = vsel %vm3165, %v3167, %v3195
      %v3198 = vsel %vm3166, %v3168, %v3196
      %v3199 = vsub.f32 0.0, %v3197
      %v3200 = vsub.f32 0.0, %v3198
      %v3202 = vlaneseq
      %v3203 = vshrl.u32 %v3202, 7
      %v3204 = vsub.s32 0, %v3203
      %v3205 = vrot.slane %v3158, %v3204
      %v3207 = vmul.f32 %v3205, %v3199
      %v3208 = vmul.f32 %v3205, %v3200
      %v3209 = vmul.f32 %v3207, 1.442695
      %v3210 = vpow.pop %v3209
      %v3211 = vmul.f32 %v3208, 1.442695
      %v3212 = vpow.pop %v3211
      %v3213 = vmul.f32 %v555, %v3210
      %v3214 = vmul.f32 %v560, %v3212
      %3217 = vrot.lane.b32.xlu0 %v3156, 96
      %v3218 = vpop.permute.xlu0 %3217
      %3219 = vrot.lane.b32.xlu0 %v3157, 96
      %v3220 = vpop.permute.xlu0 %3219
      %v3223 = vadd.f32 %v3213, %v3218
      %v3224 = vadd.f32 %v3214, %v3220
      %v3227 = vcombine.high %v3223, %v3223
      %v3228 = vcombine.high %v3224, %v3224
      %3231 = vst.msk [vmem:[%s439] sm:$0xf] %vm2300, %v3223
      %3232 = vst.msk [vmem:[%s439 + $0x4] sm:$0xf] %vm2300, %v3227
      %3233 = vst.msk [vmem:[%s439 + $0x8] sm:$0xf] %vm2300, %v3224
      %3234 = vst.msk [vmem:[%s439 + $0xc] sm:$0xf] %vm2300, %v3228
      %v3235 = vsel %vm483, %v3207, 0.0
      %v3236 = vsel %vm483, %v3208, 0.0
      %v3237 = vadd.f32 %v3235, %v3236
      %3238 = vadd.xlane.f32.xlu0 %v3237
      %v3239 = vpop.xlane.xlu0 %3238
      %v3240 = vrot.slane %v3239, 4
      %v3241 = vadd.f32 %v3239, %v3240
      %v3242 = vrot.slane %v3241, 2
      %v3243 = vadd.f32 %v3241, %v3242
      %v3244 = vrot.slane %v3243, 1
      %v3245 = vadd.f32 %v3243, %v3244
      %s3246 = vtos %v3245
      %v3247 = vstv %s3246
      %vm3248 = vcmask 0
      %3249 = vst.msk [vmem:[%s442] sm:$0x1] %vm3248, %v3247
      %p3250 = scmp.lt.s32.totalorder %s24, 1
      %s3251 = scalar_select %p3250, %s24, 1
      %s3252 = smul.addr %s3251, 4
      %s3253 = smul.addr %s3252, 4
      %s3254 = scalar_lea.vmem %s11, %s3253
      %p3255 = scmp.lt.s32.totalorder %s24, 1
      %s3256 = scalar_select %p3255, %s24, 1
      %s3257 = scalar_lea.vmem %s12, %s3256
      // Predicated region
      $region65: #{_lambda_.6} parent=63 // pred_check
        %p3258 = pneg %p283
      $region66: #{_lambda_.6} parent=63 // pred_check_branch
        %3260 = sbr.rel (%p3258) target = $region68
      $region67: #{_lambda_.6} parent=63 // pred_region
        _
      $region68: #{_lambda_.6} parent=63 // pred_fallthru
        _
      // Predicated region
      $region69: #{_lambda_.6} parent=63 // pred_check
        %p3261 = pneg %p309
      $region70: #{_lambda_.6} parent=63 // pred_check_branch
        %3263 = sbr.rel (%p3261) target = $region72
      $region71: #{_lambda_.6} parent=63 // pred_region
        _
      $region72: #{_lambda_.6} parent=63 // pred_fallthru
        _
    $region64: #{_lambda_.6} parent=5 // pred_fallthru
      _
    %p3264 = scmp.le.s32.totalorder 2, %s19
    // Predicated region
    $region73: #{_lambda_.6} parent=5 // pred_check
      %p3265 = pneg %p3264
    $region74: #{_lambda_.6} parent=5 // pred_check_branch
      %3267 = sbr.rel (%p3265) target = $region76
    $region75: #{_lambda_.6} parent=5 // pred_region
      %s3268 = ssub.s32 %s19, 2
      // Predicated region
      $region77: #{_lambda_.6} parent=75 // pred_check
        %p3269 = pneg %p289
      $region78: #{_lambda_.6} parent=75 // pred_check_branch
        %3271 = sbr.rel (%p3269) target = $region80
      $region79: #{_lambda_.6} parent=75 // pred_region
        %p3272 = scmp.lt.s32.totalorder %s25, 1
        %s3273 = scalar_select %p3272, %s25, 1
        %s3274 = smul.addr %s3273, 4
        %s3275 = smul.addr %s3274, 4
        %s3276 = scalar_lea.vmem %s11, %s3275
      $region80: #{_lambda_.6} parent=75 // pred_fallthru
        _
      // Predicated region
      $region81: #{_lambda_.6} parent=75 // pred_check
        %p3277 = pneg %p315
      $region82: #{_lambda_.6} parent=75 // pred_check_branch
        %3279 = sbr.rel (%p3277) target = $region84
      $region83: #{_lambda_.6} parent=75 // pred_region
        %p3280 = scmp.lt.s32.totalorder %s25, 1
        %s3281 = scalar_select %p3280, %s25, 1
        %s3282 = scalar_lea.vmem %s12, %s3281
      $region84: #{_lambda_.6} parent=75 // pred_fallthru
        _
    $region76: #{_lambda_.6} parent=5 // pred_fallthru
      _
  $region6: #{_lambda_.6} parent=0 // loop_footer
    %s23 = sadd.s32 1, %s19
  $region7: #{_lambda_.6} parent=0 // loop_footer_branch
    %18 = sbr.rel target = $region3
  $region8: #{_lambda_.6} parent=0 // loop_exit
    _

</llo_original>
